<compile_context>
chip_gen: v7x
topology: tpu7x:2x2x1
jax: 0.10.0
libtpu: 0.0.40
codegen_flags: <defaults>
</compile_context>

<pallas_src>
import math

import jax
import jax.numpy as jnp
import numpy as np
from jax import lax
from jax.experimental import pallas as pl
from jax.experimental.pallas import tpu as pltpu

LEVEL = 3
KSIZE = 3
EPS = 1e-5  # nn.LayerNorm default

# Row indices inside the packed "misc" operand.
_B1, _B2, _B3, _GAMMA, _BETA, _QL, _QW = range(7)


# --------------------------------- kernel -------------------------------------
def _make_kernel(TS, L, H):
    R = TS * L
    scale = 1.0 / math.sqrt(H)

    def kernel(emb_ref, w1_ref, w2_ref, w3_ref, misc_ref, dil_ref, repr_ref):
        x = emb_ref[...]                                   # [R, E]  (TS items x L tokens)

        b1 = misc_ref[_B1:_B1 + 1, :]
        b2 = misc_ref[_B2:_B2 + 1, :]
        b3 = misc_ref[_B3:_B3 + 1, :]
        gamma = misc_ref[_GAMMA:_GAMMA + 1, :]
        beta = misc_ref[_BETA:_BETA + 1, :]
        ql = misc_ref[_QL:_QL + 1, :]
        qw = misc_ref[_QW:_QW + 1, :]

        # Token position within each length-L news item (hoisted, reused by all convs).
        pos = lax.broadcasted_iota(jnp.int32, (R, 1), 0) % L

        def conv_ln(x_in, w_ref, b, d):
            # Fused dilated Conv1d (kernel=3, dilation=d, padding=d) + LayerNorm.
            # w_ref = [w_left | w_center | w_right] of shape (Cin, 3H):
            #   z[:,   0:H ] = x @ w_left    (tap that pairs with x[t-d])
            #   z[:,  H:2H ] = x @ w_center  (tap that pairs with x[t])
            #   z[:, 2H:3H ] = x @ w_right   (tap that pairs with x[t+d])
            z = jnp.dot(x_in, w_ref[...], preferred_element_type=jnp.float32)
            zl = z[:, 0:H]
            zc = z[:, H:2 * H]
            zr = z[:, 2 * H:3 * H]
            # Time shifts via sublane roll (XLU) + per-item masks (replaces the old
            # [L,L] shift-matrix matmuls).  Masks also stop leakage across the TS
            # item boundaries packed into this block.
            fwd = jnp.where(pos >= d, pltpu.roll(zl, d, 0), 0.0)          # zl[t-d]
            bwd = jnp.where(pos < L - d, pltpu.roll(zr, R - d, 0), 0.0)   # zr[t+d]
            y = fwd + zc + bwd + b
            mu = jnp.mean(y, axis=-1, keepdims=True)
            var = jnp.mean(jnp.square(y - mu), axis=-1, keepdims=True)
            return (y - mu) * lax.rsqrt(var + EPS) * gamma + beta

        # HDC stack: conv -> LayerNorm (pre-ReLU fed forward), ReLU stored.
        d1 = conv_ln(x,  w1_ref, b1, 1)
        r1 = jnp.maximum(d1, 0.0)
        d2 = conv_ln(d1, w2_ref, b2, 2)
        r2 = jnp.maximum(d2, 0.0)
        d3 = conv_ln(d2, w3_ref, b3, 3)
        r3 = jnp.maximum(d3, 0.0)

        # One contiguous store of all three levels, already in (token, level, h) order.
        dil_ref[...] = jnp.concatenate([r1, r2, r3], axis=-1)             # [R, 3H]

        # Attention over the 3 dilation levels (per token).
        s1 = jnp.sum(r1 * ql, axis=-1, keepdims=True) * scale             # [R, 1]
        s2 = jnp.sum(r2 * ql, axis=-1, keepdims=True) * scale
        s3 = jnp.sum(r3 * ql, axis=-1, keepdims=True) * scale
        m = jnp.maximum(jnp.maximum(s1, s2), s3)
        e1 = jnp.exp(s1 - m)
        e2 = jnp.exp(s2 - m)
        e3 = jnp.exp(s3 - m)
        inv_den = pl.reciprocal(e1 + e2 + e3, approx=True)
        attn = (e1 * r1 + e2 * r2 + e3 * r3) * inv_den                    # [R, H]

        # Attention over words: softmax over L, independently per news item.
        attn3 = attn.reshape(TS, L, H)
        sw = jnp.sum(attn3 * qw.reshape(1, 1, H), axis=-1, keepdims=True) * scale  # [TS, L, 1]
        sw = sw - jnp.max(sw, axis=1, keepdims=True)
        ew = jnp.exp(sw)
        inv_w = pl.reciprocal(jnp.sum(ew, axis=1)[:, 0:1], approx=True)   # [TS, 1]
        repr_ref[...] = jnp.sum(ew * attn3, axis=1) * inv_w               # [TS, H]

    return kernel


# -------------------------------- wrapper --------------------------------------
def fim_encoder_forward(news_batch, params, *, rows_per_step=256):
    """news_batch: int32 [B, N, L] -> (dilations [B, N, L, 3, H], reprs [B, N, H]).

    rows_per_step ~= MXU M target: 256 for v6e/v7x, 128 is enough on v5e.
    Best lowering/perf when H (filter_num) and E are multiples of 128.
    """
    B, N, L = news_batch.shape
    E = params['embedding'].shape[1]
    H = params['w1'].shape[-1]
    S = B * N

    TS = max(1, rows_per_step // L)          # news items per grid step
    num_blocks = -(-S // TS)
    S_pad = num_blocks * TS
    R = TS * L

    # Embedding gather (XLA glue).  Dropout = identity (inference).
    emb = jnp.take(params['embedding'], news_batch.reshape(S * L), axis=0)   # [S*L, E]
    if S_pad != S:
        emb = jnp.concatenate(
            [emb, jnp.zeros(((S_pad - S) * L, E), emb.dtype)], axis=0)

    # Fuse the three conv taps along the output dim at prep time: (3, Cin, H) -> (Cin, 3H)
    def fuse(w):
        return jnp.concatenate([w[0], w[1], w[2]], axis=-1)

    w1c = fuse(params['w1'])                 # [E, 3H]
    w2c = fuse(params['w2'])                 # [H, 3H]
    w3c = fuse(params['w3'])                 # [H, 3H]

    # Pack the tiny per-call operands into one [7, H] array (one BlockSpec/DMA).
    misc = jnp.concatenate(
        [params['b1'], params['b2'], params['b3'], params['gamma'],
         params['beta'], params['query_levels'], params['query_words']], axis=0)

    kernel = _make_kernel(TS, L, H)

    dil_flat, reprs = pl.pallas_call(
        kernel,
        out_shape=(
            jax.ShapeDtypeStruct((S_pad * L, LEVEL * H), jnp.float32),
            jax.ShapeDtypeStruct((S_pad, H), jnp.float32),
        ),
        grid_spec=pltpu.PrefetchScalarGridSpec(
            num_scalar_prefetch=0,
            grid=(num_blocks,),
            in_specs=[
                pl.BlockSpec((R, E), lambda g: (g, 0)),            # embeddings tile
                pl.BlockSpec((E, LEVEL * H), lambda g: (0, 0)),    # fused w1
                pl.BlockSpec((H, LEVEL * H), lambda g: (0, 0)),    # fused w2
                pl.BlockSpec((H, LEVEL * H), lambda g: (0, 0)),    # fused w3
                pl.BlockSpec((7, H), lambda g: (0, 0)),            # packed misc params
            ],
            out_specs=[
                pl.BlockSpec((R, LEVEL * H), lambda g: (g, 0)),    # dilations (lane-dense)
                pl.BlockSpec((TS, H), lambda g: (g, 0)),           # news reprs
            ],
        ),
        compiler_params=pltpu.CompilerParams(dimension_semantics=("parallel",)),
    )(emb, w1c, w2c, w3c, misc)

    # (S_pad*L, 3H) rows are (item, token)-major, columns (level, h)-major, so this is
    # a pure metadata reshape — no post-kernel transpose / extra HBM pass.
    dil = dil_flat[:S * L].reshape(B, N, L, LEVEL, H)
    news_reprs = reprs[:S].reshape(B, N, H)
    return dil, news_reprs


# ------------------------- pure-JAX reference (checking) -----------------------
def reference_forward(news_batch, params):
    B, N, L = news_batch.shape
    H = params['w1'].shape[-1]
    emb = jnp.take(params['embedding'], news_batch.reshape(-1, L), axis=0)   # [S, L, E]

    def conv(x, w, b, d):
        Lx = x.shape[1]
        pad = jnp.pad(x, ((0, 0), (d, d), (0, 0)))
        y = (jnp.einsum('slc,ch->slh', pad[:, 0:Lx], w[0]) +
             jnp.einsum('slc,ch->slh', pad[:, d:d + Lx], w[1]) +
             jnp.einsum('slc,ch->slh', pad[:, 2 * d:2 * d + Lx], w[2]))
        return y + b

    def ln(x):
        mu = x.mean(-1, keepdims=True)
        var = ((x - mu) ** 2).mean(-1, keepdims=True)
        return (x - mu) / jnp.sqrt(var + EPS) * params['gamma'] + params['beta']

    d1 = ln(conv(emb, params['w1'], params['b1'], 1)); r1 = jnp.maximum(d1, 0.0)
    d2 = ln(conv(d1, params['w2'], params['b2'], 2)); r2 = jnp.maximum(d2, 0.0)
    d3 = ln(conv(d2, params['w3'], params['b3'], 3)); r3 = jnp.maximum(d3, 0.0)
    dil = jnp.stack([r1, r2, r3], axis=2)                                    # [S, L, 3, H]

    scale = 1.0 / math.sqrt(H)
    sc = jnp.einsum('slkh,qh->slqk', dil, params['query_levels']) * scale    # [S, L, 1, 3]
    attn = jnp.einsum('slqk,slkh->slqh', jax.nn.softmax(sc, axis=-1), dil)[:, :, 0]
    scw = jnp.einsum('slh,qh->sql', attn, params['query_words']) * scale     # [S, 1, L]
    reprs = jnp.einsum('sql,slh->sqh', jax.nn.softmax(scw, axis=-1), attn)[:, 0]
    return dil.reshape(B, N, L, LEVEL, H), reprs.reshape(B, N, H)


# ----------------------------------- main ---------------------------------------
if __name__ == "__main__":
    B, N, L = 2, 20, 16          # batch_size, news per batch, signal_length
    V, E, H = 64, 128, 128       # vocab, embedding_dim, filter_num (hidden_dim)

    key = jax.random.PRNGKey(0)
    keys = jax.random.split(key, 10)
    params = {
        'embedding':    jax.random.normal(keys[0], (V, E), jnp.float32),
        'w1':           jax.random.normal(keys[1], (KSIZE, E, H), jnp.float32) * 0.05,
        'b1':           jax.random.normal(keys[2], (1, H), jnp.float32) * 0.1,
        'w2':           jax.random.normal(keys[3], (KSIZE, H, H), jnp.float32) * 0.05,
        'b2':           jax.random.normal(keys[4], (1, H), jnp.float32) * 0.1,
        'w3':           jax.random.normal(keys[5], (KSIZE, H, H), jnp.float32) * 0.05,
        'b3':           jax.random.normal(keys[6], (1, H), jnp.float32) * 0.1,
        'gamma':        jnp.ones((1, H), jnp.float32),    # LayerNorm weight
        'beta':         jnp.zeros((1, H), jnp.float32),   # LayerNorm bias
        'query_levels': jax.random.normal(keys[7], (1, H), jnp.float32),
        'query_words':  jax.random.normal(keys[8], (1, H), jnp.float32),
    }
    news_batch = jax.random.randint(keys[9], (B, N, L), 0, V, dtype=jnp.int32)

    dil, reprs = fim_encoder_forward(news_batch, params)
    jax.block_until_ready((dil, reprs))

    assert dil.shape == (B, N, L, LEVEL, H)
    assert reprs.shape == (B, N, H)

    with jax.default_matmul_precision("highest"):
        ref_dil, ref_reprs = reference_forward(news_batch, params)
        jax.block_until_ready((ref_dil, ref_reprs))

    np.testing.assert_allclose(np.asarray(dil), np.asarray(ref_dil), atol=5e-3, rtol=5e-3)
    np.testing.assert_allclose(np.asarray(reprs), np.asarray(ref_reprs), atol=5e-3, rtol=5e-3)

    # TODO(synk): training-mode Dropout (RNG masking) not implemented; kernel is inference path.
    print("KERNEL_OK")
</pallas_src>

<mosaic_0001>
module attributes {stable_mosaic.version = 11 : i64} {
  func.func @kernel(%arg0: i32, %arg1: memref<256x128xf32, #tpu.memory_space<vmem>>, %arg2: memref<128x384xf32, #tpu.memory_space<vmem>>, %arg3: memref<128x384xf32, #tpu.memory_space<vmem>>, %arg4: memref<128x384xf32, #tpu.memory_space<vmem>>, %arg5: memref<7x128xf32, #tpu.memory_space<vmem>>, %arg6: memref<256x384xf32, #tpu.memory_space<vmem>>, %arg7: memref<16x128xf32, #tpu.memory_space<vmem>>) attributes {dimension_semantics = [#tpu.dimension_semantics<parallel>], iteration_bounds = array<i64: 3>, scalar_prefetch = 0 : i64, scratch_operands = 0 : i64, tpu.core_type = #tpu.core_type<tc>, window_params = [{transform_indices = @transform_0, window_bounds = array<i64: 256, 128>}, {pipeline_mode = #tpu.pipeline_mode<synchronous>, transform_indices = @transform_1, window_bounds = array<i64: 128, 384>}, {pipeline_mode = #tpu.pipeline_mode<synchronous>, transform_indices = @transform_2, window_bounds = array<i64: 128, 384>}, {pipeline_mode = #tpu.pipeline_mode<synchronous>, transform_indices = @transform_3, window_bounds = array<i64: 128, 384>}, {pipeline_mode = #tpu.pipeline_mode<synchronous>, transform_indices = @transform_4, window_bounds = array<i64: 7, 128>}, {transform_indices = @transform_5, window_bounds = array<i64: 256, 384>}, {transform_indices = @transform_6, window_bounds = array<i64: 16, 128>}]} {
    %c0 = arith.constant 0 : index
    %c0_0 = arith.constant 0 : index
    %0 = vector.load %arg1[%c0, %c0_0] : memref<256x128xf32, #tpu.memory_space<vmem>>, vector<256x128xf32>
    %c0_1 = arith.constant 0 : index
    %c0_2 = arith.constant 0 : index
    %1 = vector.load %arg5[%c0_1, %c0_2] : memref<7x128xf32, #tpu.memory_space<vmem>>, vector<1x128xf32>
    %c1 = arith.constant 1 : index
    %c0_3 = arith.constant 0 : index
    %2 = vector.load %arg5[%c1, %c0_3] : memref<7x128xf32, #tpu.memory_space<vmem>>, vector<1x128xf32>
    %c2 = arith.constant 2 : index
    %c0_4 = arith.constant 0 : index
    %3 = vector.load %arg5[%c2, %c0_4] : memref<7x128xf32, #tpu.memory_space<vmem>>, vector<1x128xf32>
    %c3 = arith.constant 3 : index
    %c0_5 = arith.constant 0 : index
    %4 = vector.load %arg5[%c3, %c0_5] : memref<7x128xf32, #tpu.memory_space<vmem>>, vector<1x128xf32>
    %c4 = arith.constant 4 : index
    %c0_6 = arith.constant 0 : index
    %5 = vector.load %arg5[%c4, %c0_6] : memref<7x128xf32, #tpu.memory_space<vmem>>, vector<1x128xf32>
    %c5 = arith.constant 5 : index
    %c0_7 = arith.constant 0 : index
    %6 = vector.load %arg5[%c5, %c0_7] : memref<7x128xf32, #tpu.memory_space<vmem>>, vector<1x128xf32>
    %c6 = arith.constant 6 : index
    %c0_8 = arith.constant 0 : index
    %7 = vector.load %arg5[%c6, %c0_8] : memref<7x128xf32, #tpu.memory_space<vmem>>, vector<1x128xf32>
    %8 = tpu.iota {dimensions = array<i32: 0>} : vector<256x1xi32>
    %c16_i32 = arith.constant 16 : i32
    %c0_i32 = arith.constant 0 : i32
    %9 = arith.cmpi eq, %c16_i32, %c0_i32 : i32
    %c1_i32 = arith.constant 1 : i32
    %10 = arith.select %9, %c1_i32, %c16_i32 : i32
    %11 = vector.broadcast %10 : i32 to vector<256x1xi32>
    %12 = arith.remsi %8, %11 : vector<256x1xi32>
    %c0_i32_9 = arith.constant 0 : i32
    %13 = vector.broadcast %c0_i32_9 : i32 to vector<256x1xi32>
    %14 = arith.cmpi ne, %12, %13 : vector<256x1xi32>
    %c0_i32_10 = arith.constant 0 : i32
    %15 = vector.broadcast %c0_i32_10 : i32 to vector<256x1xi32>
    %16 = arith.cmpi slt, %12, %15 : vector<256x1xi32>
    %c0_i32_11 = arith.constant 0 : i32
    %17 = arith.cmpi slt, %10, %c0_i32_11 : i32
    %18 = vector.broadcast %17 : i1 to vector<256x1xi1>
    %19 = vector.broadcast %18 : vector<256x1xi1> to vector<256x1xi1>
    %20 = arith.xori %16, %19 : vector<256x1xi1>
    %21 = arith.andi %20, %14 : vector<256x1xi1>
    %22 = vector.broadcast %10 : i32 to vector<256x1xi32>
    %23 = arith.addi %12, %22 : vector<256x1xi32>
    %24 = arith.select %21, %23, %12 : vector<256x1xi1>, vector<256x1xi32>
    %c0_12 = arith.constant 0 : index
    %c0_13 = arith.constant 0 : index
    %25 = vector.load %arg2[%c0_12, %c0_13] : memref<128x384xf32, #tpu.memory_space<vmem>>, vector<128x384xf32>
    %cst = arith.constant dense<0.000000e+00> : vector<256x384xf32>
    %26 = tpu.matmul %0, %25, %cst {dimension_numbers = #tpu.dot_dimension_numbers<[1], [0], [0], [1], [0, 0, 1, 1], [], []>} : vector<256x128xf32>, vector<128x384xf32>, vector<256x384xf32> -> vector<256x384xf32>
    %27 = vector.extract_strided_slice %26 {offsets = [0, 0], sizes = [256, 128], strides = [1, 1]} : vector<256x384xf32> to vector<256x128xf32>
    %28 = vector.extract_strided_slice %26 {offsets = [0, 128], sizes = [256, 128], strides = [1, 1]} : vector<256x384xf32> to vector<256x128xf32>
    %29 = vector.extract_strided_slice %26 {offsets = [0, 256], sizes = [256, 128], strides = [1, 1]} : vector<256x384xf32> to vector<256x128xf32>
    %c1_i32_14 = arith.constant 1 : i32
    %30 = vector.broadcast %c1_i32_14 : i32 to vector<256x1xi32>
    %31 = arith.cmpi sge, %24, %30 : vector<256x1xi32>
    %c1_i32_15 = arith.constant 1 : i32
    %32 = tpu.dynamic_rotate %27 by %c1_i32_15 dim 0 : vector<256x128xf32>, i32 -> vector<256x128xf32>
    %cst_16 = arith.constant 0.000000e+00 : f32
    %33 = vector.shape_cast %31 : vector<256x1xi1> to vector<256x1xi1>
    %34 = vector.broadcast %33 : vector<256x1xi1> to vector<256x128xi1>
    %35 = vector.broadcast %cst_16 : f32 to vector<256x128xf32>
    %36 = arith.select %34, %32, %35 : vector<256x128xi1>, vector<256x128xf32>
    %c15_i32 = arith.constant 15 : i32
    %37 = vector.broadcast %c15_i32 : i32 to vector<256x1xi32>
    %38 = arith.cmpi slt, %24, %37 : vector<256x1xi32>
    %c255_i32 = arith.constant 255 : i32
    %39 = tpu.dynamic_rotate %29 by %c255_i32 dim 0 : vector<256x128xf32>, i32 -> vector<256x128xf32>
    %cst_17 = arith.constant 0.000000e+00 : f32
    %40 = vector.shape_cast %38 : vector<256x1xi1> to vector<256x1xi1>
    %41 = vector.broadcast %40 : vector<256x1xi1> to vector<256x128xi1>
    %42 = vector.broadcast %cst_17 : f32 to vector<256x128xf32>
    %43 = arith.select %41, %39, %42 : vector<256x128xi1>, vector<256x128xf32>
    %44 = arith.addf %36, %28 : vector<256x128xf32>
    %45 = arith.addf %44, %43 : vector<256x128xf32>
    %46 = vector.broadcast %1 : vector<1x128xf32> to vector<256x128xf32>
    %47 = arith.addf %45, %46 : vector<256x128xf32>
    %cst_18 = arith.constant dense<0.000000e+00> : vector<256xf32>
    %48 = vector.multi_reduction <add>, %47, %cst_18 [1] : vector<256x128xf32> to vector<256xf32>
    %49 = vector.shape_cast %48 : vector<256xf32> to vector<256x1xf32>
    %cst_19 = arith.constant 1.280000e+02 : f32
    %50 = vector.broadcast %cst_19 : f32 to vector<256x1xf32>
    %51 = arith.divf %49, %50 : vector<256x1xf32>
    %52 = vector.broadcast %51 : vector<256x1xf32> to vector<256x128xf32>
    %53 = arith.subf %47, %52 : vector<256x128xf32>
    %54 = arith.mulf %53, %53 : vector<256x128xf32>
    %cst_20 = arith.constant dense<0.000000e+00> : vector<256xf32>
    %55 = vector.multi_reduction <add>, %54, %cst_20 [1] : vector<256x128xf32> to vector<256xf32>
    %56 = vector.shape_cast %55 : vector<256xf32> to vector<256x1xf32>
    %cst_21 = arith.constant 1.280000e+02 : f32
    %57 = vector.broadcast %cst_21 : f32 to vector<256x1xf32>
    %58 = arith.divf %56, %57 : vector<256x1xf32>
    %59 = vector.broadcast %51 : vector<256x1xf32> to vector<256x128xf32>
    %60 = arith.subf %47, %59 : vector<256x128xf32>
    %cst_22 = arith.constant 9.99999974E-6 : f32
    %61 = vector.broadcast %cst_22 : f32 to vector<256x1xf32>
    %62 = arith.addf %58, %61 : vector<256x1xf32>
    %63 = math.rsqrt %62 : vector<256x1xf32>
    %64 = vector.broadcast %63 : vector<256x1xf32> to vector<256x128xf32>
    %65 = arith.mulf %60, %64 : vector<256x128xf32>
    %66 = vector.broadcast %4 : vector<1x128xf32> to vector<256x128xf32>
    %67 = arith.mulf %65, %66 : vector<256x128xf32>
    %68 = vector.broadcast %5 : vector<1x128xf32> to vector<256x128xf32>
    %69 = arith.addf %67, %68 : vector<256x128xf32>
    %cst_23 = arith.constant 0.000000e+00 : f32
    %70 = vector.broadcast %cst_23 : f32 to vector<256x128xf32>
    %71 = arith.maximumf %69, %70 : vector<256x128xf32>
    %c0_24 = arith.constant 0 : index
    %c0_25 = arith.constant 0 : index
    %72 = vector.load %arg3[%c0_24, %c0_25] : memref<128x384xf32, #tpu.memory_space<vmem>>, vector<128x384xf32>
    %cst_26 = arith.constant dense<0.000000e+00> : vector<256x384xf32>
    %73 = tpu.matmul %69, %72, %cst_26 {dimension_numbers = #tpu.dot_dimension_numbers<[1], [0], [0], [1], [0, 0, 1, 1], [], []>} : vector<256x128xf32>, vector<128x384xf32>, vector<256x384xf32> -> vector<256x384xf32>
    %74 = vector.extract_strided_slice %73 {offsets = [0, 0], sizes = [256, 128], strides = [1, 1]} : vector<256x384xf32> to vector<256x128xf32>
    %75 = vector.extract_strided_slice %73 {offsets = [0, 128], sizes = [256, 128], strides = [1, 1]} : vector<256x384xf32> to vector<256x128xf32>
    %76 = vector.extract_strided_slice %73 {offsets = [0, 256], sizes = [256, 128], strides = [1, 1]} : vector<256x384xf32> to vector<256x128xf32>
    %c2_i32 = arith.constant 2 : i32
    %77 = vector.broadcast %c2_i32 : i32 to vector<256x1xi32>
    %78 = arith.cmpi sge, %24, %77 : vector<256x1xi32>
    %c2_i32_27 = arith.constant 2 : i32
    %79 = tpu.dynamic_rotate %74 by %c2_i32_27 dim 0 : vector<256x128xf32>, i32 -> vector<256x128xf32>
    %cst_28 = arith.constant 0.000000e+00 : f32
    %80 = vector.shape_cast %78 : vector<256x1xi1> to vector<256x1xi1>
    %81 = vector.broadcast %80 : vector<256x1xi1> to vector<256x128xi1>
    %82 = vector.broadcast %cst_28 : f32 to vector<256x128xf32>
    %83 = arith.select %81, %79, %82 : vector<256x128xi1>, vector<256x128xf32>
    %c14_i32 = arith.constant 14 : i32
    %84 = vector.broadcast %c14_i32 : i32 to vector<256x1xi32>
    %85 = arith.cmpi slt, %24, %84 : vector<256x1xi32>
    %c254_i32 = arith.constant 254 : i32
    %86 = tpu.dynamic_rotate %76 by %c254_i32 dim 0 : vector<256x128xf32>, i32 -> vector<256x128xf32>
    %cst_29 = arith.constant 0.000000e+00 : f32
    %87 = vector.shape_cast %85 : vector<256x1xi1> to vector<256x1xi1>
    %88 = vector.broadcast %87 : vector<256x1xi1> to vector<256x128xi1>
    %89 = vector.broadcast %cst_29 : f32 to vector<256x128xf32>
    %90 = arith.select %88, %86, %89 : vector<256x128xi1>, vector<256x128xf32>
    %91 = arith.addf %83, %75 : vector<256x128xf32>
    %92 = arith.addf %91, %90 : vector<256x128xf32>
    %93 = vector.broadcast %2 : vector<1x128xf32> to vector<256x128xf32>
    %94 = arith.addf %92, %93 : vector<256x128xf32>
    %cst_30 = arith.constant dense<0.000000e+00> : vector<256xf32>
    %95 = vector.multi_reduction <add>, %94, %cst_30 [1] : vector<256x128xf32> to vector<256xf32>
    %96 = vector.shape_cast %95 : vector<256xf32> to vector<256x1xf32>
    %cst_31 = arith.constant 1.280000e+02 : f32
    %97 = vector.broadcast %cst_31 : f32 to vector<256x1xf32>
    %98 = arith.divf %96, %97 : vector<256x1xf32>
    %99 = vector.broadcast %98 : vector<256x1xf32> to vector<256x128xf32>
    %100 = arith.subf %94, %99 : vector<256x128xf32>
    %101 = arith.mulf %100, %100 : vector<256x128xf32>
    %cst_32 = arith.constant dense<0.000000e+00> : vector<256xf32>
    %102 = vector.multi_reduction <add>, %101, %cst_32 [1] : vector<256x128xf32> to vector<256xf32>
    %103 = vector.shape_cast %102 : vector<256xf32> to vector<256x1xf32>
    %cst_33 = arith.constant 1.280000e+02 : f32
    %104 = vector.broadcast %cst_33 : f32 to vector<256x1xf32>
    %105 = arith.divf %103, %104 : vector<256x1xf32>
    %106 = vector.broadcast %98 : vector<256x1xf32> to vector<256x128xf32>
    %107 = arith.subf %94, %106 : vector<256x128xf32>
    %cst_34 = arith.constant 9.99999974E-6 : f32
    %108 = vector.broadcast %cst_34 : f32 to vector<256x1xf32>
    %109 = arith.addf %105, %108 : vector<256x1xf32>
    %110 = math.rsqrt %109 : vector<256x1xf32>
    %111 = vector.broadcast %110 : vector<256x1xf32> to vector<256x128xf32>
    %112 = arith.mulf %107, %111 : vector<256x128xf32>
    %113 = vector.broadcast %4 : vector<1x128xf32> to vector<256x128xf32>
    %114 = arith.mulf %112, %113 : vector<256x128xf32>
    %115 = vector.broadcast %5 : vector<1x128xf32> to vector<256x128xf32>
    %116 = arith.addf %114, %115 : vector<256x128xf32>
    %cst_35 = arith.constant 0.000000e+00 : f32
    %117 = vector.broadcast %cst_35 : f32 to vector<256x128xf32>
    %118 = arith.maximumf %116, %117 : vector<256x128xf32>
    %c0_36 = arith.constant 0 : index
    %c0_37 = arith.constant 0 : index
    %119 = vector.load %arg4[%c0_36, %c0_37] : memref<128x384xf32, #tpu.memory_space<vmem>>, vector<128x384xf32>
    %cst_38 = arith.constant dense<0.000000e+00> : vector<256x384xf32>
    %120 = tpu.matmul %116, %119, %cst_38 {dimension_numbers = #tpu.dot_dimension_numbers<[1], [0], [0], [1], [0, 0, 1, 1], [], []>} : vector<256x128xf32>, vector<128x384xf32>, vector<256x384xf32> -> vector<256x384xf32>
    %121 = vector.extract_strided_slice %120 {offsets = [0, 0], sizes = [256, 128], strides = [1, 1]} : vector<256x384xf32> to vector<256x128xf32>
    %122 = vector.extract_strided_slice %120 {offsets = [0, 128], sizes = [256, 128], strides = [1, 1]} : vector<256x384xf32> to vector<256x128xf32>
    %123 = vector.extract_strided_slice %120 {offsets = [0, 256], sizes = [256, 128], strides = [1, 1]} : vector<256x384xf32> to vector<256x128xf32>
    %c3_i32 = arith.constant 3 : i32
    %124 = vector.broadcast %c3_i32 : i32 to vector<256x1xi32>
    %125 = arith.cmpi sge, %24, %124 : vector<256x1xi32>
    %c3_i32_39 = arith.constant 3 : i32
    %126 = tpu.dynamic_rotate %121 by %c3_i32_39 dim 0 : vector<256x128xf32>, i32 -> vector<256x128xf32>
    %cst_40 = arith.constant 0.000000e+00 : f32
    %127 = vector.shape_cast %125 : vector<256x1xi1> to vector<256x1xi1>
    %128 = vector.broadcast %127 : vector<256x1xi1> to vector<256x128xi1>
    %129 = vector.broadcast %cst_40 : f32 to vector<256x128xf32>
    %130 = arith.select %128, %126, %129 : vector<256x128xi1>, vector<256x128xf32>
    %c13_i32 = arith.constant 13 : i32
    %131 = vector.broadcast %c13_i32 : i32 to vector<256x1xi32>
    %132 = arith.cmpi slt, %24, %131 : vector<256x1xi32>
    %c253_i32 = arith.constant 253 : i32
    %133 = tpu.dynamic_rotate %123 by %c253_i32 dim 0 : vector<256x128xf32>, i32 -> vector<256x128xf32>
    %cst_41 = arith.constant 0.000000e+00 : f32
    %134 = vector.shape_cast %132 : vector<256x1xi1> to vector<256x1xi1>
    %135 = vector.broadcast %134 : vector<256x1xi1> to vector<256x128xi1>
    %136 = vector.broadcast %cst_41 : f32 to vector<256x128xf32>
    %137 = arith.select %135, %133, %136 : vector<256x128xi1>, vector<256x128xf32>
    %138 = arith.addf %130, %122 : vector<256x128xf32>
    %139 = arith.addf %138, %137 : vector<256x128xf32>
    %140 = vector.broadcast %3 : vector<1x128xf32> to vector<256x128xf32>
    %141 = arith.addf %139, %140 : vector<256x128xf32>
    %cst_42 = arith.constant dense<0.000000e+00> : vector<256xf32>
    %142 = vector.multi_reduction <add>, %141, %cst_42 [1] : vector<256x128xf32> to vector<256xf32>
    %143 = vector.shape_cast %142 : vector<256xf32> to vector<256x1xf32>
    %cst_43 = arith.constant 1.280000e+02 : f32
    %144 = vector.broadcast %cst_43 : f32 to vector<256x1xf32>
    %145 = arith.divf %143, %144 : vector<256x1xf32>
    %146 = vector.broadcast %145 : vector<256x1xf32> to vector<256x128xf32>
    %147 = arith.subf %141, %146 : vector<256x128xf32>
    %148 = arith.mulf %147, %147 : vector<256x128xf32>
    %cst_44 = arith.constant dense<0.000000e+00> : vector<256xf32>
    %149 = vector.multi_reduction <add>, %148, %cst_44 [1] : vector<256x128xf32> to vector<256xf32>
    %150 = vector.shape_cast %149 : vector<256xf32> to vector<256x1xf32>
    %cst_45 = arith.constant 1.280000e+02 : f32
    %151 = vector.broadcast %cst_45 : f32 to vector<256x1xf32>
    %152 = arith.divf %150, %151 : vector<256x1xf32>
    %153 = vector.broadcast %145 : vector<256x1xf32> to vector<256x128xf32>
    %154 = arith.subf %141, %153 : vector<256x128xf32>
    %cst_46 = arith.constant 9.99999974E-6 : f32
    %155 = vector.broadcast %cst_46 : f32 to vector<256x1xf32>
    %156 = arith.addf %152, %155 : vector<256x1xf32>
    %157 = math.rsqrt %156 : vector<256x1xf32>
    %158 = vector.broadcast %157 : vector<256x1xf32> to vector<256x128xf32>
    %159 = arith.mulf %154, %158 : vector<256x128xf32>
    %160 = vector.broadcast %4 : vector<1x128xf32> to vector<256x128xf32>
    %161 = arith.mulf %159, %160 : vector<256x128xf32>
    %162 = vector.broadcast %5 : vector<1x128xf32> to vector<256x128xf32>
    %163 = arith.addf %161, %162 : vector<256x128xf32>
    %cst_47 = arith.constant 0.000000e+00 : f32
    %164 = vector.broadcast %cst_47 : f32 to vector<256x128xf32>
    %165 = arith.maximumf %163, %164 : vector<256x128xf32>
    %166 = tpu.concatenate %71, %118, %165 in 1 : vector<256x128xf32>, vector<256x128xf32>, vector<256x128xf32> -> vector<256x384xf32>
    %c0_48 = arith.constant 0 : index
    %c0_49 = arith.constant 0 : index
    %167 = vector.load %arg6[%c0_48, %c0_49] : memref<256x384xf32, #tpu.memory_space<vmem>>, vector<256x384xf32>
    tpu.vector_store %arg6[%c0_48, %c0_49], %166 {strides = array<i32>} : memref<256x384xf32, #tpu.memory_space<vmem>>, vector<256x384xf32>,
    %168 = vector.broadcast %6 : vector<1x128xf32> to vector<256x128xf32>
    %169 = arith.mulf %71, %168 : vector<256x128xf32>
    %cst_50 = arith.constant dense<0.000000e+00> : vector<256xf32>
    %170 = vector.multi_reduction <add>, %169, %cst_50 [1] : vector<256x128xf32> to vector<256xf32>
    %171 = vector.shape_cast %170 : vector<256xf32> to vector<256x1xf32>
    %cst_51 = arith.constant 0.0883883461 : f32
    %172 = vector.broadcast %cst_51 : f32 to vector<256x1xf32>
    %173 = arith.mulf %171, %172 : vector<256x1xf32>
    %174 = vector.broadcast %6 : vector<1x128xf32> to vector<256x128xf32>
    %175 = arith.mulf %118, %174 : vector<256x128xf32>
    %cst_52 = arith.constant dense<0.000000e+00> : vector<256xf32>
    %176 = vector.multi_reduction <add>, %175, %cst_52 [1] : vector<256x128xf32> to vector<256xf32>
    %177 = vector.shape_cast %176 : vector<256xf32> to vector<256x1xf32>
    %cst_53 = arith.constant 0.0883883461 : f32
    %178 = vector.broadcast %cst_53 : f32 to vector<256x1xf32>
    %179 = arith.mulf %177, %178 : vector<256x1xf32>
    %180 = vector.broadcast %6 : vector<1x128xf32> to vector<256x128xf32>
    %181 = arith.mulf %165, %180 : vector<256x128xf32>
    %cst_54 = arith.constant dense<0.000000e+00> : vector<256xf32>
    %182 = vector.multi_reduction <add>, %181, %cst_54 [1] : vector<256x128xf32> to vector<256xf32>
    %183 = vector.shape_cast %182 : vector<256xf32> to vector<256x1xf32>
    %cst_55 = arith.constant 0.0883883461 : f32
    %184 = vector.broadcast %cst_55 : f32 to vector<256x1xf32>
    %185 = arith.mulf %183, %184 : vector<256x1xf32>
    %186 = arith.maximumf %173, %179 : vector<256x1xf32>
    %187 = arith.maximumf %186, %185 : vector<256x1xf32>
    %188 = arith.subf %173, %187 : vector<256x1xf32>
    %189 = math.exp %188 : vector<256x1xf32>
    %190 = arith.subf %179, %187 : vector<256x1xf32>
    %191 = math.exp %190 : vector<256x1xf32>
    %192 = arith.subf %185, %187 : vector<256x1xf32>
    %193 = math.exp %192 : vector<256x1xf32>
    %194 = arith.addf %189, %191 : vector<256x1xf32>
    %195 = arith.addf %194, %193 : vector<256x1xf32>
    %196 = tpu.reciprocal %195 {approx = true} : vector<256x1xf32> -> vector<256x1xf32>
    %197 = vector.broadcast %189 : vector<256x1xf32> to vector<256x128xf32>
    %198 = arith.mulf %197, %71 : vector<256x128xf32>
    %199 = vector.broadcast %191 : vector<256x1xf32> to vector<256x128xf32>
    %200 = arith.mulf %199, %118 : vector<256x128xf32>
    %201 = arith.addf %198, %200 : vector<256x128xf32>
    %202 = vector.broadcast %193 : vector<256x1xf32> to vector<256x128xf32>
    %203 = arith.mulf %202, %165 : vector<256x128xf32>
    %204 = arith.addf %201, %203 : vector<256x128xf32>
    %205 = vector.broadcast %196 : vector<256x1xf32> to vector<256x128xf32>
    %206 = arith.mulf %204, %205 : vector<256x128xf32>
    %207 = vector.shape_cast %206 : vector<256x128xf32> to vector<16x16x128xf32>
    %208 = vector.shape_cast %7 : vector<1x128xf32> to vector<1x1x128xf32>
    %209 = vector.broadcast %208 : vector<1x1x128xf32> to vector<16x16x128xf32>
    %210 = arith.mulf %207, %209 : vector<16x16x128xf32>
    %cst_56 = arith.constant dense<0.000000e+00> : vector<16x16xf32>
    %211 = vector.multi_reduction <add>, %210, %cst_56 [2] : vector<16x16x128xf32> to vector<16x16xf32>
    %212 = vector.shape_cast %211 : vector<16x16xf32> to vector<16x16x1xf32>
    %cst_57 = arith.constant 0.0883883461 : f32
    %213 = vector.broadcast %cst_57 : f32 to vector<16x16x1xf32>
    %214 = arith.mulf %212, %213 : vector<16x16x1xf32>
    %cst_58 = arith.constant dense<0xFF800000> : vector<16x1xf32>
    %215 = vector.multi_reduction <maximumf>, %214, %cst_58 [1] : vector<16x16x1xf32> to vector<16x1xf32>
    %216 = vector.shape_cast %215 : vector<16x1xf32> to vector<16x1x1xf32>
    %217 = vector.broadcast %216 : vector<16x1x1xf32> to vector<16x16x1xf32>
    %218 = arith.subf %214, %217 : vector<16x16x1xf32>
    %219 = math.exp %218 : vector<16x16x1xf32>
    %cst_59 = arith.constant dense<0.000000e+00> : vector<16x1xf32>
    %220 = vector.multi_reduction <add>, %219, %cst_59 [1] : vector<16x16x1xf32> to vector<16x1xf32>
    %221 = tpu.reciprocal %220 {approx = true} : vector<16x1xf32> -> vector<16x1xf32>
    %222 = vector.broadcast %219 : vector<16x16x1xf32> to vector<16x16x128xf32>
    %223 = arith.mulf %222, %207 : vector<16x16x128xf32>
    %cst_60 = arith.constant dense<0.000000e+00> : vector<16x128xf32>
    %224 = vector.multi_reduction <add>, %223, %cst_60 [1] : vector<16x16x128xf32> to vector<16x128xf32>
    %225 = vector.broadcast %221 : vector<16x1xf32> to vector<16x128xf32>
    %226 = arith.mulf %224, %225 : vector<16x128xf32>
    %c0_61 = arith.constant 0 : index
    %c0_62 = arith.constant 0 : index
    %227 = vector.load %arg7[%c0_61, %c0_62] : memref<16x128xf32, #tpu.memory_space<vmem>>, vector<16x128xf32>
    tpu.vector_store %arg7[%c0_61, %c0_62], %226 {strides = array<i32>} : memref<16x128xf32, #tpu.memory_space<vmem>>, vector<16x128xf32>,
    return
  }
  func.func @transform_0(%arg0: i32) -> (i32, i32) {
    %c0_i32 = arith.constant 0 : i32
    %c0_i32_0 = arith.constant 0 : i32
    return %arg0, %c0_i32 : i32, i32
  }
  func.func @transform_1(%arg0: i32) -> (i32, i32) {
    %c0_i32 = arith.constant 0 : i32
    %c0_i32_0 = arith.constant 0 : i32
    %c0_i32_1 = arith.constant 0 : i32
    return %c0_i32, %c0_i32_0 : i32, i32
  }
  func.func @transform_2(%arg0: i32) -> (i32, i32) {
    %c0_i32 = arith.constant 0 : i32
    %c0_i32_0 = arith.constant 0 : i32
    %c0_i32_1 = arith.constant 0 : i32
    return %c0_i32, %c0_i32_0 : i32, i32
  }
  func.func @transform_3(%arg0: i32) -> (i32, i32) {
    %c0_i32 = arith.constant 0 : i32
    %c0_i32_0 = arith.constant 0 : i32
    %c0_i32_1 = arith.constant 0 : i32
    return %c0_i32, %c0_i32_0 : i32, i32
  }
  func.func @transform_4(%arg0: i32) -> (i32, i32) {
    %c0_i32 = arith.constant 0 : i32
    %c0_i32_0 = arith.constant 0 : i32
    %c0_i32_1 = arith.constant 0 : i32
    return %c0_i32, %c0_i32_0 : i32, i32
  }
  func.func @transform_5(%arg0: i32) -> (i32, i32) {
    %c0_i32 = arith.constant 0 : i32
    %c0_i32_0 = arith.constant 0 : i32
    return %arg0, %c0_i32 : i32, i32
  }
  func.func @transform_6(%arg0: i32) -> (i32, i32) {
    %c0_i32 = arith.constant 0 : i32
    %c0_i32_0 = arith.constant 0 : i32
    return %arg0, %c0_i32 : i32, i32
  }
}

</mosaic_0001>

<llo_original>
// kernel: tpu_custom_call.1
$region0: #{tpu_custom_call.1}
  #allocation0 [shape = 'u32[]', space=smem, size = 0x4, offset = 0x4, fixed_abs, tag = 'smem constant byte address 0x4 - core index']
  #allocation1 [shape = 'u32[144,128]{1,0:T(1,128)}', space=vmem, size = 0x12000, scoped, tag = 'internal scratch']
  %s0 = inlined_call_operand.hbm [shape: f32[768,128], index: 0, kind: input, shape index: {}]
  %s1 = inlined_call_operand.hbm [shape: f32[128,384], index: 1, kind: input, shape index: {}]
  %s2 = inlined_call_operand.hbm [shape: f32[128,384], index: 2, kind: input, shape index: {}]
  %s3 = inlined_call_operand.hbm [shape: f32[128,384], index: 3, kind: input, shape index: {}]
  %s4 = inlined_call_operand.hbm [shape: f32[7,128], index: 4, kind: input, shape index: {}]
  %s5 = inlined_call_operand.hbm [shape: f32[768,384], index: 5, kind: output, shape index: {0}]
  %s6 = inlined_call_operand.hbm [shape: f32[48,128], index: 6, kind: output, shape index: {1}]
  %7 = xla_tuple %s5, %s6
  %s8 = sld [smem:[#allocation0]]
  $region81: #{tpu_custom_call.1} parent=0
    _
  %s10 = ssub.s32 1, %s8
  %s11 = scalar_select 0, %s10, %s8
  $region1: #{tpu_custom_call.1} parent=0
    #allocation2 [shape = 'u8[262144]{0}', space=vmem, size = 0x40000, scoped, tag = 'input window, operand 0']
    #allocation3 [shape = 's32[2]{0}', space=sflag, size = 0x8, scoped, tag = 'scoped memory for tpu_custom_call.1']
    #allocation4 [shape = 's32[2]{0}', space=sflag, size = 0x8, scoped, tag = 'scoped memory for tpu_custom_call.1']
    #allocation5 [shape = 'u8[196608]{0}', space=vmem, size = 0x30000, scoped, tag = 'input window, operand 1, single buffered']
    #allocation6 [shape = 's32[1]{0}', space=sflag, size = 0x4, scoped, tag = 'scoped memory for tpu_custom_call.1']
    #allocation7 [shape = 'u8[196608]{0}', space=vmem, size = 0x30000, scoped, tag = 'input window, operand 2, single buffered']
    #allocation8 [shape = 'u8[196608]{0}', space=vmem, size = 0x30000, scoped, tag = 'input window, operand 3, single buffered']
    #allocation9 [shape = 's32[1]{0}', space=sflag, size = 0x4, scoped, tag = 'scoped memory for tpu_custom_call.1']
    #allocation10 [shape = 'u8[4096]{0}', space=vmem, size = 0x1000, scoped, tag = 'input window, operand 4, single buffered']
    #allocation11 [shape = 'u8[786432]{0}', space=vmem, size = 0xc0000, scoped, tag = 'output window, operand 0']
    #allocation12 [shape = 'u8[16384]{0}', space=vmem, size = 0x4000, scoped, tag = 'output window, operand 1']
    #allocation13 [shape = 's32[2]{0}', space=sflag, size = 0x8, scoped, tag = 'scoped memory for tpu_custom_call.1']
    %12 = vsyncpa [#allocation3], 0
    %s13 = scalar_lea.sflag [#allocation3], 1
    %14 = vsyncpa %s13, 0
    %15 = vsyncpa [#allocation6], 0
    %16 = vsyncpa [#allocation9], 0
    %17 = vsyncpa [#allocation4], 0
    %s18 = scalar_lea.sflag [#allocation4], 1
    %19 = vsyncpa %s18, 0
    %20 = vsyncpa [#allocation13], 0
    %s21 = scalar_lea.sflag [#allocation13], 1
    %22 = vsyncpa %s21, 0
    loop: start=0, step=1, limit=5
    $region2: #{tpu_custom_call.1} parent=1 // loop_pre_header
      _
    $region3: #{tpu_custom_call.1} parent=1 // loop_header
      %s24 = sphi 0, %s28
      %p25 = scmp.ge.s32.totalorder %s24, 5
      %s34 = sphi 0, %s36
      %s37 = sphi 0, %s34
      %s38 = sphi 0, %s37
      %s54 = sphi 0, %s38
      %s58 = sphi 0, %s58
      %s60 = sphi 0, %s58
      %s61 = sphi 0, %s60
      %s75 = sphi 0, %s61
      %s79 = sphi 0, %s79
      %s81 = sphi 0, %s79
      %s82 = sphi 0, %s81
      %s96 = sphi 0, %s82
      %s100 = sphi 0, %s100
      %s102 = sphi 0, %s100
      %s103 = sphi 0, %s102
      %s117 = sphi 0, %s103
      %s121 = sphi 0, %s121
      %s123 = sphi 0, %s121
      %s124 = sphi 0, %s123
      %s138 = sphi 0, %s124
      %s144 = sphi 0, %s146
      %s147 = sphi 0, %s144
      %s148 = sphi 0, %s147
      %s164 = sphi 0, %s148
      %s170 = sphi 0, %s172
      %s173 = sphi 0, %s170
      %s174 = sphi 0, %s173
      %s190 = sphi 0, %s174
    $region4: #{tpu_custom_call.1} parent=1 // loop_header_branch
      %27 = sbr.rel (%p25) target = $region8
    $region5: #{tpu_custom_call.1} parent=1 // loop_body
      %s29 = ssub.s32 %s24, 1
      %s30 = ssub.s32 %s24, 2
      %s31 = sadd.s32 %s24, 1
      %s32 = ssub.s32 %s24, %s31
      %p33 = scmp.eq.s32.totalorder %s32, 0
      %s35 = sadd.s32 %s34, 1
      %s36 = scalar_select %p33, %s34, %s35
      %p39 = pneg %p33
      %p40 = scmp.eq.s32.totalorder %s24, 2
      %p41 = por %p39, %p40
      %p42 = scmp.ne.s32.totalorder %s34, %s37
      %p43 = scmp.eq.s32.totalorder %s24, 0
      %p44 = por %p42, %p43
      %p45 = scmp.ne.s32.totalorder %s34, %s37
      %p46 = scmp.eq.s32.totalorder %s29, 2
      %p47 = por %p45, %p46
      %p48 = scmp.ne.s32.totalorder %s37, %s38
      %p49 = scmp.eq.s32.totalorder %s29, 0
      %p50 = por %p48, %p49
      %p51 = scmp.ne.s32.totalorder %s37, %s38
      %p52 = scmp.eq.s32.totalorder %s30, 2
      %p53 = por %p51, %p52
      %p55 = scmp.ne.s32.totalorder %s38, %s54
      %p56 = scmp.eq.s32.totalorder %s30, 0
      %p57 = por %p55, %p56
      %s59 = sadd.s32 %s58, 1
      %p62 = scmp.eq.s32.totalorder %s24, 2
      %p63 = scmp.ne.s32.totalorder %s58, %s60
      %p64 = scmp.eq.s32.totalorder %s24, 0
      %p65 = por %p63, %p64
      %p66 = scmp.ne.s32.totalorder %s58, %s60
      %p67 = scmp.eq.s32.totalorder %s29, 2
      %p68 = por %p66, %p67
      %p69 = scmp.ne.s32.totalorder %s60, %s61
      %p70 = scmp.eq.s32.totalorder %s29, 0
      %p71 = por %p69, %p70
      %p72 = scmp.ne.s32.totalorder %s60, %s61
      %p73 = scmp.eq.s32.totalorder %s30, 2
      %p74 = por %p72, %p73
      %p76 = scmp.ne.s32.totalorder %s61, %s75
      %p77 = scmp.eq.s32.totalorder %s30, 0
      %p78 = por %p76, %p77
      %s80 = sadd.s32 %s79, 1
      %p83 = scmp.eq.s32.totalorder %s24, 2
      %p84 = scmp.ne.s32.totalorder %s79, %s81
      %p85 = scmp.eq.s32.totalorder %s24, 0
      %p86 = por %p84, %p85
      %p87 = scmp.ne.s32.totalorder %s79, %s81
      %p88 = scmp.eq.s32.totalorder %s29, 2
      %p89 = por %p87, %p88
      %p90 = scmp.ne.s32.totalorder %s81, %s82
      %p91 = scmp.eq.s32.totalorder %s29, 0
      %p92 = por %p90, %p91
      %p93 = scmp.ne.s32.totalorder %s81, %s82
      %p94 = scmp.eq.s32.totalorder %s30, 2
      %p95 = por %p93, %p94
      %p97 = scmp.ne.s32.totalorder %s82, %s96
      %p98 = scmp.eq.s32.totalorder %s30, 0
      %p99 = por %p97, %p98
      %s101 = sadd.s32 %s100, 1
      %p104 = scmp.eq.s32.totalorder %s24, 2
      %p105 = scmp.ne.s32.totalorder %s100, %s102
      %p106 = scmp.eq.s32.totalorder %s24, 0
      %p107 = por %p105, %p106
      %p108 = scmp.ne.s32.totalorder %s100, %s102
      %p109 = scmp.eq.s32.totalorder %s29, 2
      %p110 = por %p108, %p109
      %p111 = scmp.ne.s32.totalorder %s102, %s103
      %p112 = scmp.eq.s32.totalorder %s29, 0
      %p113 = por %p111, %p112
      %p114 = scmp.ne.s32.totalorder %s102, %s103
      %p115 = scmp.eq.s32.totalorder %s30, 2
      %p116 = por %p114, %p115
      %p118 = scmp.ne.s32.totalorder %s103, %s117
      %p119 = scmp.eq.s32.totalorder %s30, 0
      %p120 = por %p118, %p119
      %s122 = sadd.s32 %s121, 1
      %p125 = scmp.eq.s32.totalorder %s24, 2
      %p126 = scmp.ne.s32.totalorder %s121, %s123
      %p127 = scmp.eq.s32.totalorder %s24, 0
      %p128 = por %p126, %p127
      %p129 = scmp.ne.s32.totalorder %s121, %s123
      %p130 = scmp.eq.s32.totalorder %s29, 2
      %p131 = por %p129, %p130
      %p132 = scmp.ne.s32.totalorder %s123, %s124
      %p133 = scmp.eq.s32.totalorder %s29, 0
      %p134 = por %p132, %p133
      %p135 = scmp.ne.s32.totalorder %s123, %s124
      %p136 = scmp.eq.s32.totalorder %s30, 2
      %p137 = por %p135, %p136
      %p139 = scmp.ne.s32.totalorder %s124, %s138
      %p140 = scmp.eq.s32.totalorder %s30, 0
      %p141 = por %p139, %p140
      %s142 = ssub.s32 %s24, %s31
      %p143 = scmp.eq.s32.totalorder %s142, 0
      %s145 = sadd.s32 %s144, 1
      %s146 = scalar_select %p143, %s144, %s145
      %p149 = pneg %p143
      %p150 = scmp.eq.s32.totalorder %s24, 2
      %p151 = por %p149, %p150
      %p152 = scmp.ne.s32.totalorder %s144, %s147
      %p153 = scmp.eq.s32.totalorder %s24, 0
      %p154 = por %p152, %p153
      %p155 = scmp.ne.s32.totalorder %s144, %s147
      %p156 = scmp.eq.s32.totalorder %s29, 2
      %p157 = por %p155, %p156
      %p158 = scmp.ne.s32.totalorder %s147, %s148
      %p159 = scmp.eq.s32.totalorder %s29, 0
      %p160 = por %p158, %p159
      %p161 = scmp.ne.s32.totalorder %s147, %s148
      %p162 = scmp.eq.s32.totalorder %s30, 2
      %p163 = por %p161, %p162
      %p165 = scmp.ne.s32.totalorder %s148, %s164
      %p166 = scmp.eq.s32.totalorder %s30, 0
      %p167 = por %p165, %p166
      %s168 = ssub.s32 %s24, %s31
      %p169 = scmp.eq.s32.totalorder %s168, 0
      %s171 = sadd.s32 %s170, 1
      %s172 = scalar_select %p169, %s170, %s171
      %p175 = pneg %p169
      %p176 = scmp.eq.s32.totalorder %s24, 2
      %p177 = por %p175, %p176
      %p178 = scmp.ne.s32.totalorder %s170, %s173
      %p179 = scmp.eq.s32.totalorder %s24, 0
      %p180 = por %p178, %p179
      %p181 = scmp.ne.s32.totalorder %s170, %s173
      %p182 = scmp.eq.s32.totalorder %s29, 2
      %p183 = por %p181, %p182
      %p184 = scmp.ne.s32.totalorder %s173, %s174
      %p185 = scmp.eq.s32.totalorder %s29, 0
      %p186 = por %p184, %p185
      %p187 = scmp.ne.s32.totalorder %s173, %s174
      %p188 = scmp.eq.s32.totalorder %s30, 2
      %p189 = por %p187, %p188
      %p191 = scmp.ne.s32.totalorder %s174, %s190
      %p192 = scmp.eq.s32.totalorder %s30, 0
      %p193 = por %p191, %p192
      %p194 = scmp.le.s32.totalorder 1, %s24
      %p195 = scmp.lt.s32.totalorder %s24, 4
      %p196 = pnand %p194, %p195
      %p197 = pneg %p196
      // Predicated region
      $region9: #{tpu_custom_call.1} parent=5 // pred_check
        _
      $region10: #{tpu_custom_call.1} parent=5 // pred_check_branch
        %199 = sbr.rel (%p196) target = $region12
      $region11: #{tpu_custom_call.1} parent=5 // pred_region
        %s200 = ssub.s32 %s24, 1
        // Predicated region
        $region13: #{tpu_custom_call.1} parent=11 // pred_check
          %p201 = pneg %p71
        $region14: #{tpu_custom_call.1} parent=11 // pred_check_branch
          %203 = sbr.rel (%p201) target = $region16
        $region15: #{tpu_custom_call.1} parent=11 // pred_region
          %s205 = ssub.s32 6144, 6144
          %206 = vsyncadd [#allocation6], %s205
          %s207 = sshll.u32 [#allocation5], 4
          %s208 = int_to_ptr.vmem [resolvable:$true] %s207
          %213 = dma.hbm_to_vmem [thread:$0]  %s1, 6144, %s208, [#allocation6], 384, 384, 24
        $region16: #{tpu_custom_call.1} parent=11 // pred_fallthru
          _
        // Predicated region
        $region17: #{tpu_custom_call.1} parent=11 // pred_check
          %p214 = pneg %p92
        $region18: #{tpu_custom_call.1} parent=11 // pred_check_branch
          %216 = sbr.rel (%p214) target = $region20
        $region19: #{tpu_custom_call.1} parent=11 // pred_region
          %s218 = ssub.s32 6144, 6144
          %219 = vsyncadd [#allocation6], %s218
          %s220 = sshll.u32 [#allocation7], 4
          %s221 = int_to_ptr.vmem [resolvable:$true] %s220
          %226 = dma.hbm_to_vmem [thread:$0]  %s2, 6144, %s221, [#allocation6], 384, 384, 24
        $region20: #{tpu_custom_call.1} parent=11 // pred_fallthru
          _
        // Predicated region
        $region21: #{tpu_custom_call.1} parent=11 // pred_check
          %p227 = pneg %p113
        $region22: #{tpu_custom_call.1} parent=11 // pred_check_branch
          %229 = sbr.rel (%p227) target = $region24
        $region23: #{tpu_custom_call.1} parent=11 // pred_region
          %s231 = ssub.s32 6144, 6144
          %232 = vsyncadd [#allocation9], %s231
          %s233 = sshll.u32 [#allocation8], 4
          %s234 = int_to_ptr.vmem [resolvable:$true] %s233
          %239 = dma.hbm_to_vmem [thread:$0]  %s3, 6144, %s234, [#allocation9], 384, 384, 24
        $region24: #{tpu_custom_call.1} parent=11 // pred_fallthru
          _
        // Predicated region
        $region25: #{tpu_custom_call.1} parent=11 // pred_check
          %p240 = pneg %p134
        $region26: #{tpu_custom_call.1} parent=11 // pred_check_branch
          %242 = sbr.rel (%p240) target = $region28
        $region27: #{tpu_custom_call.1} parent=11 // pred_region
          %s244 = ssub.s32 128, 128
          %245 = vsyncadd [#allocation9], %s244
          %s247 = sshll.u32 [#allocation10], 4
          %s248 = int_to_ptr.vmem [resolvable:$true] %s247
          %250 = dma.hbm_to_vmem [thread:$0]  %s4, 128, %s248, [#allocation9]
        $region28: #{tpu_custom_call.1} parent=11 // pred_fallthru
          _
      $region12: #{tpu_custom_call.1} parent=5 // pred_fallthru
        _
      %p251 = scmp.lt.s32.totalorder %s24, 3
      // Predicated region
      $region29: #{tpu_custom_call.1} parent=5 // pred_check
        %p252 = pneg %p251
      $region30: #{tpu_custom_call.1} parent=5 // pred_check_branch
        %254 = sbr.rel (%p252) target = $region32
      $region31: #{tpu_custom_call.1} parent=5 // pred_region
        // Predicated region
        $region33: #{tpu_custom_call.1} parent=31 // pred_check
          %p255 = pneg %p44
        $region34: #{tpu_custom_call.1} parent=31 // pred_check_branch
          %257 = sbr.rel (%p255) target = $region36
        $region35: #{tpu_custom_call.1} parent=31 // pred_region
          %s258 = sand.u32 %s34, 1
          %s259 = scalar_lea.sflag [#allocation3], %s258
          %s260 = sand.u32 %s34, 1
          %s261 = smul.addr %s260, 256
          %s262 = scalar_lea.vmem [#allocation2], %s261
          %s263 = smul.u32 32, %s24
          %s265 = ssub.s32 4096, 4096
          %266 = vsyncadd %s259, %s265
          %s267 = smul.addr %s263, 128
          %s268 = scalar_lea.hbm %s0, %s267
          %s269 = sshll.u32 %s262, 4
          %s270 = int_to_ptr.vmem [resolvable:$true] %s269
          %275 = dma.hbm_to_vmem [thread:$0]  %s268, 4096, %s270, %s259, 128, 128, 8
        $region36: #{tpu_custom_call.1} parent=31 // pred_fallthru
          _
      $region32: #{tpu_custom_call.1} parent=5 // pred_fallthru
        _
      %p276 = scmp.le.s32.totalorder 1, %s24
      %p277 = scmp.lt.s32.totalorder %s24, 4
      %p278 = pnand %p276, %p277
      %p279 = pneg %p278
      // Predicated region
      $region37: #{tpu_custom_call.1} parent=5 // pred_check
        _
      $region38: #{tpu_custom_call.1} parent=5 // pred_check_branch
        %281 = sbr.rel (%p278) target = $region40
      $region39: #{tpu_custom_call.1} parent=5 // pred_region
        %s282 = ssub.s32 %s24, 1
        %s283 = sand.u32 %s37, 1
        %s284 = scalar_lea.sflag [#allocation3], %s283
        %s285 = sand.u32 %s37, 1
        %s286 = smul.addr %s285, 256
        %s287 = scalar_lea.vmem [#allocation2], %s286
        // Predicated region
        $region41: #{tpu_custom_call.1} parent=39 // pred_check
          %p288 = pneg %p50
        $region42: #{tpu_custom_call.1} parent=39 // pred_check_branch
          %290 = sbr.rel (%p288) target = $region44
        $region43: #{tpu_custom_call.1} parent=39 // pred_region
          %291 = dma.done %s284, 4096
        $region44: #{tpu_custom_call.1} parent=39 // pred_fallthru
          _
        // Predicated region
        $region45: #{tpu_custom_call.1} parent=39 // pred_check
          %p292 = pneg %p71
        $region46: #{tpu_custom_call.1} parent=39 // pred_check_branch
          %294 = sbr.rel (%p292) target = $region48
        $region47: #{tpu_custom_call.1} parent=39 // pred_region
          %295 = dma.done [#allocation6], 6144
        $region48: #{tpu_custom_call.1} parent=39 // pred_fallthru
          _
        // Predicated region
        $region49: #{tpu_custom_call.1} parent=39 // pred_check
          %p296 = pneg %p92
        $region50: #{tpu_custom_call.1} parent=39 // pred_check_branch
          %298 = sbr.rel (%p296) target = $region52
        $region51: #{tpu_custom_call.1} parent=39 // pred_region
          %299 = dma.done [#allocation6], 6144
        $region52: #{tpu_custom_call.1} parent=39 // pred_fallthru
          _
        // Predicated region
        $region53: #{tpu_custom_call.1} parent=39 // pred_check
          %p300 = pneg %p113
        $region54: #{tpu_custom_call.1} parent=39 // pred_check_branch
          %302 = sbr.rel (%p300) target = $region56
        $region55: #{tpu_custom_call.1} parent=39 // pred_region
          %303 = dma.done [#allocation9], 6144
        $region56: #{tpu_custom_call.1} parent=39 // pred_fallthru
          _
        // Predicated region
        $region57: #{tpu_custom_call.1} parent=39 // pred_check
          %p304 = pneg %p134
        $region58: #{tpu_custom_call.1} parent=39 // pred_check_branch
          %306 = sbr.rel (%p304) target = $region60
        $region59: #{tpu_custom_call.1} parent=39 // pred_region
          %307 = dma.done [#allocation9], 128
        $region60: #{tpu_custom_call.1} parent=39 // pred_fallthru
          _
        %s308 = sand.u32 %s37, 1
        %s309 = scalar_lea.sflag [#allocation3], %s308
        %s310 = sand.u32 %s37, 1
        %s311 = smul.addr %s310, 256
        %s312 = scalar_lea.vmem [#allocation2], %s311
        %p313 = pneg %p50
        %p314 = pneg %p47
        %p315 = pneg %p71
        %p316 = pneg %p68
        %p317 = pneg %p92
        %p318 = pneg %p89
        %p319 = pneg %p113
        %p320 = pneg %p110
        %p321 = pneg %p134
        %p322 = pneg %p131
        %p323 = pneg %p160
        %p324 = pneg %p157
        %s325 = sand.u32 %s147, 1
        %s326 = scalar_lea.sflag [#allocation4], %s325
        %s327 = sand.u32 %s147, 1
        %s328 = smul.addr %s327, 768
        %s329 = scalar_lea.vmem [#allocation11], %s328
        %p330 = pneg %p186
        %p331 = pneg %p183
        %s332 = sand.u32 %s173, 1
        %s333 = scalar_lea.sflag [#allocation13], %s332
        %s334 = sand.u32 %s173, 1
        %s335 = smul.addr %s334, 16
        %s336 = scalar_lea.vmem [#allocation12], %s335
        %s337 = smul.u32 32, %s29
        %s338 = smul.u32 32, %s29
        %s339 = smul.u32 2, %s29
        %v340 = vld [vmem:[%s287] sm:$0xff]
        %v341 = vld [vmem:[%s287 + $0x8] sm:$0xff]
        %v342 = vld [vmem:[%s287 + $0x10] sm:$0xff]
        %v343 = vld [vmem:[%s287 + $0x18] sm:$0xff]
        %v344 = vld [vmem:[%s287 + $0x20] sm:$0xff]
        %v345 = vld [vmem:[%s287 + $0x28] sm:$0xff]
        %v346 = vld [vmem:[%s287 + $0x30] sm:$0xff]
        %v347 = vld [vmem:[%s287 + $0x38] sm:$0xff]
        %v348 = vld [vmem:[%s287 + $0x40] sm:$0xff]
        %v349 = vld [vmem:[%s287 + $0x48] sm:$0xff]
        %v350 = vld [vmem:[%s287 + $0x50] sm:$0xff]
        %v351 = vld [vmem:[%s287 + $0x58] sm:$0xff]
        %v352 = vld [vmem:[%s287 + $0x60] sm:$0xff]
        %v353 = vld [vmem:[%s287 + $0x68] sm:$0xff]
        %v354 = vld [vmem:[%s287 + $0x70] sm:$0xff]
        %v355 = vld [vmem:[%s287 + $0x78] sm:$0xff]
        %v356 = vld [vmem:[%s287 + $0x80] sm:$0xff]
        %v357 = vld [vmem:[%s287 + $0x88] sm:$0xff]
        %v358 = vld [vmem:[%s287 + $0x90] sm:$0xff]
        %v359 = vld [vmem:[%s287 + $0x98] sm:$0xff]
        %v360 = vld [vmem:[%s287 + $0xa0] sm:$0xff]
        %v361 = vld [vmem:[%s287 + $0xa8] sm:$0xff]
        %v362 = vld [vmem:[%s287 + $0xb0] sm:$0xff]
        %v363 = vld [vmem:[%s287 + $0xb8] sm:$0xff]
        %v364 = vld [vmem:[%s287 + $0xc0] sm:$0xff]
        %v365 = vld [vmem:[%s287 + $0xc8] sm:$0xff]
        %v366 = vld [vmem:[%s287 + $0xd0] sm:$0xff]
        %v367 = vld [vmem:[%s287 + $0xd8] sm:$0xff]
        %v368 = vld [vmem:[%s287 + $0xe0] sm:$0xff]
        %v369 = vld [vmem:[%s287 + $0xe8] sm:$0xff]
        %v370 = vld [vmem:[%s287 + $0xf0] sm:$0xff]
        %v371 = vld [vmem:[%s287 + $0xf8] sm:$0xff]
        %v372 = vld [vmem:[#allocation10] sm:$0x1]
        %v373 = vld [vmem:[#allocation10 + $0x1] sm:$0x1]
        %v374 = vld [vmem:[#allocation10 + $0x2] sm:$0x1]
        %v375 = vld [vmem:[#allocation10 + $0x3] sm:$0x1]
        %v376 = vld [vmem:[#allocation10 + $0x4] sm:$0x1]
        %v377 = vld [vmem:[#allocation10 + $0x5] sm:$0x1]
        %v378 = vld [vmem:[#allocation10 + $0x6] sm:$0x1]
        %v379 = vlaneseq
        %v380 = vshrl.u32 %v379, 7
        %v381 = vadd.s32 %v380, 8
        %v382 = vadd.s32 %v380, 16
        %v383 = vadd.s32 %v380, 24
        %v384 = vadd.s32 %v380, 32
        %v385 = vadd.s32 %v380, 40
        %v386 = vadd.s32 %v380, 48
        %v387 = vadd.s32 %v380, 56
        %v388 = vadd.s32 %v380, 64
        %v389 = vadd.s32 %v380, 72
        %v390 = vadd.s32 %v380, 80
        %v391 = vadd.s32 %v380, 88
        %v392 = vadd.s32 %v380, 96
        %v393 = vadd.s32 %v380, 104
        %v394 = vadd.s32 %v380, 112
        %v395 = vadd.s32 %v380, 120
        %v396 = vadd.s32 %v380, 128
        %v397 = vadd.s32 %v380, 136
        %v398 = vadd.s32 %v380, 144
        %v399 = vadd.s32 %v380, 152
        %v400 = vadd.s32 %v380, 160
        %v401 = vadd.s32 %v380, 168
        %v402 = vadd.s32 %v380, 176
        %v403 = vadd.s32 %v380, 184
        %v404 = vadd.s32 %v380, 192
        %v405 = vadd.s32 %v380, 200
        %v406 = vadd.s32 %v380, 208
        %v407 = vadd.s32 %v380, 216
        %v408 = vadd.s32 %v380, 224
        %v409 = vadd.s32 %v380, 232
        %v410 = vadd.s32 %v380, 240
        %v411 = vadd.s32 %v380, 248
        %vm412 = vcmp.lt.s32.totalorder %v380, 0
        %v413 = vsub.s32 0, %v380
        %v414 = vsel %vm412, %v413, %v380
        %v415 = vshrl.u32 %v414, 4
        %v416 = vand.u32 %v414, 15
        %v417 = vsub.s32 0, %v416
        %v418 = vsel %vm412, %v417, %v416
        %vm419 = vcmp.lt.s32.totalorder %v381, 0
        %v420 = vsub.s32 0, %v381
        %v421 = vsel %vm419, %v420, %v381
        %v422 = vshrl.u32 %v421, 4
        %v423 = vand.u32 %v421, 15
        %v424 = vsub.s32 0, %v423
        %v425 = vsel %vm419, %v424, %v423
        %vm426 = vcmp.lt.s32.totalorder %v382, 0
        %v427 = vsub.s32 0, %v382
        %v428 = vsel %vm426, %v427, %v382
        %v429 = vshrl.u32 %v428, 4
        %v430 = vand.u32 %v428, 15
        %v431 = vsub.s32 0, %v430
        %v432 = vsel %vm426, %v431, %v430
        %vm433 = vcmp.lt.s32.totalorder %v383, 0
        %v434 = vsub.s32 0, %v383
        %v435 = vsel %vm433, %v434, %v383
        %v436 = vshrl.u32 %v435, 4
        %v437 = vand.u32 %v435, 15
        %v438 = vsub.s32 0, %v437
        %v439 = vsel %vm433, %v438, %v437
        %vm440 = vcmp.lt.s32.totalorder %v384, 0
        %v441 = vsub.s32 0, %v384
        %v442 = vsel %vm440, %v441, %v384
        %v443 = vshrl.u32 %v442, 4
        %v444 = vand.u32 %v442, 15
        %v445 = vsub.s32 0, %v444
        %v446 = vsel %vm440, %v445, %v444
        %vm447 = vcmp.lt.s32.totalorder %v385, 0
        %v448 = vsub.s32 0, %v385
        %v449 = vsel %vm447, %v448, %v385
        %v450 = vshrl.u32 %v449, 4
        %v451 = vand.u32 %v449, 15
        %v452 = vsub.s32 0, %v451
        %v453 = vsel %vm447, %v452, %v451
        %vm454 = vcmp.lt.s32.totalorder %v386, 0
        %v455 = vsub.s32 0, %v386
        %v456 = vsel %vm454, %v455, %v386
        %v457 = vshrl.u32 %v456, 4
        %v458 = vand.u32 %v456, 15
        %v459 = vsub.s32 0, %v458
        %v460 = vsel %vm454, %v459, %v458
        %vm461 = vcmp.lt.s32.totalorder %v387, 0
        %v462 = vsub.s32 0, %v387
        %v463 = vsel %vm461, %v462, %v387
        %v464 = vshrl.u32 %v463, 4
        %v465 = vand.u32 %v463, 15
        %v466 = vsub.s32 0, %v465
        %v467 = vsel %vm461, %v466, %v465
        %vm468 = vcmp.lt.s32.totalorder %v388, 0
        %v469 = vsub.s32 0, %v388
        %v470 = vsel %vm468, %v469, %v388
        %v471 = vshrl.u32 %v470, 4
        %v472 = vand.u32 %v470, 15
        %v473 = vsub.s32 0, %v472
        %v474 = vsel %vm468, %v473, %v472
        %vm475 = vcmp.lt.s32.totalorder %v389, 0
        %v476 = vsub.s32 0, %v389
        %v477 = vsel %vm475, %v476, %v389
        %v478 = vshrl.u32 %v477, 4
        %v479 = vand.u32 %v477, 15
        %v480 = vsub.s32 0, %v479
        %v481 = vsel %vm475, %v480, %v479
        %vm482 = vcmp.lt.s32.totalorder %v390, 0
        %v483 = vsub.s32 0, %v390
        %v484 = vsel %vm482, %v483, %v390
        %v485 = vshrl.u32 %v484, 4
        %v486 = vand.u32 %v484, 15
        %v487 = vsub.s32 0, %v486
        %v488 = vsel %vm482, %v487, %v486
        %vm489 = vcmp.lt.s32.totalorder %v391, 0
        %v490 = vsub.s32 0, %v391
        %v491 = vsel %vm489, %v490, %v391
        %v492 = vshrl.u32 %v491, 4
        %v493 = vand.u32 %v491, 15
        %v494 = vsub.s32 0, %v493
        %v495 = vsel %vm489, %v494, %v493
        %vm496 = vcmp.lt.s32.totalorder %v392, 0
        %v497 = vsub.s32 0, %v392
        %v498 = vsel %vm496, %v497, %v392
        %v499 = vshrl.u32 %v498, 4
        %v500 = vand.u32 %v498, 15
        %v501 = vsub.s32 0, %v500
        %v502 = vsel %vm496, %v501, %v500
        %vm503 = vcmp.lt.s32.totalorder %v393, 0
        %v504 = vsub.s32 0, %v393
        %v505 = vsel %vm503, %v504, %v393
        %v506 = vshrl.u32 %v505, 4
        %v507 = vand.u32 %v505, 15
        %v508 = vsub.s32 0, %v507
        %v509 = vsel %vm503, %v508, %v507
        %vm510 = vcmp.lt.s32.totalorder %v394, 0
        %v511 = vsub.s32 0, %v394
        %v512 = vsel %vm510, %v511, %v394
        %v513 = vshrl.u32 %v512, 4
        %v514 = vand.u32 %v512, 15
        %v515 = vsub.s32 0, %v514
        %v516 = vsel %vm510, %v515, %v514
        %vm517 = vcmp.lt.s32.totalorder %v395, 0
        %v518 = vsub.s32 0, %v395
        %v519 = vsel %vm517, %v518, %v395
        %v520 = vshrl.u32 %v519, 4
        %v521 = vand.u32 %v519, 15
        %v522 = vsub.s32 0, %v521
        %v523 = vsel %vm517, %v522, %v521
        %vm524 = vcmp.lt.s32.totalorder %v396, 0
        %v525 = vsub.s32 0, %v396
        %v526 = vsel %vm524, %v525, %v396
        %v527 = vshrl.u32 %v526, 4
        %v528 = vand.u32 %v526, 15
        %v529 = vsub.s32 0, %v528
        %v530 = vsel %vm524, %v529, %v528
        %vm531 = vcmp.lt.s32.totalorder %v397, 0
        %v532 = vsub.s32 0, %v397
        %v533 = vsel %vm531, %v532, %v397
        %v534 = vshrl.u32 %v533, 4
        %v535 = vand.u32 %v533, 15
        %v536 = vsub.s32 0, %v535
        %v537 = vsel %vm531, %v536, %v535
        %vm538 = vcmp.lt.s32.totalorder %v398, 0
        %v539 = vsub.s32 0, %v398
        %v540 = vsel %vm538, %v539, %v398
        %v541 = vshrl.u32 %v540, 4
        %v542 = vand.u32 %v540, 15
        %v543 = vsub.s32 0, %v542
        %v544 = vsel %vm538, %v543, %v542
        %vm545 = vcmp.lt.s32.totalorder %v399, 0
        %v546 = vsub.s32 0, %v399
        %v547 = vsel %vm545, %v546, %v399
        %v548 = vshrl.u32 %v547, 4
        %v549 = vand.u32 %v547, 15
        %v550 = vsub.s32 0, %v549
        %v551 = vsel %vm545, %v550, %v549
        %vm552 = vcmp.lt.s32.totalorder %v400, 0
        %v553 = vsub.s32 0, %v400
        %v554 = vsel %vm552, %v553, %v400
        %v555 = vshrl.u32 %v554, 4
        %v556 = vand.u32 %v554, 15
        %v557 = vsub.s32 0, %v556
        %v558 = vsel %vm552, %v557, %v556
        %vm559 = vcmp.lt.s32.totalorder %v401, 0
        %v560 = vsub.s32 0, %v401
        %v561 = vsel %vm559, %v560, %v401
        %v562 = vshrl.u32 %v561, 4
        %v563 = vand.u32 %v561, 15
        %v564 = vsub.s32 0, %v563
        %v565 = vsel %vm559, %v564, %v563
        %vm566 = vcmp.lt.s32.totalorder %v402, 0
        %v567 = vsub.s32 0, %v402
        %v568 = vsel %vm566, %v567, %v402
        %v569 = vshrl.u32 %v568, 4
        %v570 = vand.u32 %v568, 15
        %v571 = vsub.s32 0, %v570
        %v572 = vsel %vm566, %v571, %v570
        %vm573 = vcmp.lt.s32.totalorder %v403, 0
        %v574 = vsub.s32 0, %v403
        %v575 = vsel %vm573, %v574, %v403
        %v576 = vshrl.u32 %v575, 4
        %v577 = vand.u32 %v575, 15
        %v578 = vsub.s32 0, %v577
        %v579 = vsel %vm573, %v578, %v577
        %vm580 = vcmp.lt.s32.totalorder %v404, 0
        %v581 = vsub.s32 0, %v404
        %v582 = vsel %vm580, %v581, %v404
        %v583 = vshrl.u32 %v582, 4
        %v584 = vand.u32 %v582, 15
        %v585 = vsub.s32 0, %v584
        %v586 = vsel %vm580, %v585, %v584
        %vm587 = vcmp.lt.s32.totalorder %v405, 0
        %v588 = vsub.s32 0, %v405
        %v589 = vsel %vm587, %v588, %v405
        %v590 = vshrl.u32 %v589, 4
        %v591 = vand.u32 %v589, 15
        %v592 = vsub.s32 0, %v591
        %v593 = vsel %vm587, %v592, %v591
        %vm594 = vcmp.lt.s32.totalorder %v406, 0
        %v595 = vsub.s32 0, %v406
        %v596 = vsel %vm594, %v595, %v406
        %v597 = vshrl.u32 %v596, 4
        %v598 = vand.u32 %v596, 15
        %v599 = vsub.s32 0, %v598
        %v600 = vsel %vm594, %v599, %v598
        %vm601 = vcmp.lt.s32.totalorder %v407, 0
        %v602 = vsub.s32 0, %v407
        %v603 = vsel %vm601, %v602, %v407
        %v604 = vshrl.u32 %v603, 4
        %v605 = vand.u32 %v603, 15
        %v606 = vsub.s32 0, %v605
        %v607 = vsel %vm601, %v606, %v605
        %vm608 = vcmp.lt.s32.totalorder %v408, 0
        %v609 = vsub.s32 0, %v408
        %v610 = vsel %vm608, %v609, %v408
        %v611 = vshrl.u32 %v610, 4
        %v612 = vand.u32 %v610, 15
        %v613 = vsub.s32 0, %v612
        %v614 = vsel %vm608, %v613, %v612
        %vm615 = vcmp.lt.s32.totalorder %v409, 0
        %v616 = vsub.s32 0, %v409
        %v617 = vsel %vm615, %v616, %v409
        %v618 = vshrl.u32 %v617, 4
        %v619 = vand.u32 %v617, 15
        %v620 = vsub.s32 0, %v619
        %v621 = vsel %vm615, %v620, %v619
        %vm622 = vcmp.lt.s32.totalorder %v410, 0
        %v623 = vsub.s32 0, %v410
        %v624 = vsel %vm622, %v623, %v410
        %v625 = vshrl.u32 %v624, 4
        %v626 = vand.u32 %v624, 15
        %v627 = vsub.s32 0, %v626
        %v628 = vsel %vm622, %v627, %v626
        %vm629 = vcmp.lt.s32.totalorder %v411, 0
        %v630 = vsub.s32 0, %v411
        %v631 = vsel %vm629, %v630, %v411
        %v632 = vshrl.u32 %v631, 4
        %v633 = vand.u32 %v631, 15
        %v634 = vsub.s32 0, %v633
        %v635 = vsel %vm629, %v634, %v633
        %vm636 = vcmp.ne.s32.totalorder %v418, 0
        %vm637 = vcmp.ne.s32.totalorder %v425, 0
        %vm638 = vcmp.ne.s32.totalorder %v432, 0
        %vm639 = vcmp.ne.s32.totalorder %v439, 0
        %vm640 = vcmp.ne.s32.totalorder %v446, 0
        %vm641 = vcmp.ne.s32.totalorder %v453, 0
        %vm642 = vcmp.ne.s32.totalorder %v460, 0
        %vm643 = vcmp.ne.s32.totalorder %v467, 0
        %vm644 = vcmp.ne.s32.totalorder %v474, 0
        %vm645 = vcmp.ne.s32.totalorder %v481, 0
        %vm646 = vcmp.ne.s32.totalorder %v488, 0
        %vm647 = vcmp.ne.s32.totalorder %v495, 0
        %vm648 = vcmp.ne.s32.totalorder %v502, 0
        %vm649 = vcmp.ne.s32.totalorder %v509, 0
        %vm650 = vcmp.ne.s32.totalorder %v516, 0
        %vm651 = vcmp.ne.s32.totalorder %v523, 0
        %vm652 = vcmp.ne.s32.totalorder %v530, 0
        %vm653 = vcmp.ne.s32.totalorder %v537, 0
        %vm654 = vcmp.ne.s32.totalorder %v544, 0
        %vm655 = vcmp.ne.s32.totalorder %v551, 0
        %vm656 = vcmp.ne.s32.totalorder %v558, 0
        %vm657 = vcmp.ne.s32.totalorder %v565, 0
        %vm658 = vcmp.ne.s32.totalorder %v572, 0
        %vm659 = vcmp.ne.s32.totalorder %v579, 0
        %vm660 = vcmp.ne.s32.totalorder %v586, 0
        %vm661 = vcmp.ne.s32.totalorder %v593, 0
        %vm662 = vcmp.ne.s32.totalorder %v600, 0
        %vm663 = vcmp.ne.s32.totalorder %v607, 0
        %vm664 = vcmp.ne.s32.totalorder %v614, 0
        %vm665 = vcmp.ne.s32.totalorder %v621, 0
        %vm666 = vcmp.ne.s32.totalorder %v628, 0
        %vm667 = vcmp.ne.s32.totalorder %v635, 0
        %vm668 = vcmp.lt.s32.totalorder %v418, 0
        %vm669 = vcmp.lt.s32.totalorder %v425, 0
        %vm670 = vcmp.lt.s32.totalorder %v432, 0
        %vm671 = vcmp.lt.s32.totalorder %v439, 0
        %vm672 = vcmp.lt.s32.totalorder %v446, 0
        %vm673 = vcmp.lt.s32.totalorder %v453, 0
        %vm674 = vcmp.lt.s32.totalorder %v460, 0
        %vm675 = vcmp.lt.s32.totalorder %v467, 0
        %vm676 = vcmp.lt.s32.totalorder %v474, 0
        %vm677 = vcmp.lt.s32.totalorder %v481, 0
        %vm678 = vcmp.lt.s32.totalorder %v488, 0
        %vm679 = vcmp.lt.s32.totalorder %v495, 0
        %vm680 = vcmp.lt.s32.totalorder %v502, 0
        %vm681 = vcmp.lt.s32.totalorder %v509, 0
        %vm682 = vcmp.lt.s32.totalorder %v516, 0
        %vm683 = vcmp.lt.s32.totalorder %v523, 0
        %vm684 = vcmp.lt.s32.totalorder %v530, 0
        %vm685 = vcmp.lt.s32.totalorder %v537, 0
        %vm686 = vcmp.lt.s32.totalorder %v544, 0
        %vm687 = vcmp.lt.s32.totalorder %v551, 0
        %vm688 = vcmp.lt.s32.totalorder %v558, 0
        %vm689 = vcmp.lt.s32.totalorder %v565, 0
        %vm690 = vcmp.lt.s32.totalorder %v572, 0
        %vm691 = vcmp.lt.s32.totalorder %v579, 0
        %vm692 = vcmp.lt.s32.totalorder %v586, 0
        %vm693 = vcmp.lt.s32.totalorder %v593, 0
        %vm694 = vcmp.lt.s32.totalorder %v600, 0
        %vm695 = vcmp.lt.s32.totalorder %v607, 0
        %vm696 = vcmp.lt.s32.totalorder %v614, 0
        %vm697 = vcmp.lt.s32.totalorder %v621, 0
        %vm698 = vcmp.lt.s32.totalorder %v628, 0
        %vm699 = vcmp.lt.s32.totalorder %v635, 0
        %vm700 = vmand %vm668, %vm636
        %vm701 = vmand %vm669, %vm637
        %vm702 = vmand %vm670, %vm638
        %vm703 = vmand %vm671, %vm639
        %vm704 = vmand %vm672, %vm640
        %vm705 = vmand %vm673, %vm641
        %vm706 = vmand %vm674, %vm642
        %vm707 = vmand %vm675, %vm643
        %vm708 = vmand %vm676, %vm644
        %vm709 = vmand %vm677, %vm645
        %vm710 = vmand %vm678, %vm646
        %vm711 = vmand %vm679, %vm647
        %vm712 = vmand %vm680, %vm648
        %vm713 = vmand %vm681, %vm649
        %vm714 = vmand %vm682, %vm650
        %vm715 = vmand %vm683, %vm651
        %vm716 = vmand %vm684, %vm652
        %vm717 = vmand %vm685, %vm653
        %vm718 = vmand %vm686, %vm654
        %vm719 = vmand %vm687, %vm655
        %vm720 = vmand %vm688, %vm656
        %vm721 = vmand %vm689, %vm657
        %vm722 = vmand %vm690, %vm658
        %vm723 = vmand %vm691, %vm659
        %vm724 = vmand %vm692, %vm660
        %vm725 = vmand %vm693, %vm661
        %vm726 = vmand %vm694, %vm662
        %vm727 = vmand %vm695, %vm663
        %vm728 = vmand %vm696, %vm664
        %vm729 = vmand %vm697, %vm665
        %vm730 = vmand %vm698, %vm666
        %vm731 = vmand %vm699, %vm667
        %v732 = vadd.s32 %v418, 16
        %v733 = vadd.s32 %v425, 16
        %v734 = vadd.s32 %v432, 16
        %v735 = vadd.s32 %v439, 16
        %v736 = vadd.s32 %v446, 16
        %v737 = vadd.s32 %v453, 16
        %v738 = vadd.s32 %v460, 16
        %v739 = vadd.s32 %v467, 16
        %v740 = vadd.s32 %v474, 16
        %v741 = vadd.s32 %v481, 16
        %v742 = vadd.s32 %v488, 16
        %v743 = vadd.s32 %v495, 16
        %v744 = vadd.s32 %v502, 16
        %v745 = vadd.s32 %v509, 16
        %v746 = vadd.s32 %v516, 16
        %v747 = vadd.s32 %v523, 16
        %v748 = vadd.s32 %v530, 16
        %v749 = vadd.s32 %v537, 16
        %v750 = vadd.s32 %v544, 16
        %v751 = vadd.s32 %v551, 16
        %v752 = vadd.s32 %v558, 16
        %v753 = vadd.s32 %v565, 16
        %v754 = vadd.s32 %v572, 16
        %v755 = vadd.s32 %v579, 16
        %v756 = vadd.s32 %v586, 16
        %v757 = vadd.s32 %v593, 16
        %v758 = vadd.s32 %v600, 16
        %v759 = vadd.s32 %v607, 16
        %v760 = vadd.s32 %v614, 16
        %v761 = vadd.s32 %v621, 16
        %v762 = vadd.s32 %v628, 16
        %v763 = vadd.s32 %v635, 16
        %v764 = vsel %vm700, %v732, %v418
        %v765 = vsel %vm701, %v733, %v425
        %v766 = vsel %vm702, %v734, %v432
        %v767 = vsel %vm703, %v735, %v439
        %v768 = vsel %vm704, %v736, %v446
        %v769 = vsel %vm705, %v737, %v453
        %v770 = vsel %vm706, %v738, %v460
        %v771 = vsel %vm707, %v739, %v467
        %v772 = vsel %vm708, %v740, %v474
        %v773 = vsel %vm709, %v741, %v481
        %v774 = vsel %vm710, %v742, %v488
        %v775 = vsel %vm711, %v743, %v495
        %v776 = vsel %vm712, %v744, %v502
        %v777 = vsel %vm713, %v745, %v509
        %v778 = vsel %vm714, %v746, %v516
        %v779 = vsel %vm715, %v747, %v523
        %v780 = vsel %vm716, %v748, %v530
        %v781 = vsel %vm717, %v749, %v537
        %v782 = vsel %vm718, %v750, %v544
        %v783 = vsel %vm719, %v751, %v551
        %v784 = vsel %vm720, %v752, %v558
        %v785 = vsel %vm721, %v753, %v565
        %v786 = vsel %vm722, %v754, %v572
        %v787 = vsel %vm723, %v755, %v579
        %v788 = vsel %vm724, %v756, %v586
        %v789 = vsel %vm725, %v757, %v593
        %v790 = vsel %vm726, %v758, %v600
        %v791 = vsel %vm727, %v759, %v607
        %v792 = vsel %vm728, %v760, %v614
        %v793 = vsel %vm729, %v761, %v621
        %v794 = vsel %vm730, %v762, %v628
        %v795 = vsel %vm731, %v763, %v635
        %v796 = vld [vmem:[#allocation5] sm:$0xff]
        %v797 = vld [vmem:[#allocation5 + $0x8] sm:$0xff]
        %v798 = vld [vmem:[#allocation5 + $0x10] sm:$0xff]
        %v799 = vld [vmem:[#allocation5 + $0x18] sm:$0xff]
        %v800 = vld [vmem:[#allocation5 + $0x20] sm:$0xff]
        %v801 = vld [vmem:[#allocation5 + $0x28] sm:$0xff]
        %v802 = vld [vmem:[#allocation5 + $0x30] sm:$0xff]
        %v803 = vld [vmem:[#allocation5 + $0x38] sm:$0xff]
        %v804 = vld [vmem:[#allocation5 + $0x40] sm:$0xff]
        %v805 = vld [vmem:[#allocation5 + $0x48] sm:$0xff]
        %v806 = vld [vmem:[#allocation5 + $0x50] sm:$0xff]
        %v807 = vld [vmem:[#allocation5 + $0x58] sm:$0xff]
        %v808 = vld [vmem:[#allocation5 + $0x60] sm:$0xff]
        %v809 = vld [vmem:[#allocation5 + $0x68] sm:$0xff]
        %v810 = vld [vmem:[#allocation5 + $0x70] sm:$0xff]
        %v811 = vld [vmem:[#allocation5 + $0x78] sm:$0xff]
        %v812 = vld [vmem:[#allocation5 + $0x80] sm:$0xff]
        %v813 = vld [vmem:[#allocation5 + $0x88] sm:$0xff]
        %v814 = vld [vmem:[#allocation5 + $0x90] sm:$0xff]
        %v815 = vld [vmem:[#allocation5 + $0x98] sm:$0xff]
        %v816 = vld [vmem:[#allocation5 + $0xa0] sm:$0xff]
        %v817 = vld [vmem:[#allocation5 + $0xa8] sm:$0xff]
        %v818 = vld [vmem:[#allocation5 + $0xb0] sm:$0xff]
        %v819 = vld [vmem:[#allocation5 + $0xb8] sm:$0xff]
        %v820 = vld [vmem:[#allocation5 + $0xc0] sm:$0xff]
        %v821 = vld [vmem:[#allocation5 + $0xc8] sm:$0xff]
        %v822 = vld [vmem:[#allocation5 + $0xd0] sm:$0xff]
        %v823 = vld [vmem:[#allocation5 + $0xd8] sm:$0xff]
        %v824 = vld [vmem:[#allocation5 + $0xe0] sm:$0xff]
        %v825 = vld [vmem:[#allocation5 + $0xe8] sm:$0xff]
        %v826 = vld [vmem:[#allocation5 + $0xf0] sm:$0xff]
        %v827 = vld [vmem:[#allocation5 + $0xf8] sm:$0xff]
        %v828 = vld [vmem:[#allocation5 + $0x100] sm:$0xff]
        %v829 = vld [vmem:[#allocation5 + $0x108] sm:$0xff]
        %v830 = vld [vmem:[#allocation5 + $0x110] sm:$0xff]
        %v831 = vld [vmem:[#allocation5 + $0x118] sm:$0xff]
        %v832 = vld [vmem:[#allocation5 + $0x120] sm:$0xff]
        %v833 = vld [vmem:[#allocation5 + $0x128] sm:$0xff]
        %v834 = vld [vmem:[#allocation5 + $0x130] sm:$0xff]
        %v835 = vld [vmem:[#allocation5 + $0x138] sm:$0xff]
        %v836 = vld [vmem:[#allocation5 + $0x140] sm:$0xff]
        %v837 = vld [vmem:[#allocation5 + $0x148] sm:$0xff]
        %v838 = vld [vmem:[#allocation5 + $0x150] sm:$0xff]
        %v839 = vld [vmem:[#allocation5 + $0x158] sm:$0xff]
        %v840 = vld [vmem:[#allocation5 + $0x160] sm:$0xff]
        %v841 = vld [vmem:[#allocation5 + $0x168] sm:$0xff]
        %v842 = vld [vmem:[#allocation5 + $0x170] sm:$0xff]
        %v843 = vld [vmem:[#allocation5 + $0x178] sm:$0xff]
        %844 = vmatprep.subr.mxu0 %v797
        %845 = vmatpush1.msra.mxu0 %v796
        %846 = vmatprep.subr.mxu0 %v800
        %847 = vmatpush1.msra.mxu0 %v799
        %848 = vmatprep.subr.mxu0 %v803
        %849 = vmatpush1.msra.mxu0 %v802
        %850 = vmatprep.subr.mxu0 %v806
        %851 = vmatpush1.msra.mxu0 %v805
        %852 = vmatprep.subr.mxu0 %v809
        %853 = vmatpush1.msra.mxu0 %v808
        %854 = vmatprep.subr.mxu0 %v812
        %855 = vmatpush1.msra.mxu0 %v811
        %856 = vmatprep.subr.mxu0 %v815
        %857 = vmatpush1.msra.mxu0 %v814
        %858 = vmatprep.subr.mxu0 %v818
        %859 = vmatpush1.msra.mxu0 %v817
        %860 = vmatprep.subr.mxu0 %v821
        %861 = vmatpush1.msra.mxu0 %v820
        %862 = vmatprep.subr.mxu0 %v824
        %863 = vmatpush1.msra.mxu0 %v823
        %864 = vmatprep.subr.mxu0 %v827
        %865 = vmatpush1.msra.mxu0 %v826
        %866 = vmatprep.subr.mxu0 %v830
        %867 = vmatpush1.msra.mxu0 %v829
        %868 = vmatprep.subr.mxu0 %v833
        %869 = vmatpush1.msra.mxu0 %v832
        %870 = vmatprep.subr.mxu0 %v836
        %871 = vmatpush1.msra.mxu0 %v835
        %872 = vmatprep.subr.mxu0 %v839
        %873 = vmatpush1.msra.mxu0 %v838
        %874 = vmatprep.subr.mxu0 %v842
        %875 = vmatpush1.msra.mxu0 %v841
        %876 = vmatprep.subr.mxu0 0.0
        %877 = vmatpush1.msra.mxu0 0.0
        %878 = vmatprep.subr.mxu0 0.0
        %879 = vmatpush1.msra.mxu0 0.0
        %880 = vmatprep.subr.mxu0 0.0
        %881 = vmatpush1.msra.mxu0 0.0
        %882 = vmatprep.subr.mxu0 0.0
        %883 = vmatpush1.msra.mxu0 0.0
        %884 = vmatprep.subr.mxu0 0.0
        %885 = vmatpush1.msra.mxu0 0.0
        %886 = vmatprep.subr.mxu0 0.0
        %887 = vmatpush1.msra.mxu0 0.0
        %888 = vmatprep.subr.mxu0 0.0
        %889 = vmatpush1.msra.mxu0 0.0
        %890 = vmatprep.subr.mxu0 0.0
        %891 = vmatpush1.msra.mxu0 0.0
        %892 = vmatprep.subr.mxu0 0.0
        %893 = vmatpush1.msra.mxu0 0.0
        %894 = vmatprep.subr.mxu0 0.0
        %895 = vmatpush1.msra.mxu0 0.0
        %896 = vmatprep.subr.mxu0 0.0
        %897 = vmatpush1.msra.mxu0 0.0
        %898 = vmatprep.subr.mxu0 0.0
        %899 = vmatpush1.msra.mxu0 0.0
        %900 = vmatprep.subr.mxu0 0.0
        %901 = vmatpush1.msra.mxu0 0.0
        %902 = vmatprep.subr.mxu0 0.0
        %903 = vmatpush1.msra.mxu0 0.0
        %904 = vmatprep.subr.mxu0 0.0
        %905 = vmatpush1.msra.mxu0 0.0
        %906 = vmatprep.subr.mxu0 0.0
        %907 = vmatpush1.msra.mxu0 0.0
        %908 = vmatprep.mubr.f32.mxu0 0.0
        %909 = vmatmul.mubr.f32.gmra.mrb[0].mxu0 %v340
        %v910 = vpop.f32.mrb[0].mxu0
        %v911 = vadd.f32 0.0, %v910
        %v912 = vpop.f32.mrb[0].mxu0
        %v913 = vadd.f32 0.0, %v912
        %914 = vmatprep.mubr.f32.mxu0 0.0
        %915 = vmatmul.mubr.f32.gmra.mrb[0].mxu0 %v341
        %v916 = vpop.f32.mrb[0].mxu0
        %v917 = vadd.f32 0.0, %v916
        %v918 = vpop.f32.mrb[0].mxu0
        %v919 = vadd.f32 0.0, %v918
        %920 = vmatprep.mubr.f32.mxu0 0.0
        %921 = vmatmul.mubr.f32.gmra.mrb[0].mxu0 %v342
        %v922 = vpop.f32.mrb[0].mxu0
        %v923 = vadd.f32 0.0, %v922
        %v924 = vpop.f32.mrb[0].mxu0
        %v925 = vadd.f32 0.0, %v924
        %926 = vmatprep.mubr.f32.mxu0 0.0
        %927 = vmatmul.mubr.f32.gmra.mrb[0].mxu0 %v343
        %v928 = vpop.f32.mrb[0].mxu0
        %v929 = vadd.f32 0.0, %v928
        %v930 = vpop.f32.mrb[0].mxu0
        %v931 = vadd.f32 0.0, %v930
        %932 = vmatprep.mubr.f32.mxu0 0.0
        %933 = vmatmul.mubr.f32.gmra.mrb[0].mxu0 %v344
        %v934 = vpop.f32.mrb[0].mxu0
        %v935 = vadd.f32 0.0, %v934
        %v936 = vpop.f32.mrb[0].mxu0
        %v937 = vadd.f32 0.0, %v936
        %938 = vmatprep.mubr.f32.mxu0 0.0
        %939 = vmatmul.mubr.f32.gmra.mrb[0].mxu0 %v345
        %v940 = vpop.f32.mrb[0].mxu0
        %v941 = vadd.f32 0.0, %v940
        %v942 = vpop.f32.mrb[0].mxu0
        %v943 = vadd.f32 0.0, %v942
        %944 = vmatprep.mubr.f32.mxu0 0.0
        %945 = vmatmul.mubr.f32.gmra.mrb[0].mxu0 %v346
        %v946 = vpop.f32.mrb[0].mxu0
        %v947 = vadd.f32 0.0, %v946
        %v948 = vpop.f32.mrb[0].mxu0
        %v949 = vadd.f32 0.0, %v948
        %950 = vmatprep.mubr.f32.mxu0 0.0
        %951 = vmatmul.mubr.f32.gmra.mrb[0].mxu0 %v347
        %v952 = vpop.f32.mrb[0].mxu0
        %v953 = vadd.f32 0.0, %v952
        %v954 = vpop.f32.mrb[0].mxu0
        %v955 = vadd.f32 0.0, %v954
        %956 = vmatprep.mubr.f32.mxu0 0.0
        %957 = vmatmul.mubr.f32.gmra.mrb[0].mxu0 %v348
        %v958 = vpop.f32.mrb[0].mxu0
        %v959 = vadd.f32 0.0, %v958
        %v960 = vpop.f32.mrb[0].mxu0
        %v961 = vadd.f32 0.0, %v960
        %962 = vmatprep.mubr.f32.mxu0 0.0
        %963 = vmatmul.mubr.f32.gmra.mrb[0].mxu0 %v349
        %v964 = vpop.f32.mrb[0].mxu0
        %v965 = vadd.f32 0.0, %v964
        %v966 = vpop.f32.mrb[0].mxu0
        %v967 = vadd.f32 0.0, %v966
        %968 = vmatprep.mubr.f32.mxu0 0.0
        %969 = vmatmul.mubr.f32.gmra.mrb[0].mxu0 %v350
        %v970 = vpop.f32.mrb[0].mxu0
        %v971 = vadd.f32 0.0, %v970
        %v972 = vpop.f32.mrb[0].mxu0
        %v973 = vadd.f32 0.0, %v972
        %974 = vmatprep.mubr.f32.mxu0 0.0
        %975 = vmatmul.mubr.f32.gmra.mrb[0].mxu0 %v351
        %v976 = vpop.f32.mrb[0].mxu0
        %v977 = vadd.f32 0.0, %v976
        %v978 = vpop.f32.mrb[0].mxu0
        %v979 = vadd.f32 0.0, %v978
        %980 = vmatprep.mubr.f32.mxu0 0.0
        %981 = vmatmul.mubr.f32.gmra.mrb[0].mxu0 %v352
        %v982 = vpop.f32.mrb[0].mxu0
        %v983 = vadd.f32 0.0, %v982
        %v984 = vpop.f32.mrb[0].mxu0
        %v985 = vadd.f32 0.0, %v984
        %986 = vmatprep.mubr.f32.mxu0 0.0
        %987 = vmatmul.mubr.f32.gmra.mrb[0].mxu0 %v353
        %v988 = vpop.f32.mrb[0].mxu0
        %v989 = vadd.f32 0.0, %v988
        %v990 = vpop.f32.mrb[0].mxu0
        %v991 = vadd.f32 0.0, %v990
        %992 = vmatprep.mubr.f32.mxu0 0.0
        %993 = vmatmul.mubr.f32.gmra.mrb[0].mxu0 %v354
        %v994 = vpop.f32.mrb[0].mxu0
        %v995 = vadd.f32 0.0, %v994
        %v996 = vpop.f32.mrb[0].mxu0
        %v997 = vadd.f32 0.0, %v996
        %998 = vmatprep.mubr.f32.mxu0 0.0
        %999 = vmatmul.mubr.f32.gmra.mrb[0].mxu0 %v355
        %v1000 = vpop.f32.mrb[0].mxu0
        %v1001 = vadd.f32 0.0, %v1000
        %v1002 = vpop.f32.mrb[0].mxu0
        %v1003 = vadd.f32 0.0, %v1002
        %1004 = vmatprep.mubr.f32.mxu0 0.0
        %1005 = vmatmul.mubr.f32.gmra.mrb[0].mxu0 %v356
        %v1006 = vpop.f32.mrb[0].mxu0
        %v1007 = vadd.f32 0.0, %v1006
        %v1008 = vpop.f32.mrb[0].mxu0
        %v1009 = vadd.f32 0.0, %v1008
        %1010 = vmatprep.mubr.f32.mxu0 0.0
        %1011 = vmatmul.mubr.f32.gmra.mrb[0].mxu0 %v357
        %v1012 = vpop.f32.mrb[0].mxu0
        %v1013 = vadd.f32 0.0, %v1012
        %v1014 = vpop.f32.mrb[0].mxu0
        %v1015 = vadd.f32 0.0, %v1014
        %1016 = vmatprep.mubr.f32.mxu0 0.0
        %1017 = vmatmul.mubr.f32.gmra.mrb[0].mxu0 %v358
        %v1018 = vpop.f32.mrb[0].mxu0
        %v1019 = vadd.f32 0.0, %v1018
        %v1020 = vpop.f32.mrb[0].mxu0
        %v1021 = vadd.f32 0.0, %v1020
        %1022 = vmatprep.mubr.f32.mxu0 0.0
        %1023 = vmatmul.mubr.f32.gmra.mrb[0].mxu0 %v359
        %v1024 = vpop.f32.mrb[0].mxu0
        %v1025 = vadd.f32 0.0, %v1024
        %v1026 = vpop.f32.mrb[0].mxu0
        %v1027 = vadd.f32 0.0, %v1026
        %1028 = vmatprep.mubr.f32.mxu0 0.0
        %1029 = vmatmul.mubr.f32.gmra.mrb[0].mxu0 %v360
        %v1030 = vpop.f32.mrb[0].mxu0
        %v1031 = vadd.f32 0.0, %v1030
        %v1032 = vpop.f32.mrb[0].mxu0
        %v1033 = vadd.f32 0.0, %v1032
        %1034 = vmatprep.mubr.f32.mxu0 0.0
        %1035 = vmatmul.mubr.f32.gmra.mrb[0].mxu0 %v361
        %v1036 = vpop.f32.mrb[0].mxu0
        %v1037 = vadd.f32 0.0, %v1036
        %v1038 = vpop.f32.mrb[0].mxu0
        %v1039 = vadd.f32 0.0, %v1038
        %1040 = vmatprep.mubr.f32.mxu0 0.0
        %1041 = vmatmul.mubr.f32.gmra.mrb[0].mxu0 %v362
        %v1042 = vpop.f32.mrb[0].mxu0
        %v1043 = vadd.f32 0.0, %v1042
        %v1044 = vpop.f32.mrb[0].mxu0
        %v1045 = vadd.f32 0.0, %v1044
        %1046 = vmatprep.mubr.f32.mxu0 0.0
        %1047 = vmatmul.mubr.f32.gmra.mrb[0].mxu0 %v363
        %v1048 = vpop.f32.mrb[0].mxu0
        %v1049 = vadd.f32 0.0, %v1048
        %v1050 = vpop.f32.mrb[0].mxu0
        %v1051 = vadd.f32 0.0, %v1050
        %1052 = vmatprep.mubr.f32.mxu0 0.0
        %1053 = vmatmul.mubr.f32.gmra.mrb[0].mxu0 %v364
        %v1054 = vpop.f32.mrb[0].mxu0
        %v1055 = vadd.f32 0.0, %v1054
        %v1056 = vpop.f32.mrb[0].mxu0
        %v1057 = vadd.f32 0.0, %v1056
        %1058 = vmatprep.mubr.f32.mxu0 0.0
        %1059 = vmatmul.mubr.f32.gmra.mrb[0].mxu0 %v365
        %v1060 = vpop.f32.mrb[0].mxu0
        %v1061 = vadd.f32 0.0, %v1060
        %v1062 = vpop.f32.mrb[0].mxu0
        %v1063 = vadd.f32 0.0, %v1062
        %1064 = vmatprep.mubr.f32.mxu0 0.0
        %1065 = vmatmul.mubr.f32.gmra.mrb[0].mxu0 %v366
        %v1066 = vpop.f32.mrb[0].mxu0
        %v1067 = vadd.f32 0.0, %v1066
        %v1068 = vpop.f32.mrb[0].mxu0
        %v1069 = vadd.f32 0.0, %v1068
        %1070 = vmatprep.mubr.f32.mxu0 0.0
        %1071 = vmatmul.mubr.f32.gmra.mrb[0].mxu0 %v367
        %v1072 = vpop.f32.mrb[0].mxu0
        %v1073 = vadd.f32 0.0, %v1072
        %v1074 = vpop.f32.mrb[0].mxu0
        %v1075 = vadd.f32 0.0, %v1074
        %1076 = vmatprep.mubr.f32.mxu0 0.0
        %1077 = vmatmul.mubr.f32.gmra.mrb[0].mxu0 %v368
        %v1078 = vpop.f32.mrb[0].mxu0
        %v1079 = vadd.f32 0.0, %v1078
        %v1080 = vpop.f32.mrb[0].mxu0
        %v1081 = vadd.f32 0.0, %v1080
        %1082 = vmatprep.mubr.f32.mxu0 0.0
        %1083 = vmatmul.mubr.f32.gmra.mrb[0].mxu0 %v369
        %v1084 = vpop.f32.mrb[0].mxu0
        %v1085 = vadd.f32 0.0, %v1084
        %v1086 = vpop.f32.mrb[0].mxu0
        %v1087 = vadd.f32 0.0, %v1086
        %1088 = vmatprep.mubr.f32.mxu0 0.0
        %1089 = vmatmul.mubr.f32.gmra.mrb[0].mxu0 %v370
        %v1090 = vpop.f32.mrb[0].mxu0
        %v1091 = vadd.f32 0.0, %v1090
        %v1092 = vpop.f32.mrb[0].mxu0
        %v1093 = vadd.f32 0.0, %v1092
        %1094 = vmatprep.mubr.f32.mxu0 0.0
        %1095 = vmatmul.mubr.f32.gmra.mrb[0].mxu0 %v371
        %v1096 = vpop.f32.mrb[0].mxu0
        %v1097 = vadd.f32 0.0, %v1096
        %v1098 = vpop.f32.mrb[0].mxu0
        %v1099 = vadd.f32 0.0, %v1098
        %1100 = vdwg.mxu0
        %1101 = vmatprep.subr.mxu0 0.0
        %1102 = vmatpush1.msra.mxu0 %v798
        %1103 = vmatprep.subr.mxu0 0.0
        %1104 = vmatpush1.msra.mxu0 %v801
        %1105 = vmatprep.subr.mxu0 0.0
        %1106 = vmatpush1.msra.mxu0 %v804
        %1107 = vmatprep.subr.mxu0 0.0
        %1108 = vmatpush1.msra.mxu0 %v807
        %1109 = vmatprep.subr.mxu0 0.0
        %1110 = vmatpush1.msra.mxu0 %v810
        %1111 = vmatprep.subr.mxu0 0.0
        %1112 = vmatpush1.msra.mxu0 %v813
        %1113 = vmatprep.subr.mxu0 0.0
        %1114 = vmatpush1.msra.mxu0 %v816
        %1115 = vmatprep.subr.mxu0 0.0
        %1116 = vmatpush1.msra.mxu0 %v819
        %1117 = vmatprep.subr.mxu0 0.0
        %1118 = vmatpush1.msra.mxu0 %v822
        %1119 = vmatprep.subr.mxu0 0.0
        %1120 = vmatpush1.msra.mxu0 %v825
        %1121 = vmatprep.subr.mxu0 0.0
        %1122 = vmatpush1.msra.mxu0 %v828
        %1123 = vmatprep.subr.mxu0 0.0
        %1124 = vmatpush1.msra.mxu0 %v831
        %1125 = vmatprep.subr.mxu0 0.0
        %1126 = vmatpush1.msra.mxu0 %v834
        %1127 = vmatprep.subr.mxu0 0.0
        %1128 = vmatpush1.msra.mxu0 %v837
        %1129 = vmatprep.subr.mxu0 0.0
        %1130 = vmatpush1.msra.mxu0 %v840
        %1131 = vmatprep.subr.mxu0 0.0
        %1132 = vmatpush1.msra.mxu0 %v843
        %1133 = vmatprep.subr.mxu0 0.0
        %1134 = vmatpush1.msra.mxu0 0.0
        %1135 = vmatprep.subr.mxu0 0.0
        %1136 = vmatpush1.msra.mxu0 0.0
        %1137 = vmatprep.subr.mxu0 0.0
        %1138 = vmatpush1.msra.mxu0 0.0
        %1139 = vmatprep.subr.mxu0 0.0
        %1140 = vmatpush1.msra.mxu0 0.0
        %1141 = vmatprep.subr.mxu0 0.0
        %1142 = vmatpush1.msra.mxu0 0.0
        %1143 = vmatprep.subr.mxu0 0.0
        %1144 = vmatpush1.msra.mxu0 0.0
        %1145 = vmatprep.subr.mxu0 0.0
        %1146 = vmatpush1.msra.mxu0 0.0
        %1147 = vmatprep.subr.mxu0 0.0
        %1148 = vmatpush1.msra.mxu0 0.0
        %1149 = vmatprep.subr.mxu0 0.0
        %1150 = vmatpush1.msra.mxu0 0.0
        %1151 = vmatprep.subr.mxu0 0.0
        %1152 = vmatpush1.msra.mxu0 0.0
        %1153 = vmatprep.subr.mxu0 0.0
        %1154 = vmatpush1.msra.mxu0 0.0
        %1155 = vmatprep.subr.mxu0 0.0
        %1156 = vmatpush1.msra.mxu0 0.0
        %1157 = vmatprep.subr.mxu0 0.0
        %1158 = vmatpush1.msra.mxu0 0.0
        %1159 = vmatprep.subr.mxu0 0.0
        %1160 = vmatpush1.msra.mxu0 0.0
        %1161 = vmatprep.subr.mxu0 0.0
        %1162 = vmatpush1.msra.mxu0 0.0
        %1163 = vmatprep.subr.mxu0 0.0
        %1164 = vmatpush1.msra.mxu0 0.0
        %1165 = vmatprep.mubr.f32.mxu0 0.0
        %1166 = vmatmul.mubr.f32.gmra.mrb[0].mxu0 %v340
        %v1167 = vpop.f32.mrb[0].mxu0
        %v1168 = vadd.f32 0.0, %v1167
        %v1169 = vpop.f32.mrb[0].mxu0
        %1170 = vmatprep.mubr.f32.mxu0 0.0
        %1171 = vmatmul.mubr.f32.gmra.mrb[0].mxu0 %v341
        %v1172 = vpop.f32.mrb[0].mxu0
        %v1173 = vadd.f32 0.0, %v1172
        %v1174 = vpop.f32.mrb[0].mxu0
        %1175 = vmatprep.mubr.f32.mxu0 0.0
        %1176 = vmatmul.mubr.f32.gmra.mrb[0].mxu0 %v342
        %v1177 = vpop.f32.mrb[0].mxu0
        %v1178 = vadd.f32 0.0, %v1177
        %v1179 = vpop.f32.mrb[0].mxu0
        %1180 = vmatprep.mubr.f32.mxu0 0.0
        %1181 = vmatmul.mubr.f32.gmra.mrb[0].mxu0 %v343
        %v1182 = vpop.f32.mrb[0].mxu0
        %v1183 = vadd.f32 0.0, %v1182
        %v1184 = vpop.f32.mrb[0].mxu0
        %1185 = vmatprep.mubr.f32.mxu0 0.0
        %1186 = vmatmul.mubr.f32.gmra.mrb[0].mxu0 %v344
        %v1187 = vpop.f32.mrb[0].mxu0
        %v1188 = vadd.f32 0.0, %v1187
        %v1189 = vpop.f32.mrb[0].mxu0
        %1190 = vmatprep.mubr.f32.mxu0 0.0
        %1191 = vmatmul.mubr.f32.gmra.mrb[0].mxu0 %v345
        %v1192 = vpop.f32.mrb[0].mxu0
        %v1193 = vadd.f32 0.0, %v1192
        %v1194 = vpop.f32.mrb[0].mxu0
        %1195 = vmatprep.mubr.f32.mxu0 0.0
        %1196 = vmatmul.mubr.f32.gmra.mrb[0].mxu0 %v346
        %v1197 = vpop.f32.mrb[0].mxu0
        %v1198 = vadd.f32 0.0, %v1197
        %v1199 = vpop.f32.mrb[0].mxu0
        %1200 = vmatprep.mubr.f32.mxu0 0.0
        %1201 = vmatmul.mubr.f32.gmra.mrb[0].mxu0 %v347
        %v1202 = vpop.f32.mrb[0].mxu0
        %v1203 = vadd.f32 0.0, %v1202
        %v1204 = vpop.f32.mrb[0].mxu0
        %1205 = vmatprep.mubr.f32.mxu0 0.0
        %1206 = vmatmul.mubr.f32.gmra.mrb[0].mxu0 %v348
        %v1207 = vpop.f32.mrb[0].mxu0
        %v1208 = vadd.f32 0.0, %v1207
        %v1209 = vpop.f32.mrb[0].mxu0
        %1210 = vmatprep.mubr.f32.mxu0 0.0
        %1211 = vmatmul.mubr.f32.gmra.mrb[0].mxu0 %v349
        %v1212 = vpop.f32.mrb[0].mxu0
        %v1213 = vadd.f32 0.0, %v1212
        %v1214 = vpop.f32.mrb[0].mxu0
        %1215 = vmatprep.mubr.f32.mxu0 0.0
        %1216 = vmatmul.mubr.f32.gmra.mrb[0].mxu0 %v350
        %v1217 = vpop.f32.mrb[0].mxu0
        %v1218 = vadd.f32 0.0, %v1217
        %v1219 = vpop.f32.mrb[0].mxu0
        %1220 = vmatprep.mubr.f32.mxu0 0.0
        %1221 = vmatmul.mubr.f32.gmra.mrb[0].mxu0 %v351
        %v1222 = vpop.f32.mrb[0].mxu0
        %v1223 = vadd.f32 0.0, %v1222
        %v1224 = vpop.f32.mrb[0].mxu0
        %1225 = vmatprep.mubr.f32.mxu0 0.0
        %1226 = vmatmul.mubr.f32.gmra.mrb[0].mxu0 %v352
        %v1227 = vpop.f32.mrb[0].mxu0
        %v1228 = vadd.f32 0.0, %v1227
        %v1229 = vpop.f32.mrb[0].mxu0
        %1230 = vmatprep.mubr.f32.mxu0 0.0
        %1231 = vmatmul.mubr.f32.gmra.mrb[0].mxu0 %v353
        %v1232 = vpop.f32.mrb[0].mxu0
        %v1233 = vadd.f32 0.0, %v1232
        %v1234 = vpop.f32.mrb[0].mxu0
        %1235 = vmatprep.mubr.f32.mxu0 0.0
        %1236 = vmatmul.mubr.f32.gmra.mrb[0].mxu0 %v354
        %v1237 = vpop.f32.mrb[0].mxu0
        %v1238 = vadd.f32 0.0, %v1237
        %v1239 = vpop.f32.mrb[0].mxu0
        %1240 = vmatprep.mubr.f32.mxu0 0.0
        %1241 = vmatmul.mubr.f32.gmra.mrb[0].mxu0 %v355
        %v1242 = vpop.f32.mrb[0].mxu0
        %v1243 = vadd.f32 0.0, %v1242
        %v1244 = vpop.f32.mrb[0].mxu0
        %1245 = vmatprep.mubr.f32.mxu0 0.0
        %1246 = vmatmul.mubr.f32.gmra.mrb[0].mxu0 %v356
        %v1247 = vpop.f32.mrb[0].mxu0
        %v1248 = vadd.f32 0.0, %v1247
        %v1249 = vpop.f32.mrb[0].mxu0
        %1250 = vmatprep.mubr.f32.mxu0 0.0
        %1251 = vmatmul.mubr.f32.gmra.mrb[0].mxu0 %v357
        %v1252 = vpop.f32.mrb[0].mxu0
        %v1253 = vadd.f32 0.0, %v1252
        %v1254 = vpop.f32.mrb[0].mxu0
        %1255 = vmatprep.mubr.f32.mxu0 0.0
        %1256 = vmatmul.mubr.f32.gmra.mrb[0].mxu0 %v358
        %v1257 = vpop.f32.mrb[0].mxu0
        %v1258 = vadd.f32 0.0, %v1257
        %v1259 = vpop.f32.mrb[0].mxu0
        %1260 = vmatprep.mubr.f32.mxu0 0.0
        %1261 = vmatmul.mubr.f32.gmra.mrb[0].mxu0 %v359
        %v1262 = vpop.f32.mrb[0].mxu0
        %v1263 = vadd.f32 0.0, %v1262
        %v1264 = vpop.f32.mrb[0].mxu0
        %1265 = vmatprep.mubr.f32.mxu0 0.0
        %1266 = vmatmul.mubr.f32.gmra.mrb[0].mxu0 %v360
        %v1267 = vpop.f32.mrb[0].mxu0
        %v1268 = vadd.f32 0.0, %v1267
        %v1269 = vpop.f32.mrb[0].mxu0
        %1270 = vmatprep.mubr.f32.mxu0 0.0
        %1271 = vmatmul.mubr.f32.gmra.mrb[0].mxu0 %v361
        %v1272 = vpop.f32.mrb[0].mxu0
        %v1273 = vadd.f32 0.0, %v1272
        %v1274 = vpop.f32.mrb[0].mxu0
        %1275 = vmatprep.mubr.f32.mxu0 0.0
        %1276 = vmatmul.mubr.f32.gmra.mrb[0].mxu0 %v362
        %v1277 = vpop.f32.mrb[0].mxu0
        %v1278 = vadd.f32 0.0, %v1277
        %v1279 = vpop.f32.mrb[0].mxu0
        %1280 = vmatprep.mubr.f32.mxu0 0.0
        %1281 = vmatmul.mubr.f32.gmra.mrb[0].mxu0 %v363
        %v1282 = vpop.f32.mrb[0].mxu0
        %v1283 = vadd.f32 0.0, %v1282
        %v1284 = vpop.f32.mrb[0].mxu0
        %1285 = vmatprep.mubr.f32.mxu0 0.0
        %1286 = vmatmul.mubr.f32.gmra.mrb[0].mxu0 %v364
        %v1287 = vpop.f32.mrb[0].mxu0
        %v1288 = vadd.f32 0.0, %v1287
        %v1289 = vpop.f32.mrb[0].mxu0
        %1290 = vmatprep.mubr.f32.mxu0 0.0
        %1291 = vmatmul.mubr.f32.gmra.mrb[0].mxu0 %v365
        %v1292 = vpop.f32.mrb[0].mxu0
        %v1293 = vadd.f32 0.0, %v1292
        %v1294 = vpop.f32.mrb[0].mxu0
        %1295 = vmatprep.mubr.f32.mxu0 0.0
        %1296 = vmatmul.mubr.f32.gmra.mrb[0].mxu0 %v366
        %v1297 = vpop.f32.mrb[0].mxu0
        %v1298 = vadd.f32 0.0, %v1297
        %v1299 = vpop.f32.mrb[0].mxu0
        %1300 = vmatprep.mubr.f32.mxu0 0.0
        %1301 = vmatmul.mubr.f32.gmra.mrb[0].mxu0 %v367
        %v1302 = vpop.f32.mrb[0].mxu0
        %v1303 = vadd.f32 0.0, %v1302
        %v1304 = vpop.f32.mrb[0].mxu0
        %1305 = vmatprep.mubr.f32.mxu0 0.0
        %1306 = vmatmul.mubr.f32.gmra.mrb[0].mxu0 %v368
        %v1307 = vpop.f32.mrb[0].mxu0
        %v1308 = vadd.f32 0.0, %v1307
        %v1309 = vpop.f32.mrb[0].mxu0
        %1310 = vmatprep.mubr.f32.mxu0 0.0
        %1311 = vmatmul.mubr.f32.gmra.mrb[0].mxu0 %v369
        %v1312 = vpop.f32.mrb[0].mxu0
        %v1313 = vadd.f32 0.0, %v1312
        %v1314 = vpop.f32.mrb[0].mxu0
        %1315 = vmatprep.mubr.f32.mxu0 0.0
        %1316 = vmatmul.mubr.f32.gmra.mrb[0].mxu0 %v370
        %v1317 = vpop.f32.mrb[0].mxu0
        %v1318 = vadd.f32 0.0, %v1317
        %v1319 = vpop.f32.mrb[0].mxu0
        %1320 = vmatprep.mubr.f32.mxu0 0.0
        %1321 = vmatmul.mubr.f32.gmra.mrb[0].mxu0 %v371
        %v1322 = vpop.f32.mrb[0].mxu0
        %v1323 = vadd.f32 0.0, %v1322
        %v1324 = vpop.f32.mrb[0].mxu0
        %1325 = vdwg.mxu0
        %vm1326 = vcmp.ge.s32.totalorder %v764, 1
        %vm1327 = vcmp.ge.s32.totalorder %v765, 1
        %vm1328 = vcmp.ge.s32.totalorder %v766, 1
        %vm1329 = vcmp.ge.s32.totalorder %v767, 1
        %vm1330 = vcmp.ge.s32.totalorder %v768, 1
        %vm1331 = vcmp.ge.s32.totalorder %v769, 1
        %vm1332 = vcmp.ge.s32.totalorder %v770, 1
        %vm1333 = vcmp.ge.s32.totalorder %v771, 1
        %vm1334 = vcmp.ge.s32.totalorder %v772, 1
        %vm1335 = vcmp.ge.s32.totalorder %v773, 1
        %vm1336 = vcmp.ge.s32.totalorder %v774, 1
        %vm1337 = vcmp.ge.s32.totalorder %v775, 1
        %vm1338 = vcmp.ge.s32.totalorder %v776, 1
        %vm1339 = vcmp.ge.s32.totalorder %v777, 1
        %vm1340 = vcmp.ge.s32.totalorder %v778, 1
        %vm1341 = vcmp.ge.s32.totalorder %v779, 1
        %vm1342 = vcmp.ge.s32.totalorder %v780, 1
        %vm1343 = vcmp.ge.s32.totalorder %v781, 1
        %vm1344 = vcmp.ge.s32.totalorder %v782, 1
        %vm1345 = vcmp.ge.s32.totalorder %v783, 1
        %vm1346 = vcmp.ge.s32.totalorder %v784, 1
        %vm1347 = vcmp.ge.s32.totalorder %v785, 1
        %vm1348 = vcmp.ge.s32.totalorder %v786, 1
        %vm1349 = vcmp.ge.s32.totalorder %v787, 1
        %vm1350 = vcmp.ge.s32.totalorder %v788, 1
        %vm1351 = vcmp.ge.s32.totalorder %v789, 1
        %vm1352 = vcmp.ge.s32.totalorder %v790, 1
        %vm1353 = vcmp.ge.s32.totalorder %v791, 1
        %vm1354 = vcmp.ge.s32.totalorder %v792, 1
        %vm1355 = vcmp.ge.s32.totalorder %v793, 1
        %vm1356 = vcmp.ge.s32.totalorder %v794, 1
        %vm1357 = vcmp.ge.s32.totalorder %v795, 1
        %v1358 = vrot.slane %v911, 7
        %v1359 = vrot.slane %v917, 7
        %v1360 = vrot.slane %v923, 7
        %v1361 = vrot.slane %v929, 7
        %v1362 = vrot.slane %v935, 7
        %v1363 = vrot.slane %v941, 7
        %v1364 = vrot.slane %v947, 7
        %v1365 = vrot.slane %v953, 7
        %v1366 = vrot.slane %v959, 7
        %v1367 = vrot.slane %v965, 7
        %v1368 = vrot.slane %v971, 7
        %v1369 = vrot.slane %v977, 7
        %v1370 = vrot.slane %v983, 7
        %v1371 = vrot.slane %v989, 7
        %v1372 = vrot.slane %v995, 7
        %v1373 = vrot.slane %v1001, 7
        %v1374 = vrot.slane %v1007, 7
        %v1375 = vrot.slane %v1013, 7
        %v1376 = vrot.slane %v1019, 7
        %v1377 = vrot.slane %v1025, 7
        %v1378 = vrot.slane %v1031, 7
        %v1379 = vrot.slane %v1037, 7
        %v1380 = vrot.slane %v1043, 7
        %v1381 = vrot.slane %v1049, 7
        %v1382 = vrot.slane %v1055, 7
        %v1383 = vrot.slane %v1061, 7
        %v1384 = vrot.slane %v1067, 7
        %v1385 = vrot.slane %v1073, 7
        %v1386 = vrot.slane %v1079, 7
        %v1387 = vrot.slane %v1085, 7
        %v1388 = vrot.slane %v1091, 7
        %v1389 = vrot.slane %v1097, 7
        %vm1390 = vcmp.lt.s32.totalorder %v380, 1
        %v1391 = vsel %vm1390, %v1388, %v1389
        %v1392 = vsel %vm1390, %v1387, %v1388
        %v1393 = vsel %vm1390, %v1386, %v1387
        %v1394 = vsel %vm1390, %v1385, %v1386
        %v1395 = vsel %vm1390, %v1384, %v1385
        %v1396 = vsel %vm1390, %v1383, %v1384
        %v1397 = vsel %vm1390, %v1382, %v1383
        %v1398 = vsel %vm1390, %v1381, %v1382
        %v1399 = vsel %vm1390, %v1380, %v1381
        %v1400 = vsel %vm1390, %v1379, %v1380
        %v1401 = vsel %vm1390, %v1378, %v1379
        %v1402 = vsel %vm1390, %v1377, %v1378
        %v1403 = vsel %vm1390, %v1376, %v1377
        %v1404 = vsel %vm1390, %v1375, %v1376
        %v1405 = vsel %vm1390, %v1374, %v1375
        %v1406 = vsel %vm1390, %v1373, %v1374
        %v1407 = vsel %vm1390, %v1372, %v1373
        %v1408 = vsel %vm1390, %v1371, %v1372
        %v1409 = vsel %vm1390, %v1370, %v1371
        %v1410 = vsel %vm1390, %v1369, %v1370
        %v1411 = vsel %vm1390, %v1368, %v1369
        %v1412 = vsel %vm1390, %v1367, %v1368
        %v1413 = vsel %vm1390, %v1366, %v1367
        %v1414 = vsel %vm1390, %v1365, %v1366
        %v1415 = vsel %vm1390, %v1364, %v1365
        %v1416 = vsel %vm1390, %v1363, %v1364
        %v1417 = vsel %vm1390, %v1362, %v1363
        %v1418 = vsel %vm1390, %v1361, %v1362
        %v1419 = vsel %vm1390, %v1360, %v1361
        %v1420 = vsel %vm1390, %v1359, %v1360
        %v1421 = vsel %vm1390, %v1358, %v1359
        %v1422 = vsel %vm1390, %v1389, %v1358
        %v1423 = vsel %vm1326, 1, 0
        %v1424 = vsel %vm1327, 1, 0
        %v1425 = vsel %vm1328, 1, 0
        %v1426 = vsel %vm1329, 1, 0
        %v1427 = vsel %vm1330, 1, 0
        %v1428 = vsel %vm1331, 1, 0
        %v1429 = vsel %vm1332, 1, 0
        %v1430 = vsel %vm1333, 1, 0
        %v1431 = vsel %vm1334, 1, 0
        %v1432 = vsel %vm1335, 1, 0
        %v1433 = vsel %vm1336, 1, 0
        %v1434 = vsel %vm1337, 1, 0
        %v1435 = vsel %vm1338, 1, 0
        %v1436 = vsel %vm1339, 1, 0
        %v1437 = vsel %vm1340, 1, 0
        %v1438 = vsel %vm1341, 1, 0
        %v1439 = vsel %vm1342, 1, 0
        %v1440 = vsel %vm1343, 1, 0
        %v1441 = vsel %vm1344, 1, 0
        %v1442 = vsel %vm1345, 1, 0
        %v1443 = vsel %vm1346, 1, 0
        %v1444 = vsel %vm1347, 1, 0
        %v1445 = vsel %vm1348, 1, 0
        %v1446 = vsel %vm1349, 1, 0
        %v1447 = vsel %vm1350, 1, 0
        %v1448 = vsel %vm1351, 1, 0
        %v1449 = vsel %vm1352, 1, 0
        %v1450 = vsel %vm1353, 1, 0
        %v1451 = vsel %vm1354, 1, 0
        %v1452 = vsel %vm1355, 1, 0
        %v1453 = vsel %vm1356, 1, 0
        %v1454 = vsel %vm1357, 1, 0
        %vm1455 = vcmp.eq.s32.totalorder %v1423, 1
        %vm1456 = vcmp.eq.s32.totalorder %v1424, 1
        %vm1457 = vcmp.eq.s32.totalorder %v1425, 1
        %vm1458 = vcmp.eq.s32.totalorder %v1426, 1
        %vm1459 = vcmp.eq.s32.totalorder %v1427, 1
        %vm1460 = vcmp.eq.s32.totalorder %v1428, 1
        %vm1461 = vcmp.eq.s32.totalorder %v1429, 1
        %vm1462 = vcmp.eq.s32.totalorder %v1430, 1
        %vm1463 = vcmp.eq.s32.totalorder %v1431, 1
        %vm1464 = vcmp.eq.s32.totalorder %v1432, 1
        %vm1465 = vcmp.eq.s32.totalorder %v1433, 1
        %vm1466 = vcmp.eq.s32.totalorder %v1434, 1
        %vm1467 = vcmp.eq.s32.totalorder %v1435, 1
        %vm1468 = vcmp.eq.s32.totalorder %v1436, 1
        %vm1469 = vcmp.eq.s32.totalorder %v1437, 1
        %vm1470 = vcmp.eq.s32.totalorder %v1438, 1
        %vm1471 = vcmp.eq.s32.totalorder %v1439, 1
        %vm1472 = vcmp.eq.s32.totalorder %v1440, 1
        %vm1473 = vcmp.eq.s32.totalorder %v1441, 1
        %vm1474 = vcmp.eq.s32.totalorder %v1442, 1
        %vm1475 = vcmp.eq.s32.totalorder %v1443, 1
        %vm1476 = vcmp.eq.s32.totalorder %v1444, 1
        %vm1477 = vcmp.eq.s32.totalorder %v1445, 1
        %vm1478 = vcmp.eq.s32.totalorder %v1446, 1
        %vm1479 = vcmp.eq.s32.totalorder %v1447, 1
        %vm1480 = vcmp.eq.s32.totalorder %v1448, 1
        %vm1481 = vcmp.eq.s32.totalorder %v1449, 1
        %vm1482 = vcmp.eq.s32.totalorder %v1450, 1
        %vm1483 = vcmp.eq.s32.totalorder %v1451, 1
        %vm1484 = vcmp.eq.s32.totalorder %v1452, 1
        %vm1485 = vcmp.eq.s32.totalorder %v1453, 1
        %vm1486 = vcmp.eq.s32.totalorder %v1454, 1
        %v1487 = vsel %vm1455, %v1422, 0.0
        %v1488 = vsel %vm1456, %v1421, 0.0
        %v1489 = vsel %vm1457, %v1420, 0.0
        %v1490 = vsel %vm1458, %v1419, 0.0
        %v1491 = vsel %vm1459, %v1418, 0.0
        %v1492 = vsel %vm1460, %v1417, 0.0
        %v1493 = vsel %vm1461, %v1416, 0.0
        %v1494 = vsel %vm1462, %v1415, 0.0
        %v1495 = vsel %vm1463, %v1414, 0.0
        %v1496 = vsel %vm1464, %v1413, 0.0
        %v1497 = vsel %vm1465, %v1412, 0.0
        %v1498 = vsel %vm1466, %v1411, 0.0
        %v1499 = vsel %vm1467, %v1410, 0.0
        %v1500 = vsel %vm1468, %v1409, 0.0
        %v1501 = vsel %vm1469, %v1408, 0.0
        %v1502 = vsel %vm1470, %v1407, 0.0
        %v1503 = vsel %vm1471, %v1406, 0.0
        %v1504 = vsel %vm1472, %v1405, 0.0
        %v1505 = vsel %vm1473, %v1404, 0.0
        %v1506 = vsel %vm1474, %v1403, 0.0
        %v1507 = vsel %vm1475, %v1402, 0.0
        %v1508 = vsel %vm1476, %v1401, 0.0
        %v1509 = vsel %vm1477, %v1400, 0.0
        %v1510 = vsel %vm1478, %v1399, 0.0
        %v1511 = vsel %vm1479, %v1398, 0.0
        %v1512 = vsel %vm1480, %v1397, 0.0
        %v1513 = vsel %vm1481, %v1396, 0.0
        %v1514 = vsel %vm1482, %v1395, 0.0
        %v1515 = vsel %vm1483, %v1394, 0.0
        %v1516 = vsel %vm1484, %v1393, 0.0
        %v1517 = vsel %vm1485, %v1392, 0.0
        %v1518 = vsel %vm1486, %v1391, 0.0
        %vm1519 = vcmp.lt.s32.totalorder %v764, 15
        %vm1520 = vcmp.lt.s32.totalorder %v765, 15
        %vm1521 = vcmp.lt.s32.totalorder %v766, 15
        %vm1522 = vcmp.lt.s32.totalorder %v767, 15
        %vm1523 = vcmp.lt.s32.totalorder %v768, 15
        %vm1524 = vcmp.lt.s32.totalorder %v769, 15
        %vm1525 = vcmp.lt.s32.totalorder %v770, 15
        %vm1526 = vcmp.lt.s32.totalorder %v771, 15
        %vm1527 = vcmp.lt.s32.totalorder %v772, 15
        %vm1528 = vcmp.lt.s32.totalorder %v773, 15
        %vm1529 = vcmp.lt.s32.totalorder %v774, 15
        %vm1530 = vcmp.lt.s32.totalorder %v775, 15
        %vm1531 = vcmp.lt.s32.totalorder %v776, 15
        %vm1532 = vcmp.lt.s32.totalorder %v777, 15
        %vm1533 = vcmp.lt.s32.totalorder %v778, 15
        %vm1534 = vcmp.lt.s32.totalorder %v779, 15
        %vm1535 = vcmp.lt.s32.totalorder %v780, 15
        %vm1536 = vcmp.lt.s32.totalorder %v781, 15
        %vm1537 = vcmp.lt.s32.totalorder %v782, 15
        %vm1538 = vcmp.lt.s32.totalorder %v783, 15
        %vm1539 = vcmp.lt.s32.totalorder %v784, 15
        %vm1540 = vcmp.lt.s32.totalorder %v785, 15
        %vm1541 = vcmp.lt.s32.totalorder %v786, 15
        %vm1542 = vcmp.lt.s32.totalorder %v787, 15
        %vm1543 = vcmp.lt.s32.totalorder %v788, 15
        %vm1544 = vcmp.lt.s32.totalorder %v789, 15
        %vm1545 = vcmp.lt.s32.totalorder %v790, 15
        %vm1546 = vcmp.lt.s32.totalorder %v791, 15
        %vm1547 = vcmp.lt.s32.totalorder %v792, 15
        %vm1548 = vcmp.lt.s32.totalorder %v793, 15
        %vm1549 = vcmp.lt.s32.totalorder %v794, 15
        %vm1550 = vcmp.lt.s32.totalorder %v795, 15
        %v1551 = vrot.slane %v1168, 1
        %v1552 = vrot.slane %v1173, 1
        %v1553 = vrot.slane %v1178, 1
        %v1554 = vrot.slane %v1183, 1
        %v1555 = vrot.slane %v1188, 1
        %v1556 = vrot.slane %v1193, 1
        %v1557 = vrot.slane %v1198, 1
        %v1558 = vrot.slane %v1203, 1
        %v1559 = vrot.slane %v1208, 1
        %v1560 = vrot.slane %v1213, 1
        %v1561 = vrot.slane %v1218, 1
        %v1562 = vrot.slane %v1223, 1
        %v1563 = vrot.slane %v1228, 1
        %v1564 = vrot.slane %v1233, 1
        %v1565 = vrot.slane %v1238, 1
        %v1566 = vrot.slane %v1243, 1
        %v1567 = vrot.slane %v1248, 1
        %v1568 = vrot.slane %v1253, 1
        %v1569 = vrot.slane %v1258, 1
        %v1570 = vrot.slane %v1263, 1
        %v1571 = vrot.slane %v1268, 1
        %v1572 = vrot.slane %v1273, 1
        %v1573 = vrot.slane %v1278, 1
        %v1574 = vrot.slane %v1283, 1
        %v1575 = vrot.slane %v1288, 1
        %v1576 = vrot.slane %v1293, 1
        %v1577 = vrot.slane %v1298, 1
        %v1578 = vrot.slane %v1303, 1
        %v1579 = vrot.slane %v1308, 1
        %v1580 = vrot.slane %v1313, 1
        %v1581 = vrot.slane %v1318, 1
        %v1582 = vrot.slane %v1323, 1
        %vm1583 = vcmp.lt.s32.totalorder %v380, 7
        %v1584 = vsel %vm1583, %v1581, %v1582
        %v1585 = vsel %vm1583, %v1580, %v1581
        %v1586 = vsel %vm1583, %v1579, %v1580
        %v1587 = vsel %vm1583, %v1578, %v1579
        %v1588 = vsel %vm1583, %v1577, %v1578
        %v1589 = vsel %vm1583, %v1576, %v1577
        %v1590 = vsel %vm1583, %v1575, %v1576
        %v1591 = vsel %vm1583, %v1574, %v1575
        %v1592 = vsel %vm1583, %v1573, %v1574
        %v1593 = vsel %vm1583, %v1572, %v1573
        %v1594 = vsel %vm1583, %v1571, %v1572
        %v1595 = vsel %vm1583, %v1570, %v1571
        %v1596 = vsel %vm1583, %v1569, %v1570
        %v1597 = vsel %vm1583, %v1568, %v1569
        %v1598 = vsel %vm1583, %v1567, %v1568
        %v1599 = vsel %vm1583, %v1566, %v1567
        %v1600 = vsel %vm1583, %v1565, %v1566
        %v1601 = vsel %vm1583, %v1564, %v1565
        %v1602 = vsel %vm1583, %v1563, %v1564
        %v1603 = vsel %vm1583, %v1562, %v1563
        %v1604 = vsel %vm1583, %v1561, %v1562
        %v1605 = vsel %vm1583, %v1560, %v1561
        %v1606 = vsel %vm1583, %v1559, %v1560
        %v1607 = vsel %vm1583, %v1558, %v1559
        %v1608 = vsel %vm1583, %v1557, %v1558
        %v1609 = vsel %vm1583, %v1556, %v1557
        %v1610 = vsel %vm1583, %v1555, %v1556
        %v1611 = vsel %vm1583, %v1554, %v1555
        %v1612 = vsel %vm1583, %v1553, %v1554
        %v1613 = vsel %vm1583, %v1552, %v1553
        %v1614 = vsel %vm1583, %v1551, %v1552
        %v1615 = vsel %vm1583, %v1582, %v1551
        %v1616 = vsel %vm1519, 1, 0
        %v1617 = vsel %vm1520, 1, 0
        %v1618 = vsel %vm1521, 1, 0
        %v1619 = vsel %vm1522, 1, 0
        %v1620 = vsel %vm1523, 1, 0
        %v1621 = vsel %vm1524, 1, 0
        %v1622 = vsel %vm1525, 1, 0
        %v1623 = vsel %vm1526, 1, 0
        %v1624 = vsel %vm1527, 1, 0
        %v1625 = vsel %vm1528, 1, 0
        %v1626 = vsel %vm1529, 1, 0
        %v1627 = vsel %vm1530, 1, 0
        %v1628 = vsel %vm1531, 1, 0
        %v1629 = vsel %vm1532, 1, 0
        %v1630 = vsel %vm1533, 1, 0
        %v1631 = vsel %vm1534, 1, 0
        %v1632 = vsel %vm1535, 1, 0
        %v1633 = vsel %vm1536, 1, 0
        %v1634 = vsel %vm1537, 1, 0
        %v1635 = vsel %vm1538, 1, 0
        %v1636 = vsel %vm1539, 1, 0
        %v1637 = vsel %vm1540, 1, 0
        %v1638 = vsel %vm1541, 1, 0
        %v1639 = vsel %vm1542, 1, 0
        %v1640 = vsel %vm1543, 1, 0
        %v1641 = vsel %vm1544, 1, 0
        %v1642 = vsel %vm1545, 1, 0
        %v1643 = vsel %vm1546, 1, 0
        %v1644 = vsel %vm1547, 1, 0
        %v1645 = vsel %vm1548, 1, 0
        %v1646 = vsel %vm1549, 1, 0
        %v1647 = vsel %vm1550, 1, 0
        %vm1648 = vcmp.eq.s32.totalorder %v1616, 1
        %vm1649 = vcmp.eq.s32.totalorder %v1617, 1
        %vm1650 = vcmp.eq.s32.totalorder %v1618, 1
        %vm1651 = vcmp.eq.s32.totalorder %v1619, 1
        %vm1652 = vcmp.eq.s32.totalorder %v1620, 1
        %vm1653 = vcmp.eq.s32.totalorder %v1621, 1
        %vm1654 = vcmp.eq.s32.totalorder %v1622, 1
        %vm1655 = vcmp.eq.s32.totalorder %v1623, 1
        %vm1656 = vcmp.eq.s32.totalorder %v1624, 1
        %vm1657 = vcmp.eq.s32.totalorder %v1625, 1
        %vm1658 = vcmp.eq.s32.totalorder %v1626, 1
        %vm1659 = vcmp.eq.s32.totalorder %v1627, 1
        %vm1660 = vcmp.eq.s32.totalorder %v1628, 1
        %vm1661 = vcmp.eq.s32.totalorder %v1629, 1
        %vm1662 = vcmp.eq.s32.totalorder %v1630, 1
        %vm1663 = vcmp.eq.s32.totalorder %v1631, 1
        %vm1664 = vcmp.eq.s32.totalorder %v1632, 1
        %vm1665 = vcmp.eq.s32.totalorder %v1633, 1
        %vm1666 = vcmp.eq.s32.totalorder %v1634, 1
        %vm1667 = vcmp.eq.s32.totalorder %v1635, 1
        %vm1668 = vcmp.eq.s32.totalorder %v1636, 1
        %vm1669 = vcmp.eq.s32.totalorder %v1637, 1
        %vm1670 = vcmp.eq.s32.totalorder %v1638, 1
        %vm1671 = vcmp.eq.s32.totalorder %v1639, 1
        %vm1672 = vcmp.eq.s32.totalorder %v1640, 1
        %vm1673 = vcmp.eq.s32.totalorder %v1641, 1
        %vm1674 = vcmp.eq.s32.totalorder %v1642, 1
        %vm1675 = vcmp.eq.s32.totalorder %v1643, 1
        %vm1676 = vcmp.eq.s32.totalorder %v1644, 1
        %vm1677 = vcmp.eq.s32.totalorder %v1645, 1
        %vm1678 = vcmp.eq.s32.totalorder %v1646, 1
        %vm1679 = vcmp.eq.s32.totalorder %v1647, 1
        %v1680 = vsel %vm1648, %v1614, 0.0
        %v1681 = vsel %vm1649, %v1613, 0.0
        %v1682 = vsel %vm1650, %v1612, 0.0
        %v1683 = vsel %vm1651, %v1611, 0.0
        %v1684 = vsel %vm1652, %v1610, 0.0
        %v1685 = vsel %vm1653, %v1609, 0.0
        %v1686 = vsel %vm1654, %v1608, 0.0
        %v1687 = vsel %vm1655, %v1607, 0.0
        %v1688 = vsel %vm1656, %v1606, 0.0
        %v1689 = vsel %vm1657, %v1605, 0.0
        %v1690 = vsel %vm1658, %v1604, 0.0
        %v1691 = vsel %vm1659, %v1603, 0.0
        %v1692 = vsel %vm1660, %v1602, 0.0
        %v1693 = vsel %vm1661, %v1601, 0.0
        %v1694 = vsel %vm1662, %v1600, 0.0
        %v1695 = vsel %vm1663, %v1599, 0.0
        %v1696 = vsel %vm1664, %v1598, 0.0
        %v1697 = vsel %vm1665, %v1597, 0.0
        %v1698 = vsel %vm1666, %v1596, 0.0
        %v1699 = vsel %vm1667, %v1595, 0.0
        %v1700 = vsel %vm1668, %v1594, 0.0
        %v1701 = vsel %vm1669, %v1593, 0.0
        %v1702 = vsel %vm1670, %v1592, 0.0
        %v1703 = vsel %vm1671, %v1591, 0.0
        %v1704 = vsel %vm1672, %v1590, 0.0
        %v1705 = vsel %vm1673, %v1589, 0.0
        %v1706 = vsel %vm1674, %v1588, 0.0
        %v1707 = vsel %vm1675, %v1587, 0.0
        %v1708 = vsel %vm1676, %v1586, 0.0
        %v1709 = vsel %vm1677, %v1585, 0.0
        %v1710 = vsel %vm1678, %v1584, 0.0
        %v1711 = vsel %vm1679, %v1615, 0.0
        %v1712 = vadd.f32 %v1487, %v913
        %v1713 = vadd.f32 %v1488, %v919
        %v1714 = vadd.f32 %v1489, %v925
        %v1715 = vadd.f32 %v1490, %v931
        %v1716 = vadd.f32 %v1491, %v937
        %v1717 = vadd.f32 %v1492, %v943
        %v1718 = vadd.f32 %v1493, %v949
        %v1719 = vadd.f32 %v1494, %v955
        %v1720 = vadd.f32 %v1495, %v961
        %v1721 = vadd.f32 %v1496, %v967
        %v1722 = vadd.f32 %v1497, %v973
        %v1723 = vadd.f32 %v1498, %v979
        %v1724 = vadd.f32 %v1499, %v985
        %v1725 = vadd.f32 %v1500, %v991
        %v1726 = vadd.f32 %v1501, %v997
        %v1727 = vadd.f32 %v1502, %v1003
        %v1728 = vadd.f32 %v1503, %v1009
        %v1729 = vadd.f32 %v1504, %v1015
        %v1730 = vadd.f32 %v1505, %v1021
        %v1731 = vadd.f32 %v1506, %v1027
        %v1732 = vadd.f32 %v1507, %v1033
        %v1733 = vadd.f32 %v1508, %v1039
        %v1734 = vadd.f32 %v1509, %v1045
        %v1735 = vadd.f32 %v1510, %v1051
        %v1736 = vadd.f32 %v1511, %v1057
        %v1737 = vadd.f32 %v1512, %v1063
        %v1738 = vadd.f32 %v1513, %v1069
        %v1739 = vadd.f32 %v1514, %v1075
        %v1740 = vadd.f32 %v1515, %v1081
        %v1741 = vadd.f32 %v1516, %v1087
        %v1742 = vadd.f32 %v1517, %v1093
        %v1743 = vadd.f32 %v1518, %v1099
        %v1744 = vadd.f32 %v1712, %v1680
        %v1745 = vadd.f32 %v1713, %v1681
        %v1746 = vadd.f32 %v1714, %v1682
        %v1747 = vadd.f32 %v1715, %v1683
        %v1748 = vadd.f32 %v1716, %v1684
        %v1749 = vadd.f32 %v1717, %v1685
        %v1750 = vadd.f32 %v1718, %v1686
        %v1751 = vadd.f32 %v1719, %v1687
        %v1752 = vadd.f32 %v1720, %v1688
        %v1753 = vadd.f32 %v1721, %v1689
        %v1754 = vadd.f32 %v1722, %v1690
        %v1755 = vadd.f32 %v1723, %v1691
        %v1756 = vadd.f32 %v1724, %v1692
        %v1757 = vadd.f32 %v1725, %v1693
        %v1758 = vadd.f32 %v1726, %v1694
        %v1759 = vadd.f32 %v1727, %v1695
        %v1760 = vadd.f32 %v1728, %v1696
        %v1761 = vadd.f32 %v1729, %v1697
        %v1762 = vadd.f32 %v1730, %v1698
        %v1763 = vadd.f32 %v1731, %v1699
        %v1764 = vadd.f32 %v1732, %v1700
        %v1765 = vadd.f32 %v1733, %v1701
        %v1766 = vadd.f32 %v1734, %v1702
        %v1767 = vadd.f32 %v1735, %v1703
        %v1768 = vadd.f32 %v1736, %v1704
        %v1769 = vadd.f32 %v1737, %v1705
        %v1770 = vadd.f32 %v1738, %v1706
        %v1771 = vadd.f32 %v1739, %v1707
        %v1772 = vadd.f32 %v1740, %v1708
        %v1773 = vadd.f32 %v1741, %v1709
        %v1774 = vadd.f32 %v1742, %v1710
        %v1775 = vadd.f32 %v1743, %v1711
        %v1776 = vlaneseq
        %v1777 = vshrl.u32 %v1776, 7
        %v1778 = vsub.s32 0, %v1777
        %v1779 = vrot.slane %v372, %v1778
        %v1780 = vadd.f32 %v1744, %v1779
        %v1781 = vadd.f32 %v1745, %v1779
        %v1782 = vadd.f32 %v1746, %v1779
        %v1783 = vadd.f32 %v1747, %v1779
        %v1784 = vadd.f32 %v1748, %v1779
        %v1785 = vadd.f32 %v1749, %v1779
        %v1786 = vadd.f32 %v1750, %v1779
        %v1787 = vadd.f32 %v1751, %v1779
        %v1788 = vadd.f32 %v1752, %v1779
        %v1789 = vadd.f32 %v1753, %v1779
        %v1790 = vadd.f32 %v1754, %v1779
        %v1791 = vadd.f32 %v1755, %v1779
        %v1792 = vadd.f32 %v1756, %v1779
        %v1793 = vadd.f32 %v1757, %v1779
        %v1794 = vadd.f32 %v1758, %v1779
        %v1795 = vadd.f32 %v1759, %v1779
        %v1796 = vadd.f32 %v1760, %v1779
        %v1797 = vadd.f32 %v1761, %v1779
        %v1798 = vadd.f32 %v1762, %v1779
        %v1799 = vadd.f32 %v1763, %v1779
        %v1800 = vadd.f32 %v1764, %v1779
        %v1801 = vadd.f32 %v1765, %v1779
        %v1802 = vadd.f32 %v1766, %v1779
        %v1803 = vadd.f32 %v1767, %v1779
        %v1804 = vadd.f32 %v1768, %v1779
        %v1805 = vadd.f32 %v1769, %v1779
        %v1806 = vadd.f32 %v1770, %v1779
        %v1807 = vadd.f32 %v1771, %v1779
        %v1808 = vadd.f32 %v1772, %v1779
        %v1809 = vadd.f32 %v1773, %v1779
        %v1810 = vadd.f32 %v1774, %v1779
        %v1811 = vadd.f32 %v1775, %v1779
        %1812 = vadd.xlane.f32.xlu0 %v1780
        %v1813 = vpop.xlane.xlu0 %1812
        %1814 = vadd.xlane.f32.xlu0 %v1781
        %v1815 = vpop.xlane.xlu0 %1814
        %1816 = vadd.xlane.f32.xlu0 %v1782
        %v1817 = vpop.xlane.xlu0 %1816
        %1818 = vadd.xlane.f32.xlu0 %v1783
        %v1819 = vpop.xlane.xlu0 %1818
        %1820 = vadd.xlane.f32.xlu0 %v1784
        %v1821 = vpop.xlane.xlu0 %1820
        %1822 = vadd.xlane.f32.xlu0 %v1785
        %v1823 = vpop.xlane.xlu0 %1822
        %1824 = vadd.xlane.f32.xlu0 %v1786
        %v1825 = vpop.xlane.xlu0 %1824
        %1826 = vadd.xlane.f32.xlu0 %v1787
        %v1827 = vpop.xlane.xlu0 %1826
        %1828 = vadd.xlane.f32.xlu0 %v1788
        %v1829 = vpop.xlane.xlu0 %1828
        %1830 = vadd.xlane.f32.xlu0 %v1789
        %v1831 = vpop.xlane.xlu0 %1830
        %1832 = vadd.xlane.f32.xlu0 %v1790
        %v1833 = vpop.xlane.xlu0 %1832
        %1834 = vadd.xlane.f32.xlu0 %v1791
        %v1835 = vpop.xlane.xlu0 %1834
        %1836 = vadd.xlane.f32.xlu0 %v1792
        %v1837 = vpop.xlane.xlu0 %1836
        %1838 = vadd.xlane.f32.xlu0 %v1793
        %v1839 = vpop.xlane.xlu0 %1838
        %1840 = vadd.xlane.f32.xlu0 %v1794
        %v1841 = vpop.xlane.xlu0 %1840
        %1842 = vadd.xlane.f32.xlu0 %v1795
        %v1843 = vpop.xlane.xlu0 %1842
        %1844 = vadd.xlane.f32.xlu0 %v1796
        %v1845 = vpop.xlane.xlu0 %1844
        %1846 = vadd.xlane.f32.xlu0 %v1797
        %v1847 = vpop.xlane.xlu0 %1846
        %1848 = vadd.xlane.f32.xlu0 %v1798
        %v1849 = vpop.xlane.xlu0 %1848
        %1850 = vadd.xlane.f32.xlu0 %v1799
        %v1851 = vpop.xlane.xlu0 %1850
        %1852 = vadd.xlane.f32.xlu0 %v1800
        %v1853 = vpop.xlane.xlu0 %1852
        %1854 = vadd.xlane.f32.xlu0 %v1801
        %v1855 = vpop.xlane.xlu0 %1854
        %1856 = vadd.xlane.f32.xlu0 %v1802
        %v1857 = vpop.xlane.xlu0 %1856
        %1858 = vadd.xlane.f32.xlu0 %v1803
        %v1859 = vpop.xlane.xlu0 %1858
        %1860 = vadd.xlane.f32.xlu0 %v1804
        %v1861 = vpop.xlane.xlu0 %1860
        %1862 = vadd.xlane.f32.xlu0 %v1805
        %v1863 = vpop.xlane.xlu0 %1862
        %1864 = vadd.xlane.f32.xlu0 %v1806
        %v1865 = vpop.xlane.xlu0 %1864
        %1866 = vadd.xlane.f32.xlu0 %v1807
        %v1867 = vpop.xlane.xlu0 %1866
        %1868 = vadd.xlane.f32.xlu0 %v1808
        %v1869 = vpop.xlane.xlu0 %1868
        %1870 = vadd.xlane.f32.xlu0 %v1809
        %v1871 = vpop.xlane.xlu0 %1870
        %1872 = vadd.xlane.f32.xlu0 %v1810
        %v1873 = vpop.xlane.xlu0 %1872
        %1874 = vadd.xlane.f32.xlu0 %v1811
        %v1875 = vpop.xlane.xlu0 %1874
        %v1876 = vrcp.pop 128.0
        %v1877 = vmul.f32 %v1813, %v1876
        %v1878 = vmul.f32 %v1815, %v1876
        %v1879 = vmul.f32 %v1817, %v1876
        %v1880 = vmul.f32 %v1819, %v1876
        %v1881 = vmul.f32 %v1821, %v1876
        %v1882 = vmul.f32 %v1823, %v1876
        %v1883 = vmul.f32 %v1825, %v1876
        %v1884 = vmul.f32 %v1827, %v1876
        %v1885 = vmul.f32 %v1829, %v1876
        %v1886 = vmul.f32 %v1831, %v1876
        %v1887 = vmul.f32 %v1833, %v1876
        %v1888 = vmul.f32 %v1835, %v1876
        %v1889 = vmul.f32 %v1837, %v1876
        %v1890 = vmul.f32 %v1839, %v1876
        %v1891 = vmul.f32 %v1841, %v1876
        %v1892 = vmul.f32 %v1843, %v1876
        %v1893 = vmul.f32 %v1845, %v1876
        %v1894 = vmul.f32 %v1847, %v1876
        %v1895 = vmul.f32 %v1849, %v1876
        %v1896 = vmul.f32 %v1851, %v1876
        %v1897 = vmul.f32 %v1853, %v1876
        %v1898 = vmul.f32 %v1855, %v1876
        %v1899 = vmul.f32 %v1857, %v1876
        %v1900 = vmul.f32 %v1859, %v1876
        %v1901 = vmul.f32 %v1861, %v1876
        %v1902 = vmul.f32 %v1863, %v1876
        %v1903 = vmul.f32 %v1865, %v1876
        %v1904 = vmul.f32 %v1867, %v1876
        %v1905 = vmul.f32 %v1869, %v1876
        %v1906 = vmul.f32 %v1871, %v1876
        %v1907 = vmul.f32 %v1873, %v1876
        %v1908 = vmul.f32 %v1875, %v1876
        %v1909 = vsub.f32 %v1780, %v1877
        %v1910 = vsub.f32 %v1781, %v1878
        %v1911 = vsub.f32 %v1782, %v1879
        %v1912 = vsub.f32 %v1783, %v1880
        %v1913 = vsub.f32 %v1784, %v1881
        %v1914 = vsub.f32 %v1785, %v1882
        %v1915 = vsub.f32 %v1786, %v1883
        %v1916 = vsub.f32 %v1787, %v1884
        %v1917 = vsub.f32 %v1788, %v1885
        %v1918 = vsub.f32 %v1789, %v1886
        %v1919 = vsub.f32 %v1790, %v1887
        %v1920 = vsub.f32 %v1791, %v1888
        %v1921 = vsub.f32 %v1792, %v1889
        %v1922 = vsub.f32 %v1793, %v1890
        %v1923 = vsub.f32 %v1794, %v1891
        %v1924 = vsub.f32 %v1795, %v1892
        %v1925 = vsub.f32 %v1796, %v1893
        %v1926 = vsub.f32 %v1797, %v1894
        %v1927 = vsub.f32 %v1798, %v1895
        %v1928 = vsub.f32 %v1799, %v1896
        %v1929 = vsub.f32 %v1800, %v1897
        %v1930 = vsub.f32 %v1801, %v1898
        %v1931 = vsub.f32 %v1802, %v1899
        %v1932 = vsub.f32 %v1803, %v1900
        %v1933 = vsub.f32 %v1804, %v1901
        %v1934 = vsub.f32 %v1805, %v1902
        %v1935 = vsub.f32 %v1806, %v1903
        %v1936 = vsub.f32 %v1807, %v1904
        %v1937 = vsub.f32 %v1808, %v1905
        %v1938 = vsub.f32 %v1809, %v1906
        %v1939 = vsub.f32 %v1810, %v1907
        %v1940 = vsub.f32 %v1811, %v1908
        %v1941 = vmul.f32 %v1909, %v1909
        %v1942 = vmul.f32 %v1910, %v1910
        %v1943 = vmul.f32 %v1911, %v1911
        %v1944 = vmul.f32 %v1912, %v1912
        %v1945 = vmul.f32 %v1913, %v1913
        %v1946 = vmul.f32 %v1914, %v1914
        %v1947 = vmul.f32 %v1915, %v1915
        %v1948 = vmul.f32 %v1916, %v1916
        %v1949 = vmul.f32 %v1917, %v1917
        %v1950 = vmul.f32 %v1918, %v1918
        %v1951 = vmul.f32 %v1919, %v1919
        %v1952 = vmul.f32 %v1920, %v1920
        %v1953 = vmul.f32 %v1921, %v1921
        %v1954 = vmul.f32 %v1922, %v1922
        %v1955 = vmul.f32 %v1923, %v1923
        %v1956 = vmul.f32 %v1924, %v1924
        %v1957 = vmul.f32 %v1925, %v1925
        %v1958 = vmul.f32 %v1926, %v1926
        %v1959 = vmul.f32 %v1927, %v1927
        %v1960 = vmul.f32 %v1928, %v1928
        %v1961 = vmul.f32 %v1929, %v1929
        %v1962 = vmul.f32 %v1930, %v1930
        %v1963 = vmul.f32 %v1931, %v1931
        %v1964 = vmul.f32 %v1932, %v1932
        %v1965 = vmul.f32 %v1933, %v1933
        %v1966 = vmul.f32 %v1934, %v1934
        %v1967 = vmul.f32 %v1935, %v1935
        %v1968 = vmul.f32 %v1936, %v1936
        %v1969 = vmul.f32 %v1937, %v1937
        %v1970 = vmul.f32 %v1938, %v1938
        %v1971 = vmul.f32 %v1939, %v1939
        %v1972 = vmul.f32 %v1940, %v1940
        %1973 = vadd.xlane.f32.xlu0 %v1941
        %v1974 = vpop.xlane.xlu0 %1973
        %1975 = vadd.xlane.f32.xlu0 %v1942
        %v1976 = vpop.xlane.xlu0 %1975
        %1977 = vadd.xlane.f32.xlu0 %v1943
        %v1978 = vpop.xlane.xlu0 %1977
        %1979 = vadd.xlane.f32.xlu0 %v1944
        %v1980 = vpop.xlane.xlu0 %1979
        %1981 = vadd.xlane.f32.xlu0 %v1945
        %v1982 = vpop.xlane.xlu0 %1981
        %1983 = vadd.xlane.f32.xlu0 %v1946
        %v1984 = vpop.xlane.xlu0 %1983
        %1985 = vadd.xlane.f32.xlu0 %v1947
        %v1986 = vpop.xlane.xlu0 %1985
        %1987 = vadd.xlane.f32.xlu0 %v1948
        %v1988 = vpop.xlane.xlu0 %1987
        %1989 = vadd.xlane.f32.xlu0 %v1949
        %v1990 = vpop.xlane.xlu0 %1989
        %1991 = vadd.xlane.f32.xlu0 %v1950
        %v1992 = vpop.xlane.xlu0 %1991
        %1993 = vadd.xlane.f32.xlu0 %v1951
        %v1994 = vpop.xlane.xlu0 %1993
        %1995 = vadd.xlane.f32.xlu0 %v1952
        %v1996 = vpop.xlane.xlu0 %1995
        %1997 = vadd.xlane.f32.xlu0 %v1953
        %v1998 = vpop.xlane.xlu0 %1997
        %1999 = vadd.xlane.f32.xlu0 %v1954
        %v2000 = vpop.xlane.xlu0 %1999
        %2001 = vadd.xlane.f32.xlu0 %v1955
        %v2002 = vpop.xlane.xlu0 %2001
        %2003 = vadd.xlane.f32.xlu0 %v1956
        %v2004 = vpop.xlane.xlu0 %2003
        %2005 = vadd.xlane.f32.xlu0 %v1957
        %v2006 = vpop.xlane.xlu0 %2005
        %2007 = vadd.xlane.f32.xlu0 %v1958
        %v2008 = vpop.xlane.xlu0 %2007
        %2009 = vadd.xlane.f32.xlu0 %v1959
        %v2010 = vpop.xlane.xlu0 %2009
        %2011 = vadd.xlane.f32.xlu0 %v1960
        %v2012 = vpop.xlane.xlu0 %2011
        %2013 = vadd.xlane.f32.xlu0 %v1961
        %v2014 = vpop.xlane.xlu0 %2013
        %2015 = vadd.xlane.f32.xlu0 %v1962
        %v2016 = vpop.xlane.xlu0 %2015
        %2017 = vadd.xlane.f32.xlu0 %v1963
        %v2018 = vpop.xlane.xlu0 %2017
        %2019 = vadd.xlane.f32.xlu0 %v1964
        %v2020 = vpop.xlane.xlu0 %2019
        %2021 = vadd.xlane.f32.xlu0 %v1965
        %v2022 = vpop.xlane.xlu0 %2021
        %2023 = vadd.xlane.f32.xlu0 %v1966
        %v2024 = vpop.xlane.xlu0 %2023
        %2025 = vadd.xlane.f32.xlu0 %v1967
        %v2026 = vpop.xlane.xlu0 %2025
        %2027 = vadd.xlane.f32.xlu0 %v1968
        %v2028 = vpop.xlane.xlu0 %2027
        %2029 = vadd.xlane.f32.xlu0 %v1969
        %v2030 = vpop.xlane.xlu0 %2029
        %2031 = vadd.xlane.f32.xlu0 %v1970
        %v2032 = vpop.xlane.xlu0 %2031
        %2033 = vadd.xlane.f32.xlu0 %v1971
        %v2034 = vpop.xlane.xlu0 %2033
        %2035 = vadd.xlane.f32.xlu0 %v1972
        %v2036 = vpop.xlane.xlu0 %2035
        %v2037 = vmul.f32 %v1974, %v1876
        %v2038 = vmul.f32 %v1976, %v1876
        %v2039 = vmul.f32 %v1978, %v1876
        %v2040 = vmul.f32 %v1980, %v1876
        %v2041 = vmul.f32 %v1982, %v1876
        %v2042 = vmul.f32 %v1984, %v1876
        %v2043 = vmul.f32 %v1986, %v1876
        %v2044 = vmul.f32 %v1988, %v1876
        %v2045 = vmul.f32 %v1990, %v1876
        %v2046 = vmul.f32 %v1992, %v1876
        %v2047 = vmul.f32 %v1994, %v1876
        %v2048 = vmul.f32 %v1996, %v1876
        %v2049 = vmul.f32 %v1998, %v1876
        %v2050 = vmul.f32 %v2000, %v1876
        %v2051 = vmul.f32 %v2002, %v1876
        %v2052 = vmul.f32 %v2004, %v1876
        %v2053 = vmul.f32 %v2006, %v1876
        %v2054 = vmul.f32 %v2008, %v1876
        %v2055 = vmul.f32 %v2010, %v1876
        %v2056 = vmul.f32 %v2012, %v1876
        %v2057 = vmul.f32 %v2014, %v1876
        %v2058 = vmul.f32 %v2016, %v1876
        %v2059 = vmul.f32 %v2018, %v1876
        %v2060 = vmul.f32 %v2020, %v1876
        %v2061 = vmul.f32 %v2022, %v1876
        %v2062 = vmul.f32 %v2024, %v1876
        %v2063 = vmul.f32 %v2026, %v1876
        %v2064 = vmul.f32 %v2028, %v1876
        %v2065 = vmul.f32 %v2030, %v1876
        %v2066 = vmul.f32 %v2032, %v1876
        %v2067 = vmul.f32 %v2034, %v1876
        %v2068 = vmul.f32 %v2036, %v1876
        %v2069 = vadd.f32 %v2037, 1e-05
        %v2070 = vadd.f32 %v2038, 1e-05
        %v2071 = vadd.f32 %v2039, 1e-05
        %v2072 = vadd.f32 %v2040, 1e-05
        %v2073 = vadd.f32 %v2041, 1e-05
        %v2074 = vadd.f32 %v2042, 1e-05
        %v2075 = vadd.f32 %v2043, 1e-05
        %v2076 = vadd.f32 %v2044, 1e-05
        %v2077 = vadd.f32 %v2045, 1e-05
        %v2078 = vadd.f32 %v2046, 1e-05
        %v2079 = vadd.f32 %v2047, 1e-05
        %v2080 = vadd.f32 %v2048, 1e-05
        %v2081 = vadd.f32 %v2049, 1e-05
        %v2082 = vadd.f32 %v2050, 1e-05
        %v2083 = vadd.f32 %v2051, 1e-05
        %v2084 = vadd.f32 %v2052, 1e-05
        %v2085 = vadd.f32 %v2053, 1e-05
        %v2086 = vadd.f32 %v2054, 1e-05
        %v2087 = vadd.f32 %v2055, 1e-05
        %v2088 = vadd.f32 %v2056, 1e-05
        %v2089 = vadd.f32 %v2057, 1e-05
        %v2090 = vadd.f32 %v2058, 1e-05
        %v2091 = vadd.f32 %v2059, 1e-05
        %v2092 = vadd.f32 %v2060, 1e-05
        %v2093 = vadd.f32 %v2061, 1e-05
        %v2094 = vadd.f32 %v2062, 1e-05
        %v2095 = vadd.f32 %v2063, 1e-05
        %v2096 = vadd.f32 %v2064, 1e-05
        %v2097 = vadd.f32 %v2065, 1e-05
        %v2098 = vadd.f32 %v2066, 1e-05
        %v2099 = vadd.f32 %v2067, 1e-05
        %v2100 = vadd.f32 %v2068, 1e-05
        %v2101 = vrsqrt.pop %v2069
        %v2102 = vrsqrt.pop %v2070
        %v2103 = vrsqrt.pop %v2071
        %v2104 = vrsqrt.pop %v2072
        %v2105 = vrsqrt.pop %v2073
        %v2106 = vrsqrt.pop %v2074
        %v2107 = vrsqrt.pop %v2075
        %v2108 = vrsqrt.pop %v2076
        %v2109 = vrsqrt.pop %v2077
        %v2110 = vrsqrt.pop %v2078
        %v2111 = vrsqrt.pop %v2079
        %v2112 = vrsqrt.pop %v2080
        %v2113 = vrsqrt.pop %v2081
        %v2114 = vrsqrt.pop %v2082
        %v2115 = vrsqrt.pop %v2083
        %v2116 = vrsqrt.pop %v2084
        %v2117 = vrsqrt.pop %v2085
        %v2118 = vrsqrt.pop %v2086
        %v2119 = vrsqrt.pop %v2087
        %v2120 = vrsqrt.pop %v2088
        %v2121 = vrsqrt.pop %v2089
        %v2122 = vrsqrt.pop %v2090
        %v2123 = vrsqrt.pop %v2091
        %v2124 = vrsqrt.pop %v2092
        %v2125 = vrsqrt.pop %v2093
        %v2126 = vrsqrt.pop %v2094
        %v2127 = vrsqrt.pop %v2095
        %v2128 = vrsqrt.pop %v2096
        %v2129 = vrsqrt.pop %v2097
        %v2130 = vrsqrt.pop %v2098
        %v2131 = vrsqrt.pop %v2099
        %v2132 = vrsqrt.pop %v2100
        %v2133 = vmul.f32 %v1909, %v2101
        %v2134 = vmul.f32 %v1910, %v2102
        %v2135 = vmul.f32 %v1911, %v2103
        %v2136 = vmul.f32 %v1912, %v2104
        %v2137 = vmul.f32 %v1913, %v2105
        %v2138 = vmul.f32 %v1914, %v2106
        %v2139 = vmul.f32 %v1915, %v2107
        %v2140 = vmul.f32 %v1916, %v2108
        %v2141 = vmul.f32 %v1917, %v2109
        %v2142 = vmul.f32 %v1918, %v2110
        %v2143 = vmul.f32 %v1919, %v2111
        %v2144 = vmul.f32 %v1920, %v2112
        %v2145 = vmul.f32 %v1921, %v2113
        %v2146 = vmul.f32 %v1922, %v2114
        %v2147 = vmul.f32 %v1923, %v2115
        %v2148 = vmul.f32 %v1924, %v2116
        %v2149 = vmul.f32 %v1925, %v2117
        %v2150 = vmul.f32 %v1926, %v2118
        %v2151 = vmul.f32 %v1927, %v2119
        %v2152 = vmul.f32 %v1928, %v2120
        %v2153 = vmul.f32 %v1929, %v2121
        %v2154 = vmul.f32 %v1930, %v2122
        %v2155 = vmul.f32 %v1931, %v2123
        %v2156 = vmul.f32 %v1932, %v2124
        %v2157 = vmul.f32 %v1933, %v2125
        %v2158 = vmul.f32 %v1934, %v2126
        %v2159 = vmul.f32 %v1935, %v2127
        %v2160 = vmul.f32 %v1936, %v2128
        %v2161 = vmul.f32 %v1937, %v2129
        %v2162 = vmul.f32 %v1938, %v2130
        %v2163 = vmul.f32 %v1939, %v2131
        %v2164 = vmul.f32 %v1940, %v2132
        %v2165 = vlaneseq
        %v2166 = vshrl.u32 %v2165, 7
        %v2167 = vsub.s32 0, %v2166
        %v2168 = vrot.slane %v375, %v2167
        %v2169 = vmul.f32 %v2133, %v2168
        %v2170 = vmul.f32 %v2134, %v2168
        %v2171 = vmul.f32 %v2135, %v2168
        %v2172 = vmul.f32 %v2136, %v2168
        %v2173 = vmul.f32 %v2137, %v2168
        %v2174 = vmul.f32 %v2138, %v2168
        %v2175 = vmul.f32 %v2139, %v2168
        %v2176 = vmul.f32 %v2140, %v2168
        %v2177 = vmul.f32 %v2141, %v2168
        %v2178 = vmul.f32 %v2142, %v2168
        %v2179 = vmul.f32 %v2143, %v2168
        %v2180 = vmul.f32 %v2144, %v2168
        %v2181 = vmul.f32 %v2145, %v2168
        %v2182 = vmul.f32 %v2146, %v2168
        %v2183 = vmul.f32 %v2147, %v2168
        %v2184 = vmul.f32 %v2148, %v2168
        %v2185 = vmul.f32 %v2149, %v2168
        %v2186 = vmul.f32 %v2150, %v2168
        %v2187 = vmul.f32 %v2151, %v2168
        %v2188 = vmul.f32 %v2152, %v2168
        %v2189 = vmul.f32 %v2153, %v2168
        %v2190 = vmul.f32 %v2154, %v2168
        %v2191 = vmul.f32 %v2155, %v2168
        %v2192 = vmul.f32 %v2156, %v2168
        %v2193 = vmul.f32 %v2157, %v2168
        %v2194 = vmul.f32 %v2158, %v2168
        %v2195 = vmul.f32 %v2159, %v2168
        %v2196 = vmul.f32 %v2160, %v2168
        %v2197 = vmul.f32 %v2161, %v2168
        %v2198 = vmul.f32 %v2162, %v2168
        %v2199 = vmul.f32 %v2163, %v2168
        %v2200 = vmul.f32 %v2164, %v2168
        %v2201 = vlaneseq
        %v2202 = vshrl.u32 %v2201, 7
        %v2203 = vsub.s32 0, %v2202
        %v2204 = vrot.slane %v376, %v2203
        %v2205 = vadd.f32 %v2169, %v2204
        %v2206 = vadd.f32 %v2170, %v2204
        %v2207 = vadd.f32 %v2171, %v2204
        %v2208 = vadd.f32 %v2172, %v2204
        %v2209 = vadd.f32 %v2173, %v2204
        %v2210 = vadd.f32 %v2174, %v2204
        %v2211 = vadd.f32 %v2175, %v2204
        %v2212 = vadd.f32 %v2176, %v2204
        %v2213 = vadd.f32 %v2177, %v2204
        %v2214 = vadd.f32 %v2178, %v2204
        %v2215 = vadd.f32 %v2179, %v2204
        %v2216 = vadd.f32 %v2180, %v2204
        %v2217 = vadd.f32 %v2181, %v2204
        %v2218 = vadd.f32 %v2182, %v2204
        %v2219 = vadd.f32 %v2183, %v2204
        %v2220 = vadd.f32 %v2184, %v2204
        %v2221 = vadd.f32 %v2185, %v2204
        %v2222 = vadd.f32 %v2186, %v2204
        %v2223 = vadd.f32 %v2187, %v2204
        %v2224 = vadd.f32 %v2188, %v2204
        %v2225 = vadd.f32 %v2189, %v2204
        %v2226 = vadd.f32 %v2190, %v2204
        %v2227 = vadd.f32 %v2191, %v2204
        %v2228 = vadd.f32 %v2192, %v2204
        %v2229 = vadd.f32 %v2193, %v2204
        %v2230 = vadd.f32 %v2194, %v2204
        %v2231 = vadd.f32 %v2195, %v2204
        %v2232 = vadd.f32 %v2196, %v2204
        %v2233 = vadd.f32 %v2197, %v2204
        %v2234 = vadd.f32 %v2198, %v2204
        %v2235 = vadd.f32 %v2199, %v2204
        %v2236 = vadd.f32 %v2200, %v2204
        %v2237 = vmax.f32 %v2205, 0.0
        %v2238 = vmax.f32 %v2206, 0.0
        %v2239 = vmax.f32 %v2207, 0.0
        %v2240 = vmax.f32 %v2208, 0.0
        %v2241 = vmax.f32 %v2209, 0.0
        %v2242 = vmax.f32 %v2210, 0.0
        %v2243 = vmax.f32 %v2211, 0.0
        %v2244 = vmax.f32 %v2212, 0.0
        %v2245 = vmax.f32 %v2213, 0.0
        %v2246 = vmax.f32 %v2214, 0.0
        %v2247 = vmax.f32 %v2215, 0.0
        %v2248 = vmax.f32 %v2216, 0.0
        %v2249 = vmax.f32 %v2217, 0.0
        %v2250 = vmax.f32 %v2218, 0.0
        %v2251 = vmax.f32 %v2219, 0.0
        %v2252 = vmax.f32 %v2220, 0.0
        %v2253 = vmax.f32 %v2221, 0.0
        %v2254 = vmax.f32 %v2222, 0.0
        %v2255 = vmax.f32 %v2223, 0.0
        %v2256 = vmax.f32 %v2224, 0.0
        %v2257 = vmax.f32 %v2225, 0.0
        %v2258 = vmax.f32 %v2226, 0.0
        %v2259 = vmax.f32 %v2227, 0.0
        %v2260 = vmax.f32 %v2228, 0.0
        %v2261 = vmax.f32 %v2229, 0.0
        %v2262 = vmax.f32 %v2230, 0.0
        %v2263 = vmax.f32 %v2231, 0.0
        %v2264 = vmax.f32 %v2232, 0.0
        %v2265 = vmax.f32 %v2233, 0.0
        %v2266 = vmax.f32 %v2234, 0.0
        %v2267 = vmax.f32 %v2235, 0.0
        %v2268 = vmax.f32 %v2236, 0.0
        %v2269 = vld [vmem:[#allocation7] sm:$0xff]
        %v2270 = vld [vmem:[#allocation7 + $0x8] sm:$0xff]
        %v2271 = vld [vmem:[#allocation7 + $0x10] sm:$0xff]
        %v2272 = vld [vmem:[#allocation7 + $0x18] sm:$0xff]
        %v2273 = vld [vmem:[#allocation7 + $0x20] sm:$0xff]
        %v2274 = vld [vmem:[#allocation7 + $0x28] sm:$0xff]
        %v2275 = vld [vmem:[#allocation7 + $0x30] sm:$0xff]
        %v2276 = vld [vmem:[#allocation7 + $0x38] sm:$0xff]
        %v2277 = vld [vmem:[#allocation7 + $0x40] sm:$0xff]
        %v2278 = vld [vmem:[#allocation7 + $0x48] sm:$0xff]
        %v2279 = vld [vmem:[#allocation7 + $0x50] sm:$0xff]
        %v2280 = vld [vmem:[#allocation7 + $0x58] sm:$0xff]
        %v2281 = vld [vmem:[#allocation7 + $0x60] sm:$0xff]
        %v2282 = vld [vmem:[#allocation7 + $0x68] sm:$0xff]
        %v2283 = vld [vmem:[#allocation7 + $0x70] sm:$0xff]
        %v2284 = vld [vmem:[#allocation7 + $0x78] sm:$0xff]
        %v2285 = vld [vmem:[#allocation7 + $0x80] sm:$0xff]
        %v2286 = vld [vmem:[#allocation7 + $0x88] sm:$0xff]
        %v2287 = vld [vmem:[#allocation7 + $0x90] sm:$0xff]
        %v2288 = vld [vmem:[#allocation7 + $0x98] sm:$0xff]
        %v2289 = vld [vmem:[#allocation7 + $0xa0] sm:$0xff]
        %v2290 = vld [vmem:[#allocation7 + $0xa8] sm:$0xff]
        %v2291 = vld [vmem:[#allocation7 + $0xb0] sm:$0xff]
        %v2292 = vld [vmem:[#allocation7 + $0xb8] sm:$0xff]
        %v2293 = vld [vmem:[#allocation7 + $0xc0] sm:$0xff]
        %v2294 = vld [vmem:[#allocation7 + $0xc8] sm:$0xff]
        %v2295 = vld [vmem:[#allocation7 + $0xd0] sm:$0xff]
        %v2296 = vld [vmem:[#allocation7 + $0xd8] sm:$0xff]
        %v2297 = vld [vmem:[#allocation7 + $0xe0] sm:$0xff]
        %v2298 = vld [vmem:[#allocation7 + $0xe8] sm:$0xff]
        %v2299 = vld [vmem:[#allocation7 + $0xf0] sm:$0xff]
        %v2300 = vld [vmem:[#allocation7 + $0xf8] sm:$0xff]
        %v2301 = vld [vmem:[#allocation7 + $0x100] sm:$0xff]
        %v2302 = vld [vmem:[#allocation7 + $0x108] sm:$0xff]
        %v2303 = vld [vmem:[#allocation7 + $0x110] sm:$0xff]
        %v2304 = vld [vmem:[#allocation7 + $0x118] sm:$0xff]
        %v2305 = vld [vmem:[#allocation7 + $0x120] sm:$0xff]
        %v2306 = vld [vmem:[#allocation7 + $0x128] sm:$0xff]
        %v2307 = vld [vmem:[#allocation7 + $0x130] sm:$0xff]
        %v2308 = vld [vmem:[#allocation7 + $0x138] sm:$0xff]
        %v2309 = vld [vmem:[#allocation7 + $0x140] sm:$0xff]
        %v2310 = vld [vmem:[#allocation7 + $0x148] sm:$0xff]
        %v2311 = vld [vmem:[#allocation7 + $0x150] sm:$0xff]
        %v2312 = vld [vmem:[#allocation7 + $0x158] sm:$0xff]
        %v2313 = vld [vmem:[#allocation7 + $0x160] sm:$0xff]
        %v2314 = vld [vmem:[#allocation7 + $0x168] sm:$0xff]
        %v2315 = vld [vmem:[#allocation7 + $0x170] sm:$0xff]
        %v2316 = vld [vmem:[#allocation7 + $0x178] sm:$0xff]
        %2317 = vmatprep.subr.mxu0 %v2270
        %2318 = vmatpush1.msra.mxu0 %v2269
        %2319 = vmatprep.subr.mxu0 %v2273
        %2320 = vmatpush1.msra.mxu0 %v2272
        %2321 = vmatprep.subr.mxu0 %v2276
        %2322 = vmatpush1.msra.mxu0 %v2275
        %2323 = vmatprep.subr.mxu0 %v2279
        %2324 = vmatpush1.msra.mxu0 %v2278
        %2325 = vmatprep.subr.mxu0 %v2282
        %2326 = vmatpush1.msra.mxu0 %v2281
        %2327 = vmatprep.subr.mxu0 %v2285
        %2328 = vmatpush1.msra.mxu0 %v2284
        %2329 = vmatprep.subr.mxu0 %v2288
        %2330 = vmatpush1.msra.mxu0 %v2287
        %2331 = vmatprep.subr.mxu0 %v2291
        %2332 = vmatpush1.msra.mxu0 %v2290
        %2333 = vmatprep.subr.mxu0 %v2294
        %2334 = vmatpush1.msra.mxu0 %v2293
        %2335 = vmatprep.subr.mxu0 %v2297
        %2336 = vmatpush1.msra.mxu0 %v2296
        %2337 = vmatprep.subr.mxu0 %v2300
        %2338 = vmatpush1.msra.mxu0 %v2299
        %2339 = vmatprep.subr.mxu0 %v2303
        %2340 = vmatpush1.msra.mxu0 %v2302
        %2341 = vmatprep.subr.mxu0 %v2306
        %2342 = vmatpush1.msra.mxu0 %v2305
        %2343 = vmatprep.subr.mxu0 %v2309
        %2344 = vmatpush1.msra.mxu0 %v2308
        %2345 = vmatprep.subr.mxu0 %v2312
        %2346 = vmatpush1.msra.mxu0 %v2311
        %2347 = vmatprep.subr.mxu0 %v2315
        %2348 = vmatpush1.msra.mxu0 %v2314
        %2349 = vmatprep.subr.mxu0 0.0
        %2350 = vmatpush1.msra.mxu0 0.0
        %2351 = vmatprep.subr.mxu0 0.0
        %2352 = vmatpush1.msra.mxu0 0.0
        %2353 = vmatprep.subr.mxu0 0.0
        %2354 = vmatpush1.msra.mxu0 0.0
        %2355 = vmatprep.subr.mxu0 0.0
        %2356 = vmatpush1.msra.mxu0 0.0
        %2357 = vmatprep.subr.mxu0 0.0
        %2358 = vmatpush1.msra.mxu0 0.0
        %2359 = vmatprep.subr.mxu0 0.0
        %2360 = vmatpush1.msra.mxu0 0.0
        %2361 = vmatprep.subr.mxu0 0.0
        %2362 = vmatpush1.msra.mxu0 0.0
        %2363 = vmatprep.subr.mxu0 0.0
        %2364 = vmatpush1.msra.mxu0 0.0
        %2365 = vmatprep.subr.mxu0 0.0
        %2366 = vmatpush1.msra.mxu0 0.0
        %2367 = vmatprep.subr.mxu0 0.0
        %2368 = vmatpush1.msra.mxu0 0.0
        %2369 = vmatprep.subr.mxu0 0.0
        %2370 = vmatpush1.msra.mxu0 0.0
        %2371 = vmatprep.subr.mxu0 0.0
        %2372 = vmatpush1.msra.mxu0 0.0
        %2373 = vmatprep.subr.mxu0 0.0
        %2374 = vmatpush1.msra.mxu0 0.0
        %2375 = vmatprep.subr.mxu0 0.0
        %2376 = vmatpush1.msra.mxu0 0.0
        %2377 = vmatprep.subr.mxu0 0.0
        %2378 = vmatpush1.msra.mxu0 0.0
        %2379 = vmatprep.subr.mxu0 0.0
        %2380 = vmatpush1.msra.mxu0 0.0
        %2381 = vmatprep.mubr.f32.mxu0 0.0
        %2382 = vmatmul.mubr.f32.gmra.mrb[0].mxu0 %v2205
        %v2383 = vpop.f32.mrb[0].mxu0
        %v2384 = vadd.f32 0.0, %v2383
        %v2385 = vpop.f32.mrb[0].mxu0
        %v2386 = vadd.f32 0.0, %v2385
        %2387 = vmatprep.mubr.f32.mxu0 0.0
        %2388 = vmatmul.mubr.f32.gmra.mrb[0].mxu0 %v2206
        %v2389 = vpop.f32.mrb[0].mxu0
        %v2390 = vadd.f32 0.0, %v2389
        %v2391 = vpop.f32.mrb[0].mxu0
        %v2392 = vadd.f32 0.0, %v2391
        %2393 = vmatprep.mubr.f32.mxu0 0.0
        %2394 = vmatmul.mubr.f32.gmra.mrb[0].mxu0 %v2207
        %v2395 = vpop.f32.mrb[0].mxu0
        %v2396 = vadd.f32 0.0, %v2395
        %v2397 = vpop.f32.mrb[0].mxu0
        %v2398 = vadd.f32 0.0, %v2397
        %2399 = vmatprep.mubr.f32.mxu0 0.0
        %2400 = vmatmul.mubr.f32.gmra.mrb[0].mxu0 %v2208
        %v2401 = vpop.f32.mrb[0].mxu0
        %v2402 = vadd.f32 0.0, %v2401
        %v2403 = vpop.f32.mrb[0].mxu0
        %v2404 = vadd.f32 0.0, %v2403
        %2405 = vmatprep.mubr.f32.mxu0 0.0
        %2406 = vmatmul.mubr.f32.gmra.mrb[0].mxu0 %v2209
        %v2407 = vpop.f32.mrb[0].mxu0
        %v2408 = vadd.f32 0.0, %v2407
        %v2409 = vpop.f32.mrb[0].mxu0
        %v2410 = vadd.f32 0.0, %v2409
        %2411 = vmatprep.mubr.f32.mxu0 0.0
        %2412 = vmatmul.mubr.f32.gmra.mrb[0].mxu0 %v2210
        %v2413 = vpop.f32.mrb[0].mxu0
        %v2414 = vadd.f32 0.0, %v2413
        %v2415 = vpop.f32.mrb[0].mxu0
        %v2416 = vadd.f32 0.0, %v2415
        %2417 = vmatprep.mubr.f32.mxu0 0.0
        %2418 = vmatmul.mubr.f32.gmra.mrb[0].mxu0 %v2211
        %v2419 = vpop.f32.mrb[0].mxu0
        %v2420 = vadd.f32 0.0, %v2419
        %v2421 = vpop.f32.mrb[0].mxu0
        %v2422 = vadd.f32 0.0, %v2421
        %2423 = vmatprep.mubr.f32.mxu0 0.0
        %2424 = vmatmul.mubr.f32.gmra.mrb[0].mxu0 %v2212
        %v2425 = vpop.f32.mrb[0].mxu0
        %v2426 = vadd.f32 0.0, %v2425
        %v2427 = vpop.f32.mrb[0].mxu0
        %v2428 = vadd.f32 0.0, %v2427
        %2429 = vmatprep.mubr.f32.mxu0 0.0
        %2430 = vmatmul.mubr.f32.gmra.mrb[0].mxu0 %v2213
        %v2431 = vpop.f32.mrb[0].mxu0
        %v2432 = vadd.f32 0.0, %v2431
        %v2433 = vpop.f32.mrb[0].mxu0
        %v2434 = vadd.f32 0.0, %v2433
        %2435 = vmatprep.mubr.f32.mxu0 0.0
        %2436 = vmatmul.mubr.f32.gmra.mrb[0].mxu0 %v2214
        %v2437 = vpop.f32.mrb[0].mxu0
        %v2438 = vadd.f32 0.0, %v2437
        %v2439 = vpop.f32.mrb[0].mxu0
        %v2440 = vadd.f32 0.0, %v2439
        %2441 = vmatprep.mubr.f32.mxu0 0.0
        %2442 = vmatmul.mubr.f32.gmra.mrb[0].mxu0 %v2215
        %v2443 = vpop.f32.mrb[0].mxu0
        %v2444 = vadd.f32 0.0, %v2443
        %v2445 = vpop.f32.mrb[0].mxu0
        %v2446 = vadd.f32 0.0, %v2445
        %2447 = vmatprep.mubr.f32.mxu0 0.0
        %2448 = vmatmul.mubr.f32.gmra.mrb[0].mxu0 %v2216
        %v2449 = vpop.f32.mrb[0].mxu0
        %v2450 = vadd.f32 0.0, %v2449
        %v2451 = vpop.f32.mrb[0].mxu0
        %v2452 = vadd.f32 0.0, %v2451
        %2453 = vmatprep.mubr.f32.mxu0 0.0
        %2454 = vmatmul.mubr.f32.gmra.mrb[0].mxu0 %v2217
        %v2455 = vpop.f32.mrb[0].mxu0
        %v2456 = vadd.f32 0.0, %v2455
        %v2457 = vpop.f32.mrb[0].mxu0
        %v2458 = vadd.f32 0.0, %v2457
        %2459 = vmatprep.mubr.f32.mxu0 0.0
        %2460 = vmatmul.mubr.f32.gmra.mrb[0].mxu0 %v2218
        %v2461 = vpop.f32.mrb[0].mxu0
        %v2462 = vadd.f32 0.0, %v2461
        %v2463 = vpop.f32.mrb[0].mxu0
        %v2464 = vadd.f32 0.0, %v2463
        %2465 = vmatprep.mubr.f32.mxu0 0.0
        %2466 = vmatmul.mubr.f32.gmra.mrb[0].mxu0 %v2219
        %v2467 = vpop.f32.mrb[0].mxu0
        %v2468 = vadd.f32 0.0, %v2467
        %v2469 = vpop.f32.mrb[0].mxu0
        %v2470 = vadd.f32 0.0, %v2469
        %2471 = vmatprep.mubr.f32.mxu0 0.0
        %2472 = vmatmul.mubr.f32.gmra.mrb[0].mxu0 %v2220
        %v2473 = vpop.f32.mrb[0].mxu0
        %v2474 = vadd.f32 0.0, %v2473
        %v2475 = vpop.f32.mrb[0].mxu0
        %v2476 = vadd.f32 0.0, %v2475
        %2477 = vmatprep.mubr.f32.mxu0 0.0
        %2478 = vmatmul.mubr.f32.gmra.mrb[0].mxu0 %v2221
        %v2479 = vpop.f32.mrb[0].mxu0
        %v2480 = vadd.f32 0.0, %v2479
        %v2481 = vpop.f32.mrb[0].mxu0
        %v2482 = vadd.f32 0.0, %v2481
        %2483 = vmatprep.mubr.f32.mxu0 0.0
        %2484 = vmatmul.mubr.f32.gmra.mrb[0].mxu0 %v2222
        %v2485 = vpop.f32.mrb[0].mxu0
        %v2486 = vadd.f32 0.0, %v2485
        %v2487 = vpop.f32.mrb[0].mxu0
        %v2488 = vadd.f32 0.0, %v2487
        %2489 = vmatprep.mubr.f32.mxu0 0.0
        %2490 = vmatmul.mubr.f32.gmra.mrb[0].mxu0 %v2223
        %v2491 = vpop.f32.mrb[0].mxu0
        %v2492 = vadd.f32 0.0, %v2491
        %v2493 = vpop.f32.mrb[0].mxu0
        %v2494 = vadd.f32 0.0, %v2493
        %2495 = vmatprep.mubr.f32.mxu0 0.0
        %2496 = vmatmul.mubr.f32.gmra.mrb[0].mxu0 %v2224
        %v2497 = vpop.f32.mrb[0].mxu0
        %v2498 = vadd.f32 0.0, %v2497
        %v2499 = vpop.f32.mrb[0].mxu0
        %v2500 = vadd.f32 0.0, %v2499
        %2501 = vmatprep.mubr.f32.mxu0 0.0
        %2502 = vmatmul.mubr.f32.gmra.mrb[0].mxu0 %v2225
        %v2503 = vpop.f32.mrb[0].mxu0
        %v2504 = vadd.f32 0.0, %v2503
        %v2505 = vpop.f32.mrb[0].mxu0
        %v2506 = vadd.f32 0.0, %v2505
        %2507 = vmatprep.mubr.f32.mxu0 0.0
        %2508 = vmatmul.mubr.f32.gmra.mrb[0].mxu0 %v2226
        %v2509 = vpop.f32.mrb[0].mxu0
        %v2510 = vadd.f32 0.0, %v2509
        %v2511 = vpop.f32.mrb[0].mxu0
        %v2512 = vadd.f32 0.0, %v2511
        %2513 = vmatprep.mubr.f32.mxu0 0.0
        %2514 = vmatmul.mubr.f32.gmra.mrb[0].mxu0 %v2227
        %v2515 = vpop.f32.mrb[0].mxu0
        %v2516 = vadd.f32 0.0, %v2515
        %v2517 = vpop.f32.mrb[0].mxu0
        %v2518 = vadd.f32 0.0, %v2517
        %2519 = vmatprep.mubr.f32.mxu0 0.0
        %2520 = vmatmul.mubr.f32.gmra.mrb[0].mxu0 %v2228
        %v2521 = vpop.f32.mrb[0].mxu0
        %v2522 = vadd.f32 0.0, %v2521
        %v2523 = vpop.f32.mrb[0].mxu0
        %v2524 = vadd.f32 0.0, %v2523
        %2525 = vmatprep.mubr.f32.mxu0 0.0
        %2526 = vmatmul.mubr.f32.gmra.mrb[0].mxu0 %v2229
        %v2527 = vpop.f32.mrb[0].mxu0
        %v2528 = vadd.f32 0.0, %v2527
        %v2529 = vpop.f32.mrb[0].mxu0
        %v2530 = vadd.f32 0.0, %v2529
        %2531 = vmatprep.mubr.f32.mxu0 0.0
        %2532 = vmatmul.mubr.f32.gmra.mrb[0].mxu0 %v2230
        %v2533 = vpop.f32.mrb[0].mxu0
        %v2534 = vadd.f32 0.0, %v2533
        %v2535 = vpop.f32.mrb[0].mxu0
        %v2536 = vadd.f32 0.0, %v2535
        %2537 = vmatprep.mubr.f32.mxu0 0.0
        %2538 = vmatmul.mubr.f32.gmra.mrb[0].mxu0 %v2231
        %v2539 = vpop.f32.mrb[0].mxu0
        %v2540 = vadd.f32 0.0, %v2539
        %v2541 = vpop.f32.mrb[0].mxu0
        %v2542 = vadd.f32 0.0, %v2541
        %2543 = vmatprep.mubr.f32.mxu0 0.0
        %2544 = vmatmul.mubr.f32.gmra.mrb[0].mxu0 %v2232
        %v2545 = vpop.f32.mrb[0].mxu0
        %v2546 = vadd.f32 0.0, %v2545
        %v2547 = vpop.f32.mrb[0].mxu0
        %v2548 = vadd.f32 0.0, %v2547
        %2549 = vmatprep.mubr.f32.mxu0 0.0
        %2550 = vmatmul.mubr.f32.gmra.mrb[0].mxu0 %v2233
        %v2551 = vpop.f32.mrb[0].mxu0
        %v2552 = vadd.f32 0.0, %v2551
        %v2553 = vpop.f32.mrb[0].mxu0
        %v2554 = vadd.f32 0.0, %v2553
        %2555 = vmatprep.mubr.f32.mxu0 0.0
        %2556 = vmatmul.mubr.f32.gmra.mrb[0].mxu0 %v2234
        %v2557 = vpop.f32.mrb[0].mxu0
        %v2558 = vadd.f32 0.0, %v2557
        %v2559 = vpop.f32.mrb[0].mxu0
        %v2560 = vadd.f32 0.0, %v2559
        %2561 = vmatprep.mubr.f32.mxu0 0.0
        %2562 = vmatmul.mubr.f32.gmra.mrb[0].mxu0 %v2235
        %v2563 = vpop.f32.mrb[0].mxu0
        %v2564 = vadd.f32 0.0, %v2563
        %v2565 = vpop.f32.mrb[0].mxu0
        %v2566 = vadd.f32 0.0, %v2565
        %2567 = vmatprep.mubr.f32.mxu0 0.0
        %2568 = vmatmul.mubr.f32.gmra.mrb[0].mxu0 %v2236
        %v2569 = vpop.f32.mrb[0].mxu0
        %v2570 = vadd.f32 0.0, %v2569
        %v2571 = vpop.f32.mrb[0].mxu0
        %v2572 = vadd.f32 0.0, %v2571
        %2573 = vdwg.mxu0
        %2574 = vmatprep.subr.mxu0 0.0
        %2575 = vmatpush1.msra.mxu0 %v2271
        %2576 = vmatprep.subr.mxu0 0.0
        %2577 = vmatpush1.msra.mxu0 %v2274
        %2578 = vmatprep.subr.mxu0 0.0
        %2579 = vmatpush1.msra.mxu0 %v2277
        %2580 = vmatprep.subr.mxu0 0.0
        %2581 = vmatpush1.msra.mxu0 %v2280
        %2582 = vmatprep.subr.mxu0 0.0
        %2583 = vmatpush1.msra.mxu0 %v2283
        %2584 = vmatprep.subr.mxu0 0.0
        %2585 = vmatpush1.msra.mxu0 %v2286
        %2586 = vmatprep.subr.mxu0 0.0
        %2587 = vmatpush1.msra.mxu0 %v2289
        %2588 = vmatprep.subr.mxu0 0.0
        %2589 = vmatpush1.msra.mxu0 %v2292
        %2590 = vmatprep.subr.mxu0 0.0
        %2591 = vmatpush1.msra.mxu0 %v2295
        %2592 = vmatprep.subr.mxu0 0.0
        %2593 = vmatpush1.msra.mxu0 %v2298
        %2594 = vmatprep.subr.mxu0 0.0
        %2595 = vmatpush1.msra.mxu0 %v2301
        %2596 = vmatprep.subr.mxu0 0.0
        %2597 = vmatpush1.msra.mxu0 %v2304
        %2598 = vmatprep.subr.mxu0 0.0
        %2599 = vmatpush1.msra.mxu0 %v2307
        %2600 = vmatprep.subr.mxu0 0.0
        %2601 = vmatpush1.msra.mxu0 %v2310
        %2602 = vmatprep.subr.mxu0 0.0
        %2603 = vmatpush1.msra.mxu0 %v2313
        %2604 = vmatprep.subr.mxu0 0.0
        %2605 = vmatpush1.msra.mxu0 %v2316
        %2606 = vmatprep.subr.mxu0 0.0
        %2607 = vmatpush1.msra.mxu0 0.0
        %2608 = vmatprep.subr.mxu0 0.0
        %2609 = vmatpush1.msra.mxu0 0.0
        %2610 = vmatprep.subr.mxu0 0.0
        %2611 = vmatpush1.msra.mxu0 0.0
        %2612 = vmatprep.subr.mxu0 0.0
        %2613 = vmatpush1.msra.mxu0 0.0
        %2614 = vmatprep.subr.mxu0 0.0
        %2615 = vmatpush1.msra.mxu0 0.0
        %2616 = vmatprep.subr.mxu0 0.0
        %2617 = vmatpush1.msra.mxu0 0.0
        %2618 = vmatprep.subr.mxu0 0.0
        %2619 = vmatpush1.msra.mxu0 0.0
        %2620 = vmatprep.subr.mxu0 0.0
        %2621 = vmatpush1.msra.mxu0 0.0
        %2622 = vmatprep.subr.mxu0 0.0
        %2623 = vmatpush1.msra.mxu0 0.0
        %2624 = vmatprep.subr.mxu0 0.0
        %2625 = vmatpush1.msra.mxu0 0.0
        %2626 = vmatprep.subr.mxu0 0.0
        %2627 = vmatpush1.msra.mxu0 0.0
        %2628 = vmatprep.subr.mxu0 0.0
        %2629 = vmatpush1.msra.mxu0 0.0
        %2630 = vmatprep.subr.mxu0 0.0
        %2631 = vmatpush1.msra.mxu0 0.0
        %2632 = vmatprep.subr.mxu0 0.0
        %2633 = vmatpush1.msra.mxu0 0.0
        %2634 = vmatprep.subr.mxu0 0.0
        %2635 = vmatpush1.msra.mxu0 0.0
        %2636 = vmatprep.subr.mxu0 0.0
        %2637 = vmatpush1.msra.mxu0 0.0
        %2638 = vmatprep.mubr.f32.mxu0 0.0
        %2639 = vmatmul.mubr.f32.gmra.mrb[0].mxu0 %v2205
        %v2640 = vpop.f32.mrb[0].mxu0
        %v2641 = vadd.f32 0.0, %v2640
        %v2642 = vpop.f32.mrb[0].mxu0
        %2643 = vmatprep.mubr.f32.mxu0 0.0
        %2644 = vmatmul.mubr.f32.gmra.mrb[0].mxu0 %v2206
        %v2645 = vpop.f32.mrb[0].mxu0
        %v2646 = vadd.f32 0.0, %v2645
        %v2647 = vpop.f32.mrb[0].mxu0
        %2648 = vmatprep.mubr.f32.mxu0 0.0
        %2649 = vmatmul.mubr.f32.gmra.mrb[0].mxu0 %v2207
        %v2650 = vpop.f32.mrb[0].mxu0
        %v2651 = vadd.f32 0.0, %v2650
        %v2652 = vpop.f32.mrb[0].mxu0
        %2653 = vmatprep.mubr.f32.mxu0 0.0
        %2654 = vmatmul.mubr.f32.gmra.mrb[0].mxu0 %v2208
        %v2655 = vpop.f32.mrb[0].mxu0
        %v2656 = vadd.f32 0.0, %v2655
        %v2657 = vpop.f32.mrb[0].mxu0
        %2658 = vmatprep.mubr.f32.mxu0 0.0
        %2659 = vmatmul.mubr.f32.gmra.mrb[0].mxu0 %v2209
        %v2660 = vpop.f32.mrb[0].mxu0
        %v2661 = vadd.f32 0.0, %v2660
        %v2662 = vpop.f32.mrb[0].mxu0
        %2663 = vmatprep.mubr.f32.mxu0 0.0
        %2664 = vmatmul.mubr.f32.gmra.mrb[0].mxu0 %v2210
        %v2665 = vpop.f32.mrb[0].mxu0
        %v2666 = vadd.f32 0.0, %v2665
        %v2667 = vpop.f32.mrb[0].mxu0
        %2668 = vmatprep.mubr.f32.mxu0 0.0
        %2669 = vmatmul.mubr.f32.gmra.mrb[0].mxu0 %v2211
        %v2670 = vpop.f32.mrb[0].mxu0
        %v2671 = vadd.f32 0.0, %v2670
        %v2672 = vpop.f32.mrb[0].mxu0
        %2673 = vmatprep.mubr.f32.mxu0 0.0
        %2674 = vmatmul.mubr.f32.gmra.mrb[0].mxu0 %v2212
        %v2675 = vpop.f32.mrb[0].mxu0
        %v2676 = vadd.f32 0.0, %v2675
        %v2677 = vpop.f32.mrb[0].mxu0
        %2678 = vmatprep.mubr.f32.mxu0 0.0
        %2679 = vmatmul.mubr.f32.gmra.mrb[0].mxu0 %v2213
        %v2680 = vpop.f32.mrb[0].mxu0
        %v2681 = vadd.f32 0.0, %v2680
        %v2682 = vpop.f32.mrb[0].mxu0
        %2683 = vmatprep.mubr.f32.mxu0 0.0
        %2684 = vmatmul.mubr.f32.gmra.mrb[0].mxu0 %v2214
        %v2685 = vpop.f32.mrb[0].mxu0
        %v2686 = vadd.f32 0.0, %v2685
        %v2687 = vpop.f32.mrb[0].mxu0
        %2688 = vmatprep.mubr.f32.mxu0 0.0
        %2689 = vmatmul.mubr.f32.gmra.mrb[0].mxu0 %v2215
        %v2690 = vpop.f32.mrb[0].mxu0
        %v2691 = vadd.f32 0.0, %v2690
        %v2692 = vpop.f32.mrb[0].mxu0
        %2693 = vmatprep.mubr.f32.mxu0 0.0
        %2694 = vmatmul.mubr.f32.gmra.mrb[0].mxu0 %v2216
        %v2695 = vpop.f32.mrb[0].mxu0
        %v2696 = vadd.f32 0.0, %v2695
        %v2697 = vpop.f32.mrb[0].mxu0
        %2698 = vmatprep.mubr.f32.mxu0 0.0
        %2699 = vmatmul.mubr.f32.gmra.mrb[0].mxu0 %v2217
        %v2700 = vpop.f32.mrb[0].mxu0
        %v2701 = vadd.f32 0.0, %v2700
        %v2702 = vpop.f32.mrb[0].mxu0
        %2703 = vmatprep.mubr.f32.mxu0 0.0
        %2704 = vmatmul.mubr.f32.gmra.mrb[0].mxu0 %v2218
        %v2705 = vpop.f32.mrb[0].mxu0
        %v2706 = vadd.f32 0.0, %v2705
        %v2707 = vpop.f32.mrb[0].mxu0
        %2708 = vmatprep.mubr.f32.mxu0 0.0
        %2709 = vmatmul.mubr.f32.gmra.mrb[0].mxu0 %v2219
        %v2710 = vpop.f32.mrb[0].mxu0
        %v2711 = vadd.f32 0.0, %v2710
        %v2712 = vpop.f32.mrb[0].mxu0
        %2713 = vmatprep.mubr.f32.mxu0 0.0
        %2714 = vmatmul.mubr.f32.gmra.mrb[0].mxu0 %v2220
        %v2715 = vpop.f32.mrb[0].mxu0
        %v2716 = vadd.f32 0.0, %v2715
        %v2717 = vpop.f32.mrb[0].mxu0
        %2718 = vmatprep.mubr.f32.mxu0 0.0
        %2719 = vmatmul.mubr.f32.gmra.mrb[0].mxu0 %v2221
        %v2720 = vpop.f32.mrb[0].mxu0
        %v2721 = vadd.f32 0.0, %v2720
        %v2722 = vpop.f32.mrb[0].mxu0
        %2723 = vmatprep.mubr.f32.mxu0 0.0
        %2724 = vmatmul.mubr.f32.gmra.mrb[0].mxu0 %v2222
        %v2725 = vpop.f32.mrb[0].mxu0
        %v2726 = vadd.f32 0.0, %v2725
        %v2727 = vpop.f32.mrb[0].mxu0
        %2728 = vmatprep.mubr.f32.mxu0 0.0
        %2729 = vmatmul.mubr.f32.gmra.mrb[0].mxu0 %v2223
        %v2730 = vpop.f32.mrb[0].mxu0
        %v2731 = vadd.f32 0.0, %v2730
        %v2732 = vpop.f32.mrb[0].mxu0
        %2733 = vmatprep.mubr.f32.mxu0 0.0
        %2734 = vmatmul.mubr.f32.gmra.mrb[0].mxu0 %v2224
        %v2735 = vpop.f32.mrb[0].mxu0
        %v2736 = vadd.f32 0.0, %v2735
        %v2737 = vpop.f32.mrb[0].mxu0
        %2738 = vmatprep.mubr.f32.mxu0 0.0
        %2739 = vmatmul.mubr.f32.gmra.mrb[0].mxu0 %v2225
        %v2740 = vpop.f32.mrb[0].mxu0
        %v2741 = vadd.f32 0.0, %v2740
        %v2742 = vpop.f32.mrb[0].mxu0
        %2743 = vmatprep.mubr.f32.mxu0 0.0
        %2744 = vmatmul.mubr.f32.gmra.mrb[0].mxu0 %v2226
        %v2745 = vpop.f32.mrb[0].mxu0
        %v2746 = vadd.f32 0.0, %v2745
        %v2747 = vpop.f32.mrb[0].mxu0
        %2748 = vmatprep.mubr.f32.mxu0 0.0
        %2749 = vmatmul.mubr.f32.gmra.mrb[0].mxu0 %v2227
        %v2750 = vpop.f32.mrb[0].mxu0
        %v2751 = vadd.f32 0.0, %v2750
        %v2752 = vpop.f32.mrb[0].mxu0
        %2753 = vmatprep.mubr.f32.mxu0 0.0
        %2754 = vmatmul.mubr.f32.gmra.mrb[0].mxu0 %v2228
        %v2755 = vpop.f32.mrb[0].mxu0
        %v2756 = vadd.f32 0.0, %v2755
        %v2757 = vpop.f32.mrb[0].mxu0
        %2758 = vmatprep.mubr.f32.mxu0 0.0
        %2759 = vmatmul.mubr.f32.gmra.mrb[0].mxu0 %v2229
        %v2760 = vpop.f32.mrb[0].mxu0
        %v2761 = vadd.f32 0.0, %v2760
        %v2762 = vpop.f32.mrb[0].mxu0
        %2763 = vmatprep.mubr.f32.mxu0 0.0
        %2764 = vmatmul.mubr.f32.gmra.mrb[0].mxu0 %v2230
        %v2765 = vpop.f32.mrb[0].mxu0
        %v2766 = vadd.f32 0.0, %v2765
        %v2767 = vpop.f32.mrb[0].mxu0
        %2768 = vmatprep.mubr.f32.mxu0 0.0
        %2769 = vmatmul.mubr.f32.gmra.mrb[0].mxu0 %v2231
        %v2770 = vpop.f32.mrb[0].mxu0
        %v2771 = vadd.f32 0.0, %v2770
        %v2772 = vpop.f32.mrb[0].mxu0
        %2773 = vmatprep.mubr.f32.mxu0 0.0
        %2774 = vmatmul.mubr.f32.gmra.mrb[0].mxu0 %v2232
        %v2775 = vpop.f32.mrb[0].mxu0
        %v2776 = vadd.f32 0.0, %v2775
        %v2777 = vpop.f32.mrb[0].mxu0
        %2778 = vmatprep.mubr.f32.mxu0 0.0
        %2779 = vmatmul.mubr.f32.gmra.mrb[0].mxu0 %v2233
        %v2780 = vpop.f32.mrb[0].mxu0
        %v2781 = vadd.f32 0.0, %v2780
        %v2782 = vpop.f32.mrb[0].mxu0
        %2783 = vmatprep.mubr.f32.mxu0 0.0
        %2784 = vmatmul.mubr.f32.gmra.mrb[0].mxu0 %v2234
        %v2785 = vpop.f32.mrb[0].mxu0
        %v2786 = vadd.f32 0.0, %v2785
        %v2787 = vpop.f32.mrb[0].mxu0
        %2788 = vmatprep.mubr.f32.mxu0 0.0
        %2789 = vmatmul.mubr.f32.gmra.mrb[0].mxu0 %v2235
        %v2790 = vpop.f32.mrb[0].mxu0
        %v2791 = vadd.f32 0.0, %v2790
        %v2792 = vpop.f32.mrb[0].mxu0
        %2793 = vmatprep.mubr.f32.mxu0 0.0
        %2794 = vmatmul.mubr.f32.gmra.mrb[0].mxu0 %v2236
        %v2795 = vpop.f32.mrb[0].mxu0
        %v2796 = vadd.f32 0.0, %v2795
        %v2797 = vpop.f32.mrb[0].mxu0
        %2798 = vdwg.mxu0
        %vm2799 = vcmp.ge.s32.totalorder %v764, 2
        %vm2800 = vcmp.ge.s32.totalorder %v765, 2
        %vm2801 = vcmp.ge.s32.totalorder %v766, 2
        %vm2802 = vcmp.ge.s32.totalorder %v767, 2
        %vm2803 = vcmp.ge.s32.totalorder %v768, 2
        %vm2804 = vcmp.ge.s32.totalorder %v769, 2
        %vm2805 = vcmp.ge.s32.totalorder %v770, 2
        %vm2806 = vcmp.ge.s32.totalorder %v771, 2
        %vm2807 = vcmp.ge.s32.totalorder %v772, 2
        %vm2808 = vcmp.ge.s32.totalorder %v773, 2
        %vm2809 = vcmp.ge.s32.totalorder %v774, 2
        %vm2810 = vcmp.ge.s32.totalorder %v775, 2
        %vm2811 = vcmp.ge.s32.totalorder %v776, 2
        %vm2812 = vcmp.ge.s32.totalorder %v777, 2
        %vm2813 = vcmp.ge.s32.totalorder %v778, 2
        %vm2814 = vcmp.ge.s32.totalorder %v779, 2
        %vm2815 = vcmp.ge.s32.totalorder %v780, 2
        %vm2816 = vcmp.ge.s32.totalorder %v781, 2
        %vm2817 = vcmp.ge.s32.totalorder %v782, 2
        %vm2818 = vcmp.ge.s32.totalorder %v783, 2
        %vm2819 = vcmp.ge.s32.totalorder %v784, 2
        %vm2820 = vcmp.ge.s32.totalorder %v785, 2
        %vm2821 = vcmp.ge.s32.totalorder %v786, 2
        %vm2822 = vcmp.ge.s32.totalorder %v787, 2
        %vm2823 = vcmp.ge.s32.totalorder %v788, 2
        %vm2824 = vcmp.ge.s32.totalorder %v789, 2
        %vm2825 = vcmp.ge.s32.totalorder %v790, 2
        %vm2826 = vcmp.ge.s32.totalorder %v791, 2
        %vm2827 = vcmp.ge.s32.totalorder %v792, 2
        %vm2828 = vcmp.ge.s32.totalorder %v793, 2
        %vm2829 = vcmp.ge.s32.totalorder %v794, 2
        %vm2830 = vcmp.ge.s32.totalorder %v795, 2
        %v2831 = vrot.slane %v2384, 6
        %v2832 = vrot.slane %v2390, 6
        %v2833 = vrot.slane %v2396, 6
        %v2834 = vrot.slane %v2402, 6
        %v2835 = vrot.slane %v2408, 6
        %v2836 = vrot.slane %v2414, 6
        %v2837 = vrot.slane %v2420, 6
        %v2838 = vrot.slane %v2426, 6
        %v2839 = vrot.slane %v2432, 6
        %v2840 = vrot.slane %v2438, 6
        %v2841 = vrot.slane %v2444, 6
        %v2842 = vrot.slane %v2450, 6
        %v2843 = vrot.slane %v2456, 6
        %v2844 = vrot.slane %v2462, 6
        %v2845 = vrot.slane %v2468, 6
        %v2846 = vrot.slane %v2474, 6
        %v2847 = vrot.slane %v2480, 6
        %v2848 = vrot.slane %v2486, 6
        %v2849 = vrot.slane %v2492, 6
        %v2850 = vrot.slane %v2498, 6
        %v2851 = vrot.slane %v2504, 6
        %v2852 = vrot.slane %v2510, 6
        %v2853 = vrot.slane %v2516, 6
        %v2854 = vrot.slane %v2522, 6
        %v2855 = vrot.slane %v2528, 6
        %v2856 = vrot.slane %v2534, 6
        %v2857 = vrot.slane %v2540, 6
        %v2858 = vrot.slane %v2546, 6
        %v2859 = vrot.slane %v2552, 6
        %v2860 = vrot.slane %v2558, 6
        %v2861 = vrot.slane %v2564, 6
        %v2862 = vrot.slane %v2570, 6
        %vm2863 = vcmp.lt.s32.totalorder %v380, 2
        %v2864 = vsel %vm2863, %v2861, %v2862
        %v2865 = vsel %vm2863, %v2860, %v2861
        %v2866 = vsel %vm2863, %v2859, %v2860
        %v2867 = vsel %vm2863, %v2858, %v2859
        %v2868 = vsel %vm2863, %v2857, %v2858
        %v2869 = vsel %vm2863, %v2856, %v2857
        %v2870 = vsel %vm2863, %v2855, %v2856
        %v2871 = vsel %vm2863, %v2854, %v2855
        %v2872 = vsel %vm2863, %v2853, %v2854
        %v2873 = vsel %vm2863, %v2852, %v2853
        %v2874 = vsel %vm2863, %v2851, %v2852
        %v2875 = vsel %vm2863, %v2850, %v2851
        %v2876 = vsel %vm2863, %v2849, %v2850
        %v2877 = vsel %vm2863, %v2848, %v2849
        %v2878 = vsel %vm2863, %v2847, %v2848
        %v2879 = vsel %vm2863, %v2846, %v2847
        %v2880 = vsel %vm2863, %v2845, %v2846
        %v2881 = vsel %vm2863, %v2844, %v2845
        %v2882 = vsel %vm2863, %v2843, %v2844
        %v2883 = vsel %vm2863, %v2842, %v2843
        %v2884 = vsel %vm2863, %v2841, %v2842
        %v2885 = vsel %vm2863, %v2840, %v2841
        %v2886 = vsel %vm2863, %v2839, %v2840
        %v2887 = vsel %vm2863, %v2838, %v2839
        %v2888 = vsel %vm2863, %v2837, %v2838
        %v2889 = vsel %vm2863, %v2836, %v2837
        %v2890 = vsel %vm2863, %v2835, %v2836
        %v2891 = vsel %vm2863, %v2834, %v2835
        %v2892 = vsel %vm2863, %v2833, %v2834
        %v2893 = vsel %vm2863, %v2832, %v2833
        %v2894 = vsel %vm2863, %v2831, %v2832
        %v2895 = vsel %vm2863, %v2862, %v2831
        %v2896 = vsel %vm2799, 1, 0
        %v2897 = vsel %vm2800, 1, 0
        %v2898 = vsel %vm2801, 1, 0
        %v2899 = vsel %vm2802, 1, 0
        %v2900 = vsel %vm2803, 1, 0
        %v2901 = vsel %vm2804, 1, 0
        %v2902 = vsel %vm2805, 1, 0
        %v2903 = vsel %vm2806, 1, 0
        %v2904 = vsel %vm2807, 1, 0
        %v2905 = vsel %vm2808, 1, 0
        %v2906 = vsel %vm2809, 1, 0
        %v2907 = vsel %vm2810, 1, 0
        %v2908 = vsel %vm2811, 1, 0
        %v2909 = vsel %vm2812, 1, 0
        %v2910 = vsel %vm2813, 1, 0
        %v2911 = vsel %vm2814, 1, 0
        %v2912 = vsel %vm2815, 1, 0
        %v2913 = vsel %vm2816, 1, 0
        %v2914 = vsel %vm2817, 1, 0
        %v2915 = vsel %vm2818, 1, 0
        %v2916 = vsel %vm2819, 1, 0
        %v2917 = vsel %vm2820, 1, 0
        %v2918 = vsel %vm2821, 1, 0
        %v2919 = vsel %vm2822, 1, 0
        %v2920 = vsel %vm2823, 1, 0
        %v2921 = vsel %vm2824, 1, 0
        %v2922 = vsel %vm2825, 1, 0
        %v2923 = vsel %vm2826, 1, 0
        %v2924 = vsel %vm2827, 1, 0
        %v2925 = vsel %vm2828, 1, 0
        %v2926 = vsel %vm2829, 1, 0
        %v2927 = vsel %vm2830, 1, 0
        %vm2928 = vcmp.eq.s32.totalorder %v2896, 1
        %vm2929 = vcmp.eq.s32.totalorder %v2897, 1
        %vm2930 = vcmp.eq.s32.totalorder %v2898, 1
        %vm2931 = vcmp.eq.s32.totalorder %v2899, 1
        %vm2932 = vcmp.eq.s32.totalorder %v2900, 1
        %vm2933 = vcmp.eq.s32.totalorder %v2901, 1
        %vm2934 = vcmp.eq.s32.totalorder %v2902, 1
        %vm2935 = vcmp.eq.s32.totalorder %v2903, 1
        %vm2936 = vcmp.eq.s32.totalorder %v2904, 1
        %vm2937 = vcmp.eq.s32.totalorder %v2905, 1
        %vm2938 = vcmp.eq.s32.totalorder %v2906, 1
        %vm2939 = vcmp.eq.s32.totalorder %v2907, 1
        %vm2940 = vcmp.eq.s32.totalorder %v2908, 1
        %vm2941 = vcmp.eq.s32.totalorder %v2909, 1
        %vm2942 = vcmp.eq.s32.totalorder %v2910, 1
        %vm2943 = vcmp.eq.s32.totalorder %v2911, 1
        %vm2944 = vcmp.eq.s32.totalorder %v2912, 1
        %vm2945 = vcmp.eq.s32.totalorder %v2913, 1
        %vm2946 = vcmp.eq.s32.totalorder %v2914, 1
        %vm2947 = vcmp.eq.s32.totalorder %v2915, 1
        %vm2948 = vcmp.eq.s32.totalorder %v2916, 1
        %vm2949 = vcmp.eq.s32.totalorder %v2917, 1
        %vm2950 = vcmp.eq.s32.totalorder %v2918, 1
        %vm2951 = vcmp.eq.s32.totalorder %v2919, 1
        %vm2952 = vcmp.eq.s32.totalorder %v2920, 1
        %vm2953 = vcmp.eq.s32.totalorder %v2921, 1
        %vm2954 = vcmp.eq.s32.totalorder %v2922, 1
        %vm2955 = vcmp.eq.s32.totalorder %v2923, 1
        %vm2956 = vcmp.eq.s32.totalorder %v2924, 1
        %vm2957 = vcmp.eq.s32.totalorder %v2925, 1
        %vm2958 = vcmp.eq.s32.totalorder %v2926, 1
        %vm2959 = vcmp.eq.s32.totalorder %v2927, 1
        %v2960 = vsel %vm2928, %v2895, 0.0
        %v2961 = vsel %vm2929, %v2894, 0.0
        %v2962 = vsel %vm2930, %v2893, 0.0
        %v2963 = vsel %vm2931, %v2892, 0.0
        %v2964 = vsel %vm2932, %v2891, 0.0
        %v2965 = vsel %vm2933, %v2890, 0.0
        %v2966 = vsel %vm2934, %v2889, 0.0
        %v2967 = vsel %vm2935, %v2888, 0.0
        %v2968 = vsel %vm2936, %v2887, 0.0
        %v2969 = vsel %vm2937, %v2886, 0.0
        %v2970 = vsel %vm2938, %v2885, 0.0
        %v2971 = vsel %vm2939, %v2884, 0.0
        %v2972 = vsel %vm2940, %v2883, 0.0
        %v2973 = vsel %vm2941, %v2882, 0.0
        %v2974 = vsel %vm2942, %v2881, 0.0
        %v2975 = vsel %vm2943, %v2880, 0.0
        %v2976 = vsel %vm2944, %v2879, 0.0
        %v2977 = vsel %vm2945, %v2878, 0.0
        %v2978 = vsel %vm2946, %v2877, 0.0
        %v2979 = vsel %vm2947, %v2876, 0.0
        %v2980 = vsel %vm2948, %v2875, 0.0
        %v2981 = vsel %vm2949, %v2874, 0.0
        %v2982 = vsel %vm2950, %v2873, 0.0
        %v2983 = vsel %vm2951, %v2872, 0.0
        %v2984 = vsel %vm2952, %v2871, 0.0
        %v2985 = vsel %vm2953, %v2870, 0.0
        %v2986 = vsel %vm2954, %v2869, 0.0
        %v2987 = vsel %vm2955, %v2868, 0.0
        %v2988 = vsel %vm2956, %v2867, 0.0
        %v2989 = vsel %vm2957, %v2866, 0.0
        %v2990 = vsel %vm2958, %v2865, 0.0
        %v2991 = vsel %vm2959, %v2864, 0.0
        %vm2992 = vcmp.lt.s32.totalorder %v764, 14
        %vm2993 = vcmp.lt.s32.totalorder %v765, 14
        %vm2994 = vcmp.lt.s32.totalorder %v766, 14
        %vm2995 = vcmp.lt.s32.totalorder %v767, 14
        %vm2996 = vcmp.lt.s32.totalorder %v768, 14
        %vm2997 = vcmp.lt.s32.totalorder %v769, 14
        %vm2998 = vcmp.lt.s32.totalorder %v770, 14
        %vm2999 = vcmp.lt.s32.totalorder %v771, 14
        %vm3000 = vcmp.lt.s32.totalorder %v772, 14
        %vm3001 = vcmp.lt.s32.totalorder %v773, 14
        %vm3002 = vcmp.lt.s32.totalorder %v774, 14
        %vm3003 = vcmp.lt.s32.totalorder %v775, 14
        %vm3004 = vcmp.lt.s32.totalorder %v776, 14
        %vm3005 = vcmp.lt.s32.totalorder %v777, 14
        %vm3006 = vcmp.lt.s32.totalorder %v778, 14
        %vm3007 = vcmp.lt.s32.totalorder %v779, 14
        %vm3008 = vcmp.lt.s32.totalorder %v780, 14
        %vm3009 = vcmp.lt.s32.totalorder %v781, 14
        %vm3010 = vcmp.lt.s32.totalorder %v782, 14
        %vm3011 = vcmp.lt.s32.totalorder %v783, 14
        %vm3012 = vcmp.lt.s32.totalorder %v784, 14
        %vm3013 = vcmp.lt.s32.totalorder %v785, 14
        %vm3014 = vcmp.lt.s32.totalorder %v786, 14
        %vm3015 = vcmp.lt.s32.totalorder %v787, 14
        %vm3016 = vcmp.lt.s32.totalorder %v788, 14
        %vm3017 = vcmp.lt.s32.totalorder %v789, 14
        %vm3018 = vcmp.lt.s32.totalorder %v790, 14
        %vm3019 = vcmp.lt.s32.totalorder %v791, 14
        %vm3020 = vcmp.lt.s32.totalorder %v792, 14
        %vm3021 = vcmp.lt.s32.totalorder %v793, 14
        %vm3022 = vcmp.lt.s32.totalorder %v794, 14
        %vm3023 = vcmp.lt.s32.totalorder %v795, 14
        %v3024 = vrot.slane %v2641, 2
        %v3025 = vrot.slane %v2646, 2
        %v3026 = vrot.slane %v2651, 2
        %v3027 = vrot.slane %v2656, 2
        %v3028 = vrot.slane %v2661, 2
        %v3029 = vrot.slane %v2666, 2
        %v3030 = vrot.slane %v2671, 2
        %v3031 = vrot.slane %v2676, 2
        %v3032 = vrot.slane %v2681, 2
        %v3033 = vrot.slane %v2686, 2
        %v3034 = vrot.slane %v2691, 2
        %v3035 = vrot.slane %v2696, 2
        %v3036 = vrot.slane %v2701, 2
        %v3037 = vrot.slane %v2706, 2
        %v3038 = vrot.slane %v2711, 2
        %v3039 = vrot.slane %v2716, 2
        %v3040 = vrot.slane %v2721, 2
        %v3041 = vrot.slane %v2726, 2
        %v3042 = vrot.slane %v2731, 2
        %v3043 = vrot.slane %v2736, 2
        %v3044 = vrot.slane %v2741, 2
        %v3045 = vrot.slane %v2746, 2
        %v3046 = vrot.slane %v2751, 2
        %v3047 = vrot.slane %v2756, 2
        %v3048 = vrot.slane %v2761, 2
        %v3049 = vrot.slane %v2766, 2
        %v3050 = vrot.slane %v2771, 2
        %v3051 = vrot.slane %v2776, 2
        %v3052 = vrot.slane %v2781, 2
        %v3053 = vrot.slane %v2786, 2
        %v3054 = vrot.slane %v2791, 2
        %v3055 = vrot.slane %v2796, 2
        %vm3056 = vcmp.lt.s32.totalorder %v380, 6
        %v3057 = vsel %vm3056, %v3054, %v3055
        %v3058 = vsel %vm3056, %v3053, %v3054
        %v3059 = vsel %vm3056, %v3052, %v3053
        %v3060 = vsel %vm3056, %v3051, %v3052
        %v3061 = vsel %vm3056, %v3050, %v3051
        %v3062 = vsel %vm3056, %v3049, %v3050
        %v3063 = vsel %vm3056, %v3048, %v3049
        %v3064 = vsel %vm3056, %v3047, %v3048
        %v3065 = vsel %vm3056, %v3046, %v3047
        %v3066 = vsel %vm3056, %v3045, %v3046
        %v3067 = vsel %vm3056, %v3044, %v3045
        %v3068 = vsel %vm3056, %v3043, %v3044
        %v3069 = vsel %vm3056, %v3042, %v3043
        %v3070 = vsel %vm3056, %v3041, %v3042
        %v3071 = vsel %vm3056, %v3040, %v3041
        %v3072 = vsel %vm3056, %v3039, %v3040
        %v3073 = vsel %vm3056, %v3038, %v3039
        %v3074 = vsel %vm3056, %v3037, %v3038
        %v3075 = vsel %vm3056, %v3036, %v3037
        %v3076 = vsel %vm3056, %v3035, %v3036
        %v3077 = vsel %vm3056, %v3034, %v3035
        %v3078 = vsel %vm3056, %v3033, %v3034
        %v3079 = vsel %vm3056, %v3032, %v3033
        %v3080 = vsel %vm3056, %v3031, %v3032
        %v3081 = vsel %vm3056, %v3030, %v3031
        %v3082 = vsel %vm3056, %v3029, %v3030
        %v3083 = vsel %vm3056, %v3028, %v3029
        %v3084 = vsel %vm3056, %v3027, %v3028
        %v3085 = vsel %vm3056, %v3026, %v3027
        %v3086 = vsel %vm3056, %v3025, %v3026
        %v3087 = vsel %vm3056, %v3024, %v3025
        %v3088 = vsel %vm3056, %v3055, %v3024
        %v3089 = vsel %vm2992, 1, 0
        %v3090 = vsel %vm2993, 1, 0
        %v3091 = vsel %vm2994, 1, 0
        %v3092 = vsel %vm2995, 1, 0
        %v3093 = vsel %vm2996, 1, 0
        %v3094 = vsel %vm2997, 1, 0
        %v3095 = vsel %vm2998, 1, 0
        %v3096 = vsel %vm2999, 1, 0
        %v3097 = vsel %vm3000, 1, 0
        %v3098 = vsel %vm3001, 1, 0
        %v3099 = vsel %vm3002, 1, 0
        %v3100 = vsel %vm3003, 1, 0
        %v3101 = vsel %vm3004, 1, 0
        %v3102 = vsel %vm3005, 1, 0
        %v3103 = vsel %vm3006, 1, 0
        %v3104 = vsel %vm3007, 1, 0
        %v3105 = vsel %vm3008, 1, 0
        %v3106 = vsel %vm3009, 1, 0
        %v3107 = vsel %vm3010, 1, 0
        %v3108 = vsel %vm3011, 1, 0
        %v3109 = vsel %vm3012, 1, 0
        %v3110 = vsel %vm3013, 1, 0
        %v3111 = vsel %vm3014, 1, 0
        %v3112 = vsel %vm3015, 1, 0
        %v3113 = vsel %vm3016, 1, 0
        %v3114 = vsel %vm3017, 1, 0
        %v3115 = vsel %vm3018, 1, 0
        %v3116 = vsel %vm3019, 1, 0
        %v3117 = vsel %vm3020, 1, 0
        %v3118 = vsel %vm3021, 1, 0
        %v3119 = vsel %vm3022, 1, 0
        %v3120 = vsel %vm3023, 1, 0
        %vm3121 = vcmp.eq.s32.totalorder %v3089, 1
        %vm3122 = vcmp.eq.s32.totalorder %v3090, 1
        %vm3123 = vcmp.eq.s32.totalorder %v3091, 1
        %vm3124 = vcmp.eq.s32.totalorder %v3092, 1
        %vm3125 = vcmp.eq.s32.totalorder %v3093, 1
        %vm3126 = vcmp.eq.s32.totalorder %v3094, 1
        %vm3127 = vcmp.eq.s32.totalorder %v3095, 1
        %vm3128 = vcmp.eq.s32.totalorder %v3096, 1
        %vm3129 = vcmp.eq.s32.totalorder %v3097, 1
        %vm3130 = vcmp.eq.s32.totalorder %v3098, 1
        %vm3131 = vcmp.eq.s32.totalorder %v3099, 1
        %vm3132 = vcmp.eq.s32.totalorder %v3100, 1
        %vm3133 = vcmp.eq.s32.totalorder %v3101, 1
        %vm3134 = vcmp.eq.s32.totalorder %v3102, 1
        %vm3135 = vcmp.eq.s32.totalorder %v3103, 1
        %vm3136 = vcmp.eq.s32.totalorder %v3104, 1
        %vm3137 = vcmp.eq.s32.totalorder %v3105, 1
        %vm3138 = vcmp.eq.s32.totalorder %v3106, 1
        %vm3139 = vcmp.eq.s32.totalorder %v3107, 1
        %vm3140 = vcmp.eq.s32.totalorder %v3108, 1
        %vm3141 = vcmp.eq.s32.totalorder %v3109, 1
        %vm3142 = vcmp.eq.s32.totalorder %v3110, 1
        %vm3143 = vcmp.eq.s32.totalorder %v3111, 1
        %vm3144 = vcmp.eq.s32.totalorder %v3112, 1
        %vm3145 = vcmp.eq.s32.totalorder %v3113, 1
        %vm3146 = vcmp.eq.s32.totalorder %v3114, 1
        %vm3147 = vcmp.eq.s32.totalorder %v3115, 1
        %vm3148 = vcmp.eq.s32.totalorder %v3116, 1
        %vm3149 = vcmp.eq.s32.totalorder %v3117, 1
        %vm3150 = vcmp.eq.s32.totalorder %v3118, 1
        %vm3151 = vcmp.eq.s32.totalorder %v3119, 1
        %vm3152 = vcmp.eq.s32.totalorder %v3120, 1
        %v3153 = vsel %vm3121, %v3087, 0.0
        %v3154 = vsel %vm3122, %v3086, 0.0
        %v3155 = vsel %vm3123, %v3085, 0.0
        %v3156 = vsel %vm3124, %v3084, 0.0
        %v3157 = vsel %vm3125, %v3083, 0.0
        %v3158 = vsel %vm3126, %v3082, 0.0
        %v3159 = vsel %vm3127, %v3081, 0.0
        %v3160 = vsel %vm3128, %v3080, 0.0
        %v3161 = vsel %vm3129, %v3079, 0.0
        %v3162 = vsel %vm3130, %v3078, 0.0
        %v3163 = vsel %vm3131, %v3077, 0.0
        %v3164 = vsel %vm3132, %v3076, 0.0
        %v3165 = vsel %vm3133, %v3075, 0.0
        %v3166 = vsel %vm3134, %v3074, 0.0
        %v3167 = vsel %vm3135, %v3073, 0.0
        %v3168 = vsel %vm3136, %v3072, 0.0
        %v3169 = vsel %vm3137, %v3071, 0.0
        %v3170 = vsel %vm3138, %v3070, 0.0
        %v3171 = vsel %vm3139, %v3069, 0.0
        %v3172 = vsel %vm3140, %v3068, 0.0
        %v3173 = vsel %vm3141, %v3067, 0.0
        %v3174 = vsel %vm3142, %v3066, 0.0
        %v3175 = vsel %vm3143, %v3065, 0.0
        %v3176 = vsel %vm3144, %v3064, 0.0
        %v3177 = vsel %vm3145, %v3063, 0.0
        %v3178 = vsel %vm3146, %v3062, 0.0
        %v3179 = vsel %vm3147, %v3061, 0.0
        %v3180 = vsel %vm3148, %v3060, 0.0
        %v3181 = vsel %vm3149, %v3059, 0.0
        %v3182 = vsel %vm3150, %v3058, 0.0
        %v3183 = vsel %vm3151, %v3057, 0.0
        %v3184 = vsel %vm3152, %v3088, 0.0
        %v3185 = vadd.f32 %v2960, %v2386
        %v3186 = vadd.f32 %v2961, %v2392
        %v3187 = vadd.f32 %v2962, %v2398
        %v3188 = vadd.f32 %v2963, %v2404
        %v3189 = vadd.f32 %v2964, %v2410
        %v3190 = vadd.f32 %v2965, %v2416
        %v3191 = vadd.f32 %v2966, %v2422
        %v3192 = vadd.f32 %v2967, %v2428
        %v3193 = vadd.f32 %v2968, %v2434
        %v3194 = vadd.f32 %v2969, %v2440
        %v3195 = vadd.f32 %v2970, %v2446
        %v3196 = vadd.f32 %v2971, %v2452
        %v3197 = vadd.f32 %v2972, %v2458
        %v3198 = vadd.f32 %v2973, %v2464
        %v3199 = vadd.f32 %v2974, %v2470
        %v3200 = vadd.f32 %v2975, %v2476
        %v3201 = vadd.f32 %v2976, %v2482
        %v3202 = vadd.f32 %v2977, %v2488
        %v3203 = vadd.f32 %v2978, %v2494
        %v3204 = vadd.f32 %v2979, %v2500
        %v3205 = vadd.f32 %v2980, %v2506
        %v3206 = vadd.f32 %v2981, %v2512
        %v3207 = vadd.f32 %v2982, %v2518
        %v3208 = vadd.f32 %v2983, %v2524
        %v3209 = vadd.f32 %v2984, %v2530
        %v3210 = vadd.f32 %v2985, %v2536
        %v3211 = vadd.f32 %v2986, %v2542
        %v3212 = vadd.f32 %v2987, %v2548
        %v3213 = vadd.f32 %v2988, %v2554
        %v3214 = vadd.f32 %v2989, %v2560
        %v3215 = vadd.f32 %v2990, %v2566
        %v3216 = vadd.f32 %v2991, %v2572
        %v3217 = vadd.f32 %v3185, %v3153
        %v3218 = vadd.f32 %v3186, %v3154
        %v3219 = vadd.f32 %v3187, %v3155
        %v3220 = vadd.f32 %v3188, %v3156
        %v3221 = vadd.f32 %v3189, %v3157
        %v3222 = vadd.f32 %v3190, %v3158
        %v3223 = vadd.f32 %v3191, %v3159
        %v3224 = vadd.f32 %v3192, %v3160
        %v3225 = vadd.f32 %v3193, %v3161
        %v3226 = vadd.f32 %v3194, %v3162
        %v3227 = vadd.f32 %v3195, %v3163
        %v3228 = vadd.f32 %v3196, %v3164
        %v3229 = vadd.f32 %v3197, %v3165
        %v3230 = vadd.f32 %v3198, %v3166
        %v3231 = vadd.f32 %v3199, %v3167
        %v3232 = vadd.f32 %v3200, %v3168
        %v3233 = vadd.f32 %v3201, %v3169
        %v3234 = vadd.f32 %v3202, %v3170
        %v3235 = vadd.f32 %v3203, %v3171
        %v3236 = vadd.f32 %v3204, %v3172
        %v3237 = vadd.f32 %v3205, %v3173
        %v3238 = vadd.f32 %v3206, %v3174
        %v3239 = vadd.f32 %v3207, %v3175
        %v3240 = vadd.f32 %v3208, %v3176
        %v3241 = vadd.f32 %v3209, %v3177
        %v3242 = vadd.f32 %v3210, %v3178
        %v3243 = vadd.f32 %v3211, %v3179
        %v3244 = vadd.f32 %v3212, %v3180
        %v3245 = vadd.f32 %v3213, %v3181
        %v3246 = vadd.f32 %v3214, %v3182
        %v3247 = vadd.f32 %v3215, %v3183
        %v3248 = vadd.f32 %v3216, %v3184
        %v3249 = vlaneseq
        %v3250 = vshrl.u32 %v3249, 7
        %v3251 = vsub.s32 0, %v3250
        %v3252 = vrot.slane %v373, %v3251
        %v3253 = vadd.f32 %v3217, %v3252
        %v3254 = vadd.f32 %v3218, %v3252
        %v3255 = vadd.f32 %v3219, %v3252
        %v3256 = vadd.f32 %v3220, %v3252
        %v3257 = vadd.f32 %v3221, %v3252
        %v3258 = vadd.f32 %v3222, %v3252
        %v3259 = vadd.f32 %v3223, %v3252
        %v3260 = vadd.f32 %v3224, %v3252
        %v3261 = vadd.f32 %v3225, %v3252
        %v3262 = vadd.f32 %v3226, %v3252
        %v3263 = vadd.f32 %v3227, %v3252
        %v3264 = vadd.f32 %v3228, %v3252
        %v3265 = vadd.f32 %v3229, %v3252
        %v3266 = vadd.f32 %v3230, %v3252
        %v3267 = vadd.f32 %v3231, %v3252
        %v3268 = vadd.f32 %v3232, %v3252
        %v3269 = vadd.f32 %v3233, %v3252
        %v3270 = vadd.f32 %v3234, %v3252
        %v3271 = vadd.f32 %v3235, %v3252
        %v3272 = vadd.f32 %v3236, %v3252
        %v3273 = vadd.f32 %v3237, %v3252
        %v3274 = vadd.f32 %v3238, %v3252
        %v3275 = vadd.f32 %v3239, %v3252
        %v3276 = vadd.f32 %v3240, %v3252
        %v3277 = vadd.f32 %v3241, %v3252
        %v3278 = vadd.f32 %v3242, %v3252
        %v3279 = vadd.f32 %v3243, %v3252
        %v3280 = vadd.f32 %v3244, %v3252
        %v3281 = vadd.f32 %v3245, %v3252
        %v3282 = vadd.f32 %v3246, %v3252
        %v3283 = vadd.f32 %v3247, %v3252
        %v3284 = vadd.f32 %v3248, %v3252
        %3285 = vadd.xlane.f32.xlu0 %v3253
        %v3286 = vpop.xlane.xlu0 %3285
        %3287 = vadd.xlane.f32.xlu0 %v3254
        %v3288 = vpop.xlane.xlu0 %3287
        %3289 = vadd.xlane.f32.xlu0 %v3255
        %v3290 = vpop.xlane.xlu0 %3289
        %3291 = vadd.xlane.f32.xlu0 %v3256
        %v3292 = vpop.xlane.xlu0 %3291
        %3293 = vadd.xlane.f32.xlu0 %v3257
        %v3294 = vpop.xlane.xlu0 %3293
        %3295 = vadd.xlane.f32.xlu0 %v3258
        %v3296 = vpop.xlane.xlu0 %3295
        %3297 = vadd.xlane.f32.xlu0 %v3259
        %v3298 = vpop.xlane.xlu0 %3297
        %3299 = vadd.xlane.f32.xlu0 %v3260
        %v3300 = vpop.xlane.xlu0 %3299
        %3301 = vadd.xlane.f32.xlu0 %v3261
        %v3302 = vpop.xlane.xlu0 %3301
        %3303 = vadd.xlane.f32.xlu0 %v3262
        %v3304 = vpop.xlane.xlu0 %3303
        %3305 = vadd.xlane.f32.xlu0 %v3263
        %v3306 = vpop.xlane.xlu0 %3305
        %3307 = vadd.xlane.f32.xlu0 %v3264
        %v3308 = vpop.xlane.xlu0 %3307
        %3309 = vadd.xlane.f32.xlu0 %v3265
        %v3310 = vpop.xlane.xlu0 %3309
        %3311 = vadd.xlane.f32.xlu0 %v3266
        %v3312 = vpop.xlane.xlu0 %3311
        %3313 = vadd.xlane.f32.xlu0 %v3267
        %v3314 = vpop.xlane.xlu0 %3313
        %3315 = vadd.xlane.f32.xlu0 %v3268
        %v3316 = vpop.xlane.xlu0 %3315
        %3317 = vadd.xlane.f32.xlu0 %v3269
        %v3318 = vpop.xlane.xlu0 %3317
        %3319 = vadd.xlane.f32.xlu0 %v3270
        %v3320 = vpop.xlane.xlu0 %3319
        %3321 = vadd.xlane.f32.xlu0 %v3271
        %v3322 = vpop.xlane.xlu0 %3321
        %3323 = vadd.xlane.f32.xlu0 %v3272
        %v3324 = vpop.xlane.xlu0 %3323
        %3325 = vadd.xlane.f32.xlu0 %v3273
        %v3326 = vpop.xlane.xlu0 %3325
        %3327 = vadd.xlane.f32.xlu0 %v3274
        %v3328 = vpop.xlane.xlu0 %3327
        %3329 = vadd.xlane.f32.xlu0 %v3275
        %v3330 = vpop.xlane.xlu0 %3329
        %3331 = vadd.xlane.f32.xlu0 %v3276
        %v3332 = vpop.xlane.xlu0 %3331
        %3333 = vadd.xlane.f32.xlu0 %v3277
        %v3334 = vpop.xlane.xlu0 %3333
        %3335 = vadd.xlane.f32.xlu0 %v3278
        %v3336 = vpop.xlane.xlu0 %3335
        %3337 = vadd.xlane.f32.xlu0 %v3279
        %v3338 = vpop.xlane.xlu0 %3337
        %3339 = vadd.xlane.f32.xlu0 %v3280
        %v3340 = vpop.xlane.xlu0 %3339
        %3341 = vadd.xlane.f32.xlu0 %v3281
        %v3342 = vpop.xlane.xlu0 %3341
        %3343 = vadd.xlane.f32.xlu0 %v3282
        %v3344 = vpop.xlane.xlu0 %3343
        %3345 = vadd.xlane.f32.xlu0 %v3283
        %v3346 = vpop.xlane.xlu0 %3345
        %3347 = vadd.xlane.f32.xlu0 %v3284
        %v3348 = vpop.xlane.xlu0 %3347
        %v3349 = vmul.f32 %v3286, %v1876
        %v3350 = vmul.f32 %v3288, %v1876
        %v3351 = vmul.f32 %v3290, %v1876
        %v3352 = vmul.f32 %v3292, %v1876
        %v3353 = vmul.f32 %v3294, %v1876
        %v3354 = vmul.f32 %v3296, %v1876
        %v3355 = vmul.f32 %v3298, %v1876
        %v3356 = vmul.f32 %v3300, %v1876
        %v3357 = vmul.f32 %v3302, %v1876
        %v3358 = vmul.f32 %v3304, %v1876
        %v3359 = vmul.f32 %v3306, %v1876
        %v3360 = vmul.f32 %v3308, %v1876
        %v3361 = vmul.f32 %v3310, %v1876
        %v3362 = vmul.f32 %v3312, %v1876
        %v3363 = vmul.f32 %v3314, %v1876
        %v3364 = vmul.f32 %v3316, %v1876
        %v3365 = vmul.f32 %v3318, %v1876
        %v3366 = vmul.f32 %v3320, %v1876
        %v3367 = vmul.f32 %v3322, %v1876
        %v3368 = vmul.f32 %v3324, %v1876
        %v3369 = vmul.f32 %v3326, %v1876
        %v3370 = vmul.f32 %v3328, %v1876
        %v3371 = vmul.f32 %v3330, %v1876
        %v3372 = vmul.f32 %v3332, %v1876
        %v3373 = vmul.f32 %v3334, %v1876
        %v3374 = vmul.f32 %v3336, %v1876
        %v3375 = vmul.f32 %v3338, %v1876
        %v3376 = vmul.f32 %v3340, %v1876
        %v3377 = vmul.f32 %v3342, %v1876
        %v3378 = vmul.f32 %v3344, %v1876
        %v3379 = vmul.f32 %v3346, %v1876
        %v3380 = vmul.f32 %v3348, %v1876
        %v3381 = vsub.f32 %v3253, %v3349
        %v3382 = vsub.f32 %v3254, %v3350
        %v3383 = vsub.f32 %v3255, %v3351
        %v3384 = vsub.f32 %v3256, %v3352
        %v3385 = vsub.f32 %v3257, %v3353
        %v3386 = vsub.f32 %v3258, %v3354
        %v3387 = vsub.f32 %v3259, %v3355
        %v3388 = vsub.f32 %v3260, %v3356
        %v3389 = vsub.f32 %v3261, %v3357
        %v3390 = vsub.f32 %v3262, %v3358
        %v3391 = vsub.f32 %v3263, %v3359
        %v3392 = vsub.f32 %v3264, %v3360
        %v3393 = vsub.f32 %v3265, %v3361
        %v3394 = vsub.f32 %v3266, %v3362
        %v3395 = vsub.f32 %v3267, %v3363
        %v3396 = vsub.f32 %v3268, %v3364
        %v3397 = vsub.f32 %v3269, %v3365
        %v3398 = vsub.f32 %v3270, %v3366
        %v3399 = vsub.f32 %v3271, %v3367
        %v3400 = vsub.f32 %v3272, %v3368
        %v3401 = vsub.f32 %v3273, %v3369
        %v3402 = vsub.f32 %v3274, %v3370
        %v3403 = vsub.f32 %v3275, %v3371
        %v3404 = vsub.f32 %v3276, %v3372
        %v3405 = vsub.f32 %v3277, %v3373
        %v3406 = vsub.f32 %v3278, %v3374
        %v3407 = vsub.f32 %v3279, %v3375
        %v3408 = vsub.f32 %v3280, %v3376
        %v3409 = vsub.f32 %v3281, %v3377
        %v3410 = vsub.f32 %v3282, %v3378
        %v3411 = vsub.f32 %v3283, %v3379
        %v3412 = vsub.f32 %v3284, %v3380
        %v3413 = vmul.f32 %v3381, %v3381
        %v3414 = vmul.f32 %v3382, %v3382
        %v3415 = vmul.f32 %v3383, %v3383
        %v3416 = vmul.f32 %v3384, %v3384
        %v3417 = vmul.f32 %v3385, %v3385
        %v3418 = vmul.f32 %v3386, %v3386
        %v3419 = vmul.f32 %v3387, %v3387
        %v3420 = vmul.f32 %v3388, %v3388
        %v3421 = vmul.f32 %v3389, %v3389
        %v3422 = vmul.f32 %v3390, %v3390
        %v3423 = vmul.f32 %v3391, %v3391
        %v3424 = vmul.f32 %v3392, %v3392
        %v3425 = vmul.f32 %v3393, %v3393
        %v3426 = vmul.f32 %v3394, %v3394
        %v3427 = vmul.f32 %v3395, %v3395
        %v3428 = vmul.f32 %v3396, %v3396
        %v3429 = vmul.f32 %v3397, %v3397
        %v3430 = vmul.f32 %v3398, %v3398
        %v3431 = vmul.f32 %v3399, %v3399
        %v3432 = vmul.f32 %v3400, %v3400
        %v3433 = vmul.f32 %v3401, %v3401
        %v3434 = vmul.f32 %v3402, %v3402
        %v3435 = vmul.f32 %v3403, %v3403
        %v3436 = vmul.f32 %v3404, %v3404
        %v3437 = vmul.f32 %v3405, %v3405
        %v3438 = vmul.f32 %v3406, %v3406
        %v3439 = vmul.f32 %v3407, %v3407
        %v3440 = vmul.f32 %v3408, %v3408
        %v3441 = vmul.f32 %v3409, %v3409
        %v3442 = vmul.f32 %v3410, %v3410
        %v3443 = vmul.f32 %v3411, %v3411
        %v3444 = vmul.f32 %v3412, %v3412
        %3445 = vadd.xlane.f32.xlu0 %v3413
        %v3446 = vpop.xlane.xlu0 %3445
        %3447 = vadd.xlane.f32.xlu0 %v3414
        %v3448 = vpop.xlane.xlu0 %3447
        %3449 = vadd.xlane.f32.xlu0 %v3415
        %v3450 = vpop.xlane.xlu0 %3449
        %3451 = vadd.xlane.f32.xlu0 %v3416
        %v3452 = vpop.xlane.xlu0 %3451
        %3453 = vadd.xlane.f32.xlu0 %v3417
        %v3454 = vpop.xlane.xlu0 %3453
        %3455 = vadd.xlane.f32.xlu0 %v3418
        %v3456 = vpop.xlane.xlu0 %3455
        %3457 = vadd.xlane.f32.xlu0 %v3419
        %v3458 = vpop.xlane.xlu0 %3457
        %3459 = vadd.xlane.f32.xlu0 %v3420
        %v3460 = vpop.xlane.xlu0 %3459
        %3461 = vadd.xlane.f32.xlu0 %v3421
        %v3462 = vpop.xlane.xlu0 %3461
        %3463 = vadd.xlane.f32.xlu0 %v3422
        %v3464 = vpop.xlane.xlu0 %3463
        %3465 = vadd.xlane.f32.xlu0 %v3423
        %v3466 = vpop.xlane.xlu0 %3465
        %3467 = vadd.xlane.f32.xlu0 %v3424
        %v3468 = vpop.xlane.xlu0 %3467
        %3469 = vadd.xlane.f32.xlu0 %v3425
        %v3470 = vpop.xlane.xlu0 %3469
        %3471 = vadd.xlane.f32.xlu0 %v3426
        %v3472 = vpop.xlane.xlu0 %3471
        %3473 = vadd.xlane.f32.xlu0 %v3427
        %v3474 = vpop.xlane.xlu0 %3473
        %3475 = vadd.xlane.f32.xlu0 %v3428
        %v3476 = vpop.xlane.xlu0 %3475
        %3477 = vadd.xlane.f32.xlu0 %v3429
        %v3478 = vpop.xlane.xlu0 %3477
        %3479 = vadd.xlane.f32.xlu0 %v3430
        %v3480 = vpop.xlane.xlu0 %3479
        %3481 = vadd.xlane.f32.xlu0 %v3431
        %v3482 = vpop.xlane.xlu0 %3481
        %3483 = vadd.xlane.f32.xlu0 %v3432
        %v3484 = vpop.xlane.xlu0 %3483
        %3485 = vadd.xlane.f32.xlu0 %v3433
        %v3486 = vpop.xlane.xlu0 %3485
        %3487 = vadd.xlane.f32.xlu0 %v3434
        %v3488 = vpop.xlane.xlu0 %3487
        %3489 = vadd.xlane.f32.xlu0 %v3435
        %v3490 = vpop.xlane.xlu0 %3489
        %3491 = vadd.xlane.f32.xlu0 %v3436
        %v3492 = vpop.xlane.xlu0 %3491
        %3493 = vadd.xlane.f32.xlu0 %v3437
        %v3494 = vpop.xlane.xlu0 %3493
        %3495 = vadd.xlane.f32.xlu0 %v3438
        %v3496 = vpop.xlane.xlu0 %3495
        %3497 = vadd.xlane.f32.xlu0 %v3439
        %v3498 = vpop.xlane.xlu0 %3497
        %3499 = vadd.xlane.f32.xlu0 %v3440
        %v3500 = vpop.xlane.xlu0 %3499
        %3501 = vadd.xlane.f32.xlu0 %v3441
        %v3502 = vpop.xlane.xlu0 %3501
        %3503 = vadd.xlane.f32.xlu0 %v3442
        %v3504 = vpop.xlane.xlu0 %3503
        %3505 = vadd.xlane.f32.xlu0 %v3443
        %v3506 = vpop.xlane.xlu0 %3505
        %3507 = vadd.xlane.f32.xlu0 %v3444
        %v3508 = vpop.xlane.xlu0 %3507
        %v3509 = vmul.f32 %v3446, %v1876
        %v3510 = vmul.f32 %v3448, %v1876
        %v3511 = vmul.f32 %v3450, %v1876
        %v3512 = vmul.f32 %v3452, %v1876
        %v3513 = vmul.f32 %v3454, %v1876
        %v3514 = vmul.f32 %v3456, %v1876
        %v3515 = vmul.f32 %v3458, %v1876
        %v3516 = vmul.f32 %v3460, %v1876
        %v3517 = vmul.f32 %v3462, %v1876
        %v3518 = vmul.f32 %v3464, %v1876
        %v3519 = vmul.f32 %v3466, %v1876
        %v3520 = vmul.f32 %v3468, %v1876
        %v3521 = vmul.f32 %v3470, %v1876
        %v3522 = vmul.f32 %v3472, %v1876
        %v3523 = vmul.f32 %v3474, %v1876
        %v3524 = vmul.f32 %v3476, %v1876
        %v3525 = vmul.f32 %v3478, %v1876
        %v3526 = vmul.f32 %v3480, %v1876
        %v3527 = vmul.f32 %v3482, %v1876
        %v3528 = vmul.f32 %v3484, %v1876
        %v3529 = vmul.f32 %v3486, %v1876
        %v3530 = vmul.f32 %v3488, %v1876
        %v3531 = vmul.f32 %v3490, %v1876
        %v3532 = vmul.f32 %v3492, %v1876
        %v3533 = vmul.f32 %v3494, %v1876
        %v3534 = vmul.f32 %v3496, %v1876
        %v3535 = vmul.f32 %v3498, %v1876
        %v3536 = vmul.f32 %v3500, %v1876
        %v3537 = vmul.f32 %v3502, %v1876
        %v3538 = vmul.f32 %v3504, %v1876
        %v3539 = vmul.f32 %v3506, %v1876
        %v3540 = vmul.f32 %v3508, %v1876
        %v3541 = vadd.f32 %v3509, 1e-05
        %v3542 = vadd.f32 %v3510, 1e-05
        %v3543 = vadd.f32 %v3511, 1e-05
        %v3544 = vadd.f32 %v3512, 1e-05
        %v3545 = vadd.f32 %v3513, 1e-05
        %v3546 = vadd.f32 %v3514, 1e-05
        %v3547 = vadd.f32 %v3515, 1e-05
        %v3548 = vadd.f32 %v3516, 1e-05
        %v3549 = vadd.f32 %v3517, 1e-05
        %v3550 = vadd.f32 %v3518, 1e-05
        %v3551 = vadd.f32 %v3519, 1e-05
        %v3552 = vadd.f32 %v3520, 1e-05
        %v3553 = vadd.f32 %v3521, 1e-05
        %v3554 = vadd.f32 %v3522, 1e-05
        %v3555 = vadd.f32 %v3523, 1e-05
        %v3556 = vadd.f32 %v3524, 1e-05
        %v3557 = vadd.f32 %v3525, 1e-05
        %v3558 = vadd.f32 %v3526, 1e-05
        %v3559 = vadd.f32 %v3527, 1e-05
        %v3560 = vadd.f32 %v3528, 1e-05
        %v3561 = vadd.f32 %v3529, 1e-05
        %v3562 = vadd.f32 %v3530, 1e-05
        %v3563 = vadd.f32 %v3531, 1e-05
        %v3564 = vadd.f32 %v3532, 1e-05
        %v3565 = vadd.f32 %v3533, 1e-05
        %v3566 = vadd.f32 %v3534, 1e-05
        %v3567 = vadd.f32 %v3535, 1e-05
        %v3568 = vadd.f32 %v3536, 1e-05
        %v3569 = vadd.f32 %v3537, 1e-05
        %v3570 = vadd.f32 %v3538, 1e-05
        %v3571 = vadd.f32 %v3539, 1e-05
        %v3572 = vadd.f32 %v3540, 1e-05
        %v3573 = vrsqrt.pop %v3541
        %v3574 = vrsqrt.pop %v3542
        %v3575 = vrsqrt.pop %v3543
        %v3576 = vrsqrt.pop %v3544
        %v3577 = vrsqrt.pop %v3545
        %v3578 = vrsqrt.pop %v3546
        %v3579 = vrsqrt.pop %v3547
        %v3580 = vrsqrt.pop %v3548
        %v3581 = vrsqrt.pop %v3549
        %v3582 = vrsqrt.pop %v3550
        %v3583 = vrsqrt.pop %v3551
        %v3584 = vrsqrt.pop %v3552
        %v3585 = vrsqrt.pop %v3553
        %v3586 = vrsqrt.pop %v3554
        %v3587 = vrsqrt.pop %v3555
        %v3588 = vrsqrt.pop %v3556
        %v3589 = vrsqrt.pop %v3557
        %v3590 = vrsqrt.pop %v3558
        %v3591 = vrsqrt.pop %v3559
        %v3592 = vrsqrt.pop %v3560
        %v3593 = vrsqrt.pop %v3561
        %v3594 = vrsqrt.pop %v3562
        %v3595 = vrsqrt.pop %v3563
        %v3596 = vrsqrt.pop %v3564
        %v3597 = vrsqrt.pop %v3565
        %v3598 = vrsqrt.pop %v3566
        %v3599 = vrsqrt.pop %v3567
        %v3600 = vrsqrt.pop %v3568
        %v3601 = vrsqrt.pop %v3569
        %v3602 = vrsqrt.pop %v3570
        %v3603 = vrsqrt.pop %v3571
        %v3604 = vrsqrt.pop %v3572
        %v3605 = vmul.f32 %v3381, %v3573
        %v3606 = vmul.f32 %v3382, %v3574
        %v3607 = vmul.f32 %v3383, %v3575
        %v3608 = vmul.f32 %v3384, %v3576
        %v3609 = vmul.f32 %v3385, %v3577
        %v3610 = vmul.f32 %v3386, %v3578
        %v3611 = vmul.f32 %v3387, %v3579
        %v3612 = vmul.f32 %v3388, %v3580
        %v3613 = vmul.f32 %v3389, %v3581
        %v3614 = vmul.f32 %v3390, %v3582
        %v3615 = vmul.f32 %v3391, %v3583
        %v3616 = vmul.f32 %v3392, %v3584
        %v3617 = vmul.f32 %v3393, %v3585
        %v3618 = vmul.f32 %v3394, %v3586
        %v3619 = vmul.f32 %v3395, %v3587
        %v3620 = vmul.f32 %v3396, %v3588
        %v3621 = vmul.f32 %v3397, %v3589
        %v3622 = vmul.f32 %v3398, %v3590
        %v3623 = vmul.f32 %v3399, %v3591
        %v3624 = vmul.f32 %v3400, %v3592
        %v3625 = vmul.f32 %v3401, %v3593
        %v3626 = vmul.f32 %v3402, %v3594
        %v3627 = vmul.f32 %v3403, %v3595
        %v3628 = vmul.f32 %v3404, %v3596
        %v3629 = vmul.f32 %v3405, %v3597
        %v3630 = vmul.f32 %v3406, %v3598
        %v3631 = vmul.f32 %v3407, %v3599
        %v3632 = vmul.f32 %v3408, %v3600
        %v3633 = vmul.f32 %v3409, %v3601
        %v3634 = vmul.f32 %v3410, %v3602
        %v3635 = vmul.f32 %v3411, %v3603
        %v3636 = vmul.f32 %v3412, %v3604
        %v3637 = vmul.f32 %v3605, %v2168
        %v3638 = vmul.f32 %v3606, %v2168
        %v3639 = vmul.f32 %v3607, %v2168
        %v3640 = vmul.f32 %v3608, %v2168
        %v3641 = vmul.f32 %v3609, %v2168
        %v3642 = vmul.f32 %v3610, %v2168
        %v3643 = vmul.f32 %v3611, %v2168
        %v3644 = vmul.f32 %v3612, %v2168
        %v3645 = vmul.f32 %v3613, %v2168
        %v3646 = vmul.f32 %v3614, %v2168
        %v3647 = vmul.f32 %v3615, %v2168
        %v3648 = vmul.f32 %v3616, %v2168
        %v3649 = vmul.f32 %v3617, %v2168
        %v3650 = vmul.f32 %v3618, %v2168
        %v3651 = vmul.f32 %v3619, %v2168
        %v3652 = vmul.f32 %v3620, %v2168
        %v3653 = vmul.f32 %v3621, %v2168
        %v3654 = vmul.f32 %v3622, %v2168
        %v3655 = vmul.f32 %v3623, %v2168
        %v3656 = vmul.f32 %v3624, %v2168
        %v3657 = vmul.f32 %v3625, %v2168
        %v3658 = vmul.f32 %v3626, %v2168
        %v3659 = vmul.f32 %v3627, %v2168
        %v3660 = vmul.f32 %v3628, %v2168
        %v3661 = vmul.f32 %v3629, %v2168
        %v3662 = vmul.f32 %v3630, %v2168
        %v3663 = vmul.f32 %v3631, %v2168
        %v3664 = vmul.f32 %v3632, %v2168
        %v3665 = vmul.f32 %v3633, %v2168
        %v3666 = vmul.f32 %v3634, %v2168
        %v3667 = vmul.f32 %v3635, %v2168
        %v3668 = vmul.f32 %v3636, %v2168
        %v3669 = vadd.f32 %v3637, %v2204
        %v3670 = vadd.f32 %v3638, %v2204
        %v3671 = vadd.f32 %v3639, %v2204
        %v3672 = vadd.f32 %v3640, %v2204
        %v3673 = vadd.f32 %v3641, %v2204
        %v3674 = vadd.f32 %v3642, %v2204
        %v3675 = vadd.f32 %v3643, %v2204
        %v3676 = vadd.f32 %v3644, %v2204
        %v3677 = vadd.f32 %v3645, %v2204
        %v3678 = vadd.f32 %v3646, %v2204
        %v3679 = vadd.f32 %v3647, %v2204
        %v3680 = vadd.f32 %v3648, %v2204
        %v3681 = vadd.f32 %v3649, %v2204
        %v3682 = vadd.f32 %v3650, %v2204
        %v3683 = vadd.f32 %v3651, %v2204
        %v3684 = vadd.f32 %v3652, %v2204
        %v3685 = vadd.f32 %v3653, %v2204
        %v3686 = vadd.f32 %v3654, %v2204
        %v3687 = vadd.f32 %v3655, %v2204
        %v3688 = vadd.f32 %v3656, %v2204
        %v3689 = vadd.f32 %v3657, %v2204
        %v3690 = vadd.f32 %v3658, %v2204
        %v3691 = vadd.f32 %v3659, %v2204
        %v3692 = vadd.f32 %v3660, %v2204
        %v3693 = vadd.f32 %v3661, %v2204
        %v3694 = vadd.f32 %v3662, %v2204
        %v3695 = vadd.f32 %v3663, %v2204
        %v3696 = vadd.f32 %v3664, %v2204
        %v3697 = vadd.f32 %v3665, %v2204
        %v3698 = vadd.f32 %v3666, %v2204
        %v3699 = vadd.f32 %v3667, %v2204
        %v3700 = vadd.f32 %v3668, %v2204
        %v3701 = vmax.f32 %v3669, 0.0
        %v3702 = vmax.f32 %v3670, 0.0
        %v3703 = vmax.f32 %v3671, 0.0
        %v3704 = vmax.f32 %v3672, 0.0
        %v3705 = vmax.f32 %v3673, 0.0
        %v3706 = vmax.f32 %v3674, 0.0
        %v3707 = vmax.f32 %v3675, 0.0
        %v3708 = vmax.f32 %v3676, 0.0
        %v3709 = vmax.f32 %v3677, 0.0
        %v3710 = vmax.f32 %v3678, 0.0
        %v3711 = vmax.f32 %v3679, 0.0
        %v3712 = vmax.f32 %v3680, 0.0
        %v3713 = vmax.f32 %v3681, 0.0
        %v3714 = vmax.f32 %v3682, 0.0
        %v3715 = vmax.f32 %v3683, 0.0
        %v3716 = vmax.f32 %v3684, 0.0
        %v3717 = vmax.f32 %v3685, 0.0
        %v3718 = vmax.f32 %v3686, 0.0
        %v3719 = vmax.f32 %v3687, 0.0
        %v3720 = vmax.f32 %v3688, 0.0
        %v3721 = vmax.f32 %v3689, 0.0
        %v3722 = vmax.f32 %v3690, 0.0
        %v3723 = vmax.f32 %v3691, 0.0
        %v3724 = vmax.f32 %v3692, 0.0
        %v3725 = vmax.f32 %v3693, 0.0
        %v3726 = vmax.f32 %v3694, 0.0
        %v3727 = vmax.f32 %v3695, 0.0
        %v3728 = vmax.f32 %v3696, 0.0
        %v3729 = vmax.f32 %v3697, 0.0
        %v3730 = vmax.f32 %v3698, 0.0
        %v3731 = vmax.f32 %v3699, 0.0
        %v3732 = vmax.f32 %v3700, 0.0
        %v3733 = vld [vmem:[#allocation8] sm:$0xff]
        %v3734 = vld [vmem:[#allocation8 + $0x8] sm:$0xff]
        %v3735 = vld [vmem:[#allocation8 + $0x10] sm:$0xff]
        %v3736 = vld [vmem:[#allocation8 + $0x18] sm:$0xff]
        %v3737 = vld [vmem:[#allocation8 + $0x20] sm:$0xff]
        %v3738 = vld [vmem:[#allocation8 + $0x28] sm:$0xff]
        %v3739 = vld [vmem:[#allocation8 + $0x30] sm:$0xff]
        %v3740 = vld [vmem:[#allocation8 + $0x38] sm:$0xff]
        %v3741 = vld [vmem:[#allocation8 + $0x40] sm:$0xff]
        %v3742 = vld [vmem:[#allocation8 + $0x48] sm:$0xff]
        %v3743 = vld [vmem:[#allocation8 + $0x50] sm:$0xff]
        %v3744 = vld [vmem:[#allocation8 + $0x58] sm:$0xff]
        %v3745 = vld [vmem:[#allocation8 + $0x60] sm:$0xff]
        %v3746 = vld [vmem:[#allocation8 + $0x68] sm:$0xff]
        %v3747 = vld [vmem:[#allocation8 + $0x70] sm:$0xff]
        %v3748 = vld [vmem:[#allocation8 + $0x78] sm:$0xff]
        %v3749 = vld [vmem:[#allocation8 + $0x80] sm:$0xff]
        %v3750 = vld [vmem:[#allocation8 + $0x88] sm:$0xff]
        %v3751 = vld [vmem:[#allocation8 + $0x90] sm:$0xff]
        %v3752 = vld [vmem:[#allocation8 + $0x98] sm:$0xff]
        %v3753 = vld [vmem:[#allocation8 + $0xa0] sm:$0xff]
        %v3754 = vld [vmem:[#allocation8 + $0xa8] sm:$0xff]
        %v3755 = vld [vmem:[#allocation8 + $0xb0] sm:$0xff]
        %v3756 = vld [vmem:[#allocation8 + $0xb8] sm:$0xff]
        %v3757 = vld [vmem:[#allocation8 + $0xc0] sm:$0xff]
        %v3758 = vld [vmem:[#allocation8 + $0xc8] sm:$0xff]
        %v3759 = vld [vmem:[#allocation8 + $0xd0] sm:$0xff]
        %v3760 = vld [vmem:[#allocation8 + $0xd8] sm:$0xff]
        %v3761 = vld [vmem:[#allocation8 + $0xe0] sm:$0xff]
        %v3762 = vld [vmem:[#allocation8 + $0xe8] sm:$0xff]
        %v3763 = vld [vmem:[#allocation8 + $0xf0] sm:$0xff]
        %v3764 = vld [vmem:[#allocation8 + $0xf8] sm:$0xff]
        %v3765 = vld [vmem:[#allocation8 + $0x100] sm:$0xff]
        %v3766 = vld [vmem:[#allocation8 + $0x108] sm:$0xff]
        %v3767 = vld [vmem:[#allocation8 + $0x110] sm:$0xff]
        %v3768 = vld [vmem:[#allocation8 + $0x118] sm:$0xff]
        %v3769 = vld [vmem:[#allocation8 + $0x120] sm:$0xff]
        %v3770 = vld [vmem:[#allocation8 + $0x128] sm:$0xff]
        %v3771 = vld [vmem:[#allocation8 + $0x130] sm:$0xff]
        %v3772 = vld [vmem:[#allocation8 + $0x138] sm:$0xff]
        %v3773 = vld [vmem:[#allocation8 + $0x140] sm:$0xff]
        %v3774 = vld [vmem:[#allocation8 + $0x148] sm:$0xff]
        %v3775 = vld [vmem:[#allocation8 + $0x150] sm:$0xff]
        %v3776 = vld [vmem:[#allocation8 + $0x158] sm:$0xff]
        %v3777 = vld [vmem:[#allocation8 + $0x160] sm:$0xff]
        %v3778 = vld [vmem:[#allocation8 + $0x168] sm:$0xff]
        %v3779 = vld [vmem:[#allocation8 + $0x170] sm:$0xff]
        %v3780 = vld [vmem:[#allocation8 + $0x178] sm:$0xff]
        %3781 = vmatprep.subr.mxu0 %v3734
        %3782 = vmatpush1.msra.mxu0 %v3733
        %3783 = vmatprep.subr.mxu0 %v3737
        %3784 = vmatpush1.msra.mxu0 %v3736
        %3785 = vmatprep.subr.mxu0 %v3740
        %3786 = vmatpush1.msra.mxu0 %v3739
        %3787 = vmatprep.subr.mxu0 %v3743
        %3788 = vmatpush1.msra.mxu0 %v3742
        %3789 = vmatprep.subr.mxu0 %v3746
        %3790 = vmatpush1.msra.mxu0 %v3745
        %3791 = vmatprep.subr.mxu0 %v3749
        %3792 = vmatpush1.msra.mxu0 %v3748
        %3793 = vmatprep.subr.mxu0 %v3752
        %3794 = vmatpush1.msra.mxu0 %v3751
        %3795 = vmatprep.subr.mxu0 %v3755
        %3796 = vmatpush1.msra.mxu0 %v3754
        %3797 = vmatprep.subr.mxu0 %v3758
        %3798 = vmatpush1.msra.mxu0 %v3757
        %3799 = vmatprep.subr.mxu0 %v3761
        %3800 = vmatpush1.msra.mxu0 %v3760
        %3801 = vmatprep.subr.mxu0 %v3764
        %3802 = vmatpush1.msra.mxu0 %v3763
        %3803 = vmatprep.subr.mxu0 %v3767
        %3804 = vmatpush1.msra.mxu0 %v3766
        %3805 = vmatprep.subr.mxu0 %v3770
        %3806 = vmatpush1.msra.mxu0 %v3769
        %3807 = vmatprep.subr.mxu0 %v3773
        %3808 = vmatpush1.msra.mxu0 %v3772
        %3809 = vmatprep.subr.mxu0 %v3776
        %3810 = vmatpush1.msra.mxu0 %v3775
        %3811 = vmatprep.subr.mxu0 %v3779
        %3812 = vmatpush1.msra.mxu0 %v3778
        %3813 = vmatprep.subr.mxu0 0.0
        %3814 = vmatpush1.msra.mxu0 0.0
        %3815 = vmatprep.subr.mxu0 0.0
        %3816 = vmatpush1.msra.mxu0 0.0
        %3817 = vmatprep.subr.mxu0 0.0
        %3818 = vmatpush1.msra.mxu0 0.0
        %3819 = vmatprep.subr.mxu0 0.0
        %3820 = vmatpush1.msra.mxu0 0.0
        %3821 = vmatprep.subr.mxu0 0.0
        %3822 = vmatpush1.msra.mxu0 0.0
        %3823 = vmatprep.subr.mxu0 0.0
        %3824 = vmatpush1.msra.mxu0 0.0
        %3825 = vmatprep.subr.mxu0 0.0
        %3826 = vmatpush1.msra.mxu0 0.0
        %3827 = vmatprep.subr.mxu0 0.0
        %3828 = vmatpush1.msra.mxu0 0.0
        %3829 = vmatprep.subr.mxu0 0.0
        %3830 = vmatpush1.msra.mxu0 0.0
        %3831 = vmatprep.subr.mxu0 0.0
        %3832 = vmatpush1.msra.mxu0 0.0
        %3833 = vmatprep.subr.mxu0 0.0
        %3834 = vmatpush1.msra.mxu0 0.0
        %3835 = vmatprep.subr.mxu0 0.0
        %3836 = vmatpush1.msra.mxu0 0.0
        %3837 = vmatprep.subr.mxu0 0.0
        %3838 = vmatpush1.msra.mxu0 0.0
        %3839 = vmatprep.subr.mxu0 0.0
        %3840 = vmatpush1.msra.mxu0 0.0
        %3841 = vmatprep.subr.mxu0 0.0
        %3842 = vmatpush1.msra.mxu0 0.0
        %3843 = vmatprep.subr.mxu0 0.0
        %3844 = vmatpush1.msra.mxu0 0.0
        %3845 = vmatprep.mubr.f32.mxu0 0.0
        %3846 = vmatmul.mubr.f32.gmra.mrb[0].mxu0 %v3669
        %v3847 = vpop.f32.mrb[0].mxu0
        %v3848 = vadd.f32 0.0, %v3847
        %v3849 = vpop.f32.mrb[0].mxu0
        %v3850 = vadd.f32 0.0, %v3849
        %3851 = vmatprep.mubr.f32.mxu0 0.0
        %3852 = vmatmul.mubr.f32.gmra.mrb[0].mxu0 %v3670
        %v3853 = vpop.f32.mrb[0].mxu0
        %v3854 = vadd.f32 0.0, %v3853
        %v3855 = vpop.f32.mrb[0].mxu0
        %v3856 = vadd.f32 0.0, %v3855
        %3857 = vmatprep.mubr.f32.mxu0 0.0
        %3858 = vmatmul.mubr.f32.gmra.mrb[0].mxu0 %v3671
        %v3859 = vpop.f32.mrb[0].mxu0
        %v3860 = vadd.f32 0.0, %v3859
        %v3861 = vpop.f32.mrb[0].mxu0
        %v3862 = vadd.f32 0.0, %v3861
        %3863 = vmatprep.mubr.f32.mxu0 0.0
        %3864 = vmatmul.mubr.f32.gmra.mrb[0].mxu0 %v3672
        %v3865 = vpop.f32.mrb[0].mxu0
        %v3866 = vadd.f32 0.0, %v3865
        %v3867 = vpop.f32.mrb[0].mxu0
        %v3868 = vadd.f32 0.0, %v3867
        %3869 = vmatprep.mubr.f32.mxu0 0.0
        %3870 = vmatmul.mubr.f32.gmra.mrb[0].mxu0 %v3673
        %v3871 = vpop.f32.mrb[0].mxu0
        %v3872 = vadd.f32 0.0, %v3871
        %v3873 = vpop.f32.mrb[0].mxu0
        %v3874 = vadd.f32 0.0, %v3873
        %3875 = vmatprep.mubr.f32.mxu0 0.0
        %3876 = vmatmul.mubr.f32.gmra.mrb[0].mxu0 %v3674
        %v3877 = vpop.f32.mrb[0].mxu0
        %v3878 = vadd.f32 0.0, %v3877
        %v3879 = vpop.f32.mrb[0].mxu0
        %v3880 = vadd.f32 0.0, %v3879
        %3881 = vmatprep.mubr.f32.mxu0 0.0
        %3882 = vmatmul.mubr.f32.gmra.mrb[0].mxu0 %v3675
        %v3883 = vpop.f32.mrb[0].mxu0
        %v3884 = vadd.f32 0.0, %v3883
        %v3885 = vpop.f32.mrb[0].mxu0
        %v3886 = vadd.f32 0.0, %v3885
        %3887 = vmatprep.mubr.f32.mxu0 0.0
        %3888 = vmatmul.mubr.f32.gmra.mrb[0].mxu0 %v3676
        %v3889 = vpop.f32.mrb[0].mxu0
        %v3890 = vadd.f32 0.0, %v3889
        %v3891 = vpop.f32.mrb[0].mxu0
        %v3892 = vadd.f32 0.0, %v3891
        %3893 = vmatprep.mubr.f32.mxu0 0.0
        %3894 = vmatmul.mubr.f32.gmra.mrb[0].mxu0 %v3677
        %v3895 = vpop.f32.mrb[0].mxu0
        %v3896 = vadd.f32 0.0, %v3895
        %v3897 = vpop.f32.mrb[0].mxu0
        %v3898 = vadd.f32 0.0, %v3897
        %3899 = vmatprep.mubr.f32.mxu0 0.0
        %3900 = vmatmul.mubr.f32.gmra.mrb[0].mxu0 %v3678
        %v3901 = vpop.f32.mrb[0].mxu0
        %v3902 = vadd.f32 0.0, %v3901
        %v3903 = vpop.f32.mrb[0].mxu0
        %v3904 = vadd.f32 0.0, %v3903
        %3905 = vmatprep.mubr.f32.mxu0 0.0
        %3906 = vmatmul.mubr.f32.gmra.mrb[0].mxu0 %v3679
        %v3907 = vpop.f32.mrb[0].mxu0
        %v3908 = vadd.f32 0.0, %v3907
        %v3909 = vpop.f32.mrb[0].mxu0
        %v3910 = vadd.f32 0.0, %v3909
        %3911 = vmatprep.mubr.f32.mxu0 0.0
        %3912 = vmatmul.mubr.f32.gmra.mrb[0].mxu0 %v3680
        %v3913 = vpop.f32.mrb[0].mxu0
        %v3914 = vadd.f32 0.0, %v3913
        %v3915 = vpop.f32.mrb[0].mxu0
        %v3916 = vadd.f32 0.0, %v3915
        %3917 = vmatprep.mubr.f32.mxu0 0.0
        %3918 = vmatmul.mubr.f32.gmra.mrb[0].mxu0 %v3681
        %v3919 = vpop.f32.mrb[0].mxu0
        %v3920 = vadd.f32 0.0, %v3919
        %v3921 = vpop.f32.mrb[0].mxu0
        %v3922 = vadd.f32 0.0, %v3921
        %3923 = vmatprep.mubr.f32.mxu0 0.0
        %3924 = vmatmul.mubr.f32.gmra.mrb[0].mxu0 %v3682
        %v3925 = vpop.f32.mrb[0].mxu0
        %v3926 = vadd.f32 0.0, %v3925
        %v3927 = vpop.f32.mrb[0].mxu0
        %v3928 = vadd.f32 0.0, %v3927
        %3929 = vmatprep.mubr.f32.mxu0 0.0
        %3930 = vmatmul.mubr.f32.gmra.mrb[0].mxu0 %v3683
        %v3931 = vpop.f32.mrb[0].mxu0
        %v3932 = vadd.f32 0.0, %v3931
        %v3933 = vpop.f32.mrb[0].mxu0
        %v3934 = vadd.f32 0.0, %v3933
        %3935 = vmatprep.mubr.f32.mxu0 0.0
        %3936 = vmatmul.mubr.f32.gmra.mrb[0].mxu0 %v3684
        %v3937 = vpop.f32.mrb[0].mxu0
        %v3938 = vadd.f32 0.0, %v3937
        %v3939 = vpop.f32.mrb[0].mxu0
        %v3940 = vadd.f32 0.0, %v3939
        %3941 = vmatprep.mubr.f32.mxu0 0.0
        %3942 = vmatmul.mubr.f32.gmra.mrb[0].mxu0 %v3685
        %v3943 = vpop.f32.mrb[0].mxu0
        %v3944 = vadd.f32 0.0, %v3943
        %v3945 = vpop.f32.mrb[0].mxu0
        %v3946 = vadd.f32 0.0, %v3945
        %3947 = vmatprep.mubr.f32.mxu0 0.0
        %3948 = vmatmul.mubr.f32.gmra.mrb[0].mxu0 %v3686
        %v3949 = vpop.f32.mrb[0].mxu0
        %v3950 = vadd.f32 0.0, %v3949
        %v3951 = vpop.f32.mrb[0].mxu0
        %v3952 = vadd.f32 0.0, %v3951
        %3953 = vmatprep.mubr.f32.mxu0 0.0
        %3954 = vmatmul.mubr.f32.gmra.mrb[0].mxu0 %v3687
        %v3955 = vpop.f32.mrb[0].mxu0
        %v3956 = vadd.f32 0.0, %v3955
        %v3957 = vpop.f32.mrb[0].mxu0
        %v3958 = vadd.f32 0.0, %v3957
        %3959 = vmatprep.mubr.f32.mxu0 0.0
        %3960 = vmatmul.mubr.f32.gmra.mrb[0].mxu0 %v3688
        %v3961 = vpop.f32.mrb[0].mxu0
        %v3962 = vadd.f32 0.0, %v3961
        %v3963 = vpop.f32.mrb[0].mxu0
        %v3964 = vadd.f32 0.0, %v3963
        %3965 = vmatprep.mubr.f32.mxu0 0.0
        %3966 = vmatmul.mubr.f32.gmra.mrb[0].mxu0 %v3689
        %v3967 = vpop.f32.mrb[0].mxu0
        %v3968 = vadd.f32 0.0, %v3967
        %v3969 = vpop.f32.mrb[0].mxu0
        %v3970 = vadd.f32 0.0, %v3969
        %3971 = vmatprep.mubr.f32.mxu0 0.0
        %3972 = vmatmul.mubr.f32.gmra.mrb[0].mxu0 %v3690
        %v3973 = vpop.f32.mrb[0].mxu0
        %v3974 = vadd.f32 0.0, %v3973
        %v3975 = vpop.f32.mrb[0].mxu0
        %v3976 = vadd.f32 0.0, %v3975
        %3977 = vmatprep.mubr.f32.mxu0 0.0
        %3978 = vmatmul.mubr.f32.gmra.mrb[0].mxu0 %v3691
        %v3979 = vpop.f32.mrb[0].mxu0
        %v3980 = vadd.f32 0.0, %v3979
        %v3981 = vpop.f32.mrb[0].mxu0
        %v3982 = vadd.f32 0.0, %v3981
        %3983 = vmatprep.mubr.f32.mxu0 0.0
        %3984 = vmatmul.mubr.f32.gmra.mrb[0].mxu0 %v3692
        %v3985 = vpop.f32.mrb[0].mxu0
        %v3986 = vadd.f32 0.0, %v3985
        %v3987 = vpop.f32.mrb[0].mxu0
        %v3988 = vadd.f32 0.0, %v3987
        %3989 = vmatprep.mubr.f32.mxu0 0.0
        %3990 = vmatmul.mubr.f32.gmra.mrb[0].mxu0 %v3693
        %v3991 = vpop.f32.mrb[0].mxu0
        %v3992 = vadd.f32 0.0, %v3991
        %v3993 = vpop.f32.mrb[0].mxu0
        %v3994 = vadd.f32 0.0, %v3993
        %3995 = vmatprep.mubr.f32.mxu0 0.0
        %3996 = vmatmul.mubr.f32.gmra.mrb[0].mxu0 %v3694
        %v3997 = vpop.f32.mrb[0].mxu0
        %v3998 = vadd.f32 0.0, %v3997
        %v3999 = vpop.f32.mrb[0].mxu0
        %v4000 = vadd.f32 0.0, %v3999
        %4001 = vmatprep.mubr.f32.mxu0 0.0
        %4002 = vmatmul.mubr.f32.gmra.mrb[0].mxu0 %v3695
        %v4003 = vpop.f32.mrb[0].mxu0
        %v4004 = vadd.f32 0.0, %v4003
        %v4005 = vpop.f32.mrb[0].mxu0
        %v4006 = vadd.f32 0.0, %v4005
        %4007 = vmatprep.mubr.f32.mxu0 0.0
        %4008 = vmatmul.mubr.f32.gmra.mrb[0].mxu0 %v3696
        %v4009 = vpop.f32.mrb[0].mxu0
        %v4010 = vadd.f32 0.0, %v4009
        %v4011 = vpop.f32.mrb[0].mxu0
        %v4012 = vadd.f32 0.0, %v4011
        %4013 = vmatprep.mubr.f32.mxu0 0.0
        %4014 = vmatmul.mubr.f32.gmra.mrb[0].mxu0 %v3697
        %v4015 = vpop.f32.mrb[0].mxu0
        %v4016 = vadd.f32 0.0, %v4015
        %v4017 = vpop.f32.mrb[0].mxu0
        %v4018 = vadd.f32 0.0, %v4017
        %4019 = vmatprep.mubr.f32.mxu0 0.0
        %4020 = vmatmul.mubr.f32.gmra.mrb[0].mxu0 %v3698
        %v4021 = vpop.f32.mrb[0].mxu0
        %v4022 = vadd.f32 0.0, %v4021
        %v4023 = vpop.f32.mrb[0].mxu0
        %v4024 = vadd.f32 0.0, %v4023
        %4025 = vmatprep.mubr.f32.mxu0 0.0
        %4026 = vmatmul.mubr.f32.gmra.mrb[0].mxu0 %v3699
        %v4027 = vpop.f32.mrb[0].mxu0
        %v4028 = vadd.f32 0.0, %v4027
        %v4029 = vpop.f32.mrb[0].mxu0
        %v4030 = vadd.f32 0.0, %v4029
        %4031 = vmatprep.mubr.f32.mxu0 0.0
        %4032 = vmatmul.mubr.f32.gmra.mrb[0].mxu0 %v3700
        %v4033 = vpop.f32.mrb[0].mxu0
        %v4034 = vadd.f32 0.0, %v4033
        %v4035 = vpop.f32.mrb[0].mxu0
        %v4036 = vadd.f32 0.0, %v4035
        %4037 = vdwg.mxu0
        %4038 = vmatprep.subr.mxu0 0.0
        %4039 = vmatpush1.msra.mxu0 %v3735
        %4040 = vmatprep.subr.mxu0 0.0
        %4041 = vmatpush1.msra.mxu0 %v3738
        %4042 = vmatprep.subr.mxu0 0.0
        %4043 = vmatpush1.msra.mxu0 %v3741
        %4044 = vmatprep.subr.mxu0 0.0
        %4045 = vmatpush1.msra.mxu0 %v3744
        %4046 = vmatprep.subr.mxu0 0.0
        %4047 = vmatpush1.msra.mxu0 %v3747
        %4048 = vmatprep.subr.mxu0 0.0
        %4049 = vmatpush1.msra.mxu0 %v3750
        %4050 = vmatprep.subr.mxu0 0.0
        %4051 = vmatpush1.msra.mxu0 %v3753
        %4052 = vmatprep.subr.mxu0 0.0
        %4053 = vmatpush1.msra.mxu0 %v3756
        %4054 = vmatprep.subr.mxu0 0.0
        %4055 = vmatpush1.msra.mxu0 %v3759
        %4056 = vmatprep.subr.mxu0 0.0
        %4057 = vmatpush1.msra.mxu0 %v3762
        %4058 = vmatprep.subr.mxu0 0.0
        %4059 = vmatpush1.msra.mxu0 %v3765
        %4060 = vmatprep.subr.mxu0 0.0
        %4061 = vmatpush1.msra.mxu0 %v3768
        %4062 = vmatprep.subr.mxu0 0.0
        %4063 = vmatpush1.msra.mxu0 %v3771
        %4064 = vmatprep.subr.mxu0 0.0
        %4065 = vmatpush1.msra.mxu0 %v3774
        %4066 = vmatprep.subr.mxu0 0.0
        %4067 = vmatpush1.msra.mxu0 %v3777
        %4068 = vmatprep.subr.mxu0 0.0
        %4069 = vmatpush1.msra.mxu0 %v3780
        %4070 = vmatprep.subr.mxu0 0.0
        %4071 = vmatpush1.msra.mxu0 0.0
        %4072 = vmatprep.subr.mxu0 0.0
        %4073 = vmatpush1.msra.mxu0 0.0
        %4074 = vmatprep.subr.mxu0 0.0
        %4075 = vmatpush1.msra.mxu0 0.0
        %4076 = vmatprep.subr.mxu0 0.0
        %4077 = vmatpush1.msra.mxu0 0.0
        %4078 = vmatprep.subr.mxu0 0.0
        %4079 = vmatpush1.msra.mxu0 0.0
        %4080 = vmatprep.subr.mxu0 0.0
        %4081 = vmatpush1.msra.mxu0 0.0
        %4082 = vmatprep.subr.mxu0 0.0
        %4083 = vmatpush1.msra.mxu0 0.0
        %4084 = vmatprep.subr.mxu0 0.0
        %4085 = vmatpush1.msra.mxu0 0.0
        %4086 = vmatprep.subr.mxu0 0.0
        %4087 = vmatpush1.msra.mxu0 0.0
        %4088 = vmatprep.subr.mxu0 0.0
        %4089 = vmatpush1.msra.mxu0 0.0
        %4090 = vmatprep.subr.mxu0 0.0
        %4091 = vmatpush1.msra.mxu0 0.0
        %4092 = vmatprep.subr.mxu0 0.0
        %4093 = vmatpush1.msra.mxu0 0.0
        %4094 = vmatprep.subr.mxu0 0.0
        %4095 = vmatpush1.msra.mxu0 0.0
        %4096 = vmatprep.subr.mxu0 0.0
        %4097 = vmatpush1.msra.mxu0 0.0
        %4098 = vmatprep.subr.mxu0 0.0
        %4099 = vmatpush1.msra.mxu0 0.0
        %4100 = vmatprep.subr.mxu0 0.0
        %4101 = vmatpush1.msra.mxu0 0.0
        %4102 = vmatprep.mubr.f32.mxu0 0.0
        %4103 = vmatmul.mubr.f32.gmra.mrb[0].mxu0 %v3669
        %v4104 = vpop.f32.mrb[0].mxu0
        %v4105 = vadd.f32 0.0, %v4104
        %v4106 = vpop.f32.mrb[0].mxu0
        %4107 = vmatprep.mubr.f32.mxu0 0.0
        %4108 = vmatmul.mubr.f32.gmra.mrb[0].mxu0 %v3670
        %v4109 = vpop.f32.mrb[0].mxu0
        %v4110 = vadd.f32 0.0, %v4109
        %v4111 = vpop.f32.mrb[0].mxu0
        %4112 = vmatprep.mubr.f32.mxu0 0.0
        %4113 = vmatmul.mubr.f32.gmra.mrb[0].mxu0 %v3671
        %v4114 = vpop.f32.mrb[0].mxu0
        %v4115 = vadd.f32 0.0, %v4114
        %v4116 = vpop.f32.mrb[0].mxu0
        %4117 = vmatprep.mubr.f32.mxu0 0.0
        %4118 = vmatmul.mubr.f32.gmra.mrb[0].mxu0 %v3672
        %v4119 = vpop.f32.mrb[0].mxu0
        %v4120 = vadd.f32 0.0, %v4119
        %v4121 = vpop.f32.mrb[0].mxu0
        %4122 = vmatprep.mubr.f32.mxu0 0.0
        %4123 = vmatmul.mubr.f32.gmra.mrb[0].mxu0 %v3673
        %v4124 = vpop.f32.mrb[0].mxu0
        %v4125 = vadd.f32 0.0, %v4124
        %v4126 = vpop.f32.mrb[0].mxu0
        %4127 = vmatprep.mubr.f32.mxu0 0.0
        %4128 = vmatmul.mubr.f32.gmra.mrb[0].mxu0 %v3674
        %v4129 = vpop.f32.mrb[0].mxu0
        %v4130 = vadd.f32 0.0, %v4129
        %v4131 = vpop.f32.mrb[0].mxu0
        %4132 = vmatprep.mubr.f32.mxu0 0.0
        %4133 = vmatmul.mubr.f32.gmra.mrb[0].mxu0 %v3675
        %v4134 = vpop.f32.mrb[0].mxu0
        %v4135 = vadd.f32 0.0, %v4134
        %v4136 = vpop.f32.mrb[0].mxu0
        %4137 = vmatprep.mubr.f32.mxu0 0.0
        %4138 = vmatmul.mubr.f32.gmra.mrb[0].mxu0 %v3676
        %v4139 = vpop.f32.mrb[0].mxu0
        %v4140 = vadd.f32 0.0, %v4139
        %v4141 = vpop.f32.mrb[0].mxu0
        %4142 = vmatprep.mubr.f32.mxu0 0.0
        %4143 = vmatmul.mubr.f32.gmra.mrb[0].mxu0 %v3677
        %v4144 = vpop.f32.mrb[0].mxu0
        %v4145 = vadd.f32 0.0, %v4144
        %v4146 = vpop.f32.mrb[0].mxu0
        %4147 = vmatprep.mubr.f32.mxu0 0.0
        %4148 = vmatmul.mubr.f32.gmra.mrb[0].mxu0 %v3678
        %v4149 = vpop.f32.mrb[0].mxu0
        %v4150 = vadd.f32 0.0, %v4149
        %v4151 = vpop.f32.mrb[0].mxu0
        %4152 = vmatprep.mubr.f32.mxu0 0.0
        %4153 = vmatmul.mubr.f32.gmra.mrb[0].mxu0 %v3679
        %v4154 = vpop.f32.mrb[0].mxu0
        %v4155 = vadd.f32 0.0, %v4154
        %v4156 = vpop.f32.mrb[0].mxu0
        %4157 = vmatprep.mubr.f32.mxu0 0.0
        %4158 = vmatmul.mubr.f32.gmra.mrb[0].mxu0 %v3680
        %v4159 = vpop.f32.mrb[0].mxu0
        %v4160 = vadd.f32 0.0, %v4159
        %v4161 = vpop.f32.mrb[0].mxu0
        %4162 = vmatprep.mubr.f32.mxu0 0.0
        %4163 = vmatmul.mubr.f32.gmra.mrb[0].mxu0 %v3681
        %v4164 = vpop.f32.mrb[0].mxu0
        %v4165 = vadd.f32 0.0, %v4164
        %v4166 = vpop.f32.mrb[0].mxu0
        %4167 = vmatprep.mubr.f32.mxu0 0.0
        %4168 = vmatmul.mubr.f32.gmra.mrb[0].mxu0 %v3682
        %v4169 = vpop.f32.mrb[0].mxu0
        %v4170 = vadd.f32 0.0, %v4169
        %v4171 = vpop.f32.mrb[0].mxu0
        %4172 = vmatprep.mubr.f32.mxu0 0.0
        %4173 = vmatmul.mubr.f32.gmra.mrb[0].mxu0 %v3683
        %v4174 = vpop.f32.mrb[0].mxu0
        %v4175 = vadd.f32 0.0, %v4174
        %v4176 = vpop.f32.mrb[0].mxu0
        %4177 = vmatprep.mubr.f32.mxu0 0.0
        %4178 = vmatmul.mubr.f32.gmra.mrb[0].mxu0 %v3684
        %v4179 = vpop.f32.mrb[0].mxu0
        %v4180 = vadd.f32 0.0, %v4179
        %v4181 = vpop.f32.mrb[0].mxu0
        %4182 = vmatprep.mubr.f32.mxu0 0.0
        %4183 = vmatmul.mubr.f32.gmra.mrb[0].mxu0 %v3685
        %v4184 = vpop.f32.mrb[0].mxu0
        %v4185 = vadd.f32 0.0, %v4184
        %v4186 = vpop.f32.mrb[0].mxu0
        %4187 = vmatprep.mubr.f32.mxu0 0.0
        %4188 = vmatmul.mubr.f32.gmra.mrb[0].mxu0 %v3686
        %v4189 = vpop.f32.mrb[0].mxu0
        %v4190 = vadd.f32 0.0, %v4189
        %v4191 = vpop.f32.mrb[0].mxu0
        %4192 = vmatprep.mubr.f32.mxu0 0.0
        %4193 = vmatmul.mubr.f32.gmra.mrb[0].mxu0 %v3687
        %v4194 = vpop.f32.mrb[0].mxu0
        %v4195 = vadd.f32 0.0, %v4194
        %v4196 = vpop.f32.mrb[0].mxu0
        %4197 = vmatprep.mubr.f32.mxu0 0.0
        %4198 = vmatmul.mubr.f32.gmra.mrb[0].mxu0 %v3688
        %v4199 = vpop.f32.mrb[0].mxu0
        %v4200 = vadd.f32 0.0, %v4199
        %v4201 = vpop.f32.mrb[0].mxu0
        %4202 = vmatprep.mubr.f32.mxu0 0.0
        %4203 = vmatmul.mubr.f32.gmra.mrb[0].mxu0 %v3689
        %v4204 = vpop.f32.mrb[0].mxu0
        %v4205 = vadd.f32 0.0, %v4204
        %v4206 = vpop.f32.mrb[0].mxu0
        %4207 = vmatprep.mubr.f32.mxu0 0.0
        %4208 = vmatmul.mubr.f32.gmra.mrb[0].mxu0 %v3690
        %v4209 = vpop.f32.mrb[0].mxu0
        %v4210 = vadd.f32 0.0, %v4209
        %v4211 = vpop.f32.mrb[0].mxu0
        %4212 = vmatprep.mubr.f32.mxu0 0.0
        %4213 = vmatmul.mubr.f32.gmra.mrb[0].mxu0 %v3691
        %v4214 = vpop.f32.mrb[0].mxu0
        %v4215 = vadd.f32 0.0, %v4214
        %v4216 = vpop.f32.mrb[0].mxu0
        %4217 = vmatprep.mubr.f32.mxu0 0.0
        %4218 = vmatmul.mubr.f32.gmra.mrb[0].mxu0 %v3692
        %v4219 = vpop.f32.mrb[0].mxu0
        %v4220 = vadd.f32 0.0, %v4219
        %v4221 = vpop.f32.mrb[0].mxu0
        %4222 = vmatprep.mubr.f32.mxu0 0.0
        %4223 = vmatmul.mubr.f32.gmra.mrb[0].mxu0 %v3693
        %v4224 = vpop.f32.mrb[0].mxu0
        %v4225 = vadd.f32 0.0, %v4224
        %v4226 = vpop.f32.mrb[0].mxu0
        %4227 = vmatprep.mubr.f32.mxu0 0.0
        %4228 = vmatmul.mubr.f32.gmra.mrb[0].mxu0 %v3694
        %v4229 = vpop.f32.mrb[0].mxu0
        %v4230 = vadd.f32 0.0, %v4229
        %v4231 = vpop.f32.mrb[0].mxu0
        %4232 = vmatprep.mubr.f32.mxu0 0.0
        %4233 = vmatmul.mubr.f32.gmra.mrb[0].mxu0 %v3695
        %v4234 = vpop.f32.mrb[0].mxu0
        %v4235 = vadd.f32 0.0, %v4234
        %v4236 = vpop.f32.mrb[0].mxu0
        %4237 = vmatprep.mubr.f32.mxu0 0.0
        %4238 = vmatmul.mubr.f32.gmra.mrb[0].mxu0 %v3696
        %v4239 = vpop.f32.mrb[0].mxu0
        %v4240 = vadd.f32 0.0, %v4239
        %v4241 = vpop.f32.mrb[0].mxu0
        %4242 = vmatprep.mubr.f32.mxu0 0.0
        %4243 = vmatmul.mubr.f32.gmra.mrb[0].mxu0 %v3697
        %v4244 = vpop.f32.mrb[0].mxu0
        %v4245 = vadd.f32 0.0, %v4244
        %v4246 = vpop.f32.mrb[0].mxu0
        %4247 = vmatprep.mubr.f32.mxu0 0.0
        %4248 = vmatmul.mubr.f32.gmra.mrb[0].mxu0 %v3698
        %v4249 = vpop.f32.mrb[0].mxu0
        %v4250 = vadd.f32 0.0, %v4249
        %v4251 = vpop.f32.mrb[0].mxu0
        %4252 = vmatprep.mubr.f32.mxu0 0.0
        %4253 = vmatmul.mubr.f32.gmra.mrb[0].mxu0 %v3699
        %v4254 = vpop.f32.mrb[0].mxu0
        %v4255 = vadd.f32 0.0, %v4254
        %v4256 = vpop.f32.mrb[0].mxu0
        %4257 = vmatprep.mubr.f32.mxu0 0.0
        %4258 = vmatmul.mubr.f32.gmra.mrb[0].mxu0 %v3700
        %v4259 = vpop.f32.mrb[0].mxu0
        %v4260 = vadd.f32 0.0, %v4259
        %v4261 = vpop.f32.mrb[0].mxu0
        %4262 = vdwg.mxu0
        %vm4263 = vcmp.ge.s32.totalorder %v764, 3
        %vm4264 = vcmp.ge.s32.totalorder %v765, 3
        %vm4265 = vcmp.ge.s32.totalorder %v766, 3
        %vm4266 = vcmp.ge.s32.totalorder %v767, 3
        %vm4267 = vcmp.ge.s32.totalorder %v768, 3
        %vm4268 = vcmp.ge.s32.totalorder %v769, 3
        %vm4269 = vcmp.ge.s32.totalorder %v770, 3
        %vm4270 = vcmp.ge.s32.totalorder %v771, 3
        %vm4271 = vcmp.ge.s32.totalorder %v772, 3
        %vm4272 = vcmp.ge.s32.totalorder %v773, 3
        %vm4273 = vcmp.ge.s32.totalorder %v774, 3
        %vm4274 = vcmp.ge.s32.totalorder %v775, 3
        %vm4275 = vcmp.ge.s32.totalorder %v776, 3
        %vm4276 = vcmp.ge.s32.totalorder %v777, 3
        %vm4277 = vcmp.ge.s32.totalorder %v778, 3
        %vm4278 = vcmp.ge.s32.totalorder %v779, 3
        %vm4279 = vcmp.ge.s32.totalorder %v780, 3
        %vm4280 = vcmp.ge.s32.totalorder %v781, 3
        %vm4281 = vcmp.ge.s32.totalorder %v782, 3
        %vm4282 = vcmp.ge.s32.totalorder %v783, 3
        %vm4283 = vcmp.ge.s32.totalorder %v784, 3
        %vm4284 = vcmp.ge.s32.totalorder %v785, 3
        %vm4285 = vcmp.ge.s32.totalorder %v786, 3
        %vm4286 = vcmp.ge.s32.totalorder %v787, 3
        %vm4287 = vcmp.ge.s32.totalorder %v788, 3
        %vm4288 = vcmp.ge.s32.totalorder %v789, 3
        %vm4289 = vcmp.ge.s32.totalorder %v790, 3
        %vm4290 = vcmp.ge.s32.totalorder %v791, 3
        %vm4291 = vcmp.ge.s32.totalorder %v792, 3
        %vm4292 = vcmp.ge.s32.totalorder %v793, 3
        %vm4293 = vcmp.ge.s32.totalorder %v794, 3
        %vm4294 = vcmp.ge.s32.totalorder %v795, 3
        %v4295 = vrot.slane %v3848, 5
        %v4296 = vrot.slane %v3854, 5
        %v4297 = vrot.slane %v3860, 5
        %v4298 = vrot.slane %v3866, 5
        %v4299 = vrot.slane %v3872, 5
        %v4300 = vrot.slane %v3878, 5
        %v4301 = vrot.slane %v3884, 5
        %v4302 = vrot.slane %v3890, 5
        %v4303 = vrot.slane %v3896, 5
        %v4304 = vrot.slane %v3902, 5
        %v4305 = vrot.slane %v3908, 5
        %v4306 = vrot.slane %v3914, 5
        %v4307 = vrot.slane %v3920, 5
        %v4308 = vrot.slane %v3926, 5
        %v4309 = vrot.slane %v3932, 5
        %v4310 = vrot.slane %v3938, 5
        %v4311 = vrot.slane %v3944, 5
        %v4312 = vrot.slane %v3950, 5
        %v4313 = vrot.slane %v3956, 5
        %v4314 = vrot.slane %v3962, 5
        %v4315 = vrot.slane %v3968, 5
        %v4316 = vrot.slane %v3974, 5
        %v4317 = vrot.slane %v3980, 5
        %v4318 = vrot.slane %v3986, 5
        %v4319 = vrot.slane %v3992, 5
        %v4320 = vrot.slane %v3998, 5
        %v4321 = vrot.slane %v4004, 5
        %v4322 = vrot.slane %v4010, 5
        %v4323 = vrot.slane %v4016, 5
        %v4324 = vrot.slane %v4022, 5
        %v4325 = vrot.slane %v4028, 5
        %v4326 = vrot.slane %v4034, 5
        %vm4327 = vcmp.lt.s32.totalorder %v380, 3
        %v4328 = vsel %vm4327, %v4325, %v4326
        %v4329 = vsel %vm4327, %v4324, %v4325
        %v4330 = vsel %vm4327, %v4323, %v4324
        %v4331 = vsel %vm4327, %v4322, %v4323
        %v4332 = vsel %vm4327, %v4321, %v4322
        %v4333 = vsel %vm4327, %v4320, %v4321
        %v4334 = vsel %vm4327, %v4319, %v4320
        %v4335 = vsel %vm4327, %v4318, %v4319
        %v4336 = vsel %vm4327, %v4317, %v4318
        %v4337 = vsel %vm4327, %v4316, %v4317
        %v4338 = vsel %vm4327, %v4315, %v4316
        %v4339 = vsel %vm4327, %v4314, %v4315
        %v4340 = vsel %vm4327, %v4313, %v4314
        %v4341 = vsel %vm4327, %v4312, %v4313
        %v4342 = vsel %vm4327, %v4311, %v4312
        %v4343 = vsel %vm4327, %v4310, %v4311
        %v4344 = vsel %vm4327, %v4309, %v4310
        %v4345 = vsel %vm4327, %v4308, %v4309
        %v4346 = vsel %vm4327, %v4307, %v4308
        %v4347 = vsel %vm4327, %v4306, %v4307
        %v4348 = vsel %vm4327, %v4305, %v4306
        %v4349 = vsel %vm4327, %v4304, %v4305
        %v4350 = vsel %vm4327, %v4303, %v4304
        %v4351 = vsel %vm4327, %v4302, %v4303
        %v4352 = vsel %vm4327, %v4301, %v4302
        %v4353 = vsel %vm4327, %v4300, %v4301
        %v4354 = vsel %vm4327, %v4299, %v4300
        %v4355 = vsel %vm4327, %v4298, %v4299
        %v4356 = vsel %vm4327, %v4297, %v4298
        %v4357 = vsel %vm4327, %v4296, %v4297
        %v4358 = vsel %vm4327, %v4295, %v4296
        %v4359 = vsel %vm4327, %v4326, %v4295
        %v4360 = vsel %vm4263, 1, 0
        %v4361 = vsel %vm4264, 1, 0
        %v4362 = vsel %vm4265, 1, 0
        %v4363 = vsel %vm4266, 1, 0
        %v4364 = vsel %vm4267, 1, 0
        %v4365 = vsel %vm4268, 1, 0
        %v4366 = vsel %vm4269, 1, 0
        %v4367 = vsel %vm4270, 1, 0
        %v4368 = vsel %vm4271, 1, 0
        %v4369 = vsel %vm4272, 1, 0
        %v4370 = vsel %vm4273, 1, 0
        %v4371 = vsel %vm4274, 1, 0
        %v4372 = vsel %vm4275, 1, 0
        %v4373 = vsel %vm4276, 1, 0
        %v4374 = vsel %vm4277, 1, 0
        %v4375 = vsel %vm4278, 1, 0
        %v4376 = vsel %vm4279, 1, 0
        %v4377 = vsel %vm4280, 1, 0
        %v4378 = vsel %vm4281, 1, 0
        %v4379 = vsel %vm4282, 1, 0
        %v4380 = vsel %vm4283, 1, 0
        %v4381 = vsel %vm4284, 1, 0
        %v4382 = vsel %vm4285, 1, 0
        %v4383 = vsel %vm4286, 1, 0
        %v4384 = vsel %vm4287, 1, 0
        %v4385 = vsel %vm4288, 1, 0
        %v4386 = vsel %vm4289, 1, 0
        %v4387 = vsel %vm4290, 1, 0
        %v4388 = vsel %vm4291, 1, 0
        %v4389 = vsel %vm4292, 1, 0
        %v4390 = vsel %vm4293, 1, 0
        %v4391 = vsel %vm4294, 1, 0
        %vm4392 = vcmp.eq.s32.totalorder %v4360, 1
        %vm4393 = vcmp.eq.s32.totalorder %v4361, 1
        %vm4394 = vcmp.eq.s32.totalorder %v4362, 1
        %vm4395 = vcmp.eq.s32.totalorder %v4363, 1
        %vm4396 = vcmp.eq.s32.totalorder %v4364, 1
        %vm4397 = vcmp.eq.s32.totalorder %v4365, 1
        %vm4398 = vcmp.eq.s32.totalorder %v4366, 1
        %vm4399 = vcmp.eq.s32.totalorder %v4367, 1
        %vm4400 = vcmp.eq.s32.totalorder %v4368, 1
        %vm4401 = vcmp.eq.s32.totalorder %v4369, 1
        %vm4402 = vcmp.eq.s32.totalorder %v4370, 1
        %vm4403 = vcmp.eq.s32.totalorder %v4371, 1
        %vm4404 = vcmp.eq.s32.totalorder %v4372, 1
        %vm4405 = vcmp.eq.s32.totalorder %v4373, 1
        %vm4406 = vcmp.eq.s32.totalorder %v4374, 1
        %vm4407 = vcmp.eq.s32.totalorder %v4375, 1
        %vm4408 = vcmp.eq.s32.totalorder %v4376, 1
        %vm4409 = vcmp.eq.s32.totalorder %v4377, 1
        %vm4410 = vcmp.eq.s32.totalorder %v4378, 1
        %vm4411 = vcmp.eq.s32.totalorder %v4379, 1
        %vm4412 = vcmp.eq.s32.totalorder %v4380, 1
        %vm4413 = vcmp.eq.s32.totalorder %v4381, 1
        %vm4414 = vcmp.eq.s32.totalorder %v4382, 1
        %vm4415 = vcmp.eq.s32.totalorder %v4383, 1
        %vm4416 = vcmp.eq.s32.totalorder %v4384, 1
        %vm4417 = vcmp.eq.s32.totalorder %v4385, 1
        %vm4418 = vcmp.eq.s32.totalorder %v4386, 1
        %vm4419 = vcmp.eq.s32.totalorder %v4387, 1
        %vm4420 = vcmp.eq.s32.totalorder %v4388, 1
        %vm4421 = vcmp.eq.s32.totalorder %v4389, 1
        %vm4422 = vcmp.eq.s32.totalorder %v4390, 1
        %vm4423 = vcmp.eq.s32.totalorder %v4391, 1
        %v4424 = vsel %vm4392, %v4359, 0.0
        %v4425 = vsel %vm4393, %v4358, 0.0
        %v4426 = vsel %vm4394, %v4357, 0.0
        %v4427 = vsel %vm4395, %v4356, 0.0
        %v4428 = vsel %vm4396, %v4355, 0.0
        %v4429 = vsel %vm4397, %v4354, 0.0
        %v4430 = vsel %vm4398, %v4353, 0.0
        %v4431 = vsel %vm4399, %v4352, 0.0
        %v4432 = vsel %vm4400, %v4351, 0.0
        %v4433 = vsel %vm4401, %v4350, 0.0
        %v4434 = vsel %vm4402, %v4349, 0.0
        %v4435 = vsel %vm4403, %v4348, 0.0
        %v4436 = vsel %vm4404, %v4347, 0.0
        %v4437 = vsel %vm4405, %v4346, 0.0
        %v4438 = vsel %vm4406, %v4345, 0.0
        %v4439 = vsel %vm4407, %v4344, 0.0
        %v4440 = vsel %vm4408, %v4343, 0.0
        %v4441 = vsel %vm4409, %v4342, 0.0
        %v4442 = vsel %vm4410, %v4341, 0.0
        %v4443 = vsel %vm4411, %v4340, 0.0
        %v4444 = vsel %vm4412, %v4339, 0.0
        %v4445 = vsel %vm4413, %v4338, 0.0
        %v4446 = vsel %vm4414, %v4337, 0.0
        %v4447 = vsel %vm4415, %v4336, 0.0
        %v4448 = vsel %vm4416, %v4335, 0.0
        %v4449 = vsel %vm4417, %v4334, 0.0
        %v4450 = vsel %vm4418, %v4333, 0.0
        %v4451 = vsel %vm4419, %v4332, 0.0
        %v4452 = vsel %vm4420, %v4331, 0.0
        %v4453 = vsel %vm4421, %v4330, 0.0
        %v4454 = vsel %vm4422, %v4329, 0.0
        %v4455 = vsel %vm4423, %v4328, 0.0
        %vm4456 = vcmp.lt.s32.totalorder %v764, 13
        %vm4457 = vcmp.lt.s32.totalorder %v765, 13
        %vm4458 = vcmp.lt.s32.totalorder %v766, 13
        %vm4459 = vcmp.lt.s32.totalorder %v767, 13
        %vm4460 = vcmp.lt.s32.totalorder %v768, 13
        %vm4461 = vcmp.lt.s32.totalorder %v769, 13
        %vm4462 = vcmp.lt.s32.totalorder %v770, 13
        %vm4463 = vcmp.lt.s32.totalorder %v771, 13
        %vm4464 = vcmp.lt.s32.totalorder %v772, 13
        %vm4465 = vcmp.lt.s32.totalorder %v773, 13
        %vm4466 = vcmp.lt.s32.totalorder %v774, 13
        %vm4467 = vcmp.lt.s32.totalorder %v775, 13
        %vm4468 = vcmp.lt.s32.totalorder %v776, 13
        %vm4469 = vcmp.lt.s32.totalorder %v777, 13
        %vm4470 = vcmp.lt.s32.totalorder %v778, 13
        %vm4471 = vcmp.lt.s32.totalorder %v779, 13
        %vm4472 = vcmp.lt.s32.totalorder %v780, 13
        %vm4473 = vcmp.lt.s32.totalorder %v781, 13
        %vm4474 = vcmp.lt.s32.totalorder %v782, 13
        %vm4475 = vcmp.lt.s32.totalorder %v783, 13
        %vm4476 = vcmp.lt.s32.totalorder %v784, 13
        %vm4477 = vcmp.lt.s32.totalorder %v785, 13
        %vm4478 = vcmp.lt.s32.totalorder %v786, 13
        %vm4479 = vcmp.lt.s32.totalorder %v787, 13
        %vm4480 = vcmp.lt.s32.totalorder %v788, 13
        %vm4481 = vcmp.lt.s32.totalorder %v789, 13
        %vm4482 = vcmp.lt.s32.totalorder %v790, 13
        %vm4483 = vcmp.lt.s32.totalorder %v791, 13
        %vm4484 = vcmp.lt.s32.totalorder %v792, 13
        %vm4485 = vcmp.lt.s32.totalorder %v793, 13
        %vm4486 = vcmp.lt.s32.totalorder %v794, 13
        %vm4487 = vcmp.lt.s32.totalorder %v795, 13
        %v4488 = vrot.slane %v4105, 3
        %v4489 = vrot.slane %v4110, 3
        %v4490 = vrot.slane %v4115, 3
        %v4491 = vrot.slane %v4120, 3
        %v4492 = vrot.slane %v4125, 3
        %v4493 = vrot.slane %v4130, 3
        %v4494 = vrot.slane %v4135, 3
        %v4495 = vrot.slane %v4140, 3
        %v4496 = vrot.slane %v4145, 3
        %v4497 = vrot.slane %v4150, 3
        %v4498 = vrot.slane %v4155, 3
        %v4499 = vrot.slane %v4160, 3
        %v4500 = vrot.slane %v4165, 3
        %v4501 = vrot.slane %v4170, 3
        %v4502 = vrot.slane %v4175, 3
        %v4503 = vrot.slane %v4180, 3
        %v4504 = vrot.slane %v4185, 3
        %v4505 = vrot.slane %v4190, 3
        %v4506 = vrot.slane %v4195, 3
        %v4507 = vrot.slane %v4200, 3
        %v4508 = vrot.slane %v4205, 3
        %v4509 = vrot.slane %v4210, 3
        %v4510 = vrot.slane %v4215, 3
        %v4511 = vrot.slane %v4220, 3
        %v4512 = vrot.slane %v4225, 3
        %v4513 = vrot.slane %v4230, 3
        %v4514 = vrot.slane %v4235, 3
        %v4515 = vrot.slane %v4240, 3
        %v4516 = vrot.slane %v4245, 3
        %v4517 = vrot.slane %v4250, 3
        %v4518 = vrot.slane %v4255, 3
        %v4519 = vrot.slane %v4260, 3
        %vm4520 = vcmp.lt.s32.totalorder %v380, 5
        %v4521 = vsel %vm4520, %v4518, %v4519
        %v4522 = vsel %vm4520, %v4517, %v4518
        %v4523 = vsel %vm4520, %v4516, %v4517
        %v4524 = vsel %vm4520, %v4515, %v4516
        %v4525 = vsel %vm4520, %v4514, %v4515
        %v4526 = vsel %vm4520, %v4513, %v4514
        %v4527 = vsel %vm4520, %v4512, %v4513
        %v4528 = vsel %vm4520, %v4511, %v4512
        %v4529 = vsel %vm4520, %v4510, %v4511
        %v4530 = vsel %vm4520, %v4509, %v4510
        %v4531 = vsel %vm4520, %v4508, %v4509
        %v4532 = vsel %vm4520, %v4507, %v4508
        %v4533 = vsel %vm4520, %v4506, %v4507
        %v4534 = vsel %vm4520, %v4505, %v4506
        %v4535 = vsel %vm4520, %v4504, %v4505
        %v4536 = vsel %vm4520, %v4503, %v4504
        %v4537 = vsel %vm4520, %v4502, %v4503
        %v4538 = vsel %vm4520, %v4501, %v4502
        %v4539 = vsel %vm4520, %v4500, %v4501
        %v4540 = vsel %vm4520, %v4499, %v4500
        %v4541 = vsel %vm4520, %v4498, %v4499
        %v4542 = vsel %vm4520, %v4497, %v4498
        %v4543 = vsel %vm4520, %v4496, %v4497
        %v4544 = vsel %vm4520, %v4495, %v4496
        %v4545 = vsel %vm4520, %v4494, %v4495
        %v4546 = vsel %vm4520, %v4493, %v4494
        %v4547 = vsel %vm4520, %v4492, %v4493
        %v4548 = vsel %vm4520, %v4491, %v4492
        %v4549 = vsel %vm4520, %v4490, %v4491
        %v4550 = vsel %vm4520, %v4489, %v4490
        %v4551 = vsel %vm4520, %v4488, %v4489
        %v4552 = vsel %vm4520, %v4519, %v4488
        %v4553 = vsel %vm4456, 1, 0
        %v4554 = vsel %vm4457, 1, 0
        %v4555 = vsel %vm4458, 1, 0
        %v4556 = vsel %vm4459, 1, 0
        %v4557 = vsel %vm4460, 1, 0
        %v4558 = vsel %vm4461, 1, 0
        %v4559 = vsel %vm4462, 1, 0
        %v4560 = vsel %vm4463, 1, 0
        %v4561 = vsel %vm4464, 1, 0
        %v4562 = vsel %vm4465, 1, 0
        %v4563 = vsel %vm4466, 1, 0
        %v4564 = vsel %vm4467, 1, 0
        %v4565 = vsel %vm4468, 1, 0
        %v4566 = vsel %vm4469, 1, 0
        %v4567 = vsel %vm4470, 1, 0
        %v4568 = vsel %vm4471, 1, 0
        %v4569 = vsel %vm4472, 1, 0
        %v4570 = vsel %vm4473, 1, 0
        %v4571 = vsel %vm4474, 1, 0
        %v4572 = vsel %vm4475, 1, 0
        %v4573 = vsel %vm4476, 1, 0
        %v4574 = vsel %vm4477, 1, 0
        %v4575 = vsel %vm4478, 1, 0
        %v4576 = vsel %vm4479, 1, 0
        %v4577 = vsel %vm4480, 1, 0
        %v4578 = vsel %vm4481, 1, 0
        %v4579 = vsel %vm4482, 1, 0
        %v4580 = vsel %vm4483, 1, 0
        %v4581 = vsel %vm4484, 1, 0
        %v4582 = vsel %vm4485, 1, 0
        %v4583 = vsel %vm4486, 1, 0
        %v4584 = vsel %vm4487, 1, 0
        %vm4585 = vcmp.eq.s32.totalorder %v4553, 1
        %vm4586 = vcmp.eq.s32.totalorder %v4554, 1
        %vm4587 = vcmp.eq.s32.totalorder %v4555, 1
        %vm4588 = vcmp.eq.s32.totalorder %v4556, 1
        %vm4589 = vcmp.eq.s32.totalorder %v4557, 1
        %vm4590 = vcmp.eq.s32.totalorder %v4558, 1
        %vm4591 = vcmp.eq.s32.totalorder %v4559, 1
        %vm4592 = vcmp.eq.s32.totalorder %v4560, 1
        %vm4593 = vcmp.eq.s32.totalorder %v4561, 1
        %vm4594 = vcmp.eq.s32.totalorder %v4562, 1
        %vm4595 = vcmp.eq.s32.totalorder %v4563, 1
        %vm4596 = vcmp.eq.s32.totalorder %v4564, 1
        %vm4597 = vcmp.eq.s32.totalorder %v4565, 1
        %vm4598 = vcmp.eq.s32.totalorder %v4566, 1
        %vm4599 = vcmp.eq.s32.totalorder %v4567, 1
        %vm4600 = vcmp.eq.s32.totalorder %v4568, 1
        %vm4601 = vcmp.eq.s32.totalorder %v4569, 1
        %vm4602 = vcmp.eq.s32.totalorder %v4570, 1
        %vm4603 = vcmp.eq.s32.totalorder %v4571, 1
        %vm4604 = vcmp.eq.s32.totalorder %v4572, 1
        %vm4605 = vcmp.eq.s32.totalorder %v4573, 1
        %vm4606 = vcmp.eq.s32.totalorder %v4574, 1
        %vm4607 = vcmp.eq.s32.totalorder %v4575, 1
        %vm4608 = vcmp.eq.s32.totalorder %v4576, 1
        %vm4609 = vcmp.eq.s32.totalorder %v4577, 1
        %vm4610 = vcmp.eq.s32.totalorder %v4578, 1
        %vm4611 = vcmp.eq.s32.totalorder %v4579, 1
        %vm4612 = vcmp.eq.s32.totalorder %v4580, 1
        %vm4613 = vcmp.eq.s32.totalorder %v4581, 1
        %vm4614 = vcmp.eq.s32.totalorder %v4582, 1
        %vm4615 = vcmp.eq.s32.totalorder %v4583, 1
        %vm4616 = vcmp.eq.s32.totalorder %v4584, 1
        %v4617 = vsel %vm4585, %v4551, 0.0
        %v4618 = vsel %vm4586, %v4550, 0.0
        %v4619 = vsel %vm4587, %v4549, 0.0
        %v4620 = vsel %vm4588, %v4548, 0.0
        %v4621 = vsel %vm4589, %v4547, 0.0
        %v4622 = vsel %vm4590, %v4546, 0.0
        %v4623 = vsel %vm4591, %v4545, 0.0
        %v4624 = vsel %vm4592, %v4544, 0.0
        %v4625 = vsel %vm4593, %v4543, 0.0
        %v4626 = vsel %vm4594, %v4542, 0.0
        %v4627 = vsel %vm4595, %v4541, 0.0
        %v4628 = vsel %vm4596, %v4540, 0.0
        %v4629 = vsel %vm4597, %v4539, 0.0
        %v4630 = vsel %vm4598, %v4538, 0.0
        %v4631 = vsel %vm4599, %v4537, 0.0
        %v4632 = vsel %vm4600, %v4536, 0.0
        %v4633 = vsel %vm4601, %v4535, 0.0
        %v4634 = vsel %vm4602, %v4534, 0.0
        %v4635 = vsel %vm4603, %v4533, 0.0
        %v4636 = vsel %vm4604, %v4532, 0.0
        %v4637 = vsel %vm4605, %v4531, 0.0
        %v4638 = vsel %vm4606, %v4530, 0.0
        %v4639 = vsel %vm4607, %v4529, 0.0
        %v4640 = vsel %vm4608, %v4528, 0.0
        %v4641 = vsel %vm4609, %v4527, 0.0
        %v4642 = vsel %vm4610, %v4526, 0.0
        %v4643 = vsel %vm4611, %v4525, 0.0
        %v4644 = vsel %vm4612, %v4524, 0.0
        %v4645 = vsel %vm4613, %v4523, 0.0
        %v4646 = vsel %vm4614, %v4522, 0.0
        %v4647 = vsel %vm4615, %v4521, 0.0
        %v4648 = vsel %vm4616, %v4552, 0.0
        %v4649 = vadd.f32 %v4424, %v3850
        %v4650 = vadd.f32 %v4425, %v3856
        %v4651 = vadd.f32 %v4426, %v3862
        %v4652 = vadd.f32 %v4427, %v3868
        %v4653 = vadd.f32 %v4428, %v3874
        %v4654 = vadd.f32 %v4429, %v3880
        %v4655 = vadd.f32 %v4430, %v3886
        %v4656 = vadd.f32 %v4431, %v3892
        %v4657 = vadd.f32 %v4432, %v3898
        %v4658 = vadd.f32 %v4433, %v3904
        %v4659 = vadd.f32 %v4434, %v3910
        %v4660 = vadd.f32 %v4435, %v3916
        %v4661 = vadd.f32 %v4436, %v3922
        %v4662 = vadd.f32 %v4437, %v3928
        %v4663 = vadd.f32 %v4438, %v3934
        %v4664 = vadd.f32 %v4439, %v3940
        %v4665 = vadd.f32 %v4440, %v3946
        %v4666 = vadd.f32 %v4441, %v3952
        %v4667 = vadd.f32 %v4442, %v3958
        %v4668 = vadd.f32 %v4443, %v3964
        %v4669 = vadd.f32 %v4444, %v3970
        %v4670 = vadd.f32 %v4445, %v3976
        %v4671 = vadd.f32 %v4446, %v3982
        %v4672 = vadd.f32 %v4447, %v3988
        %v4673 = vadd.f32 %v4448, %v3994
        %v4674 = vadd.f32 %v4449, %v4000
        %v4675 = vadd.f32 %v4450, %v4006
        %v4676 = vadd.f32 %v4451, %v4012
        %v4677 = vadd.f32 %v4452, %v4018
        %v4678 = vadd.f32 %v4453, %v4024
        %v4679 = vadd.f32 %v4454, %v4030
        %v4680 = vadd.f32 %v4455, %v4036
        %v4681 = vadd.f32 %v4649, %v4617
        %v4682 = vadd.f32 %v4650, %v4618
        %v4683 = vadd.f32 %v4651, %v4619
        %v4684 = vadd.f32 %v4652, %v4620
        %v4685 = vadd.f32 %v4653, %v4621
        %v4686 = vadd.f32 %v4654, %v4622
        %v4687 = vadd.f32 %v4655, %v4623
        %v4688 = vadd.f32 %v4656, %v4624
        %v4689 = vadd.f32 %v4657, %v4625
        %v4690 = vadd.f32 %v4658, %v4626
        %v4691 = vadd.f32 %v4659, %v4627
        %v4692 = vadd.f32 %v4660, %v4628
        %v4693 = vadd.f32 %v4661, %v4629
        %v4694 = vadd.f32 %v4662, %v4630
        %v4695 = vadd.f32 %v4663, %v4631
        %v4696 = vadd.f32 %v4664, %v4632
        %v4697 = vadd.f32 %v4665, %v4633
        %v4698 = vadd.f32 %v4666, %v4634
        %v4699 = vadd.f32 %v4667, %v4635
        %v4700 = vadd.f32 %v4668, %v4636
        %v4701 = vadd.f32 %v4669, %v4637
        %v4702 = vadd.f32 %v4670, %v4638
        %v4703 = vadd.f32 %v4671, %v4639
        %v4704 = vadd.f32 %v4672, %v4640
        %v4705 = vadd.f32 %v4673, %v4641
        %v4706 = vadd.f32 %v4674, %v4642
        %v4707 = vadd.f32 %v4675, %v4643
        %v4708 = vadd.f32 %v4676, %v4644
        %v4709 = vadd.f32 %v4677, %v4645
        %v4710 = vadd.f32 %v4678, %v4646
        %v4711 = vadd.f32 %v4679, %v4647
        %v4712 = vadd.f32 %v4680, %v4648
        %v4713 = vlaneseq
        %v4714 = vshrl.u32 %v4713, 7
        %v4715 = vsub.s32 0, %v4714
        %v4716 = vrot.slane %v374, %v4715
        %v4717 = vadd.f32 %v4681, %v4716
        %v4718 = vadd.f32 %v4682, %v4716
        %v4719 = vadd.f32 %v4683, %v4716
        %v4720 = vadd.f32 %v4684, %v4716
        %v4721 = vadd.f32 %v4685, %v4716
        %v4722 = vadd.f32 %v4686, %v4716
        %v4723 = vadd.f32 %v4687, %v4716
        %v4724 = vadd.f32 %v4688, %v4716
        %v4725 = vadd.f32 %v4689, %v4716
        %v4726 = vadd.f32 %v4690, %v4716
        %v4727 = vadd.f32 %v4691, %v4716
        %v4728 = vadd.f32 %v4692, %v4716
        %v4729 = vadd.f32 %v4693, %v4716
        %v4730 = vadd.f32 %v4694, %v4716
        %v4731 = vadd.f32 %v4695, %v4716
        %v4732 = vadd.f32 %v4696, %v4716
        %v4733 = vadd.f32 %v4697, %v4716
        %v4734 = vadd.f32 %v4698, %v4716
        %v4735 = vadd.f32 %v4699, %v4716
        %v4736 = vadd.f32 %v4700, %v4716
        %v4737 = vadd.f32 %v4701, %v4716
        %v4738 = vadd.f32 %v4702, %v4716
        %v4739 = vadd.f32 %v4703, %v4716
        %v4740 = vadd.f32 %v4704, %v4716
        %v4741 = vadd.f32 %v4705, %v4716
        %v4742 = vadd.f32 %v4706, %v4716
        %v4743 = vadd.f32 %v4707, %v4716
        %v4744 = vadd.f32 %v4708, %v4716
        %v4745 = vadd.f32 %v4709, %v4716
        %v4746 = vadd.f32 %v4710, %v4716
        %v4747 = vadd.f32 %v4711, %v4716
        %v4748 = vadd.f32 %v4712, %v4716
        %4749 = vadd.xlane.f32.xlu0 %v4717
        %v4750 = vpop.xlane.xlu0 %4749
        %4751 = vadd.xlane.f32.xlu0 %v4718
        %v4752 = vpop.xlane.xlu0 %4751
        %4753 = vadd.xlane.f32.xlu0 %v4719
        %v4754 = vpop.xlane.xlu0 %4753
        %4755 = vadd.xlane.f32.xlu0 %v4720
        %v4756 = vpop.xlane.xlu0 %4755
        %4757 = vadd.xlane.f32.xlu0 %v4721
        %v4758 = vpop.xlane.xlu0 %4757
        %4759 = vadd.xlane.f32.xlu0 %v4722
        %v4760 = vpop.xlane.xlu0 %4759
        %4761 = vadd.xlane.f32.xlu0 %v4723
        %v4762 = vpop.xlane.xlu0 %4761
        %4763 = vadd.xlane.f32.xlu0 %v4724
        %v4764 = vpop.xlane.xlu0 %4763
        %4765 = vadd.xlane.f32.xlu0 %v4725
        %v4766 = vpop.xlane.xlu0 %4765
        %4767 = vadd.xlane.f32.xlu0 %v4726
        %v4768 = vpop.xlane.xlu0 %4767
        %4769 = vadd.xlane.f32.xlu0 %v4727
        %v4770 = vpop.xlane.xlu0 %4769
        %4771 = vadd.xlane.f32.xlu0 %v4728
        %v4772 = vpop.xlane.xlu0 %4771
        %4773 = vadd.xlane.f32.xlu0 %v4729
        %v4774 = vpop.xlane.xlu0 %4773
        %4775 = vadd.xlane.f32.xlu0 %v4730
        %v4776 = vpop.xlane.xlu0 %4775
        %4777 = vadd.xlane.f32.xlu0 %v4731
        %v4778 = vpop.xlane.xlu0 %4777
        %4779 = vadd.xlane.f32.xlu0 %v4732
        %v4780 = vpop.xlane.xlu0 %4779
        %4781 = vadd.xlane.f32.xlu0 %v4733
        %v4782 = vpop.xlane.xlu0 %4781
        %4783 = vadd.xlane.f32.xlu0 %v4734
        %v4784 = vpop.xlane.xlu0 %4783
        %4785 = vadd.xlane.f32.xlu0 %v4735
        %v4786 = vpop.xlane.xlu0 %4785
        %4787 = vadd.xlane.f32.xlu0 %v4736
        %v4788 = vpop.xlane.xlu0 %4787
        %4789 = vadd.xlane.f32.xlu0 %v4737
        %v4790 = vpop.xlane.xlu0 %4789
        %4791 = vadd.xlane.f32.xlu0 %v4738
        %v4792 = vpop.xlane.xlu0 %4791
        %4793 = vadd.xlane.f32.xlu0 %v4739
        %v4794 = vpop.xlane.xlu0 %4793
        %4795 = vadd.xlane.f32.xlu0 %v4740
        %v4796 = vpop.xlane.xlu0 %4795
        %4797 = vadd.xlane.f32.xlu0 %v4741
        %v4798 = vpop.xlane.xlu0 %4797
        %4799 = vadd.xlane.f32.xlu0 %v4742
        %v4800 = vpop.xlane.xlu0 %4799
        %4801 = vadd.xlane.f32.xlu0 %v4743
        %v4802 = vpop.xlane.xlu0 %4801
        %4803 = vadd.xlane.f32.xlu0 %v4744
        %v4804 = vpop.xlane.xlu0 %4803
        %4805 = vadd.xlane.f32.xlu0 %v4745
        %v4806 = vpop.xlane.xlu0 %4805
        %4807 = vadd.xlane.f32.xlu0 %v4746
        %v4808 = vpop.xlane.xlu0 %4807
        %4809 = vadd.xlane.f32.xlu0 %v4747
        %v4810 = vpop.xlane.xlu0 %4809
        %4811 = vadd.xlane.f32.xlu0 %v4748
        %v4812 = vpop.xlane.xlu0 %4811
        %v4813 = vmul.f32 %v4750, %v1876
        %v4814 = vmul.f32 %v4752, %v1876
        %v4815 = vmul.f32 %v4754, %v1876
        %v4816 = vmul.f32 %v4756, %v1876
        %v4817 = vmul.f32 %v4758, %v1876
        %v4818 = vmul.f32 %v4760, %v1876
        %v4819 = vmul.f32 %v4762, %v1876
        %v4820 = vmul.f32 %v4764, %v1876
        %v4821 = vmul.f32 %v4766, %v1876
        %v4822 = vmul.f32 %v4768, %v1876
        %v4823 = vmul.f32 %v4770, %v1876
        %v4824 = vmul.f32 %v4772, %v1876
        %v4825 = vmul.f32 %v4774, %v1876
        %v4826 = vmul.f32 %v4776, %v1876
        %v4827 = vmul.f32 %v4778, %v1876
        %v4828 = vmul.f32 %v4780, %v1876
        %v4829 = vmul.f32 %v4782, %v1876
        %v4830 = vmul.f32 %v4784, %v1876
        %v4831 = vmul.f32 %v4786, %v1876
        %v4832 = vmul.f32 %v4788, %v1876
        %v4833 = vmul.f32 %v4790, %v1876
        %v4834 = vmul.f32 %v4792, %v1876
        %v4835 = vmul.f32 %v4794, %v1876
        %v4836 = vmul.f32 %v4796, %v1876
        %v4837 = vmul.f32 %v4798, %v1876
        %v4838 = vmul.f32 %v4800, %v1876
        %v4839 = vmul.f32 %v4802, %v1876
        %v4840 = vmul.f32 %v4804, %v1876
        %v4841 = vmul.f32 %v4806, %v1876
        %v4842 = vmul.f32 %v4808, %v1876
        %v4843 = vmul.f32 %v4810, %v1876
        %v4844 = vmul.f32 %v4812, %v1876
        %v4845 = vsub.f32 %v4717, %v4813
        %v4846 = vsub.f32 %v4718, %v4814
        %v4847 = vsub.f32 %v4719, %v4815
        %v4848 = vsub.f32 %v4720, %v4816
        %v4849 = vsub.f32 %v4721, %v4817
        %v4850 = vsub.f32 %v4722, %v4818
        %v4851 = vsub.f32 %v4723, %v4819
        %v4852 = vsub.f32 %v4724, %v4820
        %v4853 = vsub.f32 %v4725, %v4821
        %v4854 = vsub.f32 %v4726, %v4822
        %v4855 = vsub.f32 %v4727, %v4823
        %v4856 = vsub.f32 %v4728, %v4824
        %v4857 = vsub.f32 %v4729, %v4825
        %v4858 = vsub.f32 %v4730, %v4826
        %v4859 = vsub.f32 %v4731, %v4827
        %v4860 = vsub.f32 %v4732, %v4828
        %v4861 = vsub.f32 %v4733, %v4829
        %v4862 = vsub.f32 %v4734, %v4830
        %v4863 = vsub.f32 %v4735, %v4831
        %v4864 = vsub.f32 %v4736, %v4832
        %v4865 = vsub.f32 %v4737, %v4833
        %v4866 = vsub.f32 %v4738, %v4834
        %v4867 = vsub.f32 %v4739, %v4835
        %v4868 = vsub.f32 %v4740, %v4836
        %v4869 = vsub.f32 %v4741, %v4837
        %v4870 = vsub.f32 %v4742, %v4838
        %v4871 = vsub.f32 %v4743, %v4839
        %v4872 = vsub.f32 %v4744, %v4840
        %v4873 = vsub.f32 %v4745, %v4841
        %v4874 = vsub.f32 %v4746, %v4842
        %v4875 = vsub.f32 %v4747, %v4843
        %v4876 = vsub.f32 %v4748, %v4844
        %v4877 = vmul.f32 %v4845, %v4845
        %v4878 = vmul.f32 %v4846, %v4846
        %v4879 = vmul.f32 %v4847, %v4847
        %v4880 = vmul.f32 %v4848, %v4848
        %v4881 = vmul.f32 %v4849, %v4849
        %v4882 = vmul.f32 %v4850, %v4850
        %v4883 = vmul.f32 %v4851, %v4851
        %v4884 = vmul.f32 %v4852, %v4852
        %v4885 = vmul.f32 %v4853, %v4853
        %v4886 = vmul.f32 %v4854, %v4854
        %v4887 = vmul.f32 %v4855, %v4855
        %v4888 = vmul.f32 %v4856, %v4856
        %v4889 = vmul.f32 %v4857, %v4857
        %v4890 = vmul.f32 %v4858, %v4858
        %v4891 = vmul.f32 %v4859, %v4859
        %v4892 = vmul.f32 %v4860, %v4860
        %v4893 = vmul.f32 %v4861, %v4861
        %v4894 = vmul.f32 %v4862, %v4862
        %v4895 = vmul.f32 %v4863, %v4863
        %v4896 = vmul.f32 %v4864, %v4864
        %v4897 = vmul.f32 %v4865, %v4865
        %v4898 = vmul.f32 %v4866, %v4866
        %v4899 = vmul.f32 %v4867, %v4867
        %v4900 = vmul.f32 %v4868, %v4868
        %v4901 = vmul.f32 %v4869, %v4869
        %v4902 = vmul.f32 %v4870, %v4870
        %v4903 = vmul.f32 %v4871, %v4871
        %v4904 = vmul.f32 %v4872, %v4872
        %v4905 = vmul.f32 %v4873, %v4873
        %v4906 = vmul.f32 %v4874, %v4874
        %v4907 = vmul.f32 %v4875, %v4875
        %v4908 = vmul.f32 %v4876, %v4876
        %4909 = vadd.xlane.f32.xlu0 %v4877
        %v4910 = vpop.xlane.xlu0 %4909
        %4911 = vadd.xlane.f32.xlu0 %v4878
        %v4912 = vpop.xlane.xlu0 %4911
        %4913 = vadd.xlane.f32.xlu0 %v4879
        %v4914 = vpop.xlane.xlu0 %4913
        %4915 = vadd.xlane.f32.xlu0 %v4880
        %v4916 = vpop.xlane.xlu0 %4915
        %4917 = vadd.xlane.f32.xlu0 %v4881
        %v4918 = vpop.xlane.xlu0 %4917
        %4919 = vadd.xlane.f32.xlu0 %v4882
        %v4920 = vpop.xlane.xlu0 %4919
        %4921 = vadd.xlane.f32.xlu0 %v4883
        %v4922 = vpop.xlane.xlu0 %4921
        %4923 = vadd.xlane.f32.xlu0 %v4884
        %v4924 = vpop.xlane.xlu0 %4923
        %4925 = vadd.xlane.f32.xlu0 %v4885
        %v4926 = vpop.xlane.xlu0 %4925
        %4927 = vadd.xlane.f32.xlu0 %v4886
        %v4928 = vpop.xlane.xlu0 %4927
        %4929 = vadd.xlane.f32.xlu0 %v4887
        %v4930 = vpop.xlane.xlu0 %4929
        %4931 = vadd.xlane.f32.xlu0 %v4888
        %v4932 = vpop.xlane.xlu0 %4931
        %4933 = vadd.xlane.f32.xlu0 %v4889
        %v4934 = vpop.xlane.xlu0 %4933
        %4935 = vadd.xlane.f32.xlu0 %v4890
        %v4936 = vpop.xlane.xlu0 %4935
        %4937 = vadd.xlane.f32.xlu0 %v4891
        %v4938 = vpop.xlane.xlu0 %4937
        %4939 = vadd.xlane.f32.xlu0 %v4892
        %v4940 = vpop.xlane.xlu0 %4939
        %4941 = vadd.xlane.f32.xlu0 %v4893
        %v4942 = vpop.xlane.xlu0 %4941
        %4943 = vadd.xlane.f32.xlu0 %v4894
        %v4944 = vpop.xlane.xlu0 %4943
        %4945 = vadd.xlane.f32.xlu0 %v4895
        %v4946 = vpop.xlane.xlu0 %4945
        %4947 = vadd.xlane.f32.xlu0 %v4896
        %v4948 = vpop.xlane.xlu0 %4947
        %4949 = vadd.xlane.f32.xlu0 %v4897
        %v4950 = vpop.xlane.xlu0 %4949
        %4951 = vadd.xlane.f32.xlu0 %v4898
        %v4952 = vpop.xlane.xlu0 %4951
        %4953 = vadd.xlane.f32.xlu0 %v4899
        %v4954 = vpop.xlane.xlu0 %4953
        %4955 = vadd.xlane.f32.xlu0 %v4900
        %v4956 = vpop.xlane.xlu0 %4955
        %4957 = vadd.xlane.f32.xlu0 %v4901
        %v4958 = vpop.xlane.xlu0 %4957
        %4959 = vadd.xlane.f32.xlu0 %v4902
        %v4960 = vpop.xlane.xlu0 %4959
        %4961 = vadd.xlane.f32.xlu0 %v4903
        %v4962 = vpop.xlane.xlu0 %4961
        %4963 = vadd.xlane.f32.xlu0 %v4904
        %v4964 = vpop.xlane.xlu0 %4963
        %4965 = vadd.xlane.f32.xlu0 %v4905
        %v4966 = vpop.xlane.xlu0 %4965
        %4967 = vadd.xlane.f32.xlu0 %v4906
        %v4968 = vpop.xlane.xlu0 %4967
        %4969 = vadd.xlane.f32.xlu0 %v4907
        %v4970 = vpop.xlane.xlu0 %4969
        %4971 = vadd.xlane.f32.xlu0 %v4908
        %v4972 = vpop.xlane.xlu0 %4971
        %v4973 = vmul.f32 %v4910, %v1876
        %v4974 = vmul.f32 %v4912, %v1876
        %v4975 = vmul.f32 %v4914, %v1876
        %v4976 = vmul.f32 %v4916, %v1876
        %v4977 = vmul.f32 %v4918, %v1876
        %v4978 = vmul.f32 %v4920, %v1876
        %v4979 = vmul.f32 %v4922, %v1876
        %v4980 = vmul.f32 %v4924, %v1876
        %v4981 = vmul.f32 %v4926, %v1876
        %v4982 = vmul.f32 %v4928, %v1876
        %v4983 = vmul.f32 %v4930, %v1876
        %v4984 = vmul.f32 %v4932, %v1876
        %v4985 = vmul.f32 %v4934, %v1876
        %v4986 = vmul.f32 %v4936, %v1876
        %v4987 = vmul.f32 %v4938, %v1876
        %v4988 = vmul.f32 %v4940, %v1876
        %v4989 = vmul.f32 %v4942, %v1876
        %v4990 = vmul.f32 %v4944, %v1876
        %v4991 = vmul.f32 %v4946, %v1876
        %v4992 = vmul.f32 %v4948, %v1876
        %v4993 = vmul.f32 %v4950, %v1876
        %v4994 = vmul.f32 %v4952, %v1876
        %v4995 = vmul.f32 %v4954, %v1876
        %v4996 = vmul.f32 %v4956, %v1876
        %v4997 = vmul.f32 %v4958, %v1876
        %v4998 = vmul.f32 %v4960, %v1876
        %v4999 = vmul.f32 %v4962, %v1876
        %v5000 = vmul.f32 %v4964, %v1876
        %v5001 = vmul.f32 %v4966, %v1876
        %v5002 = vmul.f32 %v4968, %v1876
        %v5003 = vmul.f32 %v4970, %v1876
        %v5004 = vmul.f32 %v4972, %v1876
        %v5005 = vadd.f32 %v4973, 1e-05
        %v5006 = vadd.f32 %v4974, 1e-05
        %v5007 = vadd.f32 %v4975, 1e-05
        %v5008 = vadd.f32 %v4976, 1e-05
        %v5009 = vadd.f32 %v4977, 1e-05
        %v5010 = vadd.f32 %v4978, 1e-05
        %v5011 = vadd.f32 %v4979, 1e-05
        %v5012 = vadd.f32 %v4980, 1e-05
        %v5013 = vadd.f32 %v4981, 1e-05
        %v5014 = vadd.f32 %v4982, 1e-05
        %v5015 = vadd.f32 %v4983, 1e-05
        %v5016 = vadd.f32 %v4984, 1e-05
        %v5017 = vadd.f32 %v4985, 1e-05
        %v5018 = vadd.f32 %v4986, 1e-05
        %v5019 = vadd.f32 %v4987, 1e-05
        %v5020 = vadd.f32 %v4988, 1e-05
        %v5021 = vadd.f32 %v4989, 1e-05
        %v5022 = vadd.f32 %v4990, 1e-05
        %v5023 = vadd.f32 %v4991, 1e-05
        %v5024 = vadd.f32 %v4992, 1e-05
        %v5025 = vadd.f32 %v4993, 1e-05
        %v5026 = vadd.f32 %v4994, 1e-05
        %v5027 = vadd.f32 %v4995, 1e-05
        %v5028 = vadd.f32 %v4996, 1e-05
        %v5029 = vadd.f32 %v4997, 1e-05
        %v5030 = vadd.f32 %v4998, 1e-05
        %v5031 = vadd.f32 %v4999, 1e-05
        %v5032 = vadd.f32 %v5000, 1e-05
        %v5033 = vadd.f32 %v5001, 1e-05
        %v5034 = vadd.f32 %v5002, 1e-05
        %v5035 = vadd.f32 %v5003, 1e-05
        %v5036 = vadd.f32 %v5004, 1e-05
        %v5037 = vrsqrt.pop %v5005
        %v5038 = vrsqrt.pop %v5006
        %v5039 = vrsqrt.pop %v5007
        %v5040 = vrsqrt.pop %v5008
        %v5041 = vrsqrt.pop %v5009
        %v5042 = vrsqrt.pop %v5010
        %v5043 = vrsqrt.pop %v5011
        %v5044 = vrsqrt.pop %v5012
        %v5045 = vrsqrt.pop %v5013
        %v5046 = vrsqrt.pop %v5014
        %v5047 = vrsqrt.pop %v5015
        %v5048 = vrsqrt.pop %v5016
        %v5049 = vrsqrt.pop %v5017
        %v5050 = vrsqrt.pop %v5018
        %v5051 = vrsqrt.pop %v5019
        %v5052 = vrsqrt.pop %v5020
        %v5053 = vrsqrt.pop %v5021
        %v5054 = vrsqrt.pop %v5022
        %v5055 = vrsqrt.pop %v5023
        %v5056 = vrsqrt.pop %v5024
        %v5057 = vrsqrt.pop %v5025
        %v5058 = vrsqrt.pop %v5026
        %v5059 = vrsqrt.pop %v5027
        %v5060 = vrsqrt.pop %v5028
        %v5061 = vrsqrt.pop %v5029
        %v5062 = vrsqrt.pop %v5030
        %v5063 = vrsqrt.pop %v5031
        %v5064 = vrsqrt.pop %v5032
        %v5065 = vrsqrt.pop %v5033
        %v5066 = vrsqrt.pop %v5034
        %v5067 = vrsqrt.pop %v5035
        %v5068 = vrsqrt.pop %v5036
        %v5069 = vmul.f32 %v4845, %v5037
        %v5070 = vmul.f32 %v4846, %v5038
        %v5071 = vmul.f32 %v4847, %v5039
        %v5072 = vmul.f32 %v4848, %v5040
        %v5073 = vmul.f32 %v4849, %v5041
        %v5074 = vmul.f32 %v4850, %v5042
        %v5075 = vmul.f32 %v4851, %v5043
        %v5076 = vmul.f32 %v4852, %v5044
        %v5077 = vmul.f32 %v4853, %v5045
        %v5078 = vmul.f32 %v4854, %v5046
        %v5079 = vmul.f32 %v4855, %v5047
        %v5080 = vmul.f32 %v4856, %v5048
        %v5081 = vmul.f32 %v4857, %v5049
        %v5082 = vmul.f32 %v4858, %v5050
        %v5083 = vmul.f32 %v4859, %v5051
        %v5084 = vmul.f32 %v4860, %v5052
        %v5085 = vmul.f32 %v4861, %v5053
        %v5086 = vmul.f32 %v4862, %v5054
        %v5087 = vmul.f32 %v4863, %v5055
        %v5088 = vmul.f32 %v4864, %v5056
        %v5089 = vmul.f32 %v4865, %v5057
        %v5090 = vmul.f32 %v4866, %v5058
        %v5091 = vmul.f32 %v4867, %v5059
        %v5092 = vmul.f32 %v4868, %v5060
        %v5093 = vmul.f32 %v4869, %v5061
        %v5094 = vmul.f32 %v4870, %v5062
        %v5095 = vmul.f32 %v4871, %v5063
        %v5096 = vmul.f32 %v4872, %v5064
        %v5097 = vmul.f32 %v4873, %v5065
        %v5098 = vmul.f32 %v4874, %v5066
        %v5099 = vmul.f32 %v4875, %v5067
        %v5100 = vmul.f32 %v4876, %v5068
        %v5101 = vmul.f32 %v5069, %v2168
        %v5102 = vmul.f32 %v5070, %v2168
        %v5103 = vmul.f32 %v5071, %v2168
        %v5104 = vmul.f32 %v5072, %v2168
        %v5105 = vmul.f32 %v5073, %v2168
        %v5106 = vmul.f32 %v5074, %v2168
        %v5107 = vmul.f32 %v5075, %v2168
        %v5108 = vmul.f32 %v5076, %v2168
        %v5109 = vmul.f32 %v5077, %v2168
        %v5110 = vmul.f32 %v5078, %v2168
        %v5111 = vmul.f32 %v5079, %v2168
        %v5112 = vmul.f32 %v5080, %v2168
        %v5113 = vmul.f32 %v5081, %v2168
        %v5114 = vmul.f32 %v5082, %v2168
        %v5115 = vmul.f32 %v5083, %v2168
        %v5116 = vmul.f32 %v5084, %v2168
        %v5117 = vmul.f32 %v5085, %v2168
        %v5118 = vmul.f32 %v5086, %v2168
        %v5119 = vmul.f32 %v5087, %v2168
        %v5120 = vmul.f32 %v5088, %v2168
        %v5121 = vmul.f32 %v5089, %v2168
        %v5122 = vmul.f32 %v5090, %v2168
        %v5123 = vmul.f32 %v5091, %v2168
        %v5124 = vmul.f32 %v5092, %v2168
        %v5125 = vmul.f32 %v5093, %v2168
        %v5126 = vmul.f32 %v5094, %v2168
        %v5127 = vmul.f32 %v5095, %v2168
        %v5128 = vmul.f32 %v5096, %v2168
        %v5129 = vmul.f32 %v5097, %v2168
        %v5130 = vmul.f32 %v5098, %v2168
        %v5131 = vmul.f32 %v5099, %v2168
        %v5132 = vmul.f32 %v5100, %v2168
        %v5133 = vadd.f32 %v5101, %v2204
        %v5134 = vadd.f32 %v5102, %v2204
        %v5135 = vadd.f32 %v5103, %v2204
        %v5136 = vadd.f32 %v5104, %v2204
        %v5137 = vadd.f32 %v5105, %v2204
        %v5138 = vadd.f32 %v5106, %v2204
        %v5139 = vadd.f32 %v5107, %v2204
        %v5140 = vadd.f32 %v5108, %v2204
        %v5141 = vadd.f32 %v5109, %v2204
        %v5142 = vadd.f32 %v5110, %v2204
        %v5143 = vadd.f32 %v5111, %v2204
        %v5144 = vadd.f32 %v5112, %v2204
        %v5145 = vadd.f32 %v5113, %v2204
        %v5146 = vadd.f32 %v5114, %v2204
        %v5147 = vadd.f32 %v5115, %v2204
        %v5148 = vadd.f32 %v5116, %v2204
        %v5149 = vadd.f32 %v5117, %v2204
        %v5150 = vadd.f32 %v5118, %v2204
        %v5151 = vadd.f32 %v5119, %v2204
        %v5152 = vadd.f32 %v5120, %v2204
        %v5153 = vadd.f32 %v5121, %v2204
        %v5154 = vadd.f32 %v5122, %v2204
        %v5155 = vadd.f32 %v5123, %v2204
        %v5156 = vadd.f32 %v5124, %v2204
        %v5157 = vadd.f32 %v5125, %v2204
        %v5158 = vadd.f32 %v5126, %v2204
        %v5159 = vadd.f32 %v5127, %v2204
        %v5160 = vadd.f32 %v5128, %v2204
        %v5161 = vadd.f32 %v5129, %v2204
        %v5162 = vadd.f32 %v5130, %v2204
        %v5163 = vadd.f32 %v5131, %v2204
        %v5164 = vadd.f32 %v5132, %v2204
        %v5165 = vmax.f32 %v5133, 0.0
        %v5166 = vmax.f32 %v5134, 0.0
        %v5167 = vmax.f32 %v5135, 0.0
        %v5168 = vmax.f32 %v5136, 0.0
        %v5169 = vmax.f32 %v5137, 0.0
        %v5170 = vmax.f32 %v5138, 0.0
        %v5171 = vmax.f32 %v5139, 0.0
        %v5172 = vmax.f32 %v5140, 0.0
        %v5173 = vmax.f32 %v5141, 0.0
        %v5174 = vmax.f32 %v5142, 0.0
        %v5175 = vmax.f32 %v5143, 0.0
        %v5176 = vmax.f32 %v5144, 0.0
        %v5177 = vmax.f32 %v5145, 0.0
        %v5178 = vmax.f32 %v5146, 0.0
        %v5179 = vmax.f32 %v5147, 0.0
        %v5180 = vmax.f32 %v5148, 0.0
        %v5181 = vmax.f32 %v5149, 0.0
        %v5182 = vmax.f32 %v5150, 0.0
        %v5183 = vmax.f32 %v5151, 0.0
        %v5184 = vmax.f32 %v5152, 0.0
        %v5185 = vmax.f32 %v5153, 0.0
        %v5186 = vmax.f32 %v5154, 0.0
        %v5187 = vmax.f32 %v5155, 0.0
        %v5188 = vmax.f32 %v5156, 0.0
        %v5189 = vmax.f32 %v5157, 0.0
        %v5190 = vmax.f32 %v5158, 0.0
        %v5191 = vmax.f32 %v5159, 0.0
        %v5192 = vmax.f32 %v5160, 0.0
        %v5193 = vmax.f32 %v5161, 0.0
        %v5194 = vmax.f32 %v5162, 0.0
        %v5195 = vmax.f32 %v5163, 0.0
        %v5196 = vmax.f32 %v5164, 0.0
        %5197 = vst [vmem:[%s329] sm:$0xff] %v2237
        %5198 = vst [vmem:[%s329 + $0x8] sm:$0xff] %v3701
        %5199 = vst [vmem:[%s329 + $0x10] sm:$0xff] %v5165
        %5200 = vst [vmem:[%s329 + $0x18] sm:$0xff] %v2238
        %5201 = vst [vmem:[%s329 + $0x20] sm:$0xff] %v3702
        %5202 = vst [vmem:[%s329 + $0x28] sm:$0xff] %v5166
        %5203 = vst [vmem:[%s329 + $0x30] sm:$0xff] %v2239
        %5204 = vst [vmem:[%s329 + $0x38] sm:$0xff] %v3703
        %5205 = vst [vmem:[%s329 + $0x40] sm:$0xff] %v5167
        %5206 = vst [vmem:[%s329 + $0x48] sm:$0xff] %v2240
        %5207 = vst [vmem:[%s329 + $0x50] sm:$0xff] %v3704
        %5208 = vst [vmem:[%s329 + $0x58] sm:$0xff] %v5168
        %5209 = vst [vmem:[%s329 + $0x60] sm:$0xff] %v2241
        %5210 = vst [vmem:[%s329 + $0x68] sm:$0xff] %v3705
        %5211 = vst [vmem:[%s329 + $0x70] sm:$0xff] %v5169
        %5212 = vst [vmem:[%s329 + $0x78] sm:$0xff] %v2242
        %5213 = vst [vmem:[%s329 + $0x80] sm:$0xff] %v3706
        %5214 = vst [vmem:[%s329 + $0x88] sm:$0xff] %v5170
        %5215 = vst [vmem:[%s329 + $0x90] sm:$0xff] %v2243
        %5216 = vst [vmem:[%s329 + $0x98] sm:$0xff] %v3707
        %5217 = vst [vmem:[%s329 + $0xa0] sm:$0xff] %v5171
        %5218 = vst [vmem:[%s329 + $0xa8] sm:$0xff] %v2244
        %5219 = vst [vmem:[%s329 + $0xb0] sm:$0xff] %v3708
        %5220 = vst [vmem:[%s329 + $0xb8] sm:$0xff] %v5172
        %5221 = vst [vmem:[%s329 + $0xc0] sm:$0xff] %v2245
        %5222 = vst [vmem:[%s329 + $0xc8] sm:$0xff] %v3709
        %5223 = vst [vmem:[%s329 + $0xd0] sm:$0xff] %v5173
        %5224 = vst [vmem:[%s329 + $0xd8] sm:$0xff] %v2246
        %5225 = vst [vmem:[%s329 + $0xe0] sm:$0xff] %v3710
        %5226 = vst [vmem:[%s329 + $0xe8] sm:$0xff] %v5174
        %5227 = vst [vmem:[%s329 + $0xf0] sm:$0xff] %v2247
        %5228 = vst [vmem:[%s329 + $0xf8] sm:$0xff] %v3711
        %5229 = vst [vmem:[%s329 + $0x100] sm:$0xff] %v5175
        %5230 = vst [vmem:[%s329 + $0x108] sm:$0xff] %v2248
        %5231 = vst [vmem:[%s329 + $0x110] sm:$0xff] %v3712
        %5232 = vst [vmem:[%s329 + $0x118] sm:$0xff] %v5176
        %5233 = vst [vmem:[%s329 + $0x120] sm:$0xff] %v2249
        %5234 = vst [vmem:[%s329 + $0x128] sm:$0xff] %v3713
        %5235 = vst [vmem:[%s329 + $0x130] sm:$0xff] %v5177
        %5236 = vst [vmem:[%s329 + $0x138] sm:$0xff] %v2250
        %5237 = vst [vmem:[%s329 + $0x140] sm:$0xff] %v3714
        %5238 = vst [vmem:[%s329 + $0x148] sm:$0xff] %v5178
        %5239 = vst [vmem:[%s329 + $0x150] sm:$0xff] %v2251
        %5240 = vst [vmem:[%s329 + $0x158] sm:$0xff] %v3715
        %5241 = vst [vmem:[%s329 + $0x160] sm:$0xff] %v5179
        %5242 = vst [vmem:[%s329 + $0x168] sm:$0xff] %v2252
        %5243 = vst [vmem:[%s329 + $0x170] sm:$0xff] %v3716
        %5244 = vst [vmem:[%s329 + $0x178] sm:$0xff] %v5180
        %5245 = vst [vmem:[%s329 + $0x180] sm:$0xff] %v2253
        %5246 = vst [vmem:[%s329 + $0x188] sm:$0xff] %v3717
        %5247 = vst [vmem:[%s329 + $0x190] sm:$0xff] %v5181
        %5248 = vst [vmem:[%s329 + $0x198] sm:$0xff] %v2254
        %5249 = vst [vmem:[%s329 + $0x1a0] sm:$0xff] %v3718
        %5250 = vst [vmem:[%s329 + $0x1a8] sm:$0xff] %v5182
        %5251 = vst [vmem:[%s329 + $0x1b0] sm:$0xff] %v2255
        %5252 = vst [vmem:[%s329 + $0x1b8] sm:$0xff] %v3719
        %5253 = vst [vmem:[%s329 + $0x1c0] sm:$0xff] %v5183
        %5254 = vst [vmem:[%s329 + $0x1c8] sm:$0xff] %v2256
        %5255 = vst [vmem:[%s329 + $0x1d0] sm:$0xff] %v3720
        %5256 = vst [vmem:[%s329 + $0x1d8] sm:$0xff] %v5184
        %5257 = vst [vmem:[%s329 + $0x1e0] sm:$0xff] %v2257
        %5258 = vst [vmem:[%s329 + $0x1e8] sm:$0xff] %v3721
        %5259 = vst [vmem:[%s329 + $0x1f0] sm:$0xff] %v5185
        %5260 = vst [vmem:[%s329 + $0x1f8] sm:$0xff] %v2258
        %5261 = vst [vmem:[%s329 + $0x200] sm:$0xff] %v3722
        %5262 = vst [vmem:[%s329 + $0x208] sm:$0xff] %v5186
        %5263 = vst [vmem:[%s329 + $0x210] sm:$0xff] %v2259
        %5264 = vst [vmem:[%s329 + $0x218] sm:$0xff] %v3723
        %5265 = vst [vmem:[%s329 + $0x220] sm:$0xff] %v5187
        %5266 = vst [vmem:[%s329 + $0x228] sm:$0xff] %v2260
        %5267 = vst [vmem:[%s329 + $0x230] sm:$0xff] %v3724
        %5268 = vst [vmem:[%s329 + $0x238] sm:$0xff] %v5188
        %5269 = vst [vmem:[%s329 + $0x240] sm:$0xff] %v2261
        %5270 = vst [vmem:[%s329 + $0x248] sm:$0xff] %v3725
        %5271 = vst [vmem:[%s329 + $0x250] sm:$0xff] %v5189
        %5272 = vst [vmem:[%s329 + $0x258] sm:$0xff] %v2262
        %5273 = vst [vmem:[%s329 + $0x260] sm:$0xff] %v3726
        %5274 = vst [vmem:[%s329 + $0x268] sm:$0xff] %v5190
        %5275 = vst [vmem:[%s329 + $0x270] sm:$0xff] %v2263
        %5276 = vst [vmem:[%s329 + $0x278] sm:$0xff] %v3727
        %5277 = vst [vmem:[%s329 + $0x280] sm:$0xff] %v5191
        %5278 = vst [vmem:[%s329 + $0x288] sm:$0xff] %v2264
        %5279 = vst [vmem:[%s329 + $0x290] sm:$0xff] %v3728
        %5280 = vst [vmem:[%s329 + $0x298] sm:$0xff] %v5192
        %5281 = vst [vmem:[%s329 + $0x2a0] sm:$0xff] %v2265
        %5282 = vst [vmem:[%s329 + $0x2a8] sm:$0xff] %v3729
        %5283 = vst [vmem:[%s329 + $0x2b0] sm:$0xff] %v5193
        %5284 = vst [vmem:[%s329 + $0x2b8] sm:$0xff] %v2266
        %5285 = vst [vmem:[%s329 + $0x2c0] sm:$0xff] %v3730
        %5286 = vst [vmem:[%s329 + $0x2c8] sm:$0xff] %v5194
        %5287 = vst [vmem:[%s329 + $0x2d0] sm:$0xff] %v2267
        %5288 = vst [vmem:[%s329 + $0x2d8] sm:$0xff] %v3731
        %5289 = vst [vmem:[%s329 + $0x2e0] sm:$0xff] %v5195
        %5290 = vst [vmem:[%s329 + $0x2e8] sm:$0xff] %v2268
        %5291 = vst [vmem:[%s329 + $0x2f0] sm:$0xff] %v3732
        %5292 = vst [vmem:[%s329 + $0x2f8] sm:$0xff] %v5196
        %v5293 = vlaneseq
        %v5294 = vshrl.u32 %v5293, 7
        %v5295 = vsub.s32 0, %v5294
        %v5296 = vrot.slane %v377, %v5295
        %v5297 = vmul.f32 %v2237, %v5296
        %v5298 = vmul.f32 %v2238, %v5296
        %v5299 = vmul.f32 %v2239, %v5296
        %v5300 = vmul.f32 %v2240, %v5296
        %v5301 = vmul.f32 %v2241, %v5296
        %v5302 = vmul.f32 %v2242, %v5296
        %v5303 = vmul.f32 %v2243, %v5296
        %v5304 = vmul.f32 %v2244, %v5296
        %v5305 = vmul.f32 %v2245, %v5296
        %v5306 = vmul.f32 %v2246, %v5296
        %v5307 = vmul.f32 %v2247, %v5296
        %v5308 = vmul.f32 %v2248, %v5296
        %v5309 = vmul.f32 %v2249, %v5296
        %v5310 = vmul.f32 %v2250, %v5296
        %v5311 = vmul.f32 %v2251, %v5296
        %v5312 = vmul.f32 %v2252, %v5296
        %v5313 = vmul.f32 %v2253, %v5296
        %v5314 = vmul.f32 %v2254, %v5296
        %v5315 = vmul.f32 %v2255, %v5296
        %v5316 = vmul.f32 %v2256, %v5296
        %v5317 = vmul.f32 %v2257, %v5296
        %v5318 = vmul.f32 %v2258, %v5296
        %v5319 = vmul.f32 %v2259, %v5296
        %v5320 = vmul.f32 %v2260, %v5296
        %v5321 = vmul.f32 %v2261, %v5296
        %v5322 = vmul.f32 %v2262, %v5296
        %v5323 = vmul.f32 %v2263, %v5296
        %v5324 = vmul.f32 %v2264, %v5296
        %v5325 = vmul.f32 %v2265, %v5296
        %v5326 = vmul.f32 %v2266, %v5296
        %v5327 = vmul.f32 %v2267, %v5296
        %v5328 = vmul.f32 %v2268, %v5296
        %5329 = vadd.xlane.f32.xlu0 %v5297
        %v5330 = vpop.xlane.xlu0 %5329
        %5331 = vadd.xlane.f32.xlu0 %v5298
        %v5332 = vpop.xlane.xlu0 %5331
        %5333 = vadd.xlane.f32.xlu0 %v5299
        %v5334 = vpop.xlane.xlu0 %5333
        %5335 = vadd.xlane.f32.xlu0 %v5300
        %v5336 = vpop.xlane.xlu0 %5335
        %5337 = vadd.xlane.f32.xlu0 %v5301
        %v5338 = vpop.xlane.xlu0 %5337
        %5339 = vadd.xlane.f32.xlu0 %v5302
        %v5340 = vpop.xlane.xlu0 %5339
        %5341 = vadd.xlane.f32.xlu0 %v5303
        %v5342 = vpop.xlane.xlu0 %5341
        %5343 = vadd.xlane.f32.xlu0 %v5304
        %v5344 = vpop.xlane.xlu0 %5343
        %5345 = vadd.xlane.f32.xlu0 %v5305
        %v5346 = vpop.xlane.xlu0 %5345
        %5347 = vadd.xlane.f32.xlu0 %v5306
        %v5348 = vpop.xlane.xlu0 %5347
        %5349 = vadd.xlane.f32.xlu0 %v5307
        %v5350 = vpop.xlane.xlu0 %5349
        %5351 = vadd.xlane.f32.xlu0 %v5308
        %v5352 = vpop.xlane.xlu0 %5351
        %5353 = vadd.xlane.f32.xlu0 %v5309
        %v5354 = vpop.xlane.xlu0 %5353
        %5355 = vadd.xlane.f32.xlu0 %v5310
        %v5356 = vpop.xlane.xlu0 %5355
        %5357 = vadd.xlane.f32.xlu0 %v5311
        %v5358 = vpop.xlane.xlu0 %5357
        %5359 = vadd.xlane.f32.xlu0 %v5312
        %v5360 = vpop.xlane.xlu0 %5359
        %5361 = vadd.xlane.f32.xlu0 %v5313
        %v5362 = vpop.xlane.xlu0 %5361
        %5363 = vadd.xlane.f32.xlu0 %v5314
        %v5364 = vpop.xlane.xlu0 %5363
        %5365 = vadd.xlane.f32.xlu0 %v5315
        %v5366 = vpop.xlane.xlu0 %5365
        %5367 = vadd.xlane.f32.xlu0 %v5316
        %v5368 = vpop.xlane.xlu0 %5367
        %5369 = vadd.xlane.f32.xlu0 %v5317
        %v5370 = vpop.xlane.xlu0 %5369
        %5371 = vadd.xlane.f32.xlu0 %v5318
        %v5372 = vpop.xlane.xlu0 %5371
        %5373 = vadd.xlane.f32.xlu0 %v5319
        %v5374 = vpop.xlane.xlu0 %5373
        %5375 = vadd.xlane.f32.xlu0 %v5320
        %v5376 = vpop.xlane.xlu0 %5375
        %5377 = vadd.xlane.f32.xlu0 %v5321
        %v5378 = vpop.xlane.xlu0 %5377
        %5379 = vadd.xlane.f32.xlu0 %v5322
        %v5380 = vpop.xlane.xlu0 %5379
        %5381 = vadd.xlane.f32.xlu0 %v5323
        %v5382 = vpop.xlane.xlu0 %5381
        %5383 = vadd.xlane.f32.xlu0 %v5324
        %v5384 = vpop.xlane.xlu0 %5383
        %5385 = vadd.xlane.f32.xlu0 %v5325
        %v5386 = vpop.xlane.xlu0 %5385
        %5387 = vadd.xlane.f32.xlu0 %v5326
        %v5388 = vpop.xlane.xlu0 %5387
        %5389 = vadd.xlane.f32.xlu0 %v5327
        %v5390 = vpop.xlane.xlu0 %5389
        %5391 = vadd.xlane.f32.xlu0 %v5328
        %v5392 = vpop.xlane.xlu0 %5391
        %v5393 = vmul.f32 %v5330, 0.088388346
        %v5394 = vmul.f32 %v5332, 0.088388346
        %v5395 = vmul.f32 %v5334, 0.088388346
        %v5396 = vmul.f32 %v5336, 0.088388346
        %v5397 = vmul.f32 %v5338, 0.088388346
        %v5398 = vmul.f32 %v5340, 0.088388346
        %v5399 = vmul.f32 %v5342, 0.088388346
        %v5400 = vmul.f32 %v5344, 0.088388346
        %v5401 = vmul.f32 %v5346, 0.088388346
        %v5402 = vmul.f32 %v5348, 0.088388346
        %v5403 = vmul.f32 %v5350, 0.088388346
        %v5404 = vmul.f32 %v5352, 0.088388346
        %v5405 = vmul.f32 %v5354, 0.088388346
        %v5406 = vmul.f32 %v5356, 0.088388346
        %v5407 = vmul.f32 %v5358, 0.088388346
        %v5408 = vmul.f32 %v5360, 0.088388346
        %v5409 = vmul.f32 %v5362, 0.088388346
        %v5410 = vmul.f32 %v5364, 0.088388346
        %v5411 = vmul.f32 %v5366, 0.088388346
        %v5412 = vmul.f32 %v5368, 0.088388346
        %v5413 = vmul.f32 %v5370, 0.088388346
        %v5414 = vmul.f32 %v5372, 0.088388346
        %v5415 = vmul.f32 %v5374, 0.088388346
        %v5416 = vmul.f32 %v5376, 0.088388346
        %v5417 = vmul.f32 %v5378, 0.088388346
        %v5418 = vmul.f32 %v5380, 0.088388346
        %v5419 = vmul.f32 %v5382, 0.088388346
        %v5420 = vmul.f32 %v5384, 0.088388346
        %v5421 = vmul.f32 %v5386, 0.088388346
        %v5422 = vmul.f32 %v5388, 0.088388346
        %v5423 = vmul.f32 %v5390, 0.088388346
        %v5424 = vmul.f32 %v5392, 0.088388346
        %v5425 = vmul.f32 %v3701, %v5296
        %v5426 = vmul.f32 %v3702, %v5296
        %v5427 = vmul.f32 %v3703, %v5296
        %v5428 = vmul.f32 %v3704, %v5296
        %v5429 = vmul.f32 %v3705, %v5296
        %v5430 = vmul.f32 %v3706, %v5296
        %v5431 = vmul.f32 %v3707, %v5296
        %v5432 = vmul.f32 %v3708, %v5296
        %v5433 = vmul.f32 %v3709, %v5296
        %v5434 = vmul.f32 %v3710, %v5296
        %v5435 = vmul.f32 %v3711, %v5296
        %v5436 = vmul.f32 %v3712, %v5296
        %v5437 = vmul.f32 %v3713, %v5296
        %v5438 = vmul.f32 %v3714, %v5296
        %v5439 = vmul.f32 %v3715, %v5296
        %v5440 = vmul.f32 %v3716, %v5296
        %v5441 = vmul.f32 %v3717, %v5296
        %v5442 = vmul.f32 %v3718, %v5296
        %v5443 = vmul.f32 %v3719, %v5296
        %v5444 = vmul.f32 %v3720, %v5296
        %v5445 = vmul.f32 %v3721, %v5296
        %v5446 = vmul.f32 %v3722, %v5296
        %v5447 = vmul.f32 %v3723, %v5296
        %v5448 = vmul.f32 %v3724, %v5296
        %v5449 = vmul.f32 %v3725, %v5296
        %v5450 = vmul.f32 %v3726, %v5296
        %v5451 = vmul.f32 %v3727, %v5296
        %v5452 = vmul.f32 %v3728, %v5296
        %v5453 = vmul.f32 %v3729, %v5296
        %v5454 = vmul.f32 %v3730, %v5296
        %v5455 = vmul.f32 %v3731, %v5296
        %v5456 = vmul.f32 %v3732, %v5296
        %5457 = vadd.xlane.f32.xlu0 %v5425
        %v5458 = vpop.xlane.xlu0 %5457
        %5459 = vadd.xlane.f32.xlu0 %v5426
        %v5460 = vpop.xlane.xlu0 %5459
        %5461 = vadd.xlane.f32.xlu0 %v5427
        %v5462 = vpop.xlane.xlu0 %5461
        %5463 = vadd.xlane.f32.xlu0 %v5428
        %v5464 = vpop.xlane.xlu0 %5463
        %5465 = vadd.xlane.f32.xlu0 %v5429
        %v5466 = vpop.xlane.xlu0 %5465
        %5467 = vadd.xlane.f32.xlu0 %v5430
        %v5468 = vpop.xlane.xlu0 %5467
        %5469 = vadd.xlane.f32.xlu0 %v5431
        %v5470 = vpop.xlane.xlu0 %5469
        %5471 = vadd.xlane.f32.xlu0 %v5432
        %v5472 = vpop.xlane.xlu0 %5471
        %5473 = vadd.xlane.f32.xlu0 %v5433
        %v5474 = vpop.xlane.xlu0 %5473
        %5475 = vadd.xlane.f32.xlu0 %v5434
        %v5476 = vpop.xlane.xlu0 %5475
        %5477 = vadd.xlane.f32.xlu0 %v5435
        %v5478 = vpop.xlane.xlu0 %5477
        %5479 = vadd.xlane.f32.xlu0 %v5436
        %v5480 = vpop.xlane.xlu0 %5479
        %5481 = vadd.xlane.f32.xlu0 %v5437
        %v5482 = vpop.xlane.xlu0 %5481
        %5483 = vadd.xlane.f32.xlu0 %v5438
        %v5484 = vpop.xlane.xlu0 %5483
        %5485 = vadd.xlane.f32.xlu0 %v5439
        %v5486 = vpop.xlane.xlu0 %5485
        %5487 = vadd.xlane.f32.xlu0 %v5440
        %v5488 = vpop.xlane.xlu0 %5487
        %5489 = vadd.xlane.f32.xlu0 %v5441
        %v5490 = vpop.xlane.xlu0 %5489
        %5491 = vadd.xlane.f32.xlu0 %v5442
        %v5492 = vpop.xlane.xlu0 %5491
        %5493 = vadd.xlane.f32.xlu0 %v5443
        %v5494 = vpop.xlane.xlu0 %5493
        %5495 = vadd.xlane.f32.xlu0 %v5444
        %v5496 = vpop.xlane.xlu0 %5495
        %5497 = vadd.xlane.f32.xlu0 %v5445
        %v5498 = vpop.xlane.xlu0 %5497
        %5499 = vadd.xlane.f32.xlu0 %v5446
        %v5500 = vpop.xlane.xlu0 %5499
        %5501 = vadd.xlane.f32.xlu0 %v5447
        %v5502 = vpop.xlane.xlu0 %5501
        %5503 = vadd.xlane.f32.xlu0 %v5448
        %v5504 = vpop.xlane.xlu0 %5503
        %5505 = vadd.xlane.f32.xlu0 %v5449
        %v5506 = vpop.xlane.xlu0 %5505
        %5507 = vadd.xlane.f32.xlu0 %v5450
        %v5508 = vpop.xlane.xlu0 %5507
        %5509 = vadd.xlane.f32.xlu0 %v5451
        %v5510 = vpop.xlane.xlu0 %5509
        %5511 = vadd.xlane.f32.xlu0 %v5452
        %v5512 = vpop.xlane.xlu0 %5511
        %5513 = vadd.xlane.f32.xlu0 %v5453
        %v5514 = vpop.xlane.xlu0 %5513
        %5515 = vadd.xlane.f32.xlu0 %v5454
        %v5516 = vpop.xlane.xlu0 %5515
        %5517 = vadd.xlane.f32.xlu0 %v5455
        %v5518 = vpop.xlane.xlu0 %5517
        %5519 = vadd.xlane.f32.xlu0 %v5456
        %v5520 = vpop.xlane.xlu0 %5519
        %v5521 = vmul.f32 %v5458, 0.088388346
        %v5522 = vmul.f32 %v5460, 0.088388346
        %v5523 = vmul.f32 %v5462, 0.088388346
        %v5524 = vmul.f32 %v5464, 0.088388346
        %v5525 = vmul.f32 %v5466, 0.088388346
        %v5526 = vmul.f32 %v5468, 0.088388346
        %v5527 = vmul.f32 %v5470, 0.088388346
        %v5528 = vmul.f32 %v5472, 0.088388346
        %v5529 = vmul.f32 %v5474, 0.088388346
        %v5530 = vmul.f32 %v5476, 0.088388346
        %v5531 = vmul.f32 %v5478, 0.088388346
        %v5532 = vmul.f32 %v5480, 0.088388346
        %v5533 = vmul.f32 %v5482, 0.088388346
        %v5534 = vmul.f32 %v5484, 0.088388346
        %v5535 = vmul.f32 %v5486, 0.088388346
        %v5536 = vmul.f32 %v5488, 0.088388346
        %v5537 = vmul.f32 %v5490, 0.088388346
        %v5538 = vmul.f32 %v5492, 0.088388346
        %v5539 = vmul.f32 %v5494, 0.088388346
        %v5540 = vmul.f32 %v5496, 0.088388346
        %v5541 = vmul.f32 %v5498, 0.088388346
        %v5542 = vmul.f32 %v5500, 0.088388346
        %v5543 = vmul.f32 %v5502, 0.088388346
        %v5544 = vmul.f32 %v5504, 0.088388346
        %v5545 = vmul.f32 %v5506, 0.088388346
        %v5546 = vmul.f32 %v5508, 0.088388346
        %v5547 = vmul.f32 %v5510, 0.088388346
        %v5548 = vmul.f32 %v5512, 0.088388346
        %v5549 = vmul.f32 %v5514, 0.088388346
        %v5550 = vmul.f32 %v5516, 0.088388346
        %v5551 = vmul.f32 %v5518, 0.088388346
        %v5552 = vmul.f32 %v5520, 0.088388346
        %v5553 = vmul.f32 %v5165, %v5296
        %v5554 = vmul.f32 %v5166, %v5296
        %v5555 = vmul.f32 %v5167, %v5296
        %v5556 = vmul.f32 %v5168, %v5296
        %v5557 = vmul.f32 %v5169, %v5296
        %v5558 = vmul.f32 %v5170, %v5296
        %v5559 = vmul.f32 %v5171, %v5296
        %v5560 = vmul.f32 %v5172, %v5296
        %v5561 = vmul.f32 %v5173, %v5296
        %v5562 = vmul.f32 %v5174, %v5296
        %v5563 = vmul.f32 %v5175, %v5296
        %v5564 = vmul.f32 %v5176, %v5296
        %v5565 = vmul.f32 %v5177, %v5296
        %v5566 = vmul.f32 %v5178, %v5296
        %v5567 = vmul.f32 %v5179, %v5296
        %v5568 = vmul.f32 %v5180, %v5296
        %v5569 = vmul.f32 %v5181, %v5296
        %v5570 = vmul.f32 %v5182, %v5296
        %v5571 = vmul.f32 %v5183, %v5296
        %v5572 = vmul.f32 %v5184, %v5296
        %v5573 = vmul.f32 %v5185, %v5296
        %v5574 = vmul.f32 %v5186, %v5296
        %v5575 = vmul.f32 %v5187, %v5296
        %v5576 = vmul.f32 %v5188, %v5296
        %v5577 = vmul.f32 %v5189, %v5296
        %v5578 = vmul.f32 %v5190, %v5296
        %v5579 = vmul.f32 %v5191, %v5296
        %v5580 = vmul.f32 %v5192, %v5296
        %v5581 = vmul.f32 %v5193, %v5296
        %v5582 = vmul.f32 %v5194, %v5296
        %v5583 = vmul.f32 %v5195, %v5296
        %v5584 = vmul.f32 %v5196, %v5296
        %5585 = vadd.xlane.f32.xlu0 %v5553
        %v5586 = vpop.xlane.xlu0 %5585
        %5587 = vadd.xlane.f32.xlu0 %v5554
        %v5588 = vpop.xlane.xlu0 %5587
        %5589 = vadd.xlane.f32.xlu0 %v5555
        %v5590 = vpop.xlane.xlu0 %5589
        %5591 = vadd.xlane.f32.xlu0 %v5556
        %v5592 = vpop.xlane.xlu0 %5591
        %5593 = vadd.xlane.f32.xlu0 %v5557
        %v5594 = vpop.xlane.xlu0 %5593
        %5595 = vadd.xlane.f32.xlu0 %v5558
        %v5596 = vpop.xlane.xlu0 %5595
        %5597 = vadd.xlane.f32.xlu0 %v5559
        %v5598 = vpop.xlane.xlu0 %5597
        %5599 = vadd.xlane.f32.xlu0 %v5560
        %v5600 = vpop.xlane.xlu0 %5599
        %5601 = vadd.xlane.f32.xlu0 %v5561
        %v5602 = vpop.xlane.xlu0 %5601
        %5603 = vadd.xlane.f32.xlu0 %v5562
        %v5604 = vpop.xlane.xlu0 %5603
        %5605 = vadd.xlane.f32.xlu0 %v5563
        %v5606 = vpop.xlane.xlu0 %5605
        %5607 = vadd.xlane.f32.xlu0 %v5564
        %v5608 = vpop.xlane.xlu0 %5607
        %5609 = vadd.xlane.f32.xlu0 %v5565
        %v5610 = vpop.xlane.xlu0 %5609
        %5611 = vadd.xlane.f32.xlu0 %v5566
        %v5612 = vpop.xlane.xlu0 %5611
        %5613 = vadd.xlane.f32.xlu0 %v5567
        %v5614 = vpop.xlane.xlu0 %5613
        %5615 = vadd.xlane.f32.xlu0 %v5568
        %v5616 = vpop.xlane.xlu0 %5615
        %5617 = vadd.xlane.f32.xlu0 %v5569
        %v5618 = vpop.xlane.xlu0 %5617
        %5619 = vadd.xlane.f32.xlu0 %v5570
        %v5620 = vpop.xlane.xlu0 %5619
        %5621 = vadd.xlane.f32.xlu0 %v5571
        %v5622 = vpop.xlane.xlu0 %5621
        %5623 = vadd.xlane.f32.xlu0 %v5572
        %v5624 = vpop.xlane.xlu0 %5623
        %5625 = vadd.xlane.f32.xlu0 %v5573
        %v5626 = vpop.xlane.xlu0 %5625
        %5627 = vadd.xlane.f32.xlu0 %v5574
        %v5628 = vpop.xlane.xlu0 %5627
        %5629 = vadd.xlane.f32.xlu0 %v5575
        %v5630 = vpop.xlane.xlu0 %5629
        %5631 = vadd.xlane.f32.xlu0 %v5576
        %v5632 = vpop.xlane.xlu0 %5631
        %5633 = vadd.xlane.f32.xlu0 %v5577
        %v5634 = vpop.xlane.xlu0 %5633
        %5635 = vadd.xlane.f32.xlu0 %v5578
        %v5636 = vpop.xlane.xlu0 %5635
        %5637 = vadd.xlane.f32.xlu0 %v5579
        %v5638 = vpop.xlane.xlu0 %5637
        %5639 = vadd.xlane.f32.xlu0 %v5580
        %v5640 = vpop.xlane.xlu0 %5639
        %5641 = vadd.xlane.f32.xlu0 %v5581
        %v5642 = vpop.xlane.xlu0 %5641
        %5643 = vadd.xlane.f32.xlu0 %v5582
        %v5644 = vpop.xlane.xlu0 %5643
        %5645 = vadd.xlane.f32.xlu0 %v5583
        %v5646 = vpop.xlane.xlu0 %5645
        %5647 = vadd.xlane.f32.xlu0 %v5584
        %v5648 = vpop.xlane.xlu0 %5647
        %v5649 = vmul.f32 %v5586, 0.088388346
        %v5650 = vmul.f32 %v5588, 0.088388346
        %v5651 = vmul.f32 %v5590, 0.088388346
        %v5652 = vmul.f32 %v5592, 0.088388346
        %v5653 = vmul.f32 %v5594, 0.088388346
        %v5654 = vmul.f32 %v5596, 0.088388346
        %v5655 = vmul.f32 %v5598, 0.088388346
        %v5656 = vmul.f32 %v5600, 0.088388346
        %v5657 = vmul.f32 %v5602, 0.088388346
        %v5658 = vmul.f32 %v5604, 0.088388346
        %v5659 = vmul.f32 %v5606, 0.088388346
        %v5660 = vmul.f32 %v5608, 0.088388346
        %v5661 = vmul.f32 %v5610, 0.088388346
        %v5662 = vmul.f32 %v5612, 0.088388346
        %v5663 = vmul.f32 %v5614, 0.088388346
        %v5664 = vmul.f32 %v5616, 0.088388346
        %v5665 = vmul.f32 %v5618, 0.088388346
        %v5666 = vmul.f32 %v5620, 0.088388346
        %v5667 = vmul.f32 %v5622, 0.088388346
        %v5668 = vmul.f32 %v5624, 0.088388346
        %v5669 = vmul.f32 %v5626, 0.088388346
        %v5670 = vmul.f32 %v5628, 0.088388346
        %v5671 = vmul.f32 %v5630, 0.088388346
        %v5672 = vmul.f32 %v5632, 0.088388346
        %v5673 = vmul.f32 %v5634, 0.088388346
        %v5674 = vmul.f32 %v5636, 0.088388346
        %v5675 = vmul.f32 %v5638, 0.088388346
        %v5676 = vmul.f32 %v5640, 0.088388346
        %v5677 = vmul.f32 %v5642, 0.088388346
        %v5678 = vmul.f32 %v5644, 0.088388346
        %v5679 = vmul.f32 %v5646, 0.088388346
        %v5680 = vmul.f32 %v5648, 0.088388346
        %v5681 = vmax.f32 %v5393, %v5521
        %v5682 = vmax.f32 %v5394, %v5522
        %v5683 = vmax.f32 %v5395, %v5523
        %v5684 = vmax.f32 %v5396, %v5524
        %v5685 = vmax.f32 %v5397, %v5525
        %v5686 = vmax.f32 %v5398, %v5526
        %v5687 = vmax.f32 %v5399, %v5527
        %v5688 = vmax.f32 %v5400, %v5528
        %v5689 = vmax.f32 %v5401, %v5529
        %v5690 = vmax.f32 %v5402, %v5530
        %v5691 = vmax.f32 %v5403, %v5531
        %v5692 = vmax.f32 %v5404, %v5532
        %v5693 = vmax.f32 %v5405, %v5533
        %v5694 = vmax.f32 %v5406, %v5534
        %v5695 = vmax.f32 %v5407, %v5535
        %v5696 = vmax.f32 %v5408, %v5536
        %v5697 = vmax.f32 %v5409, %v5537
        %v5698 = vmax.f32 %v5410, %v5538
        %v5699 = vmax.f32 %v5411, %v5539
        %v5700 = vmax.f32 %v5412, %v5540
        %v5701 = vmax.f32 %v5413, %v5541
        %v5702 = vmax.f32 %v5414, %v5542
        %v5703 = vmax.f32 %v5415, %v5543
        %v5704 = vmax.f32 %v5416, %v5544
        %v5705 = vmax.f32 %v5417, %v5545
        %v5706 = vmax.f32 %v5418, %v5546
        %v5707 = vmax.f32 %v5419, %v5547
        %v5708 = vmax.f32 %v5420, %v5548
        %v5709 = vmax.f32 %v5421, %v5549
        %v5710 = vmax.f32 %v5422, %v5550
        %v5711 = vmax.f32 %v5423, %v5551
        %v5712 = vmax.f32 %v5424, %v5552
        %v5713 = vmax.f32 %v5681, %v5649
        %v5714 = vmax.f32 %v5682, %v5650
        %v5715 = vmax.f32 %v5683, %v5651
        %v5716 = vmax.f32 %v5684, %v5652
        %v5717 = vmax.f32 %v5685, %v5653
        %v5718 = vmax.f32 %v5686, %v5654
        %v5719 = vmax.f32 %v5687, %v5655
        %v5720 = vmax.f32 %v5688, %v5656
        %v5721 = vmax.f32 %v5689, %v5657
        %v5722 = vmax.f32 %v5690, %v5658
        %v5723 = vmax.f32 %v5691, %v5659
        %v5724 = vmax.f32 %v5692, %v5660
        %v5725 = vmax.f32 %v5693, %v5661
        %v5726 = vmax.f32 %v5694, %v5662
        %v5727 = vmax.f32 %v5695, %v5663
        %v5728 = vmax.f32 %v5696, %v5664
        %v5729 = vmax.f32 %v5697, %v5665
        %v5730 = vmax.f32 %v5698, %v5666
        %v5731 = vmax.f32 %v5699, %v5667
        %v5732 = vmax.f32 %v5700, %v5668
        %v5733 = vmax.f32 %v5701, %v5669
        %v5734 = vmax.f32 %v5702, %v5670
        %v5735 = vmax.f32 %v5703, %v5671
        %v5736 = vmax.f32 %v5704, %v5672
        %v5737 = vmax.f32 %v5705, %v5673
        %v5738 = vmax.f32 %v5706, %v5674
        %v5739 = vmax.f32 %v5707, %v5675
        %v5740 = vmax.f32 %v5708, %v5676
        %v5741 = vmax.f32 %v5709, %v5677
        %v5742 = vmax.f32 %v5710, %v5678
        %v5743 = vmax.f32 %v5711, %v5679
        %v5744 = vmax.f32 %v5712, %v5680
        %v5745 = vsub.f32 %v5393, %v5713
        %v5746 = vsub.f32 %v5394, %v5714
        %v5747 = vsub.f32 %v5395, %v5715
        %v5748 = vsub.f32 %v5396, %v5716
        %v5749 = vsub.f32 %v5397, %v5717
        %v5750 = vsub.f32 %v5398, %v5718
        %v5751 = vsub.f32 %v5399, %v5719
        %v5752 = vsub.f32 %v5400, %v5720
        %v5753 = vsub.f32 %v5401, %v5721
        %v5754 = vsub.f32 %v5402, %v5722
        %v5755 = vsub.f32 %v5403, %v5723
        %v5756 = vsub.f32 %v5404, %v5724
        %v5757 = vsub.f32 %v5405, %v5725
        %v5758 = vsub.f32 %v5406, %v5726
        %v5759 = vsub.f32 %v5407, %v5727
        %v5760 = vsub.f32 %v5408, %v5728
        %v5761 = vsub.f32 %v5409, %v5729
        %v5762 = vsub.f32 %v5410, %v5730
        %v5763 = vsub.f32 %v5411, %v5731
        %v5764 = vsub.f32 %v5412, %v5732
        %v5765 = vsub.f32 %v5413, %v5733
        %v5766 = vsub.f32 %v5414, %v5734
        %v5767 = vsub.f32 %v5415, %v5735
        %v5768 = vsub.f32 %v5416, %v5736
        %v5769 = vsub.f32 %v5417, %v5737
        %v5770 = vsub.f32 %v5418, %v5738
        %v5771 = vsub.f32 %v5419, %v5739
        %v5772 = vsub.f32 %v5420, %v5740
        %v5773 = vsub.f32 %v5421, %v5741
        %v5774 = vsub.f32 %v5422, %v5742
        %v5775 = vsub.f32 %v5423, %v5743
        %v5776 = vsub.f32 %v5424, %v5744
        %v5777 = vmul.f32 %v5745, 1.442695
        %v5778 = vpow.pop %v5777
        %v5779 = vmul.f32 %v5746, 1.442695
        %v5780 = vpow.pop %v5779
        %v5781 = vmul.f32 %v5747, 1.442695
        %v5782 = vpow.pop %v5781
        %v5783 = vmul.f32 %v5748, 1.442695
        %v5784 = vpow.pop %v5783
        %v5785 = vmul.f32 %v5749, 1.442695
        %v5786 = vpow.pop %v5785
        %v5787 = vmul.f32 %v5750, 1.442695
        %v5788 = vpow.pop %v5787
        %v5789 = vmul.f32 %v5751, 1.442695
        %v5790 = vpow.pop %v5789
        %v5791 = vmul.f32 %v5752, 1.442695
        %v5792 = vpow.pop %v5791
        %v5793 = vmul.f32 %v5753, 1.442695
        %v5794 = vpow.pop %v5793
        %v5795 = vmul.f32 %v5754, 1.442695
        %v5796 = vpow.pop %v5795
        %v5797 = vmul.f32 %v5755, 1.442695
        %v5798 = vpow.pop %v5797
        %v5799 = vmul.f32 %v5756, 1.442695
        %v5800 = vpow.pop %v5799
        %v5801 = vmul.f32 %v5757, 1.442695
        %v5802 = vpow.pop %v5801
        %v5803 = vmul.f32 %v5758, 1.442695
        %v5804 = vpow.pop %v5803
        %v5805 = vmul.f32 %v5759, 1.442695
        %v5806 = vpow.pop %v5805
        %v5807 = vmul.f32 %v5760, 1.442695
        %v5808 = vpow.pop %v5807
        %v5809 = vmul.f32 %v5761, 1.442695
        %v5810 = vpow.pop %v5809
        %v5811 = vmul.f32 %v5762, 1.442695
        %v5812 = vpow.pop %v5811
        %v5813 = vmul.f32 %v5763, 1.442695
        %v5814 = vpow.pop %v5813
        %v5815 = vmul.f32 %v5764, 1.442695
        %v5816 = vpow.pop %v5815
        %v5817 = vmul.f32 %v5765, 1.442695
        %v5818 = vpow.pop %v5817
        %v5819 = vmul.f32 %v5766, 1.442695
        %v5820 = vpow.pop %v5819
        %v5821 = vmul.f32 %v5767, 1.442695
        %v5822 = vpow.pop %v5821
        %v5823 = vmul.f32 %v5768, 1.442695
        %v5824 = vpow.pop %v5823
        %v5825 = vmul.f32 %v5769, 1.442695
        %v5826 = vpow.pop %v5825
        %v5827 = vmul.f32 %v5770, 1.442695
        %v5828 = vpow.pop %v5827
        %v5829 = vmul.f32 %v5771, 1.442695
        %v5830 = vpow.pop %v5829
        %v5831 = vmul.f32 %v5772, 1.442695
        %v5832 = vpow.pop %v5831
        %v5833 = vmul.f32 %v5773, 1.442695
        %v5834 = vpow.pop %v5833
        %v5835 = vmul.f32 %v5774, 1.442695
        %v5836 = vpow.pop %v5835
        %v5837 = vmul.f32 %v5775, 1.442695
        %v5838 = vpow.pop %v5837
        %v5839 = vmul.f32 %v5776, 1.442695
        %v5840 = vpow.pop %v5839
        %v5841 = vsub.f32 %v5521, %v5713
        %v5842 = vsub.f32 %v5522, %v5714
        %v5843 = vsub.f32 %v5523, %v5715
        %v5844 = vsub.f32 %v5524, %v5716
        %v5845 = vsub.f32 %v5525, %v5717
        %v5846 = vsub.f32 %v5526, %v5718
        %v5847 = vsub.f32 %v5527, %v5719
        %v5848 = vsub.f32 %v5528, %v5720
        %v5849 = vsub.f32 %v5529, %v5721
        %v5850 = vsub.f32 %v5530, %v5722
        %v5851 = vsub.f32 %v5531, %v5723
        %v5852 = vsub.f32 %v5532, %v5724
        %v5853 = vsub.f32 %v5533, %v5725
        %v5854 = vsub.f32 %v5534, %v5726
        %v5855 = vsub.f32 %v5535, %v5727
        %v5856 = vsub.f32 %v5536, %v5728
        %v5857 = vsub.f32 %v5537, %v5729
        %v5858 = vsub.f32 %v5538, %v5730
        %v5859 = vsub.f32 %v5539, %v5731
        %v5860 = vsub.f32 %v5540, %v5732
        %v5861 = vsub.f32 %v5541, %v5733
        %v5862 = vsub.f32 %v5542, %v5734
        %v5863 = vsub.f32 %v5543, %v5735
        %v5864 = vsub.f32 %v5544, %v5736
        %v5865 = vsub.f32 %v5545, %v5737
        %v5866 = vsub.f32 %v5546, %v5738
        %v5867 = vsub.f32 %v5547, %v5739
        %v5868 = vsub.f32 %v5548, %v5740
        %v5869 = vsub.f32 %v5549, %v5741
        %v5870 = vsub.f32 %v5550, %v5742
        %v5871 = vsub.f32 %v5551, %v5743
        %v5872 = vsub.f32 %v5552, %v5744
        %v5873 = vmul.f32 %v5841, 1.442695
        %v5874 = vpow.pop %v5873
        %v5875 = vmul.f32 %v5842, 1.442695
        %v5876 = vpow.pop %v5875
        %v5877 = vmul.f32 %v5843, 1.442695
        %v5878 = vpow.pop %v5877
        %v5879 = vmul.f32 %v5844, 1.442695
        %v5880 = vpow.pop %v5879
        %v5881 = vmul.f32 %v5845, 1.442695
        %v5882 = vpow.pop %v5881
        %v5883 = vmul.f32 %v5846, 1.442695
        %v5884 = vpow.pop %v5883
        %v5885 = vmul.f32 %v5847, 1.442695
        %v5886 = vpow.pop %v5885
        %v5887 = vmul.f32 %v5848, 1.442695
        %v5888 = vpow.pop %v5887
        %v5889 = vmul.f32 %v5849, 1.442695
        %v5890 = vpow.pop %v5889
        %v5891 = vmul.f32 %v5850, 1.442695
        %v5892 = vpow.pop %v5891
        %v5893 = vmul.f32 %v5851, 1.442695
        %v5894 = vpow.pop %v5893
        %v5895 = vmul.f32 %v5852, 1.442695
        %v5896 = vpow.pop %v5895
        %v5897 = vmul.f32 %v5853, 1.442695
        %v5898 = vpow.pop %v5897
        %v5899 = vmul.f32 %v5854, 1.442695
        %v5900 = vpow.pop %v5899
        %v5901 = vmul.f32 %v5855, 1.442695
        %v5902 = vpow.pop %v5901
        %v5903 = vmul.f32 %v5856, 1.442695
        %v5904 = vpow.pop %v5903
        %v5905 = vmul.f32 %v5857, 1.442695
        %v5906 = vpow.pop %v5905
        %v5907 = vmul.f32 %v5858, 1.442695
        %v5908 = vpow.pop %v5907
        %v5909 = vmul.f32 %v5859, 1.442695
        %v5910 = vpow.pop %v5909
        %v5911 = vmul.f32 %v5860, 1.442695
        %v5912 = vpow.pop %v5911
        %v5913 = vmul.f32 %v5861, 1.442695
        %v5914 = vpow.pop %v5913
        %v5915 = vmul.f32 %v5862, 1.442695
        %v5916 = vpow.pop %v5915
        %v5917 = vmul.f32 %v5863, 1.442695
        %v5918 = vpow.pop %v5917
        %v5919 = vmul.f32 %v5864, 1.442695
        %v5920 = vpow.pop %v5919
        %v5921 = vmul.f32 %v5865, 1.442695
        %v5922 = vpow.pop %v5921
        %v5923 = vmul.f32 %v5866, 1.442695
        %v5924 = vpow.pop %v5923
        %v5925 = vmul.f32 %v5867, 1.442695
        %v5926 = vpow.pop %v5925
        %v5927 = vmul.f32 %v5868, 1.442695
        %v5928 = vpow.pop %v5927
        %v5929 = vmul.f32 %v5869, 1.442695
        %v5930 = vpow.pop %v5929
        %v5931 = vmul.f32 %v5870, 1.442695
        %v5932 = vpow.pop %v5931
        %v5933 = vmul.f32 %v5871, 1.442695
        %v5934 = vpow.pop %v5933
        %v5935 = vmul.f32 %v5872, 1.442695
        %v5936 = vpow.pop %v5935
        %v5937 = vsub.f32 %v5649, %v5713
        %v5938 = vsub.f32 %v5650, %v5714
        %v5939 = vsub.f32 %v5651, %v5715
        %v5940 = vsub.f32 %v5652, %v5716
        %v5941 = vsub.f32 %v5653, %v5717
        %v5942 = vsub.f32 %v5654, %v5718
        %v5943 = vsub.f32 %v5655, %v5719
        %v5944 = vsub.f32 %v5656, %v5720
        %v5945 = vsub.f32 %v5657, %v5721
        %v5946 = vsub.f32 %v5658, %v5722
        %v5947 = vsub.f32 %v5659, %v5723
        %v5948 = vsub.f32 %v5660, %v5724
        %v5949 = vsub.f32 %v5661, %v5725
        %v5950 = vsub.f32 %v5662, %v5726
        %v5951 = vsub.f32 %v5663, %v5727
        %v5952 = vsub.f32 %v5664, %v5728
        %v5953 = vsub.f32 %v5665, %v5729
        %v5954 = vsub.f32 %v5666, %v5730
        %v5955 = vsub.f32 %v5667, %v5731
        %v5956 = vsub.f32 %v5668, %v5732
        %v5957 = vsub.f32 %v5669, %v5733
        %v5958 = vsub.f32 %v5670, %v5734
        %v5959 = vsub.f32 %v5671, %v5735
        %v5960 = vsub.f32 %v5672, %v5736
        %v5961 = vsub.f32 %v5673, %v5737
        %v5962 = vsub.f32 %v5674, %v5738
        %v5963 = vsub.f32 %v5675, %v5739
        %v5964 = vsub.f32 %v5676, %v5740
        %v5965 = vsub.f32 %v5677, %v5741
        %v5966 = vsub.f32 %v5678, %v5742
        %v5967 = vsub.f32 %v5679, %v5743
        %v5968 = vsub.f32 %v5680, %v5744
        %v5969 = vmul.f32 %v5937, 1.442695
        %v5970 = vpow.pop %v5969
        %v5971 = vmul.f32 %v5938, 1.442695
        %v5972 = vpow.pop %v5971
        %v5973 = vmul.f32 %v5939, 1.442695
        %v5974 = vpow.pop %v5973
        %v5975 = vmul.f32 %v5940, 1.442695
        %v5976 = vpow.pop %v5975
        %v5977 = vmul.f32 %v5941, 1.442695
        %v5978 = vpow.pop %v5977
        %v5979 = vmul.f32 %v5942, 1.442695
        %v5980 = vpow.pop %v5979
        %v5981 = vmul.f32 %v5943, 1.442695
        %v5982 = vpow.pop %v5981
        %v5983 = vmul.f32 %v5944, 1.442695
        %v5984 = vpow.pop %v5983
        %v5985 = vmul.f32 %v5945, 1.442695
        %v5986 = vpow.pop %v5985
        %v5987 = vmul.f32 %v5946, 1.442695
        %v5988 = vpow.pop %v5987
        %v5989 = vmul.f32 %v5947, 1.442695
        %v5990 = vpow.pop %v5989
        %v5991 = vmul.f32 %v5948, 1.442695
        %v5992 = vpow.pop %v5991
        %v5993 = vmul.f32 %v5949, 1.442695
        %v5994 = vpow.pop %v5993
        %v5995 = vmul.f32 %v5950, 1.442695
        %v5996 = vpow.pop %v5995
        %v5997 = vmul.f32 %v5951, 1.442695
        %v5998 = vpow.pop %v5997
        %v5999 = vmul.f32 %v5952, 1.442695
        %v6000 = vpow.pop %v5999
        %v6001 = vmul.f32 %v5953, 1.442695
        %v6002 = vpow.pop %v6001
        %v6003 = vmul.f32 %v5954, 1.442695
        %v6004 = vpow.pop %v6003
        %v6005 = vmul.f32 %v5955, 1.442695
        %v6006 = vpow.pop %v6005
        %v6007 = vmul.f32 %v5956, 1.442695
        %v6008 = vpow.pop %v6007
        %v6009 = vmul.f32 %v5957, 1.442695
        %v6010 = vpow.pop %v6009
        %v6011 = vmul.f32 %v5958, 1.442695
        %v6012 = vpow.pop %v6011
        %v6013 = vmul.f32 %v5959, 1.442695
        %v6014 = vpow.pop %v6013
        %v6015 = vmul.f32 %v5960, 1.442695
        %v6016 = vpow.pop %v6015
        %v6017 = vmul.f32 %v5961, 1.442695
        %v6018 = vpow.pop %v6017
        %v6019 = vmul.f32 %v5962, 1.442695
        %v6020 = vpow.pop %v6019
        %v6021 = vmul.f32 %v5963, 1.442695
        %v6022 = vpow.pop %v6021
        %v6023 = vmul.f32 %v5964, 1.442695
        %v6024 = vpow.pop %v6023
        %v6025 = vmul.f32 %v5965, 1.442695
        %v6026 = vpow.pop %v6025
        %v6027 = vmul.f32 %v5966, 1.442695
        %v6028 = vpow.pop %v6027
        %v6029 = vmul.f32 %v5967, 1.442695
        %v6030 = vpow.pop %v6029
        %v6031 = vmul.f32 %v5968, 1.442695
        %v6032 = vpow.pop %v6031
        %v6033 = vadd.f32 %v5778, %v5874
        %v6034 = vadd.f32 %v5780, %v5876
        %v6035 = vadd.f32 %v5782, %v5878
        %v6036 = vadd.f32 %v5784, %v5880
        %v6037 = vadd.f32 %v5786, %v5882
        %v6038 = vadd.f32 %v5788, %v5884
        %v6039 = vadd.f32 %v5790, %v5886
        %v6040 = vadd.f32 %v5792, %v5888
        %v6041 = vadd.f32 %v5794, %v5890
        %v6042 = vadd.f32 %v5796, %v5892
        %v6043 = vadd.f32 %v5798, %v5894
        %v6044 = vadd.f32 %v5800, %v5896
        %v6045 = vadd.f32 %v5802, %v5898
        %v6046 = vadd.f32 %v5804, %v5900
        %v6047 = vadd.f32 %v5806, %v5902
        %v6048 = vadd.f32 %v5808, %v5904
        %v6049 = vadd.f32 %v5810, %v5906
        %v6050 = vadd.f32 %v5812, %v5908
        %v6051 = vadd.f32 %v5814, %v5910
        %v6052 = vadd.f32 %v5816, %v5912
        %v6053 = vadd.f32 %v5818, %v5914
        %v6054 = vadd.f32 %v5820, %v5916
        %v6055 = vadd.f32 %v5822, %v5918
        %v6056 = vadd.f32 %v5824, %v5920
        %v6057 = vadd.f32 %v5826, %v5922
        %v6058 = vadd.f32 %v5828, %v5924
        %v6059 = vadd.f32 %v5830, %v5926
        %v6060 = vadd.f32 %v5832, %v5928
        %v6061 = vadd.f32 %v5834, %v5930
        %v6062 = vadd.f32 %v5836, %v5932
        %v6063 = vadd.f32 %v5838, %v5934
        %v6064 = vadd.f32 %v5840, %v5936
        %v6065 = vadd.f32 %v6033, %v5970
        %v6066 = vadd.f32 %v6034, %v5972
        %v6067 = vadd.f32 %v6035, %v5974
        %v6068 = vadd.f32 %v6036, %v5976
        %v6069 = vadd.f32 %v6037, %v5978
        %v6070 = vadd.f32 %v6038, %v5980
        %v6071 = vadd.f32 %v6039, %v5982
        %v6072 = vadd.f32 %v6040, %v5984
        %v6073 = vadd.f32 %v6041, %v5986
        %v6074 = vadd.f32 %v6042, %v5988
        %v6075 = vadd.f32 %v6043, %v5990
        %v6076 = vadd.f32 %v6044, %v5992
        %v6077 = vadd.f32 %v6045, %v5994
        %v6078 = vadd.f32 %v6046, %v5996
        %v6079 = vadd.f32 %v6047, %v5998
        %v6080 = vadd.f32 %v6048, %v6000
        %v6081 = vadd.f32 %v6049, %v6002
        %v6082 = vadd.f32 %v6050, %v6004
        %v6083 = vadd.f32 %v6051, %v6006
        %v6084 = vadd.f32 %v6052, %v6008
        %v6085 = vadd.f32 %v6053, %v6010
        %v6086 = vadd.f32 %v6054, %v6012
        %v6087 = vadd.f32 %v6055, %v6014
        %v6088 = vadd.f32 %v6056, %v6016
        %v6089 = vadd.f32 %v6057, %v6018
        %v6090 = vadd.f32 %v6058, %v6020
        %v6091 = vadd.f32 %v6059, %v6022
        %v6092 = vadd.f32 %v6060, %v6024
        %v6093 = vadd.f32 %v6061, %v6026
        %v6094 = vadd.f32 %v6062, %v6028
        %v6095 = vadd.f32 %v6063, %v6030
        %v6096 = vadd.f32 %v6064, %v6032
        %v6097 = vrcp.pop %v6065
        %v6098 = vrcp.pop %v6066
        %v6099 = vrcp.pop %v6067
        %v6100 = vrcp.pop %v6068
        %v6101 = vrcp.pop %v6069
        %v6102 = vrcp.pop %v6070
        %v6103 = vrcp.pop %v6071
        %v6104 = vrcp.pop %v6072
        %v6105 = vrcp.pop %v6073
        %v6106 = vrcp.pop %v6074
        %v6107 = vrcp.pop %v6075
        %v6108 = vrcp.pop %v6076
        %v6109 = vrcp.pop %v6077
        %v6110 = vrcp.pop %v6078
        %v6111 = vrcp.pop %v6079
        %v6112 = vrcp.pop %v6080
        %v6113 = vrcp.pop %v6081
        %v6114 = vrcp.pop %v6082
        %v6115 = vrcp.pop %v6083
        %v6116 = vrcp.pop %v6084
        %v6117 = vrcp.pop %v6085
        %v6118 = vrcp.pop %v6086
        %v6119 = vrcp.pop %v6087
        %v6120 = vrcp.pop %v6088
        %v6121 = vrcp.pop %v6089
        %v6122 = vrcp.pop %v6090
        %v6123 = vrcp.pop %v6091
        %v6124 = vrcp.pop %v6092
        %v6125 = vrcp.pop %v6093
        %v6126 = vrcp.pop %v6094
        %v6127 = vrcp.pop %v6095
        %v6128 = vrcp.pop %v6096
        %v6129 = vmul.f32 %v5778, %v2237
        %v6130 = vmul.f32 %v5780, %v2238
        %v6131 = vmul.f32 %v5782, %v2239
        %v6132 = vmul.f32 %v5784, %v2240
        %v6133 = vmul.f32 %v5786, %v2241
        %v6134 = vmul.f32 %v5788, %v2242
        %v6135 = vmul.f32 %v5790, %v2243
        %v6136 = vmul.f32 %v5792, %v2244
        %v6137 = vmul.f32 %v5794, %v2245
        %v6138 = vmul.f32 %v5796, %v2246
        %v6139 = vmul.f32 %v5798, %v2247
        %v6140 = vmul.f32 %v5800, %v2248
        %v6141 = vmul.f32 %v5802, %v2249
        %v6142 = vmul.f32 %v5804, %v2250
        %v6143 = vmul.f32 %v5806, %v2251
        %v6144 = vmul.f32 %v5808, %v2252
        %v6145 = vmul.f32 %v5810, %v2253
        %v6146 = vmul.f32 %v5812, %v2254
        %v6147 = vmul.f32 %v5814, %v2255
        %v6148 = vmul.f32 %v5816, %v2256
        %v6149 = vmul.f32 %v5818, %v2257
        %v6150 = vmul.f32 %v5820, %v2258
        %v6151 = vmul.f32 %v5822, %v2259
        %v6152 = vmul.f32 %v5824, %v2260
        %v6153 = vmul.f32 %v5826, %v2261
        %v6154 = vmul.f32 %v5828, %v2262
        %v6155 = vmul.f32 %v5830, %v2263
        %v6156 = vmul.f32 %v5832, %v2264
        %v6157 = vmul.f32 %v5834, %v2265
        %v6158 = vmul.f32 %v5836, %v2266
        %v6159 = vmul.f32 %v5838, %v2267
        %v6160 = vmul.f32 %v5840, %v2268
        %v6161 = vmul.f32 %v5874, %v3701
        %v6162 = vmul.f32 %v5876, %v3702
        %v6163 = vmul.f32 %v5878, %v3703
        %v6164 = vmul.f32 %v5880, %v3704
        %v6165 = vmul.f32 %v5882, %v3705
        %v6166 = vmul.f32 %v5884, %v3706
        %v6167 = vmul.f32 %v5886, %v3707
        %v6168 = vmul.f32 %v5888, %v3708
        %v6169 = vmul.f32 %v5890, %v3709
        %v6170 = vmul.f32 %v5892, %v3710
        %v6171 = vmul.f32 %v5894, %v3711
        %v6172 = vmul.f32 %v5896, %v3712
        %v6173 = vmul.f32 %v5898, %v3713
        %v6174 = vmul.f32 %v5900, %v3714
        %v6175 = vmul.f32 %v5902, %v3715
        %v6176 = vmul.f32 %v5904, %v3716
        %v6177 = vmul.f32 %v5906, %v3717
        %v6178 = vmul.f32 %v5908, %v3718
        %v6179 = vmul.f32 %v5910, %v3719
        %v6180 = vmul.f32 %v5912, %v3720
        %v6181 = vmul.f32 %v5914, %v3721
        %v6182 = vmul.f32 %v5916, %v3722
        %v6183 = vmul.f32 %v5918, %v3723
        %v6184 = vmul.f32 %v5920, %v3724
        %v6185 = vmul.f32 %v5922, %v3725
        %v6186 = vmul.f32 %v5924, %v3726
        %v6187 = vmul.f32 %v5926, %v3727
        %v6188 = vmul.f32 %v5928, %v3728
        %v6189 = vmul.f32 %v5930, %v3729
        %v6190 = vmul.f32 %v5932, %v3730
        %v6191 = vmul.f32 %v5934, %v3731
        %v6192 = vmul.f32 %v5936, %v3732
        %v6193 = vadd.f32 %v6129, %v6161
        %v6194 = vadd.f32 %v6130, %v6162
        %v6195 = vadd.f32 %v6131, %v6163
        %v6196 = vadd.f32 %v6132, %v6164
        %v6197 = vadd.f32 %v6133, %v6165
        %v6198 = vadd.f32 %v6134, %v6166
        %v6199 = vadd.f32 %v6135, %v6167
        %v6200 = vadd.f32 %v6136, %v6168
        %v6201 = vadd.f32 %v6137, %v6169
        %v6202 = vadd.f32 %v6138, %v6170
        %v6203 = vadd.f32 %v6139, %v6171
        %v6204 = vadd.f32 %v6140, %v6172
        %v6205 = vadd.f32 %v6141, %v6173
        %v6206 = vadd.f32 %v6142, %v6174
        %v6207 = vadd.f32 %v6143, %v6175
        %v6208 = vadd.f32 %v6144, %v6176
        %v6209 = vadd.f32 %v6145, %v6177
        %v6210 = vadd.f32 %v6146, %v6178
        %v6211 = vadd.f32 %v6147, %v6179
        %v6212 = vadd.f32 %v6148, %v6180
        %v6213 = vadd.f32 %v6149, %v6181
        %v6214 = vadd.f32 %v6150, %v6182
        %v6215 = vadd.f32 %v6151, %v6183
        %v6216 = vadd.f32 %v6152, %v6184
        %v6217 = vadd.f32 %v6153, %v6185
        %v6218 = vadd.f32 %v6154, %v6186
        %v6219 = vadd.f32 %v6155, %v6187
        %v6220 = vadd.f32 %v6156, %v6188
        %v6221 = vadd.f32 %v6157, %v6189
        %v6222 = vadd.f32 %v6158, %v6190
        %v6223 = vadd.f32 %v6159, %v6191
        %v6224 = vadd.f32 %v6160, %v6192
        %v6225 = vmul.f32 %v5970, %v5165
        %v6226 = vmul.f32 %v5972, %v5166
        %v6227 = vmul.f32 %v5974, %v5167
        %v6228 = vmul.f32 %v5976, %v5168
        %v6229 = vmul.f32 %v5978, %v5169
        %v6230 = vmul.f32 %v5980, %v5170
        %v6231 = vmul.f32 %v5982, %v5171
        %v6232 = vmul.f32 %v5984, %v5172
        %v6233 = vmul.f32 %v5986, %v5173
        %v6234 = vmul.f32 %v5988, %v5174
        %v6235 = vmul.f32 %v5990, %v5175
        %v6236 = vmul.f32 %v5992, %v5176
        %v6237 = vmul.f32 %v5994, %v5177
        %v6238 = vmul.f32 %v5996, %v5178
        %v6239 = vmul.f32 %v5998, %v5179
        %v6240 = vmul.f32 %v6000, %v5180
        %v6241 = vmul.f32 %v6002, %v5181
        %v6242 = vmul.f32 %v6004, %v5182
        %v6243 = vmul.f32 %v6006, %v5183
        %v6244 = vmul.f32 %v6008, %v5184
        %v6245 = vmul.f32 %v6010, %v5185
        %v6246 = vmul.f32 %v6012, %v5186
        %v6247 = vmul.f32 %v6014, %v5187
        %v6248 = vmul.f32 %v6016, %v5188
        %v6249 = vmul.f32 %v6018, %v5189
        %v6250 = vmul.f32 %v6020, %v5190
        %v6251 = vmul.f32 %v6022, %v5191
        %v6252 = vmul.f32 %v6024, %v5192
        %v6253 = vmul.f32 %v6026, %v5193
        %v6254 = vmul.f32 %v6028, %v5194
        %v6255 = vmul.f32 %v6030, %v5195
        %v6256 = vmul.f32 %v6032, %v5196
        %v6257 = vadd.f32 %v6193, %v6225
        %v6258 = vadd.f32 %v6194, %v6226
        %v6259 = vadd.f32 %v6195, %v6227
        %v6260 = vadd.f32 %v6196, %v6228
        %v6261 = vadd.f32 %v6197, %v6229
        %v6262 = vadd.f32 %v6198, %v6230
        %v6263 = vadd.f32 %v6199, %v6231
        %v6264 = vadd.f32 %v6200, %v6232
        %v6265 = vadd.f32 %v6201, %v6233
        %v6266 = vadd.f32 %v6202, %v6234
        %v6267 = vadd.f32 %v6203, %v6235
        %v6268 = vadd.f32 %v6204, %v6236
        %v6269 = vadd.f32 %v6205, %v6237
        %v6270 = vadd.f32 %v6206, %v6238
        %v6271 = vadd.f32 %v6207, %v6239
        %v6272 = vadd.f32 %v6208, %v6240
        %v6273 = vadd.f32 %v6209, %v6241
        %v6274 = vadd.f32 %v6210, %v6242
        %v6275 = vadd.f32 %v6211, %v6243
        %v6276 = vadd.f32 %v6212, %v6244
        %v6277 = vadd.f32 %v6213, %v6245
        %v6278 = vadd.f32 %v6214, %v6246
        %v6279 = vadd.f32 %v6215, %v6247
        %v6280 = vadd.f32 %v6216, %v6248
        %v6281 = vadd.f32 %v6217, %v6249
        %v6282 = vadd.f32 %v6218, %v6250
        %v6283 = vadd.f32 %v6219, %v6251
        %v6284 = vadd.f32 %v6220, %v6252
        %v6285 = vadd.f32 %v6221, %v6253
        %v6286 = vadd.f32 %v6222, %v6254
        %v6287 = vadd.f32 %v6223, %v6255
        %v6288 = vadd.f32 %v6224, %v6256
        %v6289 = vmul.f32 %v6257, %v6097
        %v6290 = vmul.f32 %v6258, %v6098
        %v6291 = vmul.f32 %v6259, %v6099
        %v6292 = vmul.f32 %v6260, %v6100
        %v6293 = vmul.f32 %v6261, %v6101
        %v6294 = vmul.f32 %v6262, %v6102
        %v6295 = vmul.f32 %v6263, %v6103
        %v6296 = vmul.f32 %v6264, %v6104
        %v6297 = vmul.f32 %v6265, %v6105
        %v6298 = vmul.f32 %v6266, %v6106
        %v6299 = vmul.f32 %v6267, %v6107
        %v6300 = vmul.f32 %v6268, %v6108
        %v6301 = vmul.f32 %v6269, %v6109
        %v6302 = vmul.f32 %v6270, %v6110
        %v6303 = vmul.f32 %v6271, %v6111
        %v6304 = vmul.f32 %v6272, %v6112
        %v6305 = vmul.f32 %v6273, %v6113
        %v6306 = vmul.f32 %v6274, %v6114
        %v6307 = vmul.f32 %v6275, %v6115
        %v6308 = vmul.f32 %v6276, %v6116
        %v6309 = vmul.f32 %v6277, %v6117
        %v6310 = vmul.f32 %v6278, %v6118
        %v6311 = vmul.f32 %v6279, %v6119
        %v6312 = vmul.f32 %v6280, %v6120
        %v6313 = vmul.f32 %v6281, %v6121
        %v6314 = vmul.f32 %v6282, %v6122
        %v6315 = vmul.f32 %v6283, %v6123
        %v6316 = vmul.f32 %v6284, %v6124
        %v6317 = vmul.f32 %v6285, %v6125
        %v6318 = vmul.f32 %v6286, %v6126
        %v6319 = vmul.f32 %v6287, %v6127
        %v6320 = vmul.f32 %v6288, %v6128
        %v6321 = vlaneseq
        %v6322 = vshrl.u32 %v6321, 7
        %v6323 = vsub.s32 0, %v6322
        %v6324 = vrot.slane %v378, %v6323
        %v6325 = vmul.f32 %v6289, %v6324
        %v6326 = vmul.f32 %v6290, %v6324
        %v6327 = vmul.f32 %v6291, %v6324
        %v6328 = vmul.f32 %v6292, %v6324
        %v6329 = vmul.f32 %v6293, %v6324
        %v6330 = vmul.f32 %v6294, %v6324
        %v6331 = vmul.f32 %v6295, %v6324
        %v6332 = vmul.f32 %v6296, %v6324
        %v6333 = vmul.f32 %v6297, %v6324
        %v6334 = vmul.f32 %v6298, %v6324
        %v6335 = vmul.f32 %v6299, %v6324
        %v6336 = vmul.f32 %v6300, %v6324
        %v6337 = vmul.f32 %v6301, %v6324
        %v6338 = vmul.f32 %v6302, %v6324
        %v6339 = vmul.f32 %v6303, %v6324
        %v6340 = vmul.f32 %v6304, %v6324
        %v6341 = vmul.f32 %v6305, %v6324
        %v6342 = vmul.f32 %v6306, %v6324
        %v6343 = vmul.f32 %v6307, %v6324
        %v6344 = vmul.f32 %v6308, %v6324
        %v6345 = vmul.f32 %v6309, %v6324
        %v6346 = vmul.f32 %v6310, %v6324
        %v6347 = vmul.f32 %v6311, %v6324
        %v6348 = vmul.f32 %v6312, %v6324
        %v6349 = vmul.f32 %v6313, %v6324
        %v6350 = vmul.f32 %v6314, %v6324
        %v6351 = vmul.f32 %v6315, %v6324
        %v6352 = vmul.f32 %v6316, %v6324
        %v6353 = vmul.f32 %v6317, %v6324
        %v6354 = vmul.f32 %v6318, %v6324
        %v6355 = vmul.f32 %v6319, %v6324
        %v6356 = vmul.f32 %v6320, %v6324
        %6357 = vadd.xlane.f32.xlu0 %v6325
        %v6358 = vpop.xlane.xlu0 %6357
        %6359 = vadd.xlane.f32.xlu0 %v6326
        %v6360 = vpop.xlane.xlu0 %6359
        %6361 = vadd.xlane.f32.xlu0 %v6327
        %v6362 = vpop.xlane.xlu0 %6361
        %6363 = vadd.xlane.f32.xlu0 %v6328
        %v6364 = vpop.xlane.xlu0 %6363
        %6365 = vadd.xlane.f32.xlu0 %v6329
        %v6366 = vpop.xlane.xlu0 %6365
        %6367 = vadd.xlane.f32.xlu0 %v6330
        %v6368 = vpop.xlane.xlu0 %6367
        %6369 = vadd.xlane.f32.xlu0 %v6331
        %v6370 = vpop.xlane.xlu0 %6369
        %6371 = vadd.xlane.f32.xlu0 %v6332
        %v6372 = vpop.xlane.xlu0 %6371
        %6373 = vadd.xlane.f32.xlu0 %v6333
        %v6374 = vpop.xlane.xlu0 %6373
        %6375 = vadd.xlane.f32.xlu0 %v6334
        %v6376 = vpop.xlane.xlu0 %6375
        %6377 = vadd.xlane.f32.xlu0 %v6335
        %v6378 = vpop.xlane.xlu0 %6377
        %6379 = vadd.xlane.f32.xlu0 %v6336
        %v6380 = vpop.xlane.xlu0 %6379
        %6381 = vadd.xlane.f32.xlu0 %v6337
        %v6382 = vpop.xlane.xlu0 %6381
        %6383 = vadd.xlane.f32.xlu0 %v6338
        %v6384 = vpop.xlane.xlu0 %6383
        %6385 = vadd.xlane.f32.xlu0 %v6339
        %v6386 = vpop.xlane.xlu0 %6385
        %6387 = vadd.xlane.f32.xlu0 %v6340
        %v6388 = vpop.xlane.xlu0 %6387
        %6389 = vadd.xlane.f32.xlu0 %v6341
        %v6390 = vpop.xlane.xlu0 %6389
        %6391 = vadd.xlane.f32.xlu0 %v6342
        %v6392 = vpop.xlane.xlu0 %6391
        %6393 = vadd.xlane.f32.xlu0 %v6343
        %v6394 = vpop.xlane.xlu0 %6393
        %6395 = vadd.xlane.f32.xlu0 %v6344
        %v6396 = vpop.xlane.xlu0 %6395
        %6397 = vadd.xlane.f32.xlu0 %v6345
        %v6398 = vpop.xlane.xlu0 %6397
        %6399 = vadd.xlane.f32.xlu0 %v6346
        %v6400 = vpop.xlane.xlu0 %6399
        %6401 = vadd.xlane.f32.xlu0 %v6347
        %v6402 = vpop.xlane.xlu0 %6401
        %6403 = vadd.xlane.f32.xlu0 %v6348
        %v6404 = vpop.xlane.xlu0 %6403
        %6405 = vadd.xlane.f32.xlu0 %v6349
        %v6406 = vpop.xlane.xlu0 %6405
        %6407 = vadd.xlane.f32.xlu0 %v6350
        %v6408 = vpop.xlane.xlu0 %6407
        %6409 = vadd.xlane.f32.xlu0 %v6351
        %v6410 = vpop.xlane.xlu0 %6409
        %6411 = vadd.xlane.f32.xlu0 %v6352
        %v6412 = vpop.xlane.xlu0 %6411
        %6413 = vadd.xlane.f32.xlu0 %v6353
        %v6414 = vpop.xlane.xlu0 %6413
        %6415 = vadd.xlane.f32.xlu0 %v6354
        %v6416 = vpop.xlane.xlu0 %6415
        %6417 = vadd.xlane.f32.xlu0 %v6355
        %v6418 = vpop.xlane.xlu0 %6417
        %6419 = vadd.xlane.f32.xlu0 %v6356
        %v6420 = vpop.xlane.xlu0 %6419
        %v6421 = vmul.f32 %v6358, 0.088388346
        %v6422 = vmul.f32 %v6360, 0.088388346
        %v6423 = vmul.f32 %v6362, 0.088388346
        %v6424 = vmul.f32 %v6364, 0.088388346
        %v6425 = vmul.f32 %v6366, 0.088388346
        %v6426 = vmul.f32 %v6368, 0.088388346
        %v6427 = vmul.f32 %v6370, 0.088388346
        %v6428 = vmul.f32 %v6372, 0.088388346
        %v6429 = vmul.f32 %v6374, 0.088388346
        %v6430 = vmul.f32 %v6376, 0.088388346
        %v6431 = vmul.f32 %v6378, 0.088388346
        %v6432 = vmul.f32 %v6380, 0.088388346
        %v6433 = vmul.f32 %v6382, 0.088388346
        %v6434 = vmul.f32 %v6384, 0.088388346
        %v6435 = vmul.f32 %v6386, 0.088388346
        %v6436 = vmul.f32 %v6388, 0.088388346
        %v6437 = vmul.f32 %v6390, 0.088388346
        %v6438 = vmul.f32 %v6392, 0.088388346
        %v6439 = vmul.f32 %v6394, 0.088388346
        %v6440 = vmul.f32 %v6396, 0.088388346
        %v6441 = vmul.f32 %v6398, 0.088388346
        %v6442 = vmul.f32 %v6400, 0.088388346
        %v6443 = vmul.f32 %v6402, 0.088388346
        %v6444 = vmul.f32 %v6404, 0.088388346
        %v6445 = vmul.f32 %v6406, 0.088388346
        %v6446 = vmul.f32 %v6408, 0.088388346
        %v6447 = vmul.f32 %v6410, 0.088388346
        %v6448 = vmul.f32 %v6412, 0.088388346
        %v6449 = vmul.f32 %v6414, 0.088388346
        %v6450 = vmul.f32 %v6416, 0.088388346
        %v6451 = vmul.f32 %v6418, 0.088388346
        %v6452 = vmul.f32 %v6420, 0.088388346
        %v6453 = vmax.f32 %v6421, %v6422
        %v6454 = vrot.slane %v6453, 4
        %v6455 = vmax.f32 %v6453, %v6454
        %v6456 = vrot.slane %v6455, 2
        %v6457 = vmax.f32 %v6455, %v6456
        %v6458 = vrot.slane %v6457, 1
        %v6459 = vmax.f32 %v6457, %v6458
        %v6460 = vmax.f32 %v6423, %v6424
        %v6461 = vrot.slane %v6460, 4
        %v6462 = vmax.f32 %v6460, %v6461
        %v6463 = vrot.slane %v6462, 2
        %v6464 = vmax.f32 %v6462, %v6463
        %v6465 = vrot.slane %v6464, 1
        %v6466 = vmax.f32 %v6464, %v6465
        %v6467 = vmax.f32 %v6425, %v6426
        %v6468 = vrot.slane %v6467, 4
        %v6469 = vmax.f32 %v6467, %v6468
        %v6470 = vrot.slane %v6469, 2
        %v6471 = vmax.f32 %v6469, %v6470
        %v6472 = vrot.slane %v6471, 1
        %v6473 = vmax.f32 %v6471, %v6472
        %v6474 = vmax.f32 %v6427, %v6428
        %v6475 = vrot.slane %v6474, 4
        %v6476 = vmax.f32 %v6474, %v6475
        %v6477 = vrot.slane %v6476, 2
        %v6478 = vmax.f32 %v6476, %v6477
        %v6479 = vrot.slane %v6478, 1
        %v6480 = vmax.f32 %v6478, %v6479
        %v6481 = vmax.f32 %v6429, %v6430
        %v6482 = vrot.slane %v6481, 4
        %v6483 = vmax.f32 %v6481, %v6482
        %v6484 = vrot.slane %v6483, 2
        %v6485 = vmax.f32 %v6483, %v6484
        %v6486 = vrot.slane %v6485, 1
        %v6487 = vmax.f32 %v6485, %v6486
        %v6488 = vmax.f32 %v6431, %v6432
        %v6489 = vrot.slane %v6488, 4
        %v6490 = vmax.f32 %v6488, %v6489
        %v6491 = vrot.slane %v6490, 2
        %v6492 = vmax.f32 %v6490, %v6491
        %v6493 = vrot.slane %v6492, 1
        %v6494 = vmax.f32 %v6492, %v6493
        %v6495 = vmax.f32 %v6433, %v6434
        %v6496 = vrot.slane %v6495, 4
        %v6497 = vmax.f32 %v6495, %v6496
        %v6498 = vrot.slane %v6497, 2
        %v6499 = vmax.f32 %v6497, %v6498
        %v6500 = vrot.slane %v6499, 1
        %v6501 = vmax.f32 %v6499, %v6500
        %v6502 = vmax.f32 %v6435, %v6436
        %v6503 = vrot.slane %v6502, 4
        %v6504 = vmax.f32 %v6502, %v6503
        %v6505 = vrot.slane %v6504, 2
        %v6506 = vmax.f32 %v6504, %v6505
        %v6507 = vrot.slane %v6506, 1
        %v6508 = vmax.f32 %v6506, %v6507
        %v6509 = vmax.f32 %v6437, %v6438
        %v6510 = vrot.slane %v6509, 4
        %v6511 = vmax.f32 %v6509, %v6510
        %v6512 = vrot.slane %v6511, 2
        %v6513 = vmax.f32 %v6511, %v6512
        %v6514 = vrot.slane %v6513, 1
        %v6515 = vmax.f32 %v6513, %v6514
        %v6516 = vmax.f32 %v6439, %v6440
        %v6517 = vrot.slane %v6516, 4
        %v6518 = vmax.f32 %v6516, %v6517
        %v6519 = vrot.slane %v6518, 2
        %v6520 = vmax.f32 %v6518, %v6519
        %v6521 = vrot.slane %v6520, 1
        %v6522 = vmax.f32 %v6520, %v6521
        %v6523 = vmax.f32 %v6441, %v6442
        %v6524 = vrot.slane %v6523, 4
        %v6525 = vmax.f32 %v6523, %v6524
        %v6526 = vrot.slane %v6525, 2
        %v6527 = vmax.f32 %v6525, %v6526
        %v6528 = vrot.slane %v6527, 1
        %v6529 = vmax.f32 %v6527, %v6528
        %v6530 = vmax.f32 %v6443, %v6444
        %v6531 = vrot.slane %v6530, 4
        %v6532 = vmax.f32 %v6530, %v6531
        %v6533 = vrot.slane %v6532, 2
        %v6534 = vmax.f32 %v6532, %v6533
        %v6535 = vrot.slane %v6534, 1
        %v6536 = vmax.f32 %v6534, %v6535
        %v6537 = vmax.f32 %v6445, %v6446
        %v6538 = vrot.slane %v6537, 4
        %v6539 = vmax.f32 %v6537, %v6538
        %v6540 = vrot.slane %v6539, 2
        %v6541 = vmax.f32 %v6539, %v6540
        %v6542 = vrot.slane %v6541, 1
        %v6543 = vmax.f32 %v6541, %v6542
        %v6544 = vmax.f32 %v6447, %v6448
        %v6545 = vrot.slane %v6544, 4
        %v6546 = vmax.f32 %v6544, %v6545
        %v6547 = vrot.slane %v6546, 2
        %v6548 = vmax.f32 %v6546, %v6547
        %v6549 = vrot.slane %v6548, 1
        %v6550 = vmax.f32 %v6548, %v6549
        %v6551 = vmax.f32 %v6449, %v6450
        %v6552 = vrot.slane %v6551, 4
        %v6553 = vmax.f32 %v6551, %v6552
        %v6554 = vrot.slane %v6553, 2
        %v6555 = vmax.f32 %v6553, %v6554
        %v6556 = vrot.slane %v6555, 1
        %v6557 = vmax.f32 %v6555, %v6556
        %v6558 = vmax.f32 %v6451, %v6452
        %v6559 = vrot.slane %v6558, 4
        %v6560 = vmax.f32 %v6558, %v6559
        %v6561 = vrot.slane %v6560, 2
        %v6562 = vmax.f32 %v6560, %v6561
        %v6563 = vrot.slane %v6562, 1
        %v6564 = vmax.f32 %v6562, %v6563
        %v6565 = vsub.f32 %v6421, %v6459
        %v6566 = vsub.f32 %v6422, %v6459
        %v6567 = vsub.f32 %v6423, %v6466
        %v6568 = vsub.f32 %v6424, %v6466
        %v6569 = vsub.f32 %v6425, %v6473
        %v6570 = vsub.f32 %v6426, %v6473
        %v6571 = vsub.f32 %v6427, %v6480
        %v6572 = vsub.f32 %v6428, %v6480
        %v6573 = vsub.f32 %v6429, %v6487
        %v6574 = vsub.f32 %v6430, %v6487
        %v6575 = vsub.f32 %v6431, %v6494
        %v6576 = vsub.f32 %v6432, %v6494
        %v6577 = vsub.f32 %v6433, %v6501
        %v6578 = vsub.f32 %v6434, %v6501
        %v6579 = vsub.f32 %v6435, %v6508
        %v6580 = vsub.f32 %v6436, %v6508
        %v6581 = vsub.f32 %v6437, %v6515
        %v6582 = vsub.f32 %v6438, %v6515
        %v6583 = vsub.f32 %v6439, %v6522
        %v6584 = vsub.f32 %v6440, %v6522
        %v6585 = vsub.f32 %v6441, %v6529
        %v6586 = vsub.f32 %v6442, %v6529
        %v6587 = vsub.f32 %v6443, %v6536
        %v6588 = vsub.f32 %v6444, %v6536
        %v6589 = vsub.f32 %v6445, %v6543
        %v6590 = vsub.f32 %v6446, %v6543
        %v6591 = vsub.f32 %v6447, %v6550
        %v6592 = vsub.f32 %v6448, %v6550
        %v6593 = vsub.f32 %v6449, %v6557
        %v6594 = vsub.f32 %v6450, %v6557
        %v6595 = vsub.f32 %v6451, %v6564
        %v6596 = vsub.f32 %v6452, %v6564
        %v6597 = vmul.f32 %v6565, 1.442695
        %v6598 = vpow.pop %v6597
        %v6599 = vmul.f32 %v6566, 1.442695
        %v6600 = vpow.pop %v6599
        %v6601 = vmul.f32 %v6567, 1.442695
        %v6602 = vpow.pop %v6601
        %v6603 = vmul.f32 %v6568, 1.442695
        %v6604 = vpow.pop %v6603
        %v6605 = vmul.f32 %v6569, 1.442695
        %v6606 = vpow.pop %v6605
        %v6607 = vmul.f32 %v6570, 1.442695
        %v6608 = vpow.pop %v6607
        %v6609 = vmul.f32 %v6571, 1.442695
        %v6610 = vpow.pop %v6609
        %v6611 = vmul.f32 %v6572, 1.442695
        %v6612 = vpow.pop %v6611
        %v6613 = vmul.f32 %v6573, 1.442695
        %v6614 = vpow.pop %v6613
        %v6615 = vmul.f32 %v6574, 1.442695
        %v6616 = vpow.pop %v6615
        %v6617 = vmul.f32 %v6575, 1.442695
        %v6618 = vpow.pop %v6617
        %v6619 = vmul.f32 %v6576, 1.442695
        %v6620 = vpow.pop %v6619
        %v6621 = vmul.f32 %v6577, 1.442695
        %v6622 = vpow.pop %v6621
        %v6623 = vmul.f32 %v6578, 1.442695
        %v6624 = vpow.pop %v6623
        %v6625 = vmul.f32 %v6579, 1.442695
        %v6626 = vpow.pop %v6625
        %v6627 = vmul.f32 %v6580, 1.442695
        %v6628 = vpow.pop %v6627
        %v6629 = vmul.f32 %v6581, 1.442695
        %v6630 = vpow.pop %v6629
        %v6631 = vmul.f32 %v6582, 1.442695
        %v6632 = vpow.pop %v6631
        %v6633 = vmul.f32 %v6583, 1.442695
        %v6634 = vpow.pop %v6633
        %v6635 = vmul.f32 %v6584, 1.442695
        %v6636 = vpow.pop %v6635
        %v6637 = vmul.f32 %v6585, 1.442695
        %v6638 = vpow.pop %v6637
        %v6639 = vmul.f32 %v6586, 1.442695
        %v6640 = vpow.pop %v6639
        %v6641 = vmul.f32 %v6587, 1.442695
        %v6642 = vpow.pop %v6641
        %v6643 = vmul.f32 %v6588, 1.442695
        %v6644 = vpow.pop %v6643
        %v6645 = vmul.f32 %v6589, 1.442695
        %v6646 = vpow.pop %v6645
        %v6647 = vmul.f32 %v6590, 1.442695
        %v6648 = vpow.pop %v6647
        %v6649 = vmul.f32 %v6591, 1.442695
        %v6650 = vpow.pop %v6649
        %v6651 = vmul.f32 %v6592, 1.442695
        %v6652 = vpow.pop %v6651
        %v6653 = vmul.f32 %v6593, 1.442695
        %v6654 = vpow.pop %v6653
        %v6655 = vmul.f32 %v6594, 1.442695
        %v6656 = vpow.pop %v6655
        %v6657 = vmul.f32 %v6595, 1.442695
        %v6658 = vpow.pop %v6657
        %v6659 = vmul.f32 %v6596, 1.442695
        %v6660 = vpow.pop %v6659
        %v6661 = vadd.f32 %v6598, %v6600
        %v6662 = vrot.slane %v6661, 4
        %v6663 = vadd.f32 %v6661, %v6662
        %v6664 = vrot.slane %v6663, 2
        %v6665 = vadd.f32 %v6663, %v6664
        %v6666 = vrot.slane %v6665, 1
        %v6667 = vadd.f32 %v6665, %v6666
        %v6668 = vadd.f32 %v6602, %v6604
        %v6669 = vrot.slane %v6668, 4
        %v6670 = vadd.f32 %v6668, %v6669
        %v6671 = vrot.slane %v6670, 2
        %v6672 = vadd.f32 %v6670, %v6671
        %v6673 = vrot.slane %v6672, 1
        %v6674 = vadd.f32 %v6672, %v6673
        %v6675 = vadd.f32 %v6606, %v6608
        %v6676 = vrot.slane %v6675, 4
        %v6677 = vadd.f32 %v6675, %v6676
        %v6678 = vrot.slane %v6677, 2
        %v6679 = vadd.f32 %v6677, %v6678
        %v6680 = vrot.slane %v6679, 1
        %v6681 = vadd.f32 %v6679, %v6680
        %v6682 = vadd.f32 %v6610, %v6612
        %v6683 = vrot.slane %v6682, 4
        %v6684 = vadd.f32 %v6682, %v6683
        %v6685 = vrot.slane %v6684, 2
        %v6686 = vadd.f32 %v6684, %v6685
        %v6687 = vrot.slane %v6686, 1
        %v6688 = vadd.f32 %v6686, %v6687
        %v6689 = vadd.f32 %v6614, %v6616
        %v6690 = vrot.slane %v6689, 4
        %v6691 = vadd.f32 %v6689, %v6690
        %v6692 = vrot.slane %v6691, 2
        %v6693 = vadd.f32 %v6691, %v6692
        %v6694 = vrot.slane %v6693, 1
        %v6695 = vadd.f32 %v6693, %v6694
        %v6696 = vadd.f32 %v6618, %v6620
        %v6697 = vrot.slane %v6696, 4
        %v6698 = vadd.f32 %v6696, %v6697
        %v6699 = vrot.slane %v6698, 2
        %v6700 = vadd.f32 %v6698, %v6699
        %v6701 = vrot.slane %v6700, 1
        %v6702 = vadd.f32 %v6700, %v6701
        %v6703 = vadd.f32 %v6622, %v6624
        %v6704 = vrot.slane %v6703, 4
        %v6705 = vadd.f32 %v6703, %v6704
        %v6706 = vrot.slane %v6705, 2
        %v6707 = vadd.f32 %v6705, %v6706
        %v6708 = vrot.slane %v6707, 1
        %v6709 = vadd.f32 %v6707, %v6708
        %v6710 = vadd.f32 %v6626, %v6628
        %v6711 = vrot.slane %v6710, 4
        %v6712 = vadd.f32 %v6710, %v6711
        %v6713 = vrot.slane %v6712, 2
        %v6714 = vadd.f32 %v6712, %v6713
        %v6715 = vrot.slane %v6714, 1
        %v6716 = vadd.f32 %v6714, %v6715
        %v6717 = vadd.f32 %v6630, %v6632
        %v6718 = vrot.slane %v6717, 4
        %v6719 = vadd.f32 %v6717, %v6718
        %v6720 = vrot.slane %v6719, 2
        %v6721 = vadd.f32 %v6719, %v6720
        %v6722 = vrot.slane %v6721, 1
        %v6723 = vadd.f32 %v6721, %v6722
        %v6724 = vadd.f32 %v6634, %v6636
        %v6725 = vrot.slane %v6724, 4
        %v6726 = vadd.f32 %v6724, %v6725
        %v6727 = vrot.slane %v6726, 2
        %v6728 = vadd.f32 %v6726, %v6727
        %v6729 = vrot.slane %v6728, 1
        %v6730 = vadd.f32 %v6728, %v6729
        %v6731 = vadd.f32 %v6638, %v6640
        %v6732 = vrot.slane %v6731, 4
        %v6733 = vadd.f32 %v6731, %v6732
        %v6734 = vrot.slane %v6733, 2
        %v6735 = vadd.f32 %v6733, %v6734
        %v6736 = vrot.slane %v6735, 1
        %v6737 = vadd.f32 %v6735, %v6736
        %v6738 = vadd.f32 %v6642, %v6644
        %v6739 = vrot.slane %v6738, 4
        %v6740 = vadd.f32 %v6738, %v6739
        %v6741 = vrot.slane %v6740, 2
        %v6742 = vadd.f32 %v6740, %v6741
        %v6743 = vrot.slane %v6742, 1
        %v6744 = vadd.f32 %v6742, %v6743
        %v6745 = vadd.f32 %v6646, %v6648
        %v6746 = vrot.slane %v6745, 4
        %v6747 = vadd.f32 %v6745, %v6746
        %v6748 = vrot.slane %v6747, 2
        %v6749 = vadd.f32 %v6747, %v6748
        %v6750 = vrot.slane %v6749, 1
        %v6751 = vadd.f32 %v6749, %v6750
        %v6752 = vadd.f32 %v6650, %v6652
        %v6753 = vrot.slane %v6752, 4
        %v6754 = vadd.f32 %v6752, %v6753
        %v6755 = vrot.slane %v6754, 2
        %v6756 = vadd.f32 %v6754, %v6755
        %v6757 = vrot.slane %v6756, 1
        %v6758 = vadd.f32 %v6756, %v6757
        %v6759 = vadd.f32 %v6654, %v6656
        %v6760 = vrot.slane %v6759, 4
        %v6761 = vadd.f32 %v6759, %v6760
        %v6762 = vrot.slane %v6761, 2
        %v6763 = vadd.f32 %v6761, %v6762
        %v6764 = vrot.slane %v6763, 1
        %v6765 = vadd.f32 %v6763, %v6764
        %v6766 = vadd.f32 %v6658, %v6660
        %v6767 = vrot.slane %v6766, 4
        %v6768 = vadd.f32 %v6766, %v6767
        %v6769 = vrot.slane %v6768, 2
        %v6770 = vadd.f32 %v6768, %v6769
        %v6771 = vrot.slane %v6770, 1
        %v6772 = vadd.f32 %v6770, %v6771
        %v6773 = vrcp.pop %v6667
        %v6774 = vrcp.pop %v6674
        %v6775 = vrcp.pop %v6681
        %v6776 = vrcp.pop %v6688
        %v6777 = vrcp.pop %v6695
        %v6778 = vrcp.pop %v6702
        %v6779 = vrcp.pop %v6709
        %v6780 = vrcp.pop %v6716
        %v6781 = vrcp.pop %v6723
        %v6782 = vrcp.pop %v6730
        %v6783 = vrcp.pop %v6737
        %v6784 = vrcp.pop %v6744
        %v6785 = vrcp.pop %v6751
        %v6786 = vrcp.pop %v6758
        %v6787 = vrcp.pop %v6765
        %v6788 = vrcp.pop %v6772
        %v6789 = vmul.f32 %v6598, %v6289
        %v6790 = vmul.f32 %v6600, %v6290
        %v6791 = vmul.f32 %v6602, %v6291
        %v6792 = vmul.f32 %v6604, %v6292
        %v6793 = vmul.f32 %v6606, %v6293
        %v6794 = vmul.f32 %v6608, %v6294
        %v6795 = vmul.f32 %v6610, %v6295
        %v6796 = vmul.f32 %v6612, %v6296
        %v6797 = vmul.f32 %v6614, %v6297
        %v6798 = vmul.f32 %v6616, %v6298
        %v6799 = vmul.f32 %v6618, %v6299
        %v6800 = vmul.f32 %v6620, %v6300
        %v6801 = vmul.f32 %v6622, %v6301
        %v6802 = vmul.f32 %v6624, %v6302
        %v6803 = vmul.f32 %v6626, %v6303
        %v6804 = vmul.f32 %v6628, %v6304
        %v6805 = vmul.f32 %v6630, %v6305
        %v6806 = vmul.f32 %v6632, %v6306
        %v6807 = vmul.f32 %v6634, %v6307
        %v6808 = vmul.f32 %v6636, %v6308
        %v6809 = vmul.f32 %v6638, %v6309
        %v6810 = vmul.f32 %v6640, %v6310
        %v6811 = vmul.f32 %v6642, %v6311
        %v6812 = vmul.f32 %v6644, %v6312
        %v6813 = vmul.f32 %v6646, %v6313
        %v6814 = vmul.f32 %v6648, %v6314
        %v6815 = vmul.f32 %v6650, %v6315
        %v6816 = vmul.f32 %v6652, %v6316
        %v6817 = vmul.f32 %v6654, %v6317
        %v6818 = vmul.f32 %v6656, %v6318
        %v6819 = vmul.f32 %v6658, %v6319
        %v6820 = vmul.f32 %v6660, %v6320
        %v6821 = vadd.f32 %v6789, %v6790
        %v6822 = vrot.slane %v6821, 4
        %v6823 = vadd.f32 %v6821, %v6822
        %v6824 = vrot.slane %v6823, 2
        %v6825 = vadd.f32 %v6823, %v6824
        %v6826 = vrot.slane %v6825, 1
        %v6827 = vadd.f32 %v6825, %v6826
        %v6828 = vadd.f32 %v6791, %v6792
        %v6829 = vrot.slane %v6828, 4
        %v6830 = vadd.f32 %v6828, %v6829
        %v6831 = vrot.slane %v6830, 2
        %v6832 = vadd.f32 %v6830, %v6831
        %v6833 = vrot.slane %v6832, 1
        %v6834 = vadd.f32 %v6832, %v6833
        %v6835 = vadd.f32 %v6793, %v6794
        %v6836 = vrot.slane %v6835, 4
        %v6837 = vadd.f32 %v6835, %v6836
        %v6838 = vrot.slane %v6837, 2
        %v6839 = vadd.f32 %v6837, %v6838
        %v6840 = vrot.slane %v6839, 1
        %v6841 = vadd.f32 %v6839, %v6840
        %v6842 = vadd.f32 %v6795, %v6796
        %v6843 = vrot.slane %v6842, 4
        %v6844 = vadd.f32 %v6842, %v6843
        %v6845 = vrot.slane %v6844, 2
        %v6846 = vadd.f32 %v6844, %v6845
        %v6847 = vrot.slane %v6846, 1
        %v6848 = vadd.f32 %v6846, %v6847
        %v6849 = vadd.f32 %v6797, %v6798
        %v6850 = vrot.slane %v6849, 4
        %v6851 = vadd.f32 %v6849, %v6850
        %v6852 = vrot.slane %v6851, 2
        %v6853 = vadd.f32 %v6851, %v6852
        %v6854 = vrot.slane %v6853, 1
        %v6855 = vadd.f32 %v6853, %v6854
        %v6856 = vadd.f32 %v6799, %v6800
        %v6857 = vrot.slane %v6856, 4
        %v6858 = vadd.f32 %v6856, %v6857
        %v6859 = vrot.slane %v6858, 2
        %v6860 = vadd.f32 %v6858, %v6859
        %v6861 = vrot.slane %v6860, 1
        %v6862 = vadd.f32 %v6860, %v6861
        %v6863 = vadd.f32 %v6801, %v6802
        %v6864 = vrot.slane %v6863, 4
        %v6865 = vadd.f32 %v6863, %v6864
        %v6866 = vrot.slane %v6865, 2
        %v6867 = vadd.f32 %v6865, %v6866
        %v6868 = vrot.slane %v6867, 1
        %v6869 = vadd.f32 %v6867, %v6868
        %v6870 = vadd.f32 %v6803, %v6804
        %v6871 = vrot.slane %v6870, 4
        %v6872 = vadd.f32 %v6870, %v6871
        %v6873 = vrot.slane %v6872, 2
        %v6874 = vadd.f32 %v6872, %v6873
        %v6875 = vrot.slane %v6874, 1
        %v6876 = vadd.f32 %v6874, %v6875
        %v6877 = vadd.f32 %v6805, %v6806
        %v6878 = vrot.slane %v6877, 4
        %v6879 = vadd.f32 %v6877, %v6878
        %v6880 = vrot.slane %v6879, 2
        %v6881 = vadd.f32 %v6879, %v6880
        %v6882 = vrot.slane %v6881, 1
        %v6883 = vadd.f32 %v6881, %v6882
        %v6884 = vadd.f32 %v6807, %v6808
        %v6885 = vrot.slane %v6884, 4
        %v6886 = vadd.f32 %v6884, %v6885
        %v6887 = vrot.slane %v6886, 2
        %v6888 = vadd.f32 %v6886, %v6887
        %v6889 = vrot.slane %v6888, 1
        %v6890 = vadd.f32 %v6888, %v6889
        %v6891 = vadd.f32 %v6809, %v6810
        %v6892 = vrot.slane %v6891, 4
        %v6893 = vadd.f32 %v6891, %v6892
        %v6894 = vrot.slane %v6893, 2
        %v6895 = vadd.f32 %v6893, %v6894
        %v6896 = vrot.slane %v6895, 1
        %v6897 = vadd.f32 %v6895, %v6896
        %v6898 = vadd.f32 %v6811, %v6812
        %v6899 = vrot.slane %v6898, 4
        %v6900 = vadd.f32 %v6898, %v6899
        %v6901 = vrot.slane %v6900, 2
        %v6902 = vadd.f32 %v6900, %v6901
        %v6903 = vrot.slane %v6902, 1
        %v6904 = vadd.f32 %v6902, %v6903
        %v6905 = vadd.f32 %v6813, %v6814
        %v6906 = vrot.slane %v6905, 4
        %v6907 = vadd.f32 %v6905, %v6906
        %v6908 = vrot.slane %v6907, 2
        %v6909 = vadd.f32 %v6907, %v6908
        %v6910 = vrot.slane %v6909, 1
        %v6911 = vadd.f32 %v6909, %v6910
        %v6912 = vadd.f32 %v6815, %v6816
        %v6913 = vrot.slane %v6912, 4
        %v6914 = vadd.f32 %v6912, %v6913
        %v6915 = vrot.slane %v6914, 2
        %v6916 = vadd.f32 %v6914, %v6915
        %v6917 = vrot.slane %v6916, 1
        %v6918 = vadd.f32 %v6916, %v6917
        %v6919 = vadd.f32 %v6817, %v6818
        %v6920 = vrot.slane %v6919, 4
        %v6921 = vadd.f32 %v6919, %v6920
        %v6922 = vrot.slane %v6921, 2
        %v6923 = vadd.f32 %v6921, %v6922
        %v6924 = vrot.slane %v6923, 1
        %v6925 = vadd.f32 %v6923, %v6924
        %v6926 = vadd.f32 %v6819, %v6820
        %v6927 = vrot.slane %v6926, 4
        %v6928 = vadd.f32 %v6926, %v6927
        %v6929 = vrot.slane %v6928, 2
        %v6930 = vadd.f32 %v6928, %v6929
        %v6931 = vrot.slane %v6930, 1
        %v6932 = vadd.f32 %v6930, %v6931
        %v6933 = vmul.f32 %v6827, %v6773
        %v6934 = vmul.f32 %v6834, %v6774
        %v6935 = vmul.f32 %v6841, %v6775
        %v6936 = vmul.f32 %v6848, %v6776
        %v6937 = vmul.f32 %v6855, %v6777
        %v6938 = vmul.f32 %v6862, %v6778
        %v6939 = vmul.f32 %v6869, %v6779
        %v6940 = vmul.f32 %v6876, %v6780
        %v6941 = vmul.f32 %v6883, %v6781
        %v6942 = vmul.f32 %v6890, %v6782
        %v6943 = vmul.f32 %v6897, %v6783
        %v6944 = vmul.f32 %v6904, %v6784
        %v6945 = vmul.f32 %v6911, %v6785
        %v6946 = vmul.f32 %v6918, %v6786
        %v6947 = vmul.f32 %v6925, %v6787
        %v6948 = vmul.f32 %v6932, %v6788
        %vm6965 = vcmask 1041409
        %v6966 = vsel %vm6965, %v6934, %v6933
        %vm6967 = vcmask 1042434
        %v6968 = vsel %vm6967, %v6935, %v6966
        %vm6969 = vcmask 1043459
        %v6970 = vsel %vm6969, %v6936, %v6968
        %vm6971 = vcmask 1044484
        %v6972 = vsel %vm6971, %v6937, %v6970
        %vm6973 = vcmask 1045509
        %v6974 = vsel %vm6973, %v6938, %v6972
        %vm6975 = vcmask 1046534
        %v6976 = vsel %vm6975, %v6939, %v6974
        %vm6977 = vcmask 1047559
        %v6978 = vsel %vm6977, %v6940, %v6976
        %v6979 = vsel %vm6965, %v6942, %v6941
        %v6980 = vsel %vm6967, %v6943, %v6979
        %v6981 = vsel %vm6969, %v6944, %v6980
        %v6982 = vsel %vm6971, %v6945, %v6981
        %v6983 = vsel %vm6973, %v6946, %v6982
        %v6984 = vsel %vm6975, %v6947, %v6983
        %v6985 = vsel %vm6977, %v6948, %v6984
        %6988 = vst [vmem:[%s336] sm:$0xff] %v6978
        %6989 = vst [vmem:[%s336 + $0x8] sm:$0xff] %v6985
        %s6990 = sand.u32 %s147, 1
        %s6991 = scalar_lea.sflag [#allocation4], %s6990
        %s6992 = sand.u32 %s147, 1
        %s6993 = smul.addr %s6992, 768
        %s6994 = scalar_lea.vmem [#allocation11], %s6993
        %s6995 = sand.u32 %s173, 1
        %s6996 = scalar_lea.sflag [#allocation13], %s6995
        %s6997 = sand.u32 %s173, 1
        %s6998 = smul.addr %s6997, 16
        %s6999 = scalar_lea.vmem [#allocation12], %s6998
        // Predicated region
        $region61: #{tpu_custom_call.1} parent=39 // pred_check
          %p7000 = pneg %p157
        $region62: #{tpu_custom_call.1} parent=39 // pred_check_branch
          %7002 = sbr.rel (%p7000) target = $region64
        $region63: #{tpu_custom_call.1} parent=39 // pred_region
          %s7003 = smul.u32 32, %s29
          %s7005 = ssub.s32 12288, 12288
          %7006 = vsyncadd %s6991, %s7005
          %s7007 = smul.addr %s7003, 3
          %s7008 = smul.addr %s7007, 128
          %s7009 = scalar_lea.hbm %s5, %s7008
          %s7010 = sshll.u32 %s6994, 4
          %s7011 = int_to_ptr.vmem [resolvable:$true] %s7010
          %7016 = dma.vmem_to_hbm [thread:$0]  %s7011, 12288, %s7009, %s6991, 384, 384, 24
        $region64: #{tpu_custom_call.1} parent=39 // pred_fallthru
          _
        // Predicated region
        $region65: #{tpu_custom_call.1} parent=39 // pred_check
          %p7017 = pneg %p183
        $region66: #{tpu_custom_call.1} parent=39 // pred_check_branch
          %7019 = sbr.rel (%p7017) target = $region68
        $region67: #{tpu_custom_call.1} parent=39 // pred_region
          %s7020 = smul.u32 2, %s29
          %s7022 = ssub.s32 256, 256
          %7023 = vsyncadd %s6996, %s7022
          %s7024 = smul.addr %s7020, 128
          %s7025 = scalar_lea.hbm %s6, %s7024
          %s7026 = sshll.u32 %s6999, 4
          %s7027 = int_to_ptr.vmem [resolvable:$true] %s7026
          %7032 = dma.vmem_to_hbm [thread:$0]  %s7027, 256, %s7025, %s6996, 128, 128, 8
        $region68: #{tpu_custom_call.1} parent=39 // pred_fallthru
          _
      $region40: #{tpu_custom_call.1} parent=5 // pred_fallthru
        _
      %p7033 = scmp.le.s32.totalorder 2, %s24
      // Predicated region
      $region69: #{tpu_custom_call.1} parent=5 // pred_check
        %p7034 = pneg %p7033
      $region70: #{tpu_custom_call.1} parent=5 // pred_check_branch
        %7036 = sbr.rel (%p7034) target = $region72
      $region71: #{tpu_custom_call.1} parent=5 // pred_region
        %s7037 = ssub.s32 %s24, 2
        // Predicated region
        $region73: #{tpu_custom_call.1} parent=71 // pred_check
          %p7038 = pneg %p163
        $region74: #{tpu_custom_call.1} parent=71 // pred_check_branch
          %7040 = sbr.rel (%p7038) target = $region76
        $region75: #{tpu_custom_call.1} parent=71 // pred_region
          %s7041 = sand.u32 %s148, 1
          %s7042 = scalar_lea.sflag [#allocation4], %s7041
          %s7043 = sand.u32 %s148, 1
          %s7044 = smul.addr %s7043, 768
          %s7045 = scalar_lea.vmem [#allocation11], %s7044
          %7046 = dma.done %s7042, 12288
        $region76: #{tpu_custom_call.1} parent=71 // pred_fallthru
          _
        // Predicated region
        $region77: #{tpu_custom_call.1} parent=71 // pred_check
          %p7047 = pneg %p189
        $region78: #{tpu_custom_call.1} parent=71 // pred_check_branch
          %7049 = sbr.rel (%p7047) target = $region80
        $region79: #{tpu_custom_call.1} parent=71 // pred_region
          %s7050 = sand.u32 %s174, 1
          %s7051 = scalar_lea.sflag [#allocation13], %s7050
          %s7052 = sand.u32 %s174, 1
          %s7053 = smul.addr %s7052, 16
          %s7054 = scalar_lea.vmem [#allocation12], %s7053
          %7055 = dma.done %s7051, 256
        $region80: #{tpu_custom_call.1} parent=71 // pred_fallthru
          _
      $region72: #{tpu_custom_call.1} parent=5 // pred_fallthru
        _
    $region6: #{tpu_custom_call.1} parent=1 // loop_footer
      %s28 = sadd.s32 1, %s24
    $region7: #{tpu_custom_call.1} parent=1 // loop_footer_branch
      %23 = sbr.rel target = $region3
    $region8: #{tpu_custom_call.1} parent=1 // loop_exit
      _
    %7056 = vsyncpa [#allocation3], 1
    %s7057 = scalar_lea.sflag [#allocation3], 1
    %7058 = vsyncpa %s7057, 1
    %7059 = vsyncpa [#allocation6], 1
    %7060 = vsyncpa [#allocation9], 1
    %7061 = vsyncpa [#allocation4], 1
    %s7062 = scalar_lea.sflag [#allocation4], 1
    %7063 = vsyncpa %s7062, 1
    %7064 = vsyncpa [#allocation13], 1
    %s7065 = scalar_lea.sflag [#allocation13], 1
    %7066 = vsyncpa %s7065, 1

</llo_original>
